<compile_context>
chip_gen: v7x
topology: tpu7x:2x2x1
jax: 0.10.0
libtpu: 0.0.40
codegen_flags: <defaults>
</compile_context>

<pallas_src>
import numpy as np
import jax
import jax.numpy as jnp
from jax.experimental import pallas as pl
from jax.experimental.pallas import tpu as pltpu


# ------------------------- helpers -------------------------

def _nbytes(*arrays):
    return sum(int(np.prod(a.shape)) * a.dtype.itemsize for a in arrays)


def _vmem_budget(working_set_bytes, *, headroom=4 << 20, floor=8 << 20, cap=32 << 20):
    """Gridless calls do no double-buffering: request working set + headroom only,
    clamped so even v7x's 64 MiB physical VMEM keeps compiler scratch room."""
    return int(min(cap, max(floor, int(working_set_bytes) + headroom)))


# ------------------------- Pallas kernels -------------------------

def _conv_mm_kernel(w_ref, p_ref, b_ref, o_ref):
    """out = LeakyReLU_0.1(W @ patches^T + b).

    bf16 operands, f32 accumulation (MXU preferred_element_type) and f32
    epilogue, bf16 store.  Output is (O, N*OH*OW): lane-dense last dim."""
    x = jnp.dot(w_ref[...], p_ref[...], preferred_element_type=jnp.float32)
    x = x + b_ref[...]                       # b is (O, 1), broadcasts over lanes
    x = jnp.where(x >= 0.0, x, 0.1 * x)      # nn.LeakyReLU(0.1)
    o_ref[...] = x.astype(o_ref.dtype)


def _mlp_head_kernel(g_ref, l_ref, s_ref,
                     w1g_ref, w1l_ref, b1_ref,
                     w2_ref, b2_ref,
                     w3a_ref, w3b_ref, b3_ref,
                     w4_ref, b4_ref,
                     w5_ref, b5_ref,
                     o_ref):
    """Whole MLP head in one kernel: all weights resident in VMEM, activations
    never leave the chip.  bf16 matmuls, f32 accumulation and f32 epilogues."""
    def mm(x, w_ref):
        return jnp.dot(x, w_ref[...], preferred_element_type=jnp.float32)

    # image_fc1 on concat([global, local]) == g @ W1[:256] + l @ W1[256:]
    h = mm(g_ref[...], w1g_ref) + mm(l_ref[...], w1l_ref)
    h = jnp.maximum(h + b1_ref[...], 0.0)                                    # (M,1024)
    # image_fc2 + ReLU
    h = jnp.maximum(mm(h.astype(jnp.bfloat16), w2_ref) + b2_ref[...], 0.0)   # (M,512)
    # fc1 on concat([img_features, stats]) == h @ W[:512] + stats @ W[512:]
    h = mm(h.astype(jnp.bfloat16), w3a_ref) + mm(s_ref[...], w3b_ref)
    h = jnp.maximum(h + b3_ref[...], 0.0)                                    # (M,256)
    # fc2 + ReLU
    h = jnp.maximum(mm(h.astype(jnp.bfloat16), w4_ref) + b4_ref[...], 0.0)   # (M,128)
    # fc3 (out_features=1) as a lane reduction (avoids an N=1 matmul store path)
    o_ref[...] = jnp.sum(h * w5_ref[...], axis=-1, keepdims=True) + b5_ref[...]


# ------------------------- wrappers -------------------------

def conv2d_leaky(x_cnhw, w_oihw, b, stride):
    """Conv2d (valid padding) + LeakyReLU(0.1) in channel-major form.

    Activations are (C, N, H, W); the conv is a single gridless Pallas matmul
    with a lane-dense output.  Tap windows are extracted with cheap JAX strided
    slices stacked along a major axis (no lane-axis concatenate)."""
    O, Ci, KH, KW = w_oihw.shape
    C, N, H, W = x_cnhw.shape
    assert C == Ci
    oh = (H - KH) // stride + 1
    ow = (W - KW) // stride + 1

    taps = []
    for i in range(KH):
        for j in range(KW):
            taps.append(x_cnhw[:, :, i:i + stride * oh:stride, j:j + stride * ow:stride])
    # (C, KH*KW, N, OH, OW) -> (C*KH*KW, N*OH*OW); row order (c, i, j) matches
    # torch's Conv2d weight flatten below.
    patches = jnp.stack(taps, axis=1).reshape(C * KH * KW, N * oh * ow)

    wmat = w_oihw.reshape(O, C * KH * KW).astype(jnp.bfloat16)
    b2d = b.reshape(O, 1).astype(jnp.float32)

    working = _nbytes(wmat, patches, b2d) + O * N * oh * ow * (2 + 4)
    y = pl.pallas_call(
        _conv_mm_kernel,
        out_shape=jax.ShapeDtypeStruct((O, N * oh * ow), jnp.bfloat16),
        compiler_params=pltpu.CompilerParams(
            vmem_limit_bytes=_vmem_budget(working)),
    )(wmat, patches, b2d)
    return y.reshape(O, N, oh, ow)           # already (C', N, H', W') for next layer


def mlp_head(global_flat, local_flat, stats, params):
    """image_fc + critic fc stack fused into a single gridless pallas_call."""
    N = global_flat.shape[0]
    args = (
        global_flat.astype(jnp.bfloat16),                      # (N, 256)
        local_flat.astype(jnp.bfloat16),                       # (N, 2304)
        stats.astype(jnp.float32),                             # (N, 8)
        params["img_fc1_w"][:256].astype(jnp.bfloat16),        # global-feature rows
        params["img_fc1_w"][256:].astype(jnp.bfloat16),        # local-feature rows
        params["img_fc1_b"].reshape(1, -1).astype(jnp.float32),
        params["img_fc2_w"].astype(jnp.bfloat16),
        params["img_fc2_b"].reshape(1, -1).astype(jnp.float32),
        params["fc1_w"][:512].astype(jnp.bfloat16),            # image-feature rows
        params["fc1_w"][512:].astype(jnp.float32),             # stats rows
        params["fc1_b"].reshape(1, -1).astype(jnp.float32),
        params["fc2_w"].astype(jnp.bfloat16),
        params["fc2_b"].reshape(1, -1).astype(jnp.float32),
        params["fc3_w"].reshape(1, -1).astype(jnp.float32),    # (128,1) -> (1,128)
        params["fc3_b"].reshape(1, 1).astype(jnp.float32),
    )
    working = _nbytes(*args) + N * 4
    return pl.pallas_call(
        _mlp_head_kernel,
        out_shape=jax.ShapeDtypeStruct((N, 1), jnp.float32),
        compiler_params=pltpu.CompilerParams(
            vmem_limit_bytes=_vmem_budget(working)),
    )(*args)


def critic_forward(params, image, stats):
    # image: (N, H, W, C).  Keep activations channel-major (C, N, H, W) so every
    # conv matmul output is lane-dense and the final flatten is already in
    # PyTorch NCHW order (no NHWC<->NCHW transposes of the feature slabs and no
    # in-graph (N,2560) concatenate).
    x = jnp.transpose(image.astype(jnp.bfloat16), (3, 0, 1, 2))             # (4,N,64,64)
    x = conv2d_leaky(x, params["conv1_w"], params["conv1_b"], stride=2)     # (16,N,30,30)
    x = conv2d_leaky(x, params["conv2_w"], params["conv2_b"], stride=2)     # (32,N,14,14)
    x = conv2d_leaky(x, params["conv3_w"], params["conv3_b"], stride=1)     # (64,N,12,12)

    C, N, H, W = x.shape
    # MaxPool2d(2,2); AdaptiveAvgPool2d(2) on the 6x6 map == mean over 3x3
    # windows; AdaptiveAvgPool2d(6) on the 6x6 map is the identity.  Tiny; XLA fuses.
    mp = x.reshape(C, N, H // 2, 2, W // 2, 2).max(axis=(3, 5))             # (64,N,6,6)
    gp = mp.astype(jnp.float32).reshape(C, N, 2, 3, 2, 3).mean(axis=(3, 5)) # (64,N,2,2)

    # Flatten in PyTorch NCHW (C, H, W) order (tiny transposes, <= 2304 cols).
    global_flat = jnp.transpose(gp, (1, 0, 2, 3)).reshape(N, -1)            # (N, 256)
    local_flat = jnp.transpose(mp, (1, 0, 2, 3)).reshape(N, -1)             # (N, 2304)

    stats_flat = stats.reshape(stats.shape[0], -1).astype(jnp.float32)
    return mlp_head(global_flat, local_flat, stats_flat, params)            # (N, 1)


def init_params(key, image_shape, stats_dim):
    """Deterministic synthetic parameters (PyTorch-default-style uniform init)."""
    H, W, Cin = image_shape
    keys = jax.random.split(key, 16)

    def u(k, shape, fan_in):
        bound = 1.0 / float(np.sqrt(fan_in))
        return jax.random.uniform(k, shape, jnp.float32, -bound, bound)

    p = {}
    # conv weights stored OIHW like torch.nn.Conv2d
    p["conv1_w"] = u(keys[0], (16, Cin, 5, 5), Cin * 25)
    p["conv1_b"] = u(keys[1], (16,), Cin * 25)
    p["conv2_w"] = u(keys[2], (32, 16, 3, 3), 16 * 9)
    p["conv2_b"] = u(keys[3], (32,), 16 * 9)
    p["conv3_w"] = u(keys[4], (64, 32, 3, 3), 32 * 9)
    p["conv3_b"] = u(keys[5], (64,), 32 * 9)
    cnn_out = 64 * 2 * 2 + 64 * 6 * 6  # 2560, same as the torch dummy-forward probe
    # linear weights stored (in, out)  (== torch (out, in) transposed)
    p["img_fc1_w"] = u(keys[6], (cnn_out, 1024), cnn_out)
    p["img_fc1_b"] = u(keys[7], (1024,), cnn_out)
    p["img_fc2_w"] = u(keys[8], (1024, 512), 1024)
    p["img_fc2_b"] = u(keys[9], (512,), 1024)
    feat_dim = 512 + stats_dim
    p["fc1_w"] = u(keys[10], (feat_dim, 256), feat_dim)
    p["fc1_b"] = u(keys[11], (256,), feat_dim)
    p["fc2_w"] = u(keys[12], (256, 128), 256)
    p["fc2_b"] = u(keys[13], (128,), 256)
    p["fc3_w"] = u(keys[14], (128, 1), 128)
    p["fc3_b"] = u(keys[15], (1,), 128)
    return p


if __name__ == "__main__":
    key = jax.random.PRNGKey(0)
    k_params, k_img, k_stats = jax.random.split(key, 3)

    image_shape = (64, 64, 4)   # (H, W, C) as passed to FeatureExtractor
    stats_dim = 8
    batch = 2

    params = init_params(k_params, image_shape, stats_dim)
    image = jax.random.uniform(k_img, (batch,) + image_shape, jnp.float32)
    stats = jax.random.normal(k_stats, (batch, stats_dim), jnp.float32)

    value = jax.jit(critic_forward)(params, image, stats)
    value = jax.block_until_ready(value)
    assert value.shape == (batch, 1) and value.dtype == jnp.float32
    print("KERNEL_OK")
</pallas_src>

<mosaic_0001>
module attributes {stable_mosaic.version = 11 : i64} {
  func.func @_conv_mm_kernel(%arg0: memref<16x100xbf16, #tpu.memory_space<vmem>>, %arg1: memref<100x1800xbf16, #tpu.memory_space<vmem>>, %arg2: memref<16x1xf32, #tpu.memory_space<vmem>>, %arg3: memref<16x1800xbf16, #tpu.memory_space<vmem>>) attributes {dimension_semantics = [], scalar_prefetch = 0 : i64, scratch_operands = 0 : i64, tpu.core_type = #tpu.core_type<tc>} {
    %c0 = arith.constant 0 : index
    %c0_0 = arith.constant 0 : index
    %0 = vector.load %arg0[%c0, %c0_0] : memref<16x100xbf16, #tpu.memory_space<vmem>>, vector<16x100xbf16>
    %c0_1 = arith.constant 0 : index
    %c0_2 = arith.constant 0 : index
    %1 = vector.load %arg1[%c0_1, %c0_2] : memref<100x1800xbf16, #tpu.memory_space<vmem>>, vector<100x1800xbf16>
    %cst = arith.constant dense<0.000000e+00> : vector<16x1800xf32>
    %2 = tpu.matmul %0, %1, %cst {dimension_numbers = #tpu.dot_dimension_numbers<[1], [0], [0], [1], [0, 0, 1, 1], [], []>} : vector<16x100xbf16>, vector<100x1800xbf16>, vector<16x1800xf32> -> vector<16x1800xf32>
    %c0_3 = arith.constant 0 : index
    %c0_4 = arith.constant 0 : index
    %3 = vector.load %arg2[%c0_3, %c0_4] : memref<16x1xf32, #tpu.memory_space<vmem>>, vector<16x1xf32>
    %4 = vector.broadcast %3 : vector<16x1xf32> to vector<16x1800xf32>
    %5 = arith.addf %2, %4 : vector<16x1800xf32>
    %cst_5 = arith.constant 0.000000e+00 : f32
    %6 = vector.broadcast %cst_5 : f32 to vector<16x1800xf32>
    %7 = arith.cmpf oge, %5, %6 : vector<16x1800xf32>
    %cst_6 = arith.constant 1.000000e-01 : f32
    %8 = vector.broadcast %cst_6 : f32 to vector<16x1800xf32>
    %9 = arith.mulf %8, %5 : vector<16x1800xf32>
    %10 = arith.select %7, %5, %9 : vector<16x1800xi1>, vector<16x1800xf32>
    %11 = arith.truncf %10 : vector<16x1800xf32> to vector<16x1800xbf16>
    %c0_7 = arith.constant 0 : index
    %c0_8 = arith.constant 0 : index
    %12 = vector.load %arg3[%c0_7, %c0_8] : memref<16x1800xbf16, #tpu.memory_space<vmem>>, vector<16x1800xbf16>
    tpu.vector_store %arg3[%c0_7, %c0_8], %11 {strides = array<i32>} : memref<16x1800xbf16, #tpu.memory_space<vmem>>, vector<16x1800xbf16>,
    return
  }
}

module attributes {stable_mosaic.version = 11 : i64} {
  func.func @_conv_mm_kernel(%arg0: memref<32x144xbf16, #tpu.memory_space<vmem>>, %arg1: memref<144x392xbf16, #tpu.memory_space<vmem>>, %arg2: memref<32x1xf32, #tpu.memory_space<vmem>>, %arg3: memref<32x392xbf16, #tpu.memory_space<vmem>>) attributes {dimension_semantics = [], scalar_prefetch = 0 : i64, scratch_operands = 0 : i64, tpu.core_type = #tpu.core_type<tc>} {
    %c0 = arith.constant 0 : index
    %c0_0 = arith.constant 0 : index
    %0 = vector.load %arg0[%c0, %c0_0] : memref<32x144xbf16, #tpu.memory_space<vmem>>, vector<32x144xbf16>
    %c0_1 = arith.constant 0 : index
    %c0_2 = arith.constant 0 : index
    %1 = vector.load %arg1[%c0_1, %c0_2] : memref<144x392xbf16, #tpu.memory_space<vmem>>, vector<144x392xbf16>
    %cst = arith.constant dense<0.000000e+00> : vector<32x392xf32>
    %2 = tpu.matmul %0, %1, %cst {dimension_numbers = #tpu.dot_dimension_numbers<[1], [0], [0], [1], [0, 0, 1, 1], [], []>} : vector<32x144xbf16>, vector<144x392xbf16>, vector<32x392xf32> -> vector<32x392xf32>
    %c0_3 = arith.constant 0 : index
    %c0_4 = arith.constant 0 : index
    %3 = vector.load %arg2[%c0_3, %c0_4] : memref<32x1xf32, #tpu.memory_space<vmem>>, vector<32x1xf32>
    %4 = vector.broadcast %3 : vector<32x1xf32> to vector<32x392xf32>
    %5 = arith.addf %2, %4 : vector<32x392xf32>
    %cst_5 = arith.constant 0.000000e+00 : f32
    %6 = vector.broadcast %cst_5 : f32 to vector<32x392xf32>
    %7 = arith.cmpf oge, %5, %6 : vector<32x392xf32>
    %cst_6 = arith.constant 1.000000e-01 : f32
    %8 = vector.broadcast %cst_6 : f32 to vector<32x392xf32>
    %9 = arith.mulf %8, %5 : vector<32x392xf32>
    %10 = arith.select %7, %5, %9 : vector<32x392xi1>, vector<32x392xf32>
    %11 = arith.truncf %10 : vector<32x392xf32> to vector<32x392xbf16>
    %c0_7 = arith.constant 0 : index
    %c0_8 = arith.constant 0 : index
    %12 = vector.load %arg3[%c0_7, %c0_8] : memref<32x392xbf16, #tpu.memory_space<vmem>>, vector<32x392xbf16>
    tpu.vector_store %arg3[%c0_7, %c0_8], %11 {strides = array<i32>} : memref<32x392xbf16, #tpu.memory_space<vmem>>, vector<32x392xbf16>,
    return
  }
}

module attributes {stable_mosaic.version = 11 : i64} {
  func.func @_conv_mm_kernel(%arg0: memref<64x288xbf16, #tpu.memory_space<vmem>>, %arg1: memref<288x288xbf16, #tpu.memory_space<vmem>>, %arg2: memref<64x1xf32, #tpu.memory_space<vmem>>, %arg3: memref<64x288xbf16, #tpu.memory_space<vmem>>) attributes {dimension_semantics = [], scalar_prefetch = 0 : i64, scratch_operands = 0 : i64, tpu.core_type = #tpu.core_type<tc>} {
    %c0 = arith.constant 0 : index
    %c0_0 = arith.constant 0 : index
    %0 = vector.load %arg0[%c0, %c0_0] : memref<64x288xbf16, #tpu.memory_space<vmem>>, vector<64x288xbf16>
    %c0_1 = arith.constant 0 : index
    %c0_2 = arith.constant 0 : index
    %1 = vector.load %arg1[%c0_1, %c0_2] : memref<288x288xbf16, #tpu.memory_space<vmem>>, vector<288x288xbf16>
    %cst = arith.constant dense<0.000000e+00> : vector<64x288xf32>
    %2 = tpu.matmul %0, %1, %cst {dimension_numbers = #tpu.dot_dimension_numbers<[1], [0], [0], [1], [0, 0, 1, 1], [], []>} : vector<64x288xbf16>, vector<288x288xbf16>, vector<64x288xf32> -> vector<64x288xf32>
    %c0_3 = arith.constant 0 : index
    %c0_4 = arith.constant 0 : index
    %3 = vector.load %arg2[%c0_3, %c0_4] : memref<64x1xf32, #tpu.memory_space<vmem>>, vector<64x1xf32>
    %4 = vector.broadcast %3 : vector<64x1xf32> to vector<64x288xf32>
    %5 = arith.addf %2, %4 : vector<64x288xf32>
    %cst_5 = arith.constant 0.000000e+00 : f32
    %6 = vector.broadcast %cst_5 : f32 to vector<64x288xf32>
    %7 = arith.cmpf oge, %5, %6 : vector<64x288xf32>
    %cst_6 = arith.constant 1.000000e-01 : f32
    %8 = vector.broadcast %cst_6 : f32 to vector<64x288xf32>
    %9 = arith.mulf %8, %5 : vector<64x288xf32>
    %10 = arith.select %7, %5, %9 : vector<64x288xi1>, vector<64x288xf32>
    %11 = arith.truncf %10 : vector<64x288xf32> to vector<64x288xbf16>
    %c0_7 = arith.constant 0 : index
    %c0_8 = arith.constant 0 : index
    %12 = vector.load %arg3[%c0_7, %c0_8] : memref<64x288xbf16, #tpu.memory_space<vmem>>, vector<64x288xbf16>
    tpu.vector_store %arg3[%c0_7, %c0_8], %11 {strides = array<i32>} : memref<64x288xbf16, #tpu.memory_space<vmem>>, vector<64x288xbf16>,
    return
  }
}

module attributes {stable_mosaic.version = 11 : i64} {
  func.func @_mlp_head_kernel(%arg0: memref<2x256xbf16, #tpu.memory_space<vmem>>, %arg1: memref<2x2304xbf16, #tpu.memory_space<vmem>>, %arg2: memref<2x8xf32, #tpu.memory_space<vmem>>, %arg3: memref<256x1024xbf16, #tpu.memory_space<vmem>>, %arg4: memref<2304x1024xbf16, #tpu.memory_space<vmem>>, %arg5: memref<1x1024xf32, #tpu.memory_space<vmem>>, %arg6: memref<1024x512xbf16, #tpu.memory_space<vmem>>, %arg7: memref<1x512xf32, #tpu.memory_space<vmem>>, %arg8: memref<512x256xbf16, #tpu.memory_space<vmem>>, %arg9: memref<8x256xf32, #tpu.memory_space<vmem>>, %arg10: memref<1x256xf32, #tpu.memory_space<vmem>>, %arg11: memref<256x128xbf16, #tpu.memory_space<vmem>>, %arg12: memref<1x128xf32, #tpu.memory_space<vmem>>, %arg13: memref<1x128xf32, #tpu.memory_space<vmem>>, %arg14: memref<1x1xf32, #tpu.memory_space<vmem>>, %arg15: memref<2x1xf32, #tpu.memory_space<vmem>>) attributes {dimension_semantics = [], scalar_prefetch = 0 : i64, scratch_operands = 0 : i64, tpu.core_type = #tpu.core_type<tc>} {
    %c0 = arith.constant 0 : index
    %c0_0 = arith.constant 0 : index
    %0 = vector.load %arg0[%c0, %c0_0] : memref<2x256xbf16, #tpu.memory_space<vmem>>, vector<2x256xbf16>
    %c0_1 = arith.constant 0 : index
    %c0_2 = arith.constant 0 : index
    %1 = vector.load %arg3[%c0_1, %c0_2] : memref<256x1024xbf16, #tpu.memory_space<vmem>>, vector<256x1024xbf16>
    %cst = arith.constant dense<0.000000e+00> : vector<2x1024xf32>
    %2 = tpu.matmul %0, %1, %cst {dimension_numbers = #tpu.dot_dimension_numbers<[1], [0], [0], [1], [0, 0, 1, 1], [], []>} : vector<2x256xbf16>, vector<256x1024xbf16>, vector<2x1024xf32> -> vector<2x1024xf32>
    %c0_3 = arith.constant 0 : index
    %c0_4 = arith.constant 0 : index
    %3 = vector.load %arg1[%c0_3, %c0_4] : memref<2x2304xbf16, #tpu.memory_space<vmem>>, vector<2x2304xbf16>
    %c0_5 = arith.constant 0 : index
    %c0_6 = arith.constant 0 : index
    %4 = vector.load %arg4[%c0_5, %c0_6] : memref<2304x1024xbf16, #tpu.memory_space<vmem>>, vector<2304x1024xbf16>
    %cst_7 = arith.constant dense<0.000000e+00> : vector<2x1024xf32>
    %5 = tpu.matmul %3, %4, %cst_7 {dimension_numbers = #tpu.dot_dimension_numbers<[1], [0], [0], [1], [0, 0, 1, 1], [], []>} : vector<2x2304xbf16>, vector<2304x1024xbf16>, vector<2x1024xf32> -> vector<2x1024xf32>
    %6 = arith.addf %2, %5 : vector<2x1024xf32>
    %c0_8 = arith.constant 0 : index
    %c0_9 = arith.constant 0 : index
    %7 = vector.load %arg5[%c0_8, %c0_9] : memref<1x1024xf32, #tpu.memory_space<vmem>>, vector<1x1024xf32>
    %8 = vector.broadcast %7 : vector<1x1024xf32> to vector<2x1024xf32>
    %9 = arith.addf %6, %8 : vector<2x1024xf32>
    %cst_10 = arith.constant 0.000000e+00 : f32
    %10 = vector.broadcast %cst_10 : f32 to vector<2x1024xf32>
    %11 = arith.maximumf %9, %10 : vector<2x1024xf32>
    %12 = arith.truncf %11 : vector<2x1024xf32> to vector<2x1024xbf16>
    %c0_11 = arith.constant 0 : index
    %c0_12 = arith.constant 0 : index
    %13 = vector.load %arg6[%c0_11, %c0_12] : memref<1024x512xbf16, #tpu.memory_space<vmem>>, vector<1024x512xbf16>
    %cst_13 = arith.constant dense<0.000000e+00> : vector<2x512xf32>
    %14 = tpu.matmul %12, %13, %cst_13 {dimension_numbers = #tpu.dot_dimension_numbers<[1], [0], [0], [1], [0, 0, 1, 1], [], []>} : vector<2x1024xbf16>, vector<1024x512xbf16>, vector<2x512xf32> -> vector<2x512xf32>
    %c0_14 = arith.constant 0 : index
    %c0_15 = arith.constant 0 : index
    %15 = vector.load %arg7[%c0_14, %c0_15] : memref<1x512xf32, #tpu.memory_space<vmem>>, vector<1x512xf32>
    %16 = vector.broadcast %15 : vector<1x512xf32> to vector<2x512xf32>
    %17 = arith.addf %14, %16 : vector<2x512xf32>
    %cst_16 = arith.constant 0.000000e+00 : f32
    %18 = vector.broadcast %cst_16 : f32 to vector<2x512xf32>
    %19 = arith.maximumf %17, %18 : vector<2x512xf32>
    %20 = arith.truncf %19 : vector<2x512xf32> to vector<2x512xbf16>
    %c0_17 = arith.constant 0 : index
    %c0_18 = arith.constant 0 : index
    %21 = vector.load %arg8[%c0_17, %c0_18] : memref<512x256xbf16, #tpu.memory_space<vmem>>, vector<512x256xbf16>
    %cst_19 = arith.constant dense<0.000000e+00> : vector<2x256xf32>
    %22 = tpu.matmul %20, %21, %cst_19 {dimension_numbers = #tpu.dot_dimension_numbers<[1], [0], [0], [1], [0, 0, 1, 1], [], []>} : vector<2x512xbf16>, vector<512x256xbf16>, vector<2x256xf32> -> vector<2x256xf32>
    %c0_20 = arith.constant 0 : index
    %c0_21 = arith.constant 0 : index
    %23 = vector.load %arg2[%c0_20, %c0_21] : memref<2x8xf32, #tpu.memory_space<vmem>>, vector<2x8xf32>
    %c0_22 = arith.constant 0 : index
    %c0_23 = arith.constant 0 : index
    %24 = vector.load %arg9[%c0_22, %c0_23] : memref<8x256xf32, #tpu.memory_space<vmem>>, vector<8x256xf32>
    %cst_24 = arith.constant dense<0.000000e+00> : vector<2x256xf32>
    %25 = tpu.matmul %23, %24, %cst_24 {dimension_numbers = #tpu.dot_dimension_numbers<[1], [0], [0], [1], [0, 0, 1, 1], [], []>} : vector<2x8xf32>, vector<8x256xf32>, vector<2x256xf32> -> vector<2x256xf32>
    %26 = arith.addf %22, %25 : vector<2x256xf32>
    %c0_25 = arith.constant 0 : index
    %c0_26 = arith.constant 0 : index
    %27 = vector.load %arg10[%c0_25, %c0_26] : memref<1x256xf32, #tpu.memory_space<vmem>>, vector<1x256xf32>
    %28 = vector.broadcast %27 : vector<1x256xf32> to vector<2x256xf32>
    %29 = arith.addf %26, %28 : vector<2x256xf32>
    %cst_27 = arith.constant 0.000000e+00 : f32
    %30 = vector.broadcast %cst_27 : f32 to vector<2x256xf32>
    %31 = arith.maximumf %29, %30 : vector<2x256xf32>
    %32 = arith.truncf %31 : vector<2x256xf32> to vector<2x256xbf16>
    %c0_28 = arith.constant 0 : index
    %c0_29 = arith.constant 0 : index
    %33 = vector.load %arg11[%c0_28, %c0_29] : memref<256x128xbf16, #tpu.memory_space<vmem>>, vector<256x128xbf16>
    %cst_30 = arith.constant dense<0.000000e+00> : vector<2x128xf32>
    %34 = tpu.matmul %32, %33, %cst_30 {dimension_numbers = #tpu.dot_dimension_numbers<[1], [0], [0], [1], [0, 0, 1, 1], [], []>} : vector<2x256xbf16>, vector<256x128xbf16>, vector<2x128xf32> -> vector<2x128xf32>
    %c0_31 = arith.constant 0 : index
    %c0_32 = arith.constant 0 : index
    %35 = vector.load %arg12[%c0_31, %c0_32] : memref<1x128xf32, #tpu.memory_space<vmem>>, vector<1x128xf32>
    %36 = vector.broadcast %35 : vector<1x128xf32> to vector<2x128xf32>
    %37 = arith.addf %34, %36 : vector<2x128xf32>
    %cst_33 = arith.constant 0.000000e+00 : f32
    %38 = vector.broadcast %cst_33 : f32 to vector<2x128xf32>
    %39 = arith.maximumf %37, %38 : vector<2x128xf32>
    %c0_34 = arith.constant 0 : index
    %c0_35 = arith.constant 0 : index
    %40 = vector.load %arg13[%c0_34, %c0_35] : memref<1x128xf32, #tpu.memory_space<vmem>>, vector<1x128xf32>
    %41 = vector.broadcast %40 : vector<1x128xf32> to vector<2x128xf32>
    %42 = arith.mulf %39, %41 : vector<2x128xf32>
    %cst_36 = arith.constant dense<0.000000e+00> : vector<2xf32>
    %43 = vector.multi_reduction <add>, %42, %cst_36 [1] : vector<2x128xf32> to vector<2xf32>
    %44 = vector.shape_cast %43 : vector<2xf32> to vector<2x1xf32>
    %c0_37 = arith.constant 0 : index
    %c0_38 = arith.constant 0 : index
    %45 = vector.load %arg14[%c0_37, %c0_38] : memref<1x1xf32, #tpu.memory_space<vmem>>, vector<1x1xf32>
    %46 = vector.broadcast %45 : vector<1x1xf32> to vector<2x1xf32>
    %47 = arith.addf %44, %46 : vector<2x1xf32>
    %c0_39 = arith.constant 0 : index
    %c0_40 = arith.constant 0 : index
    %48 = vector.load %arg15[%c0_39, %c0_40] : memref<2x1xf32, #tpu.memory_space<vmem>>, vector<2x1xf32>
    tpu.vector_store %arg15[%c0_39, %c0_40], %47 {strides = array<i32>} : memref<2x1xf32, #tpu.memory_space<vmem>>, vector<2x1xf32>,
    return
  }
}

</mosaic_0001>

<llo_original>
// kernel: critic_forward.4
$region0: #{critic_forward.4}
  #allocation0 [shape = 'u32[]', space=smem, size = 0x4, offset = 0x4, fixed_abs, tag = 'smem constant byte address 0x4 - core index']
  #allocation1 [shape = 'u32[144,128]{1,0:T(1,128)}', space=vmem, size = 0x12000, scoped, tag = 'internal scratch']
  %s0 = inlined_call_operand.vmem [shape: bf16[16,100], index: 0, kind: input, shape index: {}]
  %s1 = inlined_call_operand.vmem [shape: bf16[100,1800], index: 1, kind: input, shape index: {}]
  %s2 = inlined_call_operand.vmem [shape: f32[16,1], index: 2, kind: input, shape index: {}]
  %s3 = inlined_call_operand.vmem [shape: bf16[16,1800], index: 3, kind: output, shape index: {}]
  %s4 = sld [smem:[#allocation0]]
  $region22: #{critic_forward.4} parent=0
    _
  %s6 = ssub.s32 1, %s4
  %s7 = scalar_select 0, %s6, %s4
  // Predicated region
  $region2: #{critic_forward.4} parent=0 // pred_check
    _
  $region3: #{critic_forward.4} parent=0 // pred_check_branch
    %9 = sbr.rel (0) target = $region5
  $region4: #{critic_forward.4} parent=0 // pred_region
    _
  $region5: #{critic_forward.4} parent=0 // pred_fallthru
    _
  // Predicated region
  $region6: #{critic_forward.4} parent=0 // pred_check
    _
  $region7: #{critic_forward.4} parent=0 // pred_check_branch
    %11 = sbr.rel (0) target = $region9
  $region8: #{critic_forward.4} parent=0 // pred_region
    _
  $region9: #{critic_forward.4} parent=0 // pred_fallthru
    _
  // Predicated region
  $region10: #{critic_forward.4} parent=0 // pred_check
    _
  $region11: #{critic_forward.4} parent=0 // pred_check_branch
    %13 = sbr.rel (0) target = $region13
  $region12: #{critic_forward.4} parent=0 // pred_region
    _
  $region13: #{critic_forward.4} parent=0 // pred_fallthru
    _
  %v15 = vld [vmem:[%s0] sm:$0xf]
  %v16 = vld [vmem:[%s0 + $0x4] sm:$0xf]
  %v17 = vld [vmem:[%s1] sm:$0xff]
  %v18 = vld [vmem:[%s1 + $0x8] sm:$0xff]
  %v19 = vld [vmem:[%s1 + $0x10] sm:$0xff]
  %v20 = vld [vmem:[%s1 + $0x18] sm:$0xff]
  %v21 = vld [vmem:[%s1 + $0x20] sm:$0xff]
  %v22 = vld [vmem:[%s1 + $0x28] sm:$0xff]
  %v23 = vld [vmem:[%s1 + $0x30] sm:$0xff]
  %v24 = vld [vmem:[%s1 + $0x38] sm:$0xf]
  %v25 = vld [vmem:[%s1 + $0x3c] sm:$0xff]
  %v26 = vld [vmem:[%s1 + $0x44] sm:$0xff]
  %v27 = vld [vmem:[%s1 + $0x4c] sm:$0xff]
  %v28 = vld [vmem:[%s1 + $0x54] sm:$0xff]
  %v29 = vld [vmem:[%s1 + $0x5c] sm:$0xff]
  %v30 = vld [vmem:[%s1 + $0x64] sm:$0xff]
  %v31 = vld [vmem:[%s1 + $0x6c] sm:$0xff]
  %v32 = vld [vmem:[%s1 + $0x74] sm:$0xf]
  %v33 = vld [vmem:[%s1 + $0x78] sm:$0xff]
  %v34 = vld [vmem:[%s1 + $0x80] sm:$0xff]
  %v35 = vld [vmem:[%s1 + $0x88] sm:$0xff]
  %v36 = vld [vmem:[%s1 + $0x90] sm:$0xff]
  %v37 = vld [vmem:[%s1 + $0x98] sm:$0xff]
  %v38 = vld [vmem:[%s1 + $0xa0] sm:$0xff]
  %v39 = vld [vmem:[%s1 + $0xa8] sm:$0xff]
  %v40 = vld [vmem:[%s1 + $0xb0] sm:$0xf]
  %v41 = vld [vmem:[%s1 + $0xb4] sm:$0xff]
  %v42 = vld [vmem:[%s1 + $0xbc] sm:$0xff]
  %v43 = vld [vmem:[%s1 + $0xc4] sm:$0xff]
  %v44 = vld [vmem:[%s1 + $0xcc] sm:$0xff]
  %v45 = vld [vmem:[%s1 + $0xd4] sm:$0xff]
  %v46 = vld [vmem:[%s1 + $0xdc] sm:$0xff]
  %v47 = vld [vmem:[%s1 + $0xe4] sm:$0xff]
  %v48 = vld [vmem:[%s1 + $0xec] sm:$0xf]
  %v49 = vld [vmem:[%s1 + $0xf0] sm:$0xff]
  %v50 = vld [vmem:[%s1 + $0xf8] sm:$0xff]
  %v51 = vld [vmem:[%s1 + $0x100] sm:$0xff]
  %v52 = vld [vmem:[%s1 + $0x108] sm:$0xff]
  %v53 = vld [vmem:[%s1 + $0x110] sm:$0xff]
  %v54 = vld [vmem:[%s1 + $0x118] sm:$0xff]
  %v55 = vld [vmem:[%s1 + $0x120] sm:$0xff]
  %v56 = vld [vmem:[%s1 + $0x128] sm:$0xf]
  %v57 = vld [vmem:[%s1 + $0x12c] sm:$0xff]
  %v58 = vld [vmem:[%s1 + $0x134] sm:$0xff]
  %v59 = vld [vmem:[%s1 + $0x13c] sm:$0xff]
  %v60 = vld [vmem:[%s1 + $0x144] sm:$0xff]
  %v61 = vld [vmem:[%s1 + $0x14c] sm:$0xff]
  %v62 = vld [vmem:[%s1 + $0x154] sm:$0xff]
  %v63 = vld [vmem:[%s1 + $0x15c] sm:$0xff]
  %v64 = vld [vmem:[%s1 + $0x164] sm:$0xf]
  %v65 = vld [vmem:[%s1 + $0x168] sm:$0xff]
  %v66 = vld [vmem:[%s1 + $0x170] sm:$0xff]
  %v67 = vld [vmem:[%s1 + $0x178] sm:$0xff]
  %v68 = vld [vmem:[%s1 + $0x180] sm:$0xff]
  %v69 = vld [vmem:[%s1 + $0x188] sm:$0xff]
  %v70 = vld [vmem:[%s1 + $0x190] sm:$0xff]
  %v71 = vld [vmem:[%s1 + $0x198] sm:$0xff]
  %v72 = vld [vmem:[%s1 + $0x1a0] sm:$0xf]
  %v73 = vld [vmem:[%s1 + $0x1a4] sm:$0xff]
  %v74 = vld [vmem:[%s1 + $0x1ac] sm:$0xff]
  %v75 = vld [vmem:[%s1 + $0x1b4] sm:$0xff]
  %v76 = vld [vmem:[%s1 + $0x1bc] sm:$0xff]
  %v77 = vld [vmem:[%s1 + $0x1c4] sm:$0xff]
  %v78 = vld [vmem:[%s1 + $0x1cc] sm:$0xff]
  %v79 = vld [vmem:[%s1 + $0x1d4] sm:$0xff]
  %v80 = vld [vmem:[%s1 + $0x1dc] sm:$0xf]
  %v81 = vld [vmem:[%s1 + $0x1e0] sm:$0xff]
  %v82 = vld [vmem:[%s1 + $0x1e8] sm:$0xff]
  %v83 = vld [vmem:[%s1 + $0x1f0] sm:$0xff]
  %v84 = vld [vmem:[%s1 + $0x1f8] sm:$0xff]
  %v85 = vld [vmem:[%s1 + $0x200] sm:$0xff]
  %v86 = vld [vmem:[%s1 + $0x208] sm:$0xff]
  %v87 = vld [vmem:[%s1 + $0x210] sm:$0xff]
  %v88 = vld [vmem:[%s1 + $0x218] sm:$0xf]
  %v89 = vld [vmem:[%s1 + $0x21c] sm:$0xff]
  %v90 = vld [vmem:[%s1 + $0x224] sm:$0xff]
  %v91 = vld [vmem:[%s1 + $0x22c] sm:$0xff]
  %v92 = vld [vmem:[%s1 + $0x234] sm:$0xff]
  %v93 = vld [vmem:[%s1 + $0x23c] sm:$0xff]
  %v94 = vld [vmem:[%s1 + $0x244] sm:$0xff]
  %v95 = vld [vmem:[%s1 + $0x24c] sm:$0xff]
  %v96 = vld [vmem:[%s1 + $0x254] sm:$0xf]
  %v97 = vld [vmem:[%s1 + $0x258] sm:$0xff]
  %v98 = vld [vmem:[%s1 + $0x260] sm:$0xff]
  %v99 = vld [vmem:[%s1 + $0x268] sm:$0xff]
  %v100 = vld [vmem:[%s1 + $0x270] sm:$0xff]
  %v101 = vld [vmem:[%s1 + $0x278] sm:$0xff]
  %v102 = vld [vmem:[%s1 + $0x280] sm:$0xff]
  %v103 = vld [vmem:[%s1 + $0x288] sm:$0xff]
  %v104 = vld [vmem:[%s1 + $0x290] sm:$0xf]
  %v105 = vld [vmem:[%s1 + $0x294] sm:$0xff]
  %v106 = vld [vmem:[%s1 + $0x29c] sm:$0xff]
  %v107 = vld [vmem:[%s1 + $0x2a4] sm:$0xff]
  %v108 = vld [vmem:[%s1 + $0x2ac] sm:$0xff]
  %v109 = vld [vmem:[%s1 + $0x2b4] sm:$0xff]
  %v110 = vld [vmem:[%s1 + $0x2bc] sm:$0xff]
  %v111 = vld [vmem:[%s1 + $0x2c4] sm:$0xff]
  %v112 = vld [vmem:[%s1 + $0x2cc] sm:$0xf]
  %v113 = vld [vmem:[%s1 + $0x2d0] sm:$0x33]
  %v114 = vld [vmem:[%s1 + $0x2d8] sm:$0x33]
  %v115 = vld [vmem:[%s1 + $0x2e0] sm:$0x33]
  %v116 = vld [vmem:[%s1 + $0x2e8] sm:$0x33]
  %v117 = vld [vmem:[%s1 + $0x2f0] sm:$0x33]
  %v118 = vld [vmem:[%s1 + $0x2f8] sm:$0x33]
  %v119 = vld [vmem:[%s1 + $0x300] sm:$0x33]
  %v120 = vld [vmem:[%s1 + $0x308] sm:$0x3]
  %v121 = vld [vmem:[%s2] sm:$0xff]
  %v122 = vld [vmem:[%s2 + $0x8] sm:$0xff]
  %124 = vset.pattern.permute.xlu0 0
  %125 = vperm.xlu0 %124, %v121
  %v126 = vpop.permute.xlu0 %125
  %129 = vset.pattern.permute.xlu0 0
  %130 = vperm.xlu0 %129, %v122
  %v131 = vpop.permute.xlu0 %130
  %v135 = vunpack.c.l.b16 %v15
  %v136 = vunpack.c.l.b16 %v16
  %v137 = vpack.c.b16 %v136, %v135
  %v242 = vunpack.c.l.b16 %v17
  %v243 = vunpack.c.h.b16 %v17
  %v244 = vunpack.c.l.b16 %v18
  %v245 = vunpack.c.h.b16 %v18
  %v246 = vunpack.c.l.b16 %v19
  %v247 = vunpack.c.h.b16 %v19
  %v248 = vunpack.c.l.b16 %v20
  %v249 = vunpack.c.h.b16 %v20
  %v250 = vunpack.c.l.b16 %v21
  %v251 = vunpack.c.h.b16 %v21
  %v252 = vunpack.c.l.b16 %v22
  %v253 = vunpack.c.h.b16 %v22
  %v254 = vunpack.c.l.b16 %v23
  %v255 = vunpack.c.h.b16 %v23
  %v256 = vunpack.c.l.b16 %v24
  %v257 = vunpack.c.l.b16 %v25
  %v258 = vunpack.c.h.b16 %v25
  %v259 = vunpack.c.l.b16 %v26
  %v260 = vunpack.c.h.b16 %v26
  %v261 = vunpack.c.l.b16 %v27
  %v262 = vunpack.c.h.b16 %v27
  %v263 = vunpack.c.l.b16 %v28
  %v264 = vunpack.c.h.b16 %v28
  %v265 = vunpack.c.l.b16 %v29
  %v266 = vunpack.c.h.b16 %v29
  %v267 = vunpack.c.l.b16 %v30
  %v268 = vunpack.c.h.b16 %v30
  %v269 = vunpack.c.l.b16 %v31
  %v270 = vunpack.c.h.b16 %v31
  %v271 = vunpack.c.l.b16 %v32
  %v272 = vunpack.c.l.b16 %v33
  %v273 = vunpack.c.h.b16 %v33
  %v274 = vunpack.c.l.b16 %v34
  %v275 = vunpack.c.h.b16 %v34
  %v276 = vunpack.c.l.b16 %v35
  %v277 = vunpack.c.h.b16 %v35
  %v278 = vunpack.c.l.b16 %v36
  %v279 = vunpack.c.h.b16 %v36
  %v280 = vunpack.c.l.b16 %v37
  %v281 = vunpack.c.h.b16 %v37
  %v282 = vunpack.c.l.b16 %v38
  %v283 = vunpack.c.h.b16 %v38
  %v284 = vunpack.c.l.b16 %v39
  %v285 = vunpack.c.h.b16 %v39
  %v286 = vunpack.c.l.b16 %v40
  %v287 = vunpack.c.l.b16 %v41
  %v288 = vunpack.c.h.b16 %v41
  %v289 = vunpack.c.l.b16 %v42
  %v290 = vunpack.c.h.b16 %v42
  %v291 = vunpack.c.l.b16 %v43
  %v292 = vunpack.c.h.b16 %v43
  %v293 = vunpack.c.l.b16 %v44
  %v294 = vunpack.c.h.b16 %v44
  %v295 = vunpack.c.l.b16 %v45
  %v296 = vunpack.c.h.b16 %v45
  %v297 = vunpack.c.l.b16 %v46
  %v298 = vunpack.c.h.b16 %v46
  %v299 = vunpack.c.l.b16 %v47
  %v300 = vunpack.c.h.b16 %v47
  %v301 = vunpack.c.l.b16 %v48
  %v302 = vunpack.c.l.b16 %v49
  %v303 = vunpack.c.h.b16 %v49
  %v304 = vunpack.c.l.b16 %v50
  %v305 = vunpack.c.h.b16 %v50
  %v306 = vunpack.c.l.b16 %v51
  %v307 = vunpack.c.h.b16 %v51
  %v308 = vunpack.c.l.b16 %v52
  %v309 = vunpack.c.h.b16 %v52
  %v310 = vunpack.c.l.b16 %v53
  %v311 = vunpack.c.h.b16 %v53
  %v312 = vunpack.c.l.b16 %v54
  %v313 = vunpack.c.h.b16 %v54
  %v314 = vunpack.c.l.b16 %v55
  %v315 = vunpack.c.h.b16 %v55
  %v316 = vunpack.c.l.b16 %v56
  %v317 = vunpack.c.l.b16 %v57
  %v318 = vunpack.c.h.b16 %v57
  %v319 = vunpack.c.l.b16 %v58
  %v320 = vunpack.c.h.b16 %v58
  %v321 = vunpack.c.l.b16 %v59
  %v322 = vunpack.c.h.b16 %v59
  %v323 = vunpack.c.l.b16 %v60
  %v324 = vunpack.c.h.b16 %v60
  %v325 = vunpack.c.l.b16 %v61
  %v326 = vunpack.c.h.b16 %v61
  %v327 = vunpack.c.l.b16 %v62
  %v328 = vunpack.c.h.b16 %v62
  %v329 = vunpack.c.l.b16 %v63
  %v330 = vunpack.c.h.b16 %v63
  %v331 = vunpack.c.l.b16 %v64
  %v332 = vunpack.c.l.b16 %v65
  %v333 = vunpack.c.h.b16 %v65
  %v334 = vunpack.c.l.b16 %v66
  %v335 = vunpack.c.h.b16 %v66
  %v336 = vunpack.c.l.b16 %v67
  %v337 = vunpack.c.h.b16 %v67
  %v338 = vunpack.c.l.b16 %v68
  %v339 = vunpack.c.h.b16 %v68
  %v340 = vunpack.c.l.b16 %v69
  %v341 = vunpack.c.h.b16 %v69
  %v342 = vunpack.c.l.b16 %v70
  %v343 = vunpack.c.h.b16 %v70
  %v344 = vunpack.c.l.b16 %v71
  %v345 = vunpack.c.h.b16 %v71
  %v346 = vunpack.c.l.b16 %v72
  %v347 = vunpack.c.l.b16 %v73
  %v348 = vunpack.c.h.b16 %v73
  %v349 = vunpack.c.l.b16 %v74
  %v350 = vunpack.c.h.b16 %v74
  %v351 = vunpack.c.l.b16 %v75
  %v352 = vunpack.c.h.b16 %v75
  %v353 = vunpack.c.l.b16 %v76
  %v354 = vunpack.c.h.b16 %v76
  %v355 = vunpack.c.l.b16 %v77
  %v356 = vunpack.c.h.b16 %v77
  %v357 = vunpack.c.l.b16 %v78
  %v358 = vunpack.c.h.b16 %v78
  %v359 = vunpack.c.l.b16 %v79
  %v360 = vunpack.c.h.b16 %v79
  %v361 = vunpack.c.l.b16 %v80
  %v362 = vunpack.c.l.b16 %v81
  %v363 = vunpack.c.h.b16 %v81
  %v364 = vunpack.c.l.b16 %v82
  %v365 = vunpack.c.h.b16 %v82
  %v366 = vunpack.c.l.b16 %v83
  %v367 = vunpack.c.h.b16 %v83
  %v368 = vunpack.c.l.b16 %v84
  %v369 = vunpack.c.h.b16 %v84
  %v370 = vunpack.c.l.b16 %v85
  %v371 = vunpack.c.h.b16 %v85
  %v372 = vunpack.c.l.b16 %v86
  %v373 = vunpack.c.h.b16 %v86
  %v374 = vunpack.c.l.b16 %v87
  %v375 = vunpack.c.h.b16 %v87
  %v376 = vunpack.c.l.b16 %v88
  %v377 = vunpack.c.l.b16 %v89
  %v378 = vunpack.c.h.b16 %v89
  %v379 = vunpack.c.l.b16 %v90
  %v380 = vunpack.c.h.b16 %v90
  %v381 = vunpack.c.l.b16 %v91
  %v382 = vunpack.c.h.b16 %v91
  %v383 = vunpack.c.l.b16 %v92
  %v384 = vunpack.c.h.b16 %v92
  %v385 = vunpack.c.l.b16 %v93
  %v386 = vunpack.c.h.b16 %v93
  %v387 = vunpack.c.l.b16 %v94
  %v388 = vunpack.c.h.b16 %v94
  %v389 = vunpack.c.l.b16 %v95
  %v390 = vunpack.c.h.b16 %v95
  %v391 = vunpack.c.l.b16 %v96
  %v392 = vunpack.c.l.b16 %v97
  %v393 = vunpack.c.h.b16 %v97
  %v394 = vunpack.c.l.b16 %v98
  %v395 = vunpack.c.h.b16 %v98
  %v396 = vunpack.c.l.b16 %v99
  %v397 = vunpack.c.h.b16 %v99
  %v398 = vunpack.c.l.b16 %v100
  %v399 = vunpack.c.h.b16 %v100
  %v400 = vunpack.c.l.b16 %v101
  %v401 = vunpack.c.h.b16 %v101
  %v402 = vunpack.c.l.b16 %v102
  %v403 = vunpack.c.h.b16 %v102
  %v404 = vunpack.c.l.b16 %v103
  %v405 = vunpack.c.h.b16 %v103
  %v406 = vunpack.c.l.b16 %v104
  %v407 = vunpack.c.l.b16 %v105
  %v408 = vunpack.c.h.b16 %v105
  %v409 = vunpack.c.l.b16 %v106
  %v410 = vunpack.c.h.b16 %v106
  %v411 = vunpack.c.l.b16 %v107
  %v412 = vunpack.c.h.b16 %v107
  %v413 = vunpack.c.l.b16 %v108
  %v414 = vunpack.c.h.b16 %v108
  %v415 = vunpack.c.l.b16 %v109
  %v416 = vunpack.c.h.b16 %v109
  %v417 = vunpack.c.l.b16 %v110
  %v418 = vunpack.c.h.b16 %v110
  %v419 = vunpack.c.l.b16 %v111
  %v420 = vunpack.c.h.b16 %v111
  %v421 = vunpack.c.l.b16 %v112
  %v422 = vunpack.c.l.b16 %v113
  %v423 = vunpack.c.h.b16 %v113
  %v424 = vunpack.c.l.b16 %v114
  %v425 = vunpack.c.h.b16 %v114
  %v426 = vunpack.c.l.b16 %v115
  %v427 = vunpack.c.h.b16 %v115
  %v428 = vunpack.c.l.b16 %v116
  %v429 = vunpack.c.h.b16 %v116
  %v430 = vunpack.c.l.b16 %v117
  %v431 = vunpack.c.h.b16 %v117
  %v432 = vunpack.c.l.b16 %v118
  %v433 = vunpack.c.h.b16 %v118
  %v434 = vunpack.c.l.b16 %v119
  %v435 = vunpack.c.h.b16 %v119
  %v436 = vunpack.c.l.b16 %v120
  %v437 = vpack.c.b16 %v257, %v242
  %v438 = vpack.c.b16 %v258, %v243
  %v439 = vpack.c.b16 %v259, %v244
  %v440 = vpack.c.b16 %v260, %v245
  %v441 = vpack.c.b16 %v261, %v246
  %v442 = vpack.c.b16 %v262, %v247
  %v443 = vpack.c.b16 %v263, %v248
  %v444 = vpack.c.b16 %v264, %v249
  %v445 = vpack.c.b16 %v265, %v250
  %v446 = vpack.c.b16 %v266, %v251
  %v447 = vpack.c.b16 %v267, %v252
  %v448 = vpack.c.b16 %v268, %v253
  %v449 = vpack.c.b16 %v269, %v254
  %v450 = vpack.c.b16 %v270, %v255
  %v451 = vpack.c.b16 %v271, %v256
  %v452 = vpack.c.b16 %v287, %v272
  %v453 = vpack.c.b16 %v288, %v273
  %v454 = vpack.c.b16 %v289, %v274
  %v455 = vpack.c.b16 %v290, %v275
  %v456 = vpack.c.b16 %v291, %v276
  %v457 = vpack.c.b16 %v292, %v277
  %v458 = vpack.c.b16 %v293, %v278
  %v459 = vpack.c.b16 %v294, %v279
  %v460 = vpack.c.b16 %v295, %v280
  %v461 = vpack.c.b16 %v296, %v281
  %v462 = vpack.c.b16 %v297, %v282
  %v463 = vpack.c.b16 %v298, %v283
  %v464 = vpack.c.b16 %v299, %v284
  %v465 = vpack.c.b16 %v300, %v285
  %v466 = vpack.c.b16 %v301, %v286
  %v467 = vpack.c.b16 %v317, %v302
  %v468 = vpack.c.b16 %v318, %v303
  %v469 = vpack.c.b16 %v319, %v304
  %v470 = vpack.c.b16 %v320, %v305
  %v471 = vpack.c.b16 %v321, %v306
  %v472 = vpack.c.b16 %v322, %v307
  %v473 = vpack.c.b16 %v323, %v308
  %v474 = vpack.c.b16 %v324, %v309
  %v475 = vpack.c.b16 %v325, %v310
  %v476 = vpack.c.b16 %v326, %v311
  %v477 = vpack.c.b16 %v327, %v312
  %v478 = vpack.c.b16 %v328, %v313
  %v479 = vpack.c.b16 %v329, %v314
  %v480 = vpack.c.b16 %v330, %v315
  %v481 = vpack.c.b16 %v331, %v316
  %v482 = vpack.c.b16 %v347, %v332
  %v483 = vpack.c.b16 %v348, %v333
  %v484 = vpack.c.b16 %v349, %v334
  %v485 = vpack.c.b16 %v350, %v335
  %v486 = vpack.c.b16 %v351, %v336
  %v487 = vpack.c.b16 %v352, %v337
  %v488 = vpack.c.b16 %v353, %v338
  %v489 = vpack.c.b16 %v354, %v339
  %v490 = vpack.c.b16 %v355, %v340
  %v491 = vpack.c.b16 %v356, %v341
  %v492 = vpack.c.b16 %v357, %v342
  %v493 = vpack.c.b16 %v358, %v343
  %v494 = vpack.c.b16 %v359, %v344
  %v495 = vpack.c.b16 %v360, %v345
  %v496 = vpack.c.b16 %v361, %v346
  %v497 = vpack.c.b16 %v377, %v362
  %v498 = vpack.c.b16 %v378, %v363
  %v499 = vpack.c.b16 %v379, %v364
  %v500 = vpack.c.b16 %v380, %v365
  %v501 = vpack.c.b16 %v381, %v366
  %v502 = vpack.c.b16 %v382, %v367
  %v503 = vpack.c.b16 %v383, %v368
  %v504 = vpack.c.b16 %v384, %v369
  %v505 = vpack.c.b16 %v385, %v370
  %v506 = vpack.c.b16 %v386, %v371
  %v507 = vpack.c.b16 %v387, %v372
  %v508 = vpack.c.b16 %v388, %v373
  %v509 = vpack.c.b16 %v389, %v374
  %v510 = vpack.c.b16 %v390, %v375
  %v511 = vpack.c.b16 %v391, %v376
  %v512 = vpack.c.b16 %v407, %v392
  %v513 = vpack.c.b16 %v408, %v393
  %v514 = vpack.c.b16 %v409, %v394
  %v515 = vpack.c.b16 %v410, %v395
  %v516 = vpack.c.b16 %v411, %v396
  %v517 = vpack.c.b16 %v412, %v397
  %v518 = vpack.c.b16 %v413, %v398
  %v519 = vpack.c.b16 %v414, %v399
  %v520 = vpack.c.b16 %v415, %v400
  %v521 = vpack.c.b16 %v416, %v401
  %v522 = vpack.c.b16 %v417, %v402
  %v523 = vpack.c.b16 %v418, %v403
  %v524 = vpack.c.b16 %v419, %v404
  %v525 = vpack.c.b16 %v420, %v405
  %v526 = vpack.c.b16 %v421, %v406
  %v527 = vpack.c.b16 %v422, %v422
  %v528 = vpack.c.b16 %v423, %v423
  %v529 = vpack.c.b16 %v424, %v424
  %v530 = vpack.c.b16 %v425, %v425
  %v531 = vpack.c.b16 %v426, %v426
  %v532 = vpack.c.b16 %v427, %v427
  %v533 = vpack.c.b16 %v428, %v428
  %v534 = vpack.c.b16 %v429, %v429
  %v535 = vpack.c.b16 %v430, %v430
  %v536 = vpack.c.b16 %v431, %v431
  %v537 = vpack.c.b16 %v432, %v432
  %v538 = vpack.c.b16 %v433, %v433
  %v539 = vpack.c.b16 %v434, %v434
  %v540 = vpack.c.b16 %v435, %v435
  %v541 = vpack.c.b16 %v436, %v436
  %vm632 = vcmask 818176
  %v634 = vsel %vm632, %v137, 0
  %vm636 = vcmask 1041408
  %v638 = vsel %vm636, %v527, 0
  %v641 = vsel %vm636, %v528, 0
  %v644 = vsel %vm636, %v529, 0
  %v647 = vsel %vm636, %v530, 0
  %v650 = vsel %vm636, %v531, 0
  %v653 = vsel %vm636, %v532, 0
  %v656 = vsel %vm636, %v533, 0
  %v659 = vsel %vm636, %v534, 0
  %v662 = vsel %vm636, %v535, 0
  %v665 = vsel %vm636, %v536, 0
  %v668 = vsel %vm636, %v537, 0
  %v671 = vsel %vm636, %v538, 0
  %v674 = vsel %vm636, %v539, 0
  %v677 = vsel %vm636, %v540, 0
  %v680 = vsel %vm636, %v541, 0
  %682 = vmatprep.subr.bf16.mxu0 %v438
  %683 = vmatpush1.bf16.msra.mxu0 %v437
  %684 = vmatprep.subr.bf16.mxu0 %v453
  %685 = vmatpush1.bf16.msra.mxu0 %v452
  %686 = vmatprep.subr.bf16.mxu0 %v468
  %687 = vmatpush1.bf16.msra.mxu0 %v467
  %688 = vmatprep.subr.bf16.mxu0 %v483
  %689 = vmatpush1.bf16.msra.mxu0 %v482
  %690 = vmatprep.subr.bf16.mxu0 %v498
  %691 = vmatpush1.bf16.msra.mxu0 %v497
  %692 = vmatprep.subr.bf16.mxu0 %v513
  %693 = vmatpush1.bf16.msra.mxu0 %v512
  %694 = vmatprep.subr.bf16.mxu0 %v641
  %695 = vmatpush1.bf16.msra.mxu0 %v638
  %696 = vmatprep.subr.bf16.mxu0 0
  %697 = vmatpush1.bf16.msra.mxu0 0
  %698 = vmatprep.subr.bf16.mxu0 0
  %699 = vmatpush1.bf16.msra.mxu0 0
  %700 = vmatprep.subr.bf16.mxu0 0
  %701 = vmatpush1.bf16.msra.mxu0 0
  %702 = vmatprep.subr.bf16.mxu0 0
  %703 = vmatpush1.bf16.msra.mxu0 0
  %704 = vmatprep.subr.bf16.mxu0 0
  %705 = vmatpush1.bf16.msra.mxu0 0
  %706 = vmatprep.subr.bf16.mxu0 0
  %707 = vmatpush1.bf16.msra.mxu0 0
  %708 = vmatprep.subr.bf16.mxu0 0
  %709 = vmatpush1.bf16.msra.mxu0 0
  %710 = vmatprep.subr.bf16.mxu0 0
  %711 = vmatpush1.bf16.msra.mxu0 0
  %712 = vmatprep.subr.bf16.mxu0 0
  %713 = vmatpush1.bf16.msra.mxu0 0
  %714 = vmatprep.mubr.bf16.mxu0 0
  %715 = vmatmul.mubr.bf16.gmra.mrb[0].mxu0 %v634
  %v716 = vpop.f32.mrb[0].mxu0
  %v717 = vadd.f32 %v126, %v716
  %v718 = vpop.f32.mrb[0].mxu0
  %v719 = vadd.f32 %v126, %v718
  %v720 = vpop.f32.mrb[0].mxu0
  %v721 = vadd.f32 %v131, %v720
  %v722 = vpop.f32.mrb[0].mxu0
  %v723 = vadd.f32 %v131, %v722
  %724 = vdwg.mxu0
  %725 = vmatprep.subr.bf16.mxu0 %v440
  %726 = vmatpush1.bf16.msra.mxu0 %v439
  %727 = vmatprep.subr.bf16.mxu0 %v455
  %728 = vmatpush1.bf16.msra.mxu0 %v454
  %729 = vmatprep.subr.bf16.mxu0 %v470
  %730 = vmatpush1.bf16.msra.mxu0 %v469
  %731 = vmatprep.subr.bf16.mxu0 %v485
  %732 = vmatpush1.bf16.msra.mxu0 %v484
  %733 = vmatprep.subr.bf16.mxu0 %v500
  %734 = vmatpush1.bf16.msra.mxu0 %v499
  %735 = vmatprep.subr.bf16.mxu0 %v515
  %736 = vmatpush1.bf16.msra.mxu0 %v514
  %737 = vmatprep.subr.bf16.mxu0 %v647
  %738 = vmatpush1.bf16.msra.mxu0 %v644
  %739 = vmatprep.subr.bf16.mxu0 0
  %740 = vmatpush1.bf16.msra.mxu0 0
  %741 = vmatprep.subr.bf16.mxu0 0
  %742 = vmatpush1.bf16.msra.mxu0 0
  %743 = vmatprep.subr.bf16.mxu0 0
  %744 = vmatpush1.bf16.msra.mxu0 0
  %745 = vmatprep.subr.bf16.mxu0 0
  %746 = vmatpush1.bf16.msra.mxu0 0
  %747 = vmatprep.subr.bf16.mxu0 0
  %748 = vmatpush1.bf16.msra.mxu0 0
  %749 = vmatprep.subr.bf16.mxu0 0
  %750 = vmatpush1.bf16.msra.mxu0 0
  %751 = vmatprep.subr.bf16.mxu0 0
  %752 = vmatpush1.bf16.msra.mxu0 0
  %753 = vmatprep.subr.bf16.mxu0 0
  %754 = vmatpush1.bf16.msra.mxu0 0
  %755 = vmatprep.subr.bf16.mxu0 0
  %756 = vmatpush1.bf16.msra.mxu0 0
  %757 = vmatprep.mubr.bf16.mxu0 0
  %758 = vmatmul.mubr.bf16.gmra.mrb[0].mxu0 %v634
  %v759 = vpop.f32.mrb[0].mxu0
  %v760 = vadd.f32 %v126, %v759
  %v761 = vpop.f32.mrb[0].mxu0
  %v762 = vadd.f32 %v126, %v761
  %v763 = vpop.f32.mrb[0].mxu0
  %v764 = vadd.f32 %v131, %v763
  %v765 = vpop.f32.mrb[0].mxu0
  %v766 = vadd.f32 %v131, %v765
  %767 = vdwg.mxu0
  %768 = vmatprep.subr.bf16.mxu0 %v442
  %769 = vmatpush1.bf16.msra.mxu0 %v441
  %770 = vmatprep.subr.bf16.mxu0 %v457
  %771 = vmatpush1.bf16.msra.mxu0 %v456
  %772 = vmatprep.subr.bf16.mxu0 %v472
  %773 = vmatpush1.bf16.msra.mxu0 %v471
  %774 = vmatprep.subr.bf16.mxu0 %v487
  %775 = vmatpush1.bf16.msra.mxu0 %v486
  %776 = vmatprep.subr.bf16.mxu0 %v502
  %777 = vmatpush1.bf16.msra.mxu0 %v501
  %778 = vmatprep.subr.bf16.mxu0 %v517
  %779 = vmatpush1.bf16.msra.mxu0 %v516
  %780 = vmatprep.subr.bf16.mxu0 %v653
  %781 = vmatpush1.bf16.msra.mxu0 %v650
  %782 = vmatprep.subr.bf16.mxu0 0
  %783 = vmatpush1.bf16.msra.mxu0 0
  %784 = vmatprep.subr.bf16.mxu0 0
  %785 = vmatpush1.bf16.msra.mxu0 0
  %786 = vmatprep.subr.bf16.mxu0 0
  %787 = vmatpush1.bf16.msra.mxu0 0
  %788 = vmatprep.subr.bf16.mxu0 0
  %789 = vmatpush1.bf16.msra.mxu0 0
  %790 = vmatprep.subr.bf16.mxu0 0
  %791 = vmatpush1.bf16.msra.mxu0 0
  %792 = vmatprep.subr.bf16.mxu0 0
  %793 = vmatpush1.bf16.msra.mxu0 0
  %794 = vmatprep.subr.bf16.mxu0 0
  %795 = vmatpush1.bf16.msra.mxu0 0
  %796 = vmatprep.subr.bf16.mxu0 0
  %797 = vmatpush1.bf16.msra.mxu0 0
  %798 = vmatprep.subr.bf16.mxu0 0
  %799 = vmatpush1.bf16.msra.mxu0 0
  %800 = vmatprep.mubr.bf16.mxu0 0
  %801 = vmatmul.mubr.bf16.gmra.mrb[0].mxu0 %v634
  %v802 = vpop.f32.mrb[0].mxu0
  %v803 = vadd.f32 %v126, %v802
  %v804 = vpop.f32.mrb[0].mxu0
  %v805 = vadd.f32 %v126, %v804
  %v806 = vpop.f32.mrb[0].mxu0
  %v807 = vadd.f32 %v131, %v806
  %v808 = vpop.f32.mrb[0].mxu0
  %v809 = vadd.f32 %v131, %v808
  %810 = vdwg.mxu0
  %811 = vmatprep.subr.bf16.mxu0 %v444
  %812 = vmatpush1.bf16.msra.mxu0 %v443
  %813 = vmatprep.subr.bf16.mxu0 %v459
  %814 = vmatpush1.bf16.msra.mxu0 %v458
  %815 = vmatprep.subr.bf16.mxu0 %v474
  %816 = vmatpush1.bf16.msra.mxu0 %v473
  %817 = vmatprep.subr.bf16.mxu0 %v489
  %818 = vmatpush1.bf16.msra.mxu0 %v488
  %819 = vmatprep.subr.bf16.mxu0 %v504
  %820 = vmatpush1.bf16.msra.mxu0 %v503
  %821 = vmatprep.subr.bf16.mxu0 %v519
  %822 = vmatpush1.bf16.msra.mxu0 %v518
  %823 = vmatprep.subr.bf16.mxu0 %v659
  %824 = vmatpush1.bf16.msra.mxu0 %v656
  %825 = vmatprep.subr.bf16.mxu0 0
  %826 = vmatpush1.bf16.msra.mxu0 0
  %827 = vmatprep.subr.bf16.mxu0 0
  %828 = vmatpush1.bf16.msra.mxu0 0
  %829 = vmatprep.subr.bf16.mxu0 0
  %830 = vmatpush1.bf16.msra.mxu0 0
  %831 = vmatprep.subr.bf16.mxu0 0
  %832 = vmatpush1.bf16.msra.mxu0 0
  %833 = vmatprep.subr.bf16.mxu0 0
  %834 = vmatpush1.bf16.msra.mxu0 0
  %835 = vmatprep.subr.bf16.mxu0 0
  %836 = vmatpush1.bf16.msra.mxu0 0
  %837 = vmatprep.subr.bf16.mxu0 0
  %838 = vmatpush1.bf16.msra.mxu0 0
  %839 = vmatprep.subr.bf16.mxu0 0
  %840 = vmatpush1.bf16.msra.mxu0 0
  %841 = vmatprep.subr.bf16.mxu0 0
  %842 = vmatpush1.bf16.msra.mxu0 0
  %843 = vmatprep.mubr.bf16.mxu0 0
  %844 = vmatmul.mubr.bf16.gmra.mrb[0].mxu0 %v634
  %v845 = vpop.f32.mrb[0].mxu0
  %v846 = vadd.f32 %v126, %v845
  %v847 = vpop.f32.mrb[0].mxu0
  %v848 = vadd.f32 %v126, %v847
  %v849 = vpop.f32.mrb[0].mxu0
  %v850 = vadd.f32 %v131, %v849
  %v851 = vpop.f32.mrb[0].mxu0
  %v852 = vadd.f32 %v131, %v851
  %853 = vdwg.mxu0
  %854 = vmatprep.subr.bf16.mxu0 %v446
  %855 = vmatpush1.bf16.msra.mxu0 %v445
  %856 = vmatprep.subr.bf16.mxu0 %v461
  %857 = vmatpush1.bf16.msra.mxu0 %v460
  %858 = vmatprep.subr.bf16.mxu0 %v476
  %859 = vmatpush1.bf16.msra.mxu0 %v475
  %860 = vmatprep.subr.bf16.mxu0 %v491
  %861 = vmatpush1.bf16.msra.mxu0 %v490
  %862 = vmatprep.subr.bf16.mxu0 %v506
  %863 = vmatpush1.bf16.msra.mxu0 %v505
  %864 = vmatprep.subr.bf16.mxu0 %v521
  %865 = vmatpush1.bf16.msra.mxu0 %v520
  %866 = vmatprep.subr.bf16.mxu0 %v665
  %867 = vmatpush1.bf16.msra.mxu0 %v662
  %868 = vmatprep.subr.bf16.mxu0 0
  %869 = vmatpush1.bf16.msra.mxu0 0
  %870 = vmatprep.subr.bf16.mxu0 0
  %871 = vmatpush1.bf16.msra.mxu0 0
  %872 = vmatprep.subr.bf16.mxu0 0
  %873 = vmatpush1.bf16.msra.mxu0 0
  %874 = vmatprep.subr.bf16.mxu0 0
  %875 = vmatpush1.bf16.msra.mxu0 0
  %876 = vmatprep.subr.bf16.mxu0 0
  %877 = vmatpush1.bf16.msra.mxu0 0
  %878 = vmatprep.subr.bf16.mxu0 0
  %879 = vmatpush1.bf16.msra.mxu0 0
  %880 = vmatprep.subr.bf16.mxu0 0
  %881 = vmatpush1.bf16.msra.mxu0 0
  %882 = vmatprep.subr.bf16.mxu0 0
  %883 = vmatpush1.bf16.msra.mxu0 0
  %884 = vmatprep.subr.bf16.mxu0 0
  %885 = vmatpush1.bf16.msra.mxu0 0
  %886 = vmatprep.mubr.bf16.mxu0 0
  %887 = vmatmul.mubr.bf16.gmra.mrb[0].mxu0 %v634
  %v888 = vpop.f32.mrb[0].mxu0
  %v889 = vadd.f32 %v126, %v888
  %v890 = vpop.f32.mrb[0].mxu0
  %v891 = vadd.f32 %v126, %v890
  %v892 = vpop.f32.mrb[0].mxu0
  %v893 = vadd.f32 %v131, %v892
  %v894 = vpop.f32.mrb[0].mxu0
  %v895 = vadd.f32 %v131, %v894
  %896 = vdwg.mxu0
  %897 = vmatprep.subr.bf16.mxu0 %v448
  %898 = vmatpush1.bf16.msra.mxu0 %v447
  %899 = vmatprep.subr.bf16.mxu0 %v463
  %900 = vmatpush1.bf16.msra.mxu0 %v462
  %901 = vmatprep.subr.bf16.mxu0 %v478
  %902 = vmatpush1.bf16.msra.mxu0 %v477
  %903 = vmatprep.subr.bf16.mxu0 %v493
  %904 = vmatpush1.bf16.msra.mxu0 %v492
  %905 = vmatprep.subr.bf16.mxu0 %v508
  %906 = vmatpush1.bf16.msra.mxu0 %v507
  %907 = vmatprep.subr.bf16.mxu0 %v523
  %908 = vmatpush1.bf16.msra.mxu0 %v522
  %909 = vmatprep.subr.bf16.mxu0 %v671
  %910 = vmatpush1.bf16.msra.mxu0 %v668
  %911 = vmatprep.subr.bf16.mxu0 0
  %912 = vmatpush1.bf16.msra.mxu0 0
  %913 = vmatprep.subr.bf16.mxu0 0
  %914 = vmatpush1.bf16.msra.mxu0 0
  %915 = vmatprep.subr.bf16.mxu0 0
  %916 = vmatpush1.bf16.msra.mxu0 0
  %917 = vmatprep.subr.bf16.mxu0 0
  %918 = vmatpush1.bf16.msra.mxu0 0
  %919 = vmatprep.subr.bf16.mxu0 0
  %920 = vmatpush1.bf16.msra.mxu0 0
  %921 = vmatprep.subr.bf16.mxu0 0
  %922 = vmatpush1.bf16.msra.mxu0 0
  %923 = vmatprep.subr.bf16.mxu0 0
  %924 = vmatpush1.bf16.msra.mxu0 0
  %925 = vmatprep.subr.bf16.mxu0 0
  %926 = vmatpush1.bf16.msra.mxu0 0
  %927 = vmatprep.subr.bf16.mxu0 0
  %928 = vmatpush1.bf16.msra.mxu0 0
  %929 = vmatprep.mubr.bf16.mxu0 0
  %930 = vmatmul.mubr.bf16.gmra.mrb[0].mxu0 %v634
  %v931 = vpop.f32.mrb[0].mxu0
  %v932 = vadd.f32 %v126, %v931
  %v933 = vpop.f32.mrb[0].mxu0
  %v934 = vadd.f32 %v126, %v933
  %v935 = vpop.f32.mrb[0].mxu0
  %v936 = vadd.f32 %v131, %v935
  %v937 = vpop.f32.mrb[0].mxu0
  %v938 = vadd.f32 %v131, %v937
  %939 = vdwg.mxu0
  %940 = vmatprep.subr.bf16.mxu0 %v450
  %941 = vmatpush1.bf16.msra.mxu0 %v449
  %942 = vmatprep.subr.bf16.mxu0 %v465
  %943 = vmatpush1.bf16.msra.mxu0 %v464
  %944 = vmatprep.subr.bf16.mxu0 %v480
  %945 = vmatpush1.bf16.msra.mxu0 %v479
  %946 = vmatprep.subr.bf16.mxu0 %v495
  %947 = vmatpush1.bf16.msra.mxu0 %v494
  %948 = vmatprep.subr.bf16.mxu0 %v510
  %949 = vmatpush1.bf16.msra.mxu0 %v509
  %950 = vmatprep.subr.bf16.mxu0 %v525
  %951 = vmatpush1.bf16.msra.mxu0 %v524
  %952 = vmatprep.subr.bf16.mxu0 %v677
  %953 = vmatpush1.bf16.msra.mxu0 %v674
  %954 = vmatprep.subr.bf16.mxu0 0
  %955 = vmatpush1.bf16.msra.mxu0 0
  %956 = vmatprep.subr.bf16.mxu0 0
  %957 = vmatpush1.bf16.msra.mxu0 0
  %958 = vmatprep.subr.bf16.mxu0 0
  %959 = vmatpush1.bf16.msra.mxu0 0
  %960 = vmatprep.subr.bf16.mxu0 0
  %961 = vmatpush1.bf16.msra.mxu0 0
  %962 = vmatprep.subr.bf16.mxu0 0
  %963 = vmatpush1.bf16.msra.mxu0 0
  %964 = vmatprep.subr.bf16.mxu0 0
  %965 = vmatpush1.bf16.msra.mxu0 0
  %966 = vmatprep.subr.bf16.mxu0 0
  %967 = vmatpush1.bf16.msra.mxu0 0
  %968 = vmatprep.subr.bf16.mxu0 0
  %969 = vmatpush1.bf16.msra.mxu0 0
  %970 = vmatprep.subr.bf16.mxu0 0
  %971 = vmatpush1.bf16.msra.mxu0 0
  %972 = vmatprep.mubr.bf16.mxu0 0
  %973 = vmatmul.mubr.bf16.gmra.mrb[0].mxu0 %v634
  %v974 = vpop.f32.mrb[0].mxu0
  %v975 = vadd.f32 %v126, %v974
  %v976 = vpop.f32.mrb[0].mxu0
  %v977 = vadd.f32 %v126, %v976
  %v978 = vpop.f32.mrb[0].mxu0
  %v979 = vadd.f32 %v131, %v978
  %v980 = vpop.f32.mrb[0].mxu0
  %v981 = vadd.f32 %v131, %v980
  %982 = vdwg.mxu0
  %983 = vmatprep.subr.bf16.mxu0 0
  %984 = vmatpush1.bf16.msra.mxu0 %v451
  %985 = vmatprep.subr.bf16.mxu0 0
  %986 = vmatpush1.bf16.msra.mxu0 %v466
  %987 = vmatprep.subr.bf16.mxu0 0
  %988 = vmatpush1.bf16.msra.mxu0 %v481
  %989 = vmatprep.subr.bf16.mxu0 0
  %990 = vmatpush1.bf16.msra.mxu0 %v496
  %991 = vmatprep.subr.bf16.mxu0 0
  %992 = vmatpush1.bf16.msra.mxu0 %v511
  %993 = vmatprep.subr.bf16.mxu0 0
  %994 = vmatpush1.bf16.msra.mxu0 %v526
  %995 = vmatprep.subr.bf16.mxu0 0
  %996 = vmatpush1.bf16.msra.mxu0 %v680
  %997 = vmatprep.subr.bf16.mxu0 0
  %998 = vmatpush1.bf16.msra.mxu0 0
  %999 = vmatprep.subr.bf16.mxu0 0
  %1000 = vmatpush1.bf16.msra.mxu0 0
  %1001 = vmatprep.subr.bf16.mxu0 0
  %1002 = vmatpush1.bf16.msra.mxu0 0
  %1003 = vmatprep.subr.bf16.mxu0 0
  %1004 = vmatpush1.bf16.msra.mxu0 0
  %1005 = vmatprep.subr.bf16.mxu0 0
  %1006 = vmatpush1.bf16.msra.mxu0 0
  %1007 = vmatprep.subr.bf16.mxu0 0
  %1008 = vmatpush1.bf16.msra.mxu0 0
  %1009 = vmatprep.subr.bf16.mxu0 0
  %1010 = vmatpush1.bf16.msra.mxu0 0
  %1011 = vmatprep.subr.bf16.mxu0 0
  %1012 = vmatpush1.bf16.msra.mxu0 0
  %1013 = vmatprep.subr.bf16.mxu0 0
  %1014 = vmatpush1.bf16.msra.mxu0 0
  %1015 = vmatprep.mubr.bf16.mxu0 0
  %1016 = vmatmul.mubr.bf16.gmra.mrb[0].mxu0 %v634
  %v1017 = vpop.f32.mrb[0].mxu0
  %v1018 = vadd.f32 %v126, %v1017
  %v1019 = vpop.f32.mrb[0].mxu0
  %v1020 = vpop.f32.mrb[0].mxu0
  %v1021 = vadd.f32 %v131, %v1020
  %v1022 = vpop.f32.mrb[0].mxu0
  %1023 = vdwg.mxu0
  %vm1024 = vcmp.ge.f32.partialorder %v717, 0.0
  %vm1025 = vcmp.ge.f32.partialorder %v719, 0.0
  %vm1026 = vcmp.ge.f32.partialorder %v760, 0.0
  %vm1027 = vcmp.ge.f32.partialorder %v762, 0.0
  %vm1028 = vcmp.ge.f32.partialorder %v803, 0.0
  %vm1029 = vcmp.ge.f32.partialorder %v805, 0.0
  %vm1030 = vcmp.ge.f32.partialorder %v846, 0.0
  %vm1031 = vcmp.ge.f32.partialorder %v848, 0.0
  %vm1032 = vcmp.ge.f32.partialorder %v889, 0.0
  %vm1033 = vcmp.ge.f32.partialorder %v891, 0.0
  %vm1034 = vcmp.ge.f32.partialorder %v932, 0.0
  %vm1035 = vcmp.ge.f32.partialorder %v934, 0.0
  %vm1036 = vcmp.ge.f32.partialorder %v975, 0.0
  %vm1037 = vcmp.ge.f32.partialorder %v977, 0.0
  %vm1038 = vcmp.ge.f32.partialorder %v1018, 0.0
  %vm1039 = vcmp.ge.f32.partialorder %v721, 0.0
  %vm1040 = vcmp.ge.f32.partialorder %v723, 0.0
  %vm1041 = vcmp.ge.f32.partialorder %v764, 0.0
  %vm1042 = vcmp.ge.f32.partialorder %v766, 0.0
  %vm1043 = vcmp.ge.f32.partialorder %v807, 0.0
  %vm1044 = vcmp.ge.f32.partialorder %v809, 0.0
  %vm1045 = vcmp.ge.f32.partialorder %v850, 0.0
  %vm1046 = vcmp.ge.f32.partialorder %v852, 0.0
  %vm1047 = vcmp.ge.f32.partialorder %v893, 0.0
  %vm1048 = vcmp.ge.f32.partialorder %v895, 0.0
  %vm1049 = vcmp.ge.f32.partialorder %v936, 0.0
  %vm1050 = vcmp.ge.f32.partialorder %v938, 0.0
  %vm1051 = vcmp.ge.f32.partialorder %v979, 0.0
  %vm1052 = vcmp.ge.f32.partialorder %v981, 0.0
  %vm1053 = vcmp.ge.f32.partialorder %v1021, 0.0
  %v1054 = vmul.f32 %v717, 0.1
  %v1055 = vmul.f32 %v719, 0.1
  %v1056 = vmul.f32 %v760, 0.1
  %v1057 = vmul.f32 %v762, 0.1
  %v1058 = vmul.f32 %v803, 0.1
  %v1059 = vmul.f32 %v805, 0.1
  %v1060 = vmul.f32 %v846, 0.1
  %v1061 = vmul.f32 %v848, 0.1
  %v1062 = vmul.f32 %v889, 0.1
  %v1063 = vmul.f32 %v891, 0.1
  %v1064 = vmul.f32 %v932, 0.1
  %v1065 = vmul.f32 %v934, 0.1
  %v1066 = vmul.f32 %v975, 0.1
  %v1067 = vmul.f32 %v977, 0.1
  %v1068 = vmul.f32 %v1018, 0.1
  %v1069 = vmul.f32 %v721, 0.1
  %v1070 = vmul.f32 %v723, 0.1
  %v1071 = vmul.f32 %v764, 0.1
  %v1072 = vmul.f32 %v766, 0.1
  %v1073 = vmul.f32 %v807, 0.1
  %v1074 = vmul.f32 %v809, 0.1
  %v1075 = vmul.f32 %v850, 0.1
  %v1076 = vmul.f32 %v852, 0.1
  %v1077 = vmul.f32 %v893, 0.1
  %v1078 = vmul.f32 %v895, 0.1
  %v1079 = vmul.f32 %v936, 0.1
  %v1080 = vmul.f32 %v938, 0.1
  %v1081 = vmul.f32 %v979, 0.1
  %v1082 = vmul.f32 %v981, 0.1
  %v1083 = vmul.f32 %v1021, 0.1
  %v1084 = vsel %vm1024, %v717, %v1054
  %v1085 = vsel %vm1025, %v719, %v1055
  %v1086 = vsel %vm1026, %v760, %v1056
  %v1087 = vsel %vm1027, %v762, %v1057
  %v1088 = vsel %vm1028, %v803, %v1058
  %v1089 = vsel %vm1029, %v805, %v1059
  %v1090 = vsel %vm1030, %v846, %v1060
  %v1091 = vsel %vm1031, %v848, %v1061
  %v1092 = vsel %vm1032, %v889, %v1062
  %v1093 = vsel %vm1033, %v891, %v1063
  %v1094 = vsel %vm1034, %v932, %v1064
  %v1095 = vsel %vm1035, %v934, %v1065
  %v1096 = vsel %vm1036, %v975, %v1066
  %v1097 = vsel %vm1037, %v977, %v1067
  %v1098 = vsel %vm1038, %v1018, %v1068
  %v1099 = vsel %vm1039, %v721, %v1069
  %v1100 = vsel %vm1040, %v723, %v1070
  %v1101 = vsel %vm1041, %v764, %v1071
  %v1102 = vsel %vm1042, %v766, %v1072
  %v1103 = vsel %vm1043, %v807, %v1073
  %v1104 = vsel %vm1044, %v809, %v1074
  %v1105 = vsel %vm1045, %v850, %v1075
  %v1106 = vsel %vm1046, %v852, %v1076
  %v1107 = vsel %vm1047, %v893, %v1077
  %v1108 = vsel %vm1048, %v895, %v1078
  %v1109 = vsel %vm1049, %v936, %v1079
  %v1110 = vsel %vm1050, %v938, %v1080
  %v1111 = vsel %vm1051, %v979, %v1081
  %v1112 = vsel %vm1052, %v981, %v1082
  %v1113 = vsel %vm1053, %v1021, %v1083
  %v1114 = vpack.c.bf16 %v1099, %v1084
  %v1115 = vpack.c.bf16 %v1100, %v1085
  %v1116 = vpack.c.bf16 %v1101, %v1086
  %v1117 = vpack.c.bf16 %v1102, %v1087
  %v1118 = vpack.c.bf16 %v1103, %v1088
  %v1119 = vpack.c.bf16 %v1104, %v1089
  %v1120 = vpack.c.bf16 %v1105, %v1090
  %v1121 = vpack.c.bf16 %v1106, %v1091
  %v1122 = vpack.c.bf16 %v1107, %v1092
  %v1123 = vpack.c.bf16 %v1108, %v1093
  %v1124 = vpack.c.bf16 %v1109, %v1094
  %v1125 = vpack.c.bf16 %v1110, %v1095
  %v1126 = vpack.c.bf16 %v1111, %v1096
  %v1127 = vpack.c.bf16 %v1112, %v1097
  %v1128 = vpack.c.bf16 %v1113, %v1098
  %v1144 = vunpack.c.l.b16 %v1114
  %v1145 = vunpack.c.l.b16 %v1115
  %v1146 = vunpack.c.l.b16 %v1116
  %v1147 = vunpack.c.l.b16 %v1117
  %v1148 = vunpack.c.l.b16 %v1118
  %v1149 = vunpack.c.l.b16 %v1119
  %v1150 = vunpack.c.l.b16 %v1120
  %v1151 = vunpack.c.l.b16 %v1121
  %v1152 = vunpack.c.l.b16 %v1122
  %v1153 = vunpack.c.l.b16 %v1123
  %v1154 = vunpack.c.l.b16 %v1124
  %v1155 = vunpack.c.l.b16 %v1125
  %v1156 = vunpack.c.l.b16 %v1126
  %v1157 = vunpack.c.l.b16 %v1127
  %v1158 = vunpack.c.l.b16 %v1128
  %v1159 = vunpack.c.h.b16 %v1114
  %v1160 = vunpack.c.h.b16 %v1115
  %v1161 = vunpack.c.h.b16 %v1116
  %v1162 = vunpack.c.h.b16 %v1117
  %v1163 = vunpack.c.h.b16 %v1118
  %v1164 = vunpack.c.h.b16 %v1119
  %v1165 = vunpack.c.h.b16 %v1120
  %v1166 = vunpack.c.h.b16 %v1121
  %v1167 = vunpack.c.h.b16 %v1122
  %v1168 = vunpack.c.h.b16 %v1123
  %v1169 = vunpack.c.h.b16 %v1124
  %v1170 = vunpack.c.h.b16 %v1125
  %v1171 = vunpack.c.h.b16 %v1126
  %v1172 = vunpack.c.h.b16 %v1127
  %v1173 = vunpack.c.h.b16 %v1128
  %v1174 = vpack.c.b16 %v1145, %v1144
  %v1175 = vpack.c.b16 %v1147, %v1146
  %v1176 = vpack.c.b16 %v1149, %v1148
  %v1177 = vpack.c.b16 %v1151, %v1150
  %v1178 = vpack.c.b16 %v1153, %v1152
  %v1179 = vpack.c.b16 %v1155, %v1154
  %v1180 = vpack.c.b16 %v1157, %v1156
  %v1181 = vpack.c.b16 %v1158, %v1158
  %v1182 = vpack.c.b16 %v1160, %v1159
  %v1183 = vpack.c.b16 %v1162, %v1161
  %v1184 = vpack.c.b16 %v1164, %v1163
  %v1185 = vpack.c.b16 %v1166, %v1165
  %v1186 = vpack.c.b16 %v1168, %v1167
  %v1187 = vpack.c.b16 %v1170, %v1169
  %v1188 = vpack.c.b16 %v1172, %v1171
  %v1189 = vpack.c.b16 %v1173, %v1173
  %1206 = vst [vmem:[%s3] sm:$0xff] %v1174
  %1207 = vst [vmem:[%s3 + $0x8] sm:$0xff] %v1175
  %1208 = vst [vmem:[%s3 + $0x10] sm:$0xff] %v1176
  %1209 = vst [vmem:[%s3 + $0x18] sm:$0xff] %v1177
  %1210 = vst [vmem:[%s3 + $0x20] sm:$0xff] %v1178
  %1211 = vst [vmem:[%s3 + $0x28] sm:$0xff] %v1179
  %1212 = vst [vmem:[%s3 + $0x30] sm:$0xff] %v1180
  %vm1213 = vcmask 60416
  %1214 = vst.msk [vmem:[%s3 + $0x38] sm:$0xf] %vm1213, %v1181
  %1215 = vst [vmem:[%s3 + $0x3c] sm:$0xff] %v1182
  %1216 = vst [vmem:[%s3 + $0x44] sm:$0xff] %v1183
  %1217 = vst [vmem:[%s3 + $0x4c] sm:$0xff] %v1184
  %1218 = vst [vmem:[%s3 + $0x54] sm:$0xff] %v1185
  %1219 = vst [vmem:[%s3 + $0x5c] sm:$0xff] %v1186
  %1220 = vst [vmem:[%s3 + $0x64] sm:$0xff] %v1187
  %1221 = vst [vmem:[%s3 + $0x6c] sm:$0xff] %v1188
  %1222 = vst.msk [vmem:[%s3 + $0x74] sm:$0xf] %vm1213, %v1189
  // Predicated region
  $region14: #{critic_forward.4} parent=0 // pred_check
    _
  $region15: #{critic_forward.4} parent=0 // pred_check_branch
    %1224 = sbr.rel (0) target = $region17
  $region16: #{critic_forward.4} parent=0 // pred_region
    _
  $region17: #{critic_forward.4} parent=0 // pred_fallthru
    _
  // Predicated region
  $region18: #{critic_forward.4} parent=0 // pred_check
    _
  $region19: #{critic_forward.4} parent=0 // pred_check_branch
    %1226 = sbr.rel (0) target = $region21
  $region20: #{critic_forward.4} parent=0 // pred_region
    _
  $region21: #{critic_forward.4} parent=0 // pred_fallthru
    _

// kernel: critic_forward.5
$region0: #{critic_forward.5}
  #allocation0 [shape = 'u32[]', space=smem, size = 0x4, offset = 0x4, fixed_abs, tag = 'smem constant byte address 0x4 - core index']
  #allocation1 [shape = 'u32[144,128]{1,0:T(1,128)}', space=vmem, size = 0x12000, scoped, tag = 'internal scratch']
  %s0 = inlined_call_operand.vmem [shape: bf16[32,144], index: 0, kind: input, shape index: {}]
  %s1 = inlined_call_operand.vmem [shape: bf16[144,392], index: 1, kind: input, shape index: {}]
  %s2 = inlined_call_operand.vmem [shape: f32[32,1], index: 2, kind: input, shape index: {}]
  %s3 = inlined_call_operand.vmem [shape: bf16[32,392], index: 3, kind: output, shape index: {}]
  %s4 = sld [smem:[#allocation0]]
  $region22: #{critic_forward.5} parent=0
    _
  %s6 = ssub.s32 1, %s4
  %s7 = scalar_select 0, %s6, %s4
  // Predicated region
  $region2: #{critic_forward.5} parent=0 // pred_check
    _
  $region3: #{critic_forward.5} parent=0 // pred_check_branch
    %9 = sbr.rel (0) target = $region5
  $region4: #{critic_forward.5} parent=0 // pred_region
    _
  $region5: #{critic_forward.5} parent=0 // pred_fallthru
    _
  // Predicated region
  $region6: #{critic_forward.5} parent=0 // pred_check
    _
  $region7: #{critic_forward.5} parent=0 // pred_check_branch
    %11 = sbr.rel (0) target = $region9
  $region8: #{critic_forward.5} parent=0 // pred_region
    _
  $region9: #{critic_forward.5} parent=0 // pred_fallthru
    _
  // Predicated region
  $region10: #{critic_forward.5} parent=0 // pred_check
    _
  $region11: #{critic_forward.5} parent=0 // pred_check_branch
    %13 = sbr.rel (0) target = $region13
  $region12: #{critic_forward.5} parent=0 // pred_region
    _
  $region13: #{critic_forward.5} parent=0 // pred_fallthru
    _
  %v15 = vld [vmem:[%s0] sm:$0xff]
  %v16 = vld [vmem:[%s0 + $0x8] sm:$0xff]
  %v17 = vld [vmem:[%s0 + $0x10] sm:$0xff]
  %v18 = vld [vmem:[%s0 + $0x18] sm:$0xff]
  %v19 = vld [vmem:[%s1] sm:$0xff]
  %v20 = vld [vmem:[%s1 + $0x8] sm:$0xff]
  %v21 = vld [vmem:[%s1 + $0x10] sm:$0xff]
  %v22 = vld [vmem:[%s1 + $0x18] sm:$0xff]
  %v23 = vld [vmem:[%s1 + $0x20] sm:$0xff]
  %v24 = vld [vmem:[%s1 + $0x28] sm:$0xff]
  %v25 = vld [vmem:[%s1 + $0x30] sm:$0xff]
  %v26 = vld [vmem:[%s1 + $0x38] sm:$0xff]
  %v27 = vld [vmem:[%s1 + $0x40] sm:$0xff]
  %v28 = vld [vmem:[%s1 + $0x48] sm:$0xff]
  %v29 = vld [vmem:[%s1 + $0x50] sm:$0xff]
  %v30 = vld [vmem:[%s1 + $0x58] sm:$0xff]
  %v31 = vld [vmem:[%s1 + $0x60] sm:$0xff]
  %v32 = vld [vmem:[%s1 + $0x68] sm:$0xff]
  %v33 = vld [vmem:[%s1 + $0x70] sm:$0xff]
  %v34 = vld [vmem:[%s1 + $0x78] sm:$0xff]
  %v35 = vld [vmem:[%s1 + $0x80] sm:$0xff]
  %v36 = vld [vmem:[%s1 + $0x88] sm:$0xff]
  %v37 = vld [vmem:[%s1 + $0x90] sm:$0xff]
  %v38 = vld [vmem:[%s1 + $0x98] sm:$0xff]
  %v39 = vld [vmem:[%s1 + $0xa0] sm:$0xff]
  %v40 = vld [vmem:[%s1 + $0xa8] sm:$0xff]
  %v41 = vld [vmem:[%s1 + $0xb0] sm:$0xff]
  %v42 = vld [vmem:[%s1 + $0xb8] sm:$0xff]
  %v43 = vld [vmem:[%s1 + $0xc0] sm:$0xff]
  %v44 = vld [vmem:[%s1 + $0xc8] sm:$0xff]
  %v45 = vld [vmem:[%s1 + $0xd0] sm:$0xff]
  %v46 = vld [vmem:[%s1 + $0xd8] sm:$0xff]
  %v47 = vld [vmem:[%s1 + $0xe0] sm:$0xff]
  %v48 = vld [vmem:[%s1 + $0xe8] sm:$0xff]
  %v49 = vld [vmem:[%s1 + $0xf0] sm:$0xff]
  %v50 = vld [vmem:[%s1 + $0xf8] sm:$0xff]
  %v51 = vld [vmem:[%s1 + $0x100] sm:$0xff]
  %v52 = vld [vmem:[%s1 + $0x108] sm:$0xff]
  %v53 = vld [vmem:[%s1 + $0x110] sm:$0xff]
  %v54 = vld [vmem:[%s1 + $0x118] sm:$0xff]
  %v55 = vld [vmem:[%s2] sm:$0xff]
  %v56 = vld [vmem:[%s2 + $0x8] sm:$0xff]
  %v57 = vld [vmem:[%s2 + $0x10] sm:$0xff]
  %v58 = vld [vmem:[%s2 + $0x18] sm:$0xff]
  %60 = vset.pattern.permute.xlu0 0
  %61 = vperm.xlu0 %60, %v55
  %v62 = vpop.permute.xlu0 %61
  %65 = vset.pattern.permute.xlu0 0
  %66 = vperm.xlu0 %65, %v56
  %v67 = vpop.permute.xlu0 %66
  %70 = vset.pattern.permute.xlu0 0
  %71 = vperm.xlu0 %70, %v57
  %v72 = vpop.permute.xlu0 %71
  %75 = vset.pattern.permute.xlu0 0
  %76 = vperm.xlu0 %75, %v58
  %v77 = vpop.permute.xlu0 %76
  %v83 = vunpack.c.l.b16 %v15
  %v84 = vunpack.c.h.b16 %v15
  %v85 = vunpack.c.l.b16 %v16
  %v86 = vunpack.c.h.b16 %v16
  %v87 = vunpack.c.l.b16 %v17
  %v88 = vunpack.c.h.b16 %v17
  %v89 = vunpack.c.l.b16 %v18
  %v90 = vunpack.c.h.b16 %v18
  %v91 = vpack.c.b16 %v85, %v83
  %v92 = vpack.c.b16 %v86, %v84
  %v93 = vpack.c.b16 %v89, %v87
  %v94 = vpack.c.b16 %v90, %v88
  %v133 = vunpack.c.l.b16 %v19
  %v134 = vunpack.c.h.b16 %v19
  %v135 = vunpack.c.l.b16 %v20
  %v136 = vunpack.c.h.b16 %v20
  %v137 = vunpack.c.l.b16 %v21
  %v138 = vunpack.c.h.b16 %v21
  %v139 = vunpack.c.l.b16 %v22
  %v140 = vunpack.c.h.b16 %v22
  %v141 = vunpack.c.l.b16 %v23
  %v142 = vunpack.c.h.b16 %v23
  %v143 = vunpack.c.l.b16 %v24
  %v144 = vunpack.c.h.b16 %v24
  %v145 = vunpack.c.l.b16 %v25
  %v146 = vunpack.c.h.b16 %v25
  %v147 = vunpack.c.l.b16 %v26
  %v148 = vunpack.c.h.b16 %v26
  %v149 = vunpack.c.l.b16 %v27
  %v150 = vunpack.c.h.b16 %v27
  %v151 = vunpack.c.l.b16 %v28
  %v152 = vunpack.c.h.b16 %v28
  %v153 = vunpack.c.l.b16 %v29
  %v154 = vunpack.c.h.b16 %v29
  %v155 = vunpack.c.l.b16 %v30
  %v156 = vunpack.c.h.b16 %v30
  %v157 = vunpack.c.l.b16 %v31
  %v158 = vunpack.c.h.b16 %v31
  %v159 = vunpack.c.l.b16 %v32
  %v160 = vunpack.c.h.b16 %v32
  %v161 = vunpack.c.l.b16 %v33
  %v162 = vunpack.c.h.b16 %v33
  %v163 = vunpack.c.l.b16 %v34
  %v164 = vunpack.c.h.b16 %v34
  %v165 = vunpack.c.l.b16 %v35
  %v166 = vunpack.c.h.b16 %v35
  %v167 = vunpack.c.l.b16 %v36
  %v168 = vunpack.c.h.b16 %v36
  %v169 = vunpack.c.l.b16 %v37
  %v170 = vunpack.c.h.b16 %v37
  %v171 = vunpack.c.l.b16 %v38
  %v172 = vunpack.c.h.b16 %v38
  %v173 = vunpack.c.l.b16 %v39
  %v174 = vunpack.c.h.b16 %v39
  %v175 = vunpack.c.l.b16 %v40
  %v176 = vunpack.c.h.b16 %v40
  %v177 = vunpack.c.l.b16 %v41
  %v178 = vunpack.c.h.b16 %v41
  %v179 = vunpack.c.l.b16 %v42
  %v180 = vunpack.c.h.b16 %v42
  %v181 = vunpack.c.l.b16 %v43
  %v182 = vunpack.c.h.b16 %v43
  %v183 = vunpack.c.l.b16 %v44
  %v184 = vunpack.c.h.b16 %v44
  %v185 = vunpack.c.l.b16 %v45
  %v186 = vunpack.c.h.b16 %v45
  %v187 = vunpack.c.l.b16 %v46
  %v188 = vunpack.c.h.b16 %v46
  %v189 = vunpack.c.l.b16 %v47
  %v190 = vunpack.c.h.b16 %v47
  %v191 = vunpack.c.l.b16 %v48
  %v192 = vunpack.c.h.b16 %v48
  %v193 = vunpack.c.l.b16 %v49
  %v194 = vunpack.c.h.b16 %v49
  %v195 = vunpack.c.l.b16 %v50
  %v196 = vunpack.c.h.b16 %v50
  %v197 = vunpack.c.l.b16 %v51
  %v198 = vunpack.c.h.b16 %v51
  %v199 = vunpack.c.l.b16 %v52
  %v200 = vunpack.c.h.b16 %v52
  %v201 = vunpack.c.l.b16 %v53
  %v202 = vunpack.c.h.b16 %v53
  %v203 = vunpack.c.l.b16 %v54
  %v204 = vunpack.c.h.b16 %v54
  %v205 = vpack.c.b16 %v137, %v133
  %v206 = vpack.c.b16 %v138, %v134
  %v207 = vpack.c.b16 %v139, %v135
  %v208 = vpack.c.b16 %v140, %v136
  %v209 = vpack.c.b16 %v145, %v141
  %v210 = vpack.c.b16 %v146, %v142
  %v211 = vpack.c.b16 %v147, %v143
  %v212 = vpack.c.b16 %v148, %v144
  %v213 = vpack.c.b16 %v153, %v149
  %v214 = vpack.c.b16 %v154, %v150
  %v215 = vpack.c.b16 %v155, %v151
  %v216 = vpack.c.b16 %v156, %v152
  %v217 = vpack.c.b16 %v161, %v157
  %v218 = vpack.c.b16 %v162, %v158
  %v219 = vpack.c.b16 %v163, %v159
  %v220 = vpack.c.b16 %v164, %v160
  %v221 = vpack.c.b16 %v169, %v165
  %v222 = vpack.c.b16 %v170, %v166
  %v223 = vpack.c.b16 %v171, %v167
  %v224 = vpack.c.b16 %v172, %v168
  %v225 = vpack.c.b16 %v177, %v173
  %v226 = vpack.c.b16 %v178, %v174
  %v227 = vpack.c.b16 %v179, %v175
  %v228 = vpack.c.b16 %v180, %v176
  %v229 = vpack.c.b16 %v185, %v181
  %v230 = vpack.c.b16 %v186, %v182
  %v231 = vpack.c.b16 %v187, %v183
  %v232 = vpack.c.b16 %v188, %v184
  %v233 = vpack.c.b16 %v193, %v189
  %v234 = vpack.c.b16 %v194, %v190
  %v235 = vpack.c.b16 %v195, %v191
  %v236 = vpack.c.b16 %v196, %v192
  %v237 = vpack.c.b16 %v201, %v197
  %v238 = vpack.c.b16 %v202, %v198
  %v239 = vpack.c.b16 %v203, %v199
  %v240 = vpack.c.b16 %v204, %v200
  %vm277 = vcmask 130048
  %v279 = vsel %vm277, %v92, 0
  %v282 = vsel %vm277, %v94, 0
  %284 = vmatprep.subr.bf16.mxu0 %v206
  %285 = vmatpush1.bf16.msra.mxu0 %v205
  %286 = vmatprep.subr.bf16.mxu0 %v210
  %287 = vmatpush1.bf16.msra.mxu0 %v209
  %288 = vmatprep.subr.bf16.mxu0 %v214
  %289 = vmatpush1.bf16.msra.mxu0 %v213
  %290 = vmatprep.subr.bf16.mxu0 %v218
  %291 = vmatpush1.bf16.msra.mxu0 %v217
  %292 = vmatprep.subr.bf16.mxu0 %v222
  %293 = vmatpush1.bf16.msra.mxu0 %v221
  %294 = vmatprep.subr.bf16.mxu0 %v226
  %295 = vmatpush1.bf16.msra.mxu0 %v225
  %296 = vmatprep.subr.bf16.mxu0 %v230
  %297 = vmatpush1.bf16.msra.mxu0 %v229
  %298 = vmatprep.subr.bf16.mxu0 %v234
  %299 = vmatpush1.bf16.msra.mxu0 %v233
  %300 = vmatprep.subr.bf16.mxu0 %v238
  %301 = vmatpush1.bf16.msra.mxu0 %v237
  %302 = vmatprep.subr.bf16.mxu0 0
  %303 = vmatpush1.bf16.msra.mxu0 0
  %304 = vmatprep.subr.bf16.mxu0 0
  %305 = vmatpush1.bf16.msra.mxu0 0
  %306 = vmatprep.subr.bf16.mxu0 0
  %307 = vmatpush1.bf16.msra.mxu0 0
  %308 = vmatprep.subr.bf16.mxu0 0
  %309 = vmatpush1.bf16.msra.mxu0 0
  %310 = vmatprep.subr.bf16.mxu0 0
  %311 = vmatpush1.bf16.msra.mxu0 0
  %312 = vmatprep.subr.bf16.mxu0 0
  %313 = vmatpush1.bf16.msra.mxu0 0
  %314 = vmatprep.subr.bf16.mxu0 0
  %315 = vmatpush1.bf16.msra.mxu0 0
  %316 = vmatprep.mubr.bf16.mxu0 %v279
  %317 = vmatmul.mubr.bf16.gmra.mrb[0].mxu0 %v91
  %v318 = vpop.f32.mrb[0].mxu0
  %v319 = vadd.f32 %v62, %v318
  %v320 = vpop.f32.mrb[0].mxu0
  %v321 = vadd.f32 %v62, %v320
  %v322 = vpop.f32.mrb[0].mxu0
  %v323 = vadd.f32 %v67, %v322
  %v324 = vpop.f32.mrb[0].mxu0
  %v325 = vadd.f32 %v67, %v324
  %326 = vmatprep.mubr.bf16.mxu0 %v282
  %327 = vmatmul.mubr.bf16.gmra.mrb[0].mxu0 %v93
  %v328 = vpop.f32.mrb[0].mxu0
  %v329 = vadd.f32 %v72, %v328
  %v330 = vpop.f32.mrb[0].mxu0
  %v331 = vadd.f32 %v72, %v330
  %v332 = vpop.f32.mrb[0].mxu0
  %v333 = vadd.f32 %v77, %v332
  %v334 = vpop.f32.mrb[0].mxu0
  %v335 = vadd.f32 %v77, %v334
  %336 = vdwg.mxu0
  %337 = vmatprep.subr.bf16.mxu0 %v208
  %338 = vmatpush1.bf16.msra.mxu0 %v207
  %339 = vmatprep.subr.bf16.mxu0 %v212
  %340 = vmatpush1.bf16.msra.mxu0 %v211
  %341 = vmatprep.subr.bf16.mxu0 %v216
  %342 = vmatpush1.bf16.msra.mxu0 %v215
  %343 = vmatprep.subr.bf16.mxu0 %v220
  %344 = vmatpush1.bf16.msra.mxu0 %v219
  %345 = vmatprep.subr.bf16.mxu0 %v224
  %346 = vmatpush1.bf16.msra.mxu0 %v223
  %347 = vmatprep.subr.bf16.mxu0 %v228
  %348 = vmatpush1.bf16.msra.mxu0 %v227
  %349 = vmatprep.subr.bf16.mxu0 %v232
  %350 = vmatpush1.bf16.msra.mxu0 %v231
  %351 = vmatprep.subr.bf16.mxu0 %v236
  %352 = vmatpush1.bf16.msra.mxu0 %v235
  %353 = vmatprep.subr.bf16.mxu0 %v240
  %354 = vmatpush1.bf16.msra.mxu0 %v239
  %355 = vmatprep.subr.bf16.mxu0 0
  %356 = vmatpush1.bf16.msra.mxu0 0
  %357 = vmatprep.subr.bf16.mxu0 0
  %358 = vmatpush1.bf16.msra.mxu0 0
  %359 = vmatprep.subr.bf16.mxu0 0
  %360 = vmatpush1.bf16.msra.mxu0 0
  %361 = vmatprep.subr.bf16.mxu0 0
  %362 = vmatpush1.bf16.msra.mxu0 0
  %363 = vmatprep.subr.bf16.mxu0 0
  %364 = vmatpush1.bf16.msra.mxu0 0
  %365 = vmatprep.subr.bf16.mxu0 0
  %366 = vmatpush1.bf16.msra.mxu0 0
  %367 = vmatprep.subr.bf16.mxu0 0
  %368 = vmatpush1.bf16.msra.mxu0 0
  %369 = vmatprep.mubr.bf16.mxu0 %v279
  %370 = vmatmul.mubr.bf16.gmra.mrb[0].mxu0 %v91
  %v371 = vpop.f32.mrb[0].mxu0
  %v372 = vadd.f32 %v62, %v371
  %v373 = vpop.f32.mrb[0].mxu0
  %v374 = vadd.f32 %v62, %v373
  %v375 = vpop.f32.mrb[0].mxu0
  %v376 = vadd.f32 %v67, %v375
  %v377 = vpop.f32.mrb[0].mxu0
  %v378 = vadd.f32 %v67, %v377
  %379 = vmatprep.mubr.bf16.mxu0 %v282
  %380 = vmatmul.mubr.bf16.gmra.mrb[0].mxu0 %v93
  %v381 = vpop.f32.mrb[0].mxu0
  %v382 = vadd.f32 %v72, %v381
  %v383 = vpop.f32.mrb[0].mxu0
  %v384 = vadd.f32 %v72, %v383
  %v385 = vpop.f32.mrb[0].mxu0
  %v386 = vadd.f32 %v77, %v385
  %v387 = vpop.f32.mrb[0].mxu0
  %v388 = vadd.f32 %v77, %v387
  %389 = vdwg.mxu0
  %vm390 = vcmp.ge.f32.partialorder %v319, 0.0
  %vm391 = vcmp.ge.f32.partialorder %v321, 0.0
  %vm392 = vcmp.ge.f32.partialorder %v372, 0.0
  %vm393 = vcmp.ge.f32.partialorder %v374, 0.0
  %vm394 = vcmp.ge.f32.partialorder %v323, 0.0
  %vm395 = vcmp.ge.f32.partialorder %v325, 0.0
  %vm396 = vcmp.ge.f32.partialorder %v376, 0.0
  %vm397 = vcmp.ge.f32.partialorder %v378, 0.0
  %vm398 = vcmp.ge.f32.partialorder %v329, 0.0
  %vm399 = vcmp.ge.f32.partialorder %v331, 0.0
  %vm400 = vcmp.ge.f32.partialorder %v382, 0.0
  %vm401 = vcmp.ge.f32.partialorder %v384, 0.0
  %vm402 = vcmp.ge.f32.partialorder %v333, 0.0
  %vm403 = vcmp.ge.f32.partialorder %v335, 0.0
  %vm404 = vcmp.ge.f32.partialorder %v386, 0.0
  %vm405 = vcmp.ge.f32.partialorder %v388, 0.0
  %v406 = vmul.f32 %v319, 0.1
  %v407 = vmul.f32 %v321, 0.1
  %v408 = vmul.f32 %v372, 0.1
  %v409 = vmul.f32 %v374, 0.1
  %v410 = vmul.f32 %v323, 0.1
  %v411 = vmul.f32 %v325, 0.1
  %v412 = vmul.f32 %v376, 0.1
  %v413 = vmul.f32 %v378, 0.1
  %v414 = vmul.f32 %v329, 0.1
  %v415 = vmul.f32 %v331, 0.1
  %v416 = vmul.f32 %v382, 0.1
  %v417 = vmul.f32 %v384, 0.1
  %v418 = vmul.f32 %v333, 0.1
  %v419 = vmul.f32 %v335, 0.1
  %v420 = vmul.f32 %v386, 0.1
  %v421 = vmul.f32 %v388, 0.1
  %v422 = vsel %vm390, %v319, %v406
  %v423 = vsel %vm391, %v321, %v407
  %v424 = vsel %vm392, %v372, %v408
  %v425 = vsel %vm393, %v374, %v409
  %v426 = vsel %vm394, %v323, %v410
  %v427 = vsel %vm395, %v325, %v411
  %v428 = vsel %vm396, %v376, %v412
  %v429 = vsel %vm397, %v378, %v413
  %v430 = vsel %vm398, %v329, %v414
  %v431 = vsel %vm399, %v331, %v415
  %v432 = vsel %vm400, %v382, %v416
  %v433 = vsel %vm401, %v384, %v417
  %v434 = vsel %vm402, %v333, %v418
  %v435 = vsel %vm403, %v335, %v419
  %v436 = vsel %vm404, %v386, %v420
  %v437 = vsel %vm405, %v388, %v421
  %v438 = vpack.c.bf16 %v426, %v422
  %v439 = vpack.c.bf16 %v427, %v423
  %v440 = vpack.c.bf16 %v428, %v424
  %v441 = vpack.c.bf16 %v429, %v425
  %v442 = vpack.c.bf16 %v434, %v430
  %v443 = vpack.c.bf16 %v435, %v431
  %v444 = vpack.c.bf16 %v436, %v432
  %v445 = vpack.c.bf16 %v437, %v433
  %v454 = vunpack.c.l.b16 %v438
  %v455 = vunpack.c.l.b16 %v439
  %v456 = vunpack.c.l.b16 %v440
  %v457 = vunpack.c.l.b16 %v441
  %v458 = vunpack.c.h.b16 %v438
  %v459 = vunpack.c.h.b16 %v439
  %v460 = vunpack.c.h.b16 %v440
  %v461 = vunpack.c.h.b16 %v441
  %v462 = vunpack.c.l.b16 %v442
  %v463 = vunpack.c.l.b16 %v443
  %v464 = vunpack.c.l.b16 %v444
  %v465 = vunpack.c.l.b16 %v445
  %v466 = vunpack.c.h.b16 %v442
  %v467 = vunpack.c.h.b16 %v443
  %v468 = vunpack.c.h.b16 %v444
  %v469 = vunpack.c.h.b16 %v445
  %v470 = vpack.c.b16 %v455, %v454
  %v471 = vpack.c.b16 %v457, %v456
  %v472 = vpack.c.b16 %v459, %v458
  %v473 = vpack.c.b16 %v461, %v460
  %v474 = vpack.c.b16 %v463, %v462
  %v475 = vpack.c.b16 %v465, %v464
  %v476 = vpack.c.b16 %v467, %v466
  %v477 = vpack.c.b16 %v469, %v468
  %486 = vst [vmem:[%s3] sm:$0xff] %v470
  %vm487 = vcmask 1043456
  %vm488 = vcmask 64516
  %vm489 = vmor %vm488, %vm487
  %490 = vst.msk [vmem:[%s3 + $0x8] sm:$0xff] %vm489, %v471
  %491 = vst [vmem:[%s3 + $0x10] sm:$0xff] %v472
  %492 = vst.msk [vmem:[%s3 + $0x18] sm:$0xff] %vm489, %v473
  %493 = vst [vmem:[%s3 + $0x20] sm:$0xff] %v474
  %494 = vst.msk [vmem:[%s3 + $0x28] sm:$0xff] %vm489, %v475
  %495 = vst [vmem:[%s3 + $0x30] sm:$0xff] %v476
  %496 = vst.msk [vmem:[%s3 + $0x38] sm:$0xff] %vm489, %v477
  // Predicated region
  $region14: #{critic_forward.5} parent=0 // pred_check
    _
  $region15: #{critic_forward.5} parent=0 // pred_check_branch
    %498 = sbr.rel (0) target = $region17
  $region16: #{critic_forward.5} parent=0 // pred_region
    _
  $region17: #{critic_forward.5} parent=0 // pred_fallthru
    _
  // Predicated region
  $region18: #{critic_forward.5} parent=0 // pred_check
    _
  $region19: #{critic_forward.5} parent=0 // pred_check_branch
    %500 = sbr.rel (0) target = $region21
  $region20: #{critic_forward.5} parent=0 // pred_region
    _
  $region21: #{critic_forward.5} parent=0 // pred_fallthru
    _

// kernel: critic_forward.6
$region0: #{critic_forward.6}
  #allocation0 [shape = 'u32[]', space=smem, size = 0x4, offset = 0x4, fixed_abs, tag = 'smem constant byte address 0x4 - core index']
  #allocation1 [shape = 'u32[144,128]{1,0:T(1,128)}', space=vmem, size = 0x12000, scoped, tag = 'internal scratch']
  %s0 = inlined_call_operand.vmem [shape: bf16[64,288], index: 0, kind: input, shape index: {}]
  %s1 = inlined_call_operand.vmem [shape: bf16[288,288], index: 1, kind: input, shape index: {}]
  %s2 = inlined_call_operand.vmem [shape: f32[64,1], index: 2, kind: input, shape index: {}]
  %s3 = inlined_call_operand.vmem [shape: bf16[64,288], index: 3, kind: output, shape index: {}]
  %s4 = sld [smem:[#allocation0]]
  $region22: #{critic_forward.6} parent=0
    _
  %s6 = ssub.s32 1, %s4
  %s7 = scalar_select 0, %s6, %s4
  // Predicated region
  $region2: #{critic_forward.6} parent=0 // pred_check
    _
  $region3: #{critic_forward.6} parent=0 // pred_check_branch
    %9 = sbr.rel (0) target = $region5
  $region4: #{critic_forward.6} parent=0 // pred_region
    _
  $region5: #{critic_forward.6} parent=0 // pred_fallthru
    _
  // Predicated region
  $region6: #{critic_forward.6} parent=0 // pred_check
    _
  $region7: #{critic_forward.6} parent=0 // pred_check_branch
    %11 = sbr.rel (0) target = $region9
  $region8: #{critic_forward.6} parent=0 // pred_region
    _
  $region9: #{critic_forward.6} parent=0 // pred_fallthru
    _
  // Predicated region
  $region10: #{critic_forward.6} parent=0 // pred_check
    _
  $region11: #{critic_forward.6} parent=0 // pred_check_branch
    %13 = sbr.rel (0) target = $region13
  $region12: #{critic_forward.6} parent=0 // pred_region
    _
  $region13: #{critic_forward.6} parent=0 // pred_fallthru
    _
  %v15 = vld [vmem:[%s0] sm:$0xff]
  %v16 = vld [vmem:[%s0 + $0x8] sm:$0xf]
  %v17 = vld [vmem:[%s0 + $0xc] sm:$0xff]
  %v18 = vld [vmem:[%s0 + $0x14] sm:$0xf]
  %v19 = vld [vmem:[%s0 + $0x18] sm:$0xff]
  %v20 = vld [vmem:[%s0 + $0x20] sm:$0xf]
  %v21 = vld [vmem:[%s0 + $0x24] sm:$0xff]
  %v22 = vld [vmem:[%s0 + $0x2c] sm:$0xf]
  %v23 = vld [vmem:[%s0 + $0x30] sm:$0xff]
  %v24 = vld [vmem:[%s0 + $0x38] sm:$0xf]
  %v25 = vld [vmem:[%s0 + $0x3c] sm:$0xff]
  %v26 = vld [vmem:[%s0 + $0x44] sm:$0xf]
  %v27 = vld [vmem:[%s0 + $0x48] sm:$0xff]
  %v28 = vld [vmem:[%s0 + $0x50] sm:$0xf]
  %v29 = vld [vmem:[%s0 + $0x54] sm:$0xff]
  %v30 = vld [vmem:[%s0 + $0x5c] sm:$0xf]
  %v31 = vld [vmem:[%s1] sm:$0xff]
  %v32 = vld [vmem:[%s1 + $0x8] sm:$0xf]
  %v33 = vld [vmem:[%s1 + $0xc] sm:$0xff]
  %v34 = vld [vmem:[%s1 + $0x14] sm:$0xf]
  %v35 = vld [vmem:[%s1 + $0x18] sm:$0xff]
  %v36 = vld [vmem:[%s1 + $0x20] sm:$0xf]
  %v37 = vld [vmem:[%s1 + $0x24] sm:$0xff]
  %v38 = vld [vmem:[%s1 + $0x2c] sm:$0xf]
  %v39 = vld [vmem:[%s1 + $0x30] sm:$0xff]
  %v40 = vld [vmem:[%s1 + $0x38] sm:$0xf]
  %v41 = vld [vmem:[%s1 + $0x3c] sm:$0xff]
  %v42 = vld [vmem:[%s1 + $0x44] sm:$0xf]
  %v43 = vld [vmem:[%s1 + $0x48] sm:$0xff]
  %v44 = vld [vmem:[%s1 + $0x50] sm:$0xf]
  %v45 = vld [vmem:[%s1 + $0x54] sm:$0xff]
  %v46 = vld [vmem:[%s1 + $0x5c] sm:$0xf]
  %v47 = vld [vmem:[%s1 + $0x60] sm:$0xff]
  %v48 = vld [vmem:[%s1 + $0x68] sm:$0xf]
  %v49 = vld [vmem:[%s1 + $0x6c] sm:$0xff]
  %v50 = vld [vmem:[%s1 + $0x74] sm:$0xf]
  %v51 = vld [vmem:[%s1 + $0x78] sm:$0xff]
  %v52 = vld [vmem:[%s1 + $0x80] sm:$0xf]
  %v53 = vld [vmem:[%s1 + $0x84] sm:$0xff]
  %v54 = vld [vmem:[%s1 + $0x8c] sm:$0xf]
  %v55 = vld [vmem:[%s1 + $0x90] sm:$0xff]
  %v56 = vld [vmem:[%s1 + $0x98] sm:$0xf]
  %v57 = vld [vmem:[%s1 + $0x9c] sm:$0xff]
  %v58 = vld [vmem:[%s1 + $0xa4] sm:$0xf]
  %v59 = vld [vmem:[%s1 + $0xa8] sm:$0xff]
  %v60 = vld [vmem:[%s1 + $0xb0] sm:$0xf]
  %v61 = vld [vmem:[%s1 + $0xb4] sm:$0xff]
  %v62 = vld [vmem:[%s1 + $0xbc] sm:$0xf]
  %v63 = vld [vmem:[%s1 + $0xc0] sm:$0xff]
  %v64 = vld [vmem:[%s1 + $0xc8] sm:$0xf]
  %v65 = vld [vmem:[%s1 + $0xcc] sm:$0xff]
  %v66 = vld [vmem:[%s1 + $0xd4] sm:$0xf]
  %v67 = vld [vmem:[%s1 + $0xd8] sm:$0xff]
  %v68 = vld [vmem:[%s1 + $0xe0] sm:$0xf]
  %v69 = vld [vmem:[%s1 + $0xe4] sm:$0xff]
  %v70 = vld [vmem:[%s1 + $0xec] sm:$0xf]
  %v71 = vld [vmem:[%s1 + $0xf0] sm:$0xff]
  %v72 = vld [vmem:[%s1 + $0xf8] sm:$0xf]
  %v73 = vld [vmem:[%s1 + $0xfc] sm:$0xff]
  %v74 = vld [vmem:[%s1 + $0x104] sm:$0xf]
  %v75 = vld [vmem:[%s1 + $0x108] sm:$0xff]
  %v76 = vld [vmem:[%s1 + $0x110] sm:$0xf]
  %v77 = vld [vmem:[%s1 + $0x114] sm:$0xff]
  %v78 = vld [vmem:[%s1 + $0x11c] sm:$0xf]
  %v79 = vld [vmem:[%s1 + $0x120] sm:$0xff]
  %v80 = vld [vmem:[%s1 + $0x128] sm:$0xf]
  %v81 = vld [vmem:[%s1 + $0x12c] sm:$0xff]
  %v82 = vld [vmem:[%s1 + $0x134] sm:$0xf]
  %v83 = vld [vmem:[%s1 + $0x138] sm:$0xff]
  %v84 = vld [vmem:[%s1 + $0x140] sm:$0xf]
  %v85 = vld [vmem:[%s1 + $0x144] sm:$0xff]
  %v86 = vld [vmem:[%s1 + $0x14c] sm:$0xf]
  %v87 = vld [vmem:[%s1 + $0x150] sm:$0xff]
  %v88 = vld [vmem:[%s1 + $0x158] sm:$0xf]
  %v89 = vld [vmem:[%s1 + $0x15c] sm:$0xff]
  %v90 = vld [vmem:[%s1 + $0x164] sm:$0xf]
  %v91 = vld [vmem:[%s1 + $0x168] sm:$0xff]
  %v92 = vld [vmem:[%s1 + $0x170] sm:$0xf]
  %v93 = vld [vmem:[%s1 + $0x174] sm:$0xff]
  %v94 = vld [vmem:[%s1 + $0x17c] sm:$0xf]
  %v95 = vld [vmem:[%s1 + $0x180] sm:$0xff]
  %v96 = vld [vmem:[%s1 + $0x188] sm:$0xf]
  %v97 = vld [vmem:[%s1 + $0x18c] sm:$0xff]
  %v98 = vld [vmem:[%s1 + $0x194] sm:$0xf]
  %v99 = vld [vmem:[%s1 + $0x198] sm:$0xff]
  %v100 = vld [vmem:[%s1 + $0x1a0] sm:$0xf]
  %v101 = vld [vmem:[%s1 + $0x1a4] sm:$0xff]
  %v102 = vld [vmem:[%s1 + $0x1ac] sm:$0xf]
  %v103 = vld [vmem:[%s2] sm:$0xff]
  %v104 = vld [vmem:[%s2 + $0x8] sm:$0xff]
  %v105 = vld [vmem:[%s2 + $0x10] sm:$0xff]
  %v106 = vld [vmem:[%s2 + $0x18] sm:$0xff]
  %v107 = vld [vmem:[%s2 + $0x20] sm:$0xff]
  %v108 = vld [vmem:[%s2 + $0x28] sm:$0xff]
  %v109 = vld [vmem:[%s2 + $0x30] sm:$0xff]
  %v110 = vld [vmem:[%s2 + $0x38] sm:$0xff]
  %112 = vset.pattern.permute.xlu0 0
  %113 = vperm.xlu0 %112, %v103
  %v114 = vpop.permute.xlu0 %113
  %117 = vset.pattern.permute.xlu0 0
  %118 = vperm.xlu0 %117, %v104
  %v119 = vpop.permute.xlu0 %118
  %122 = vset.pattern.permute.xlu0 0
  %123 = vperm.xlu0 %122, %v105
  %v124 = vpop.permute.xlu0 %123
  %127 = vset.pattern.permute.xlu0 0
  %128 = vperm.xlu0 %127, %v106
  %v129 = vpop.permute.xlu0 %128
  %132 = vset.pattern.permute.xlu0 0
  %133 = vperm.xlu0 %132, %v107
  %v134 = vpop.permute.xlu0 %133
  %137 = vset.pattern.permute.xlu0 0
  %138 = vperm.xlu0 %137, %v108
  %v139 = vpop.permute.xlu0 %138
  %142 = vset.pattern.permute.xlu0 0
  %143 = vperm.xlu0 %142, %v109
  %v144 = vpop.permute.xlu0 %143
  %147 = vset.pattern.permute.xlu0 0
  %148 = vperm.xlu0 %147, %v110
  %v149 = vpop.permute.xlu0 %148
  %v167 = vunpack.c.l.b16 %v15
  %v168 = vunpack.c.h.b16 %v15
  %v169 = vunpack.c.l.b16 %v16
  %v170 = vunpack.c.l.b16 %v17
  %v171 = vunpack.c.h.b16 %v17
  %v172 = vunpack.c.l.b16 %v18
  %v173 = vunpack.c.l.b16 %v19
  %v174 = vunpack.c.h.b16 %v19
  %v175 = vunpack.c.l.b16 %v20
  %v176 = vunpack.c.l.b16 %v21
  %v177 = vunpack.c.h.b16 %v21
  %v178 = vunpack.c.l.b16 %v22
  %v179 = vunpack.c.l.b16 %v23
  %v180 = vunpack.c.h.b16 %v23
  %v181 = vunpack.c.l.b16 %v24
  %v182 = vunpack.c.l.b16 %v25
  %v183 = vunpack.c.h.b16 %v25
  %v184 = vunpack.c.l.b16 %v26
  %v185 = vunpack.c.l.b16 %v27
  %v186 = vunpack.c.h.b16 %v27
  %v187 = vunpack.c.l.b16 %v28
  %v188 = vunpack.c.l.b16 %v29
  %v189 = vunpack.c.h.b16 %v29
  %v190 = vunpack.c.l.b16 %v30
  %v191 = vpack.c.b16 %v170, %v167
  %v192 = vpack.c.b16 %v171, %v168
  %v193 = vpack.c.b16 %v172, %v169
  %v194 = vpack.c.b16 %v176, %v173
  %v195 = vpack.c.b16 %v177, %v174
  %v196 = vpack.c.b16 %v178, %v175
  %v197 = vpack.c.b16 %v182, %v179
  %v198 = vpack.c.b16 %v183, %v180
  %v199 = vpack.c.b16 %v184, %v181
  %v200 = vpack.c.b16 %v188, %v185
  %v201 = vpack.c.b16 %v189, %v186
  %v202 = vpack.c.b16 %v190, %v187
  %v283 = vunpack.c.l.b16 %v31
  %v284 = vunpack.c.h.b16 %v31
  %v285 = vunpack.c.l.b16 %v32
  %v286 = vunpack.c.l.b16 %v33
  %v287 = vunpack.c.h.b16 %v33
  %v288 = vunpack.c.l.b16 %v34
  %v289 = vunpack.c.l.b16 %v35
  %v290 = vunpack.c.h.b16 %v35
  %v291 = vunpack.c.l.b16 %v36
  %v292 = vunpack.c.l.b16 %v37
  %v293 = vunpack.c.h.b16 %v37
  %v294 = vunpack.c.l.b16 %v38
  %v295 = vunpack.c.l.b16 %v39
  %v296 = vunpack.c.h.b16 %v39
  %v297 = vunpack.c.l.b16 %v40
  %v298 = vunpack.c.l.b16 %v41
  %v299 = vunpack.c.h.b16 %v41
  %v300 = vunpack.c.l.b16 %v42
  %v301 = vunpack.c.l.b16 %v43
  %v302 = vunpack.c.h.b16 %v43
  %v303 = vunpack.c.l.b16 %v44
  %v304 = vunpack.c.l.b16 %v45
  %v305 = vunpack.c.h.b16 %v45
  %v306 = vunpack.c.l.b16 %v46
  %v307 = vunpack.c.l.b16 %v47
  %v308 = vunpack.c.h.b16 %v47
  %v309 = vunpack.c.l.b16 %v48
  %v310 = vunpack.c.l.b16 %v49
  %v311 = vunpack.c.h.b16 %v49
  %v312 = vunpack.c.l.b16 %v50
  %v313 = vunpack.c.l.b16 %v51
  %v314 = vunpack.c.h.b16 %v51
  %v315 = vunpack.c.l.b16 %v52
  %v316 = vunpack.c.l.b16 %v53
  %v317 = vunpack.c.h.b16 %v53
  %v318 = vunpack.c.l.b16 %v54
  %v319 = vunpack.c.l.b16 %v55
  %v320 = vunpack.c.h.b16 %v55
  %v321 = vunpack.c.l.b16 %v56
  %v322 = vunpack.c.l.b16 %v57
  %v323 = vunpack.c.h.b16 %v57
  %v324 = vunpack.c.l.b16 %v58
  %v325 = vunpack.c.l.b16 %v59
  %v326 = vunpack.c.h.b16 %v59
  %v327 = vunpack.c.l.b16 %v60
  %v328 = vunpack.c.l.b16 %v61
  %v329 = vunpack.c.h.b16 %v61
  %v330 = vunpack.c.l.b16 %v62
  %v331 = vunpack.c.l.b16 %v63
  %v332 = vunpack.c.h.b16 %v63
  %v333 = vunpack.c.l.b16 %v64
  %v334 = vunpack.c.l.b16 %v65
  %v335 = vunpack.c.h.b16 %v65
  %v336 = vunpack.c.l.b16 %v66
  %v337 = vunpack.c.l.b16 %v67
  %v338 = vunpack.c.h.b16 %v67
  %v339 = vunpack.c.l.b16 %v68
  %v340 = vunpack.c.l.b16 %v69
  %v341 = vunpack.c.h.b16 %v69
  %v342 = vunpack.c.l.b16 %v70
  %v343 = vunpack.c.l.b16 %v71
  %v344 = vunpack.c.h.b16 %v71
  %v345 = vunpack.c.l.b16 %v72
  %v346 = vunpack.c.l.b16 %v73
  %v347 = vunpack.c.h.b16 %v73
  %v348 = vunpack.c.l.b16 %v74
  %v349 = vunpack.c.l.b16 %v75
  %v350 = vunpack.c.h.b16 %v75
  %v351 = vunpack.c.l.b16 %v76
  %v352 = vunpack.c.l.b16 %v77
  %v353 = vunpack.c.h.b16 %v77
  %v354 = vunpack.c.l.b16 %v78
  %v355 = vunpack.c.l.b16 %v79
  %v356 = vunpack.c.h.b16 %v79
  %v357 = vunpack.c.l.b16 %v80
  %v358 = vunpack.c.l.b16 %v81
  %v359 = vunpack.c.h.b16 %v81
  %v360 = vunpack.c.l.b16 %v82
  %v361 = vunpack.c.l.b16 %v83
  %v362 = vunpack.c.h.b16 %v83
  %v363 = vunpack.c.l.b16 %v84
  %v364 = vunpack.c.l.b16 %v85
  %v365 = vunpack.c.h.b16 %v85
  %v366 = vunpack.c.l.b16 %v86
  %v367 = vunpack.c.l.b16 %v87
  %v368 = vunpack.c.h.b16 %v87
  %v369 = vunpack.c.l.b16 %v88
  %v370 = vunpack.c.l.b16 %v89
  %v371 = vunpack.c.h.b16 %v89
  %v372 = vunpack.c.l.b16 %v90
  %v373 = vunpack.c.l.b16 %v91
  %v374 = vunpack.c.h.b16 %v91
  %v375 = vunpack.c.l.b16 %v92
  %v376 = vunpack.c.l.b16 %v93
  %v377 = vunpack.c.h.b16 %v93
  %v378 = vunpack.c.l.b16 %v94
  %v379 = vunpack.c.l.b16 %v95
  %v380 = vunpack.c.h.b16 %v95
  %v381 = vunpack.c.l.b16 %v96
  %v382 = vunpack.c.l.b16 %v97
  %v383 = vunpack.c.h.b16 %v97
  %v384 = vunpack.c.l.b16 %v98
  %v385 = vunpack.c.l.b16 %v99
  %v386 = vunpack.c.h.b16 %v99
  %v387 = vunpack.c.l.b16 %v100
  %v388 = vunpack.c.l.b16 %v101
  %v389 = vunpack.c.h.b16 %v101
  %v390 = vunpack.c.l.b16 %v102
  %v391 = vpack.c.b16 %v286, %v283
  %v392 = vpack.c.b16 %v287, %v284
  %v393 = vpack.c.b16 %v288, %v285
  %v394 = vpack.c.b16 %v292, %v289
  %v395 = vpack.c.b16 %v293, %v290
  %v396 = vpack.c.b16 %v294, %v291
  %v397 = vpack.c.b16 %v298, %v295
  %v398 = vpack.c.b16 %v299, %v296
  %v399 = vpack.c.b16 %v300, %v297
  %v400 = vpack.c.b16 %v304, %v301
  %v401 = vpack.c.b16 %v305, %v302
  %v402 = vpack.c.b16 %v306, %v303
  %v403 = vpack.c.b16 %v310, %v307
  %v404 = vpack.c.b16 %v311, %v308
  %v405 = vpack.c.b16 %v312, %v309
  %v406 = vpack.c.b16 %v316, %v313
  %v407 = vpack.c.b16 %v317, %v314
  %v408 = vpack.c.b16 %v318, %v315
  %v409 = vpack.c.b16 %v322, %v319
  %v410 = vpack.c.b16 %v323, %v320
  %v411 = vpack.c.b16 %v324, %v321
  %v412 = vpack.c.b16 %v328, %v325
  %v413 = vpack.c.b16 %v329, %v326
  %v414 = vpack.c.b16 %v330, %v327
  %v415 = vpack.c.b16 %v334, %v331
  %v416 = vpack.c.b16 %v335, %v332
  %v417 = vpack.c.b16 %v336, %v333
  %v418 = vpack.c.b16 %v340, %v337
  %v419 = vpack.c.b16 %v341, %v338
  %v420 = vpack.c.b16 %v342, %v339
  %v421 = vpack.c.b16 %v346, %v343
  %v422 = vpack.c.b16 %v347, %v344
  %v423 = vpack.c.b16 %v348, %v345
  %v424 = vpack.c.b16 %v352, %v349
  %v425 = vpack.c.b16 %v353, %v350
  %v426 = vpack.c.b16 %v354, %v351
  %v427 = vpack.c.b16 %v358, %v355
  %v428 = vpack.c.b16 %v359, %v356
  %v429 = vpack.c.b16 %v360, %v357
  %v430 = vpack.c.b16 %v364, %v361
  %v431 = vpack.c.b16 %v365, %v362
  %v432 = vpack.c.b16 %v366, %v363
  %v433 = vpack.c.b16 %v370, %v367
  %v434 = vpack.c.b16 %v371, %v368
  %v435 = vpack.c.b16 %v372, %v369
  %v436 = vpack.c.b16 %v376, %v373
  %v437 = vpack.c.b16 %v377, %v374
  %v438 = vpack.c.b16 %v378, %v375
  %v439 = vpack.c.b16 %v382, %v379
  %v440 = vpack.c.b16 %v383, %v380
  %v441 = vpack.c.b16 %v384, %v381
  %v442 = vpack.c.b16 %v388, %v385
  %v443 = vpack.c.b16 %v389, %v386
  %v444 = vpack.c.b16 %v390, %v387
  %vm499 = vcmask 261120
  %v501 = vsel %vm499, %v193, 0
  %v504 = vsel %vm499, %v196, 0
  %v507 = vsel %vm499, %v199, 0
  %v510 = vsel %vm499, %v202, 0
  %512 = vmatprep.subr.bf16.mxu0 %v392
  %513 = vmatpush1.bf16.msra.mxu0 %v391
  %514 = vmatprep.subr.bf16.mxu0 %v395
  %515 = vmatpush1.bf16.msra.mxu0 %v394
  %516 = vmatprep.subr.bf16.mxu0 %v398
  %517 = vmatpush1.bf16.msra.mxu0 %v397
  %518 = vmatprep.subr.bf16.mxu0 %v401
  %519 = vmatpush1.bf16.msra.mxu0 %v400
  %520 = vmatprep.subr.bf16.mxu0 %v404
  %521 = vmatpush1.bf16.msra.mxu0 %v403
  %522 = vmatprep.subr.bf16.mxu0 %v407
  %523 = vmatpush1.bf16.msra.mxu0 %v406
  %524 = vmatprep.subr.bf16.mxu0 %v410
  %525 = vmatpush1.bf16.msra.mxu0 %v409
  %526 = vmatprep.subr.bf16.mxu0 %v413
  %527 = vmatpush1.bf16.msra.mxu0 %v412
  %528 = vmatprep.subr.bf16.mxu0 %v416
  %529 = vmatpush1.bf16.msra.mxu0 %v415
  %530 = vmatprep.subr.bf16.mxu0 %v419
  %531 = vmatpush1.bf16.msra.mxu0 %v418
  %532 = vmatprep.subr.bf16.mxu0 %v422
  %533 = vmatpush1.bf16.msra.mxu0 %v421
  %534 = vmatprep.subr.bf16.mxu0 %v425
  %535 = vmatpush1.bf16.msra.mxu0 %v424
  %536 = vmatprep.subr.bf16.mxu0 %v428
  %537 = vmatpush1.bf16.msra.mxu0 %v427
  %538 = vmatprep.subr.bf16.mxu0 %v431
  %539 = vmatpush1.bf16.msra.mxu0 %v430
  %540 = vmatprep.subr.bf16.mxu0 %v434
  %541 = vmatpush1.bf16.msra.mxu0 %v433
  %542 = vmatprep.subr.bf16.mxu0 %v437
  %543 = vmatpush1.bf16.msra.mxu0 %v436
  %544 = vmatprep.mubr.bf16.mxu0 %v192
  %545 = vmatmul.mubr.bf16.gmra.mrb[0].mxu0 %v191
  %v546 = vpop.f32.mrb[0].mxu0
  %v547 = vadd.f32 %v114, %v546
  %v548 = vpop.f32.mrb[0].mxu0
  %v549 = vadd.f32 %v114, %v548
  %v550 = vpop.f32.mrb[0].mxu0
  %v551 = vadd.f32 %v119, %v550
  %v552 = vpop.f32.mrb[0].mxu0
  %v553 = vadd.f32 %v119, %v552
  %554 = vmatprep.mubr.bf16.mxu0 %v195
  %555 = vmatmul.mubr.bf16.gmra.mrb[0].mxu0 %v194
  %v556 = vpop.f32.mrb[0].mxu0
  %v557 = vadd.f32 %v124, %v556
  %v558 = vpop.f32.mrb[0].mxu0
  %v559 = vadd.f32 %v124, %v558
  %v560 = vpop.f32.mrb[0].mxu0
  %v561 = vadd.f32 %v129, %v560
  %v562 = vpop.f32.mrb[0].mxu0
  %v563 = vadd.f32 %v129, %v562
  %564 = vmatprep.mubr.bf16.mxu0 %v198
  %565 = vmatmul.mubr.bf16.gmra.mrb[0].mxu0 %v197
  %v566 = vpop.f32.mrb[0].mxu0
  %v567 = vadd.f32 %v134, %v566
  %v568 = vpop.f32.mrb[0].mxu0
  %v569 = vadd.f32 %v134, %v568
  %v570 = vpop.f32.mrb[0].mxu0
  %v571 = vadd.f32 %v139, %v570
  %v572 = vpop.f32.mrb[0].mxu0
  %v573 = vadd.f32 %v139, %v572
  %574 = vmatprep.mubr.bf16.mxu0 %v201
  %575 = vmatmul.mubr.bf16.gmra.mrb[0].mxu0 %v200
  %v576 = vpop.f32.mrb[0].mxu0
  %v577 = vadd.f32 %v144, %v576
  %v578 = vpop.f32.mrb[0].mxu0
  %v579 = vadd.f32 %v144, %v578
  %v580 = vpop.f32.mrb[0].mxu0
  %v581 = vadd.f32 %v149, %v580
  %v582 = vpop.f32.mrb[0].mxu0
  %v583 = vadd.f32 %v149, %v582
  %584 = vdwg.mxu0
  %585 = vmatprep.subr.bf16.mxu0 %v440
  %586 = vmatpush1.bf16.msra.mxu0 %v439
  %587 = vmatprep.subr.bf16.mxu0 %v443
  %588 = vmatpush1.bf16.msra.mxu0 %v442
  %589 = vmatprep.subr.bf16.mxu0 0
  %590 = vmatpush1.bf16.msra.mxu0 0
  %591 = vmatprep.subr.bf16.mxu0 0
  %592 = vmatpush1.bf16.msra.mxu0 0
  %593 = vmatprep.subr.bf16.mxu0 0
  %594 = vmatpush1.bf16.msra.mxu0 0
  %595 = vmatprep.subr.bf16.mxu0 0
  %596 = vmatpush1.bf16.msra.mxu0 0
  %597 = vmatprep.subr.bf16.mxu0 0
  %598 = vmatpush1.bf16.msra.mxu0 0
  %599 = vmatprep.subr.bf16.mxu0 0
  %600 = vmatpush1.bf16.msra.mxu0 0
  %601 = vmatprep.subr.bf16.mxu0 0
  %602 = vmatpush1.bf16.msra.mxu0 0
  %603 = vmatprep.subr.bf16.mxu0 0
  %604 = vmatpush1.bf16.msra.mxu0 0
  %605 = vmatprep.subr.bf16.mxu0 0
  %606 = vmatpush1.bf16.msra.mxu0 0
  %607 = vmatprep.subr.bf16.mxu0 0
  %608 = vmatpush1.bf16.msra.mxu0 0
  %609 = vmatprep.subr.bf16.mxu0 0
  %610 = vmatpush1.bf16.msra.mxu0 0
  %611 = vmatprep.subr.bf16.mxu0 0
  %612 = vmatpush1.bf16.msra.mxu0 0
  %613 = vmatprep.subr.bf16.mxu0 0
  %614 = vmatpush1.bf16.msra.mxu0 0
  %615 = vmatprep.subr.bf16.mxu0 0
  %616 = vmatpush1.bf16.msra.mxu0 0
  %617 = vmatprep.mubr.bf16.mxu0 0
  %618 = vmatmul.mubr.bf16.gmra.mrb[0].mxu0 %v501
  %v619 = vpop.f32.mrb[0].mxu0
  %v620 = vadd.f32 %v547, %v619
  %v621 = vpop.f32.mrb[0].mxu0
  %v622 = vadd.f32 %v549, %v621
  %v623 = vpop.f32.mrb[0].mxu0
  %v624 = vadd.f32 %v551, %v623
  %v625 = vpop.f32.mrb[0].mxu0
  %v626 = vadd.f32 %v553, %v625
  %627 = vmatprep.mubr.bf16.mxu0 0
  %628 = vmatmul.mubr.bf16.gmra.mrb[0].mxu0 %v504
  %v629 = vpop.f32.mrb[0].mxu0
  %v630 = vadd.f32 %v557, %v629
  %v631 = vpop.f32.mrb[0].mxu0
  %v632 = vadd.f32 %v559, %v631
  %v633 = vpop.f32.mrb[0].mxu0
  %v634 = vadd.f32 %v561, %v633
  %v635 = vpop.f32.mrb[0].mxu0
  %v636 = vadd.f32 %v563, %v635
  %637 = vmatprep.mubr.bf16.mxu0 0
  %638 = vmatmul.mubr.bf16.gmra.mrb[0].mxu0 %v507
  %v639 = vpop.f32.mrb[0].mxu0
  %v640 = vadd.f32 %v567, %v639
  %v641 = vpop.f32.mrb[0].mxu0
  %v642 = vadd.f32 %v569, %v641
  %v643 = vpop.f32.mrb[0].mxu0
  %v644 = vadd.f32 %v571, %v643
  %v645 = vpop.f32.mrb[0].mxu0
  %v646 = vadd.f32 %v573, %v645
  %647 = vmatprep.mubr.bf16.mxu0 0
  %648 = vmatmul.mubr.bf16.gmra.mrb[0].mxu0 %v510
  %v649 = vpop.f32.mrb[0].mxu0
  %v650 = vadd.f32 %v577, %v649
  %v651 = vpop.f32.mrb[0].mxu0
  %v652 = vadd.f32 %v579, %v651
  %v653 = vpop.f32.mrb[0].mxu0
  %v654 = vadd.f32 %v581, %v653
  %v655 = vpop.f32.mrb[0].mxu0
  %v656 = vadd.f32 %v583, %v655
  %657 = vdwg.mxu0
  %658 = vmatprep.subr.bf16.mxu0 0
  %659 = vmatpush1.bf16.msra.mxu0 %v393
  %660 = vmatprep.subr.bf16.mxu0 0
  %661 = vmatpush1.bf16.msra.mxu0 %v396
  %662 = vmatprep.subr.bf16.mxu0 0
  %663 = vmatpush1.bf16.msra.mxu0 %v399
  %664 = vmatprep.subr.bf16.mxu0 0
  %665 = vmatpush1.bf16.msra.mxu0 %v402
  %666 = vmatprep.subr.bf16.mxu0 0
  %667 = vmatpush1.bf16.msra.mxu0 %v405
  %668 = vmatprep.subr.bf16.mxu0 0
  %669 = vmatpush1.bf16.msra.mxu0 %v408
  %670 = vmatprep.subr.bf16.mxu0 0
  %671 = vmatpush1.bf16.msra.mxu0 %v411
  %672 = vmatprep.subr.bf16.mxu0 0
  %673 = vmatpush1.bf16.msra.mxu0 %v414
  %674 = vmatprep.subr.bf16.mxu0 0
  %675 = vmatpush1.bf16.msra.mxu0 %v417
  %676 = vmatprep.subr.bf16.mxu0 0
  %677 = vmatpush1.bf16.msra.mxu0 %v420
  %678 = vmatprep.subr.bf16.mxu0 0
  %679 = vmatpush1.bf16.msra.mxu0 %v423
  %680 = vmatprep.subr.bf16.mxu0 0
  %681 = vmatpush1.bf16.msra.mxu0 %v426
  %682 = vmatprep.subr.bf16.mxu0 0
  %683 = vmatpush1.bf16.msra.mxu0 %v429
  %684 = vmatprep.subr.bf16.mxu0 0
  %685 = vmatpush1.bf16.msra.mxu0 %v432
  %686 = vmatprep.subr.bf16.mxu0 0
  %687 = vmatpush1.bf16.msra.mxu0 %v435
  %688 = vmatprep.subr.bf16.mxu0 0
  %689 = vmatpush1.bf16.msra.mxu0 %v438
  %690 = vmatprep.mubr.bf16.mxu0 %v192
  %691 = vmatmul.mubr.bf16.gmra.mrb[0].mxu0 %v191
  %v692 = vpop.f32.mrb[0].mxu0
  %v693 = vadd.f32 %v114, %v692
  %v694 = vpop.f32.mrb[0].mxu0
  %v695 = vpop.f32.mrb[0].mxu0
  %v696 = vadd.f32 %v119, %v695
  %v697 = vpop.f32.mrb[0].mxu0
  %698 = vmatprep.mubr.bf16.mxu0 %v195
  %699 = vmatmul.mubr.bf16.gmra.mrb[0].mxu0 %v194
  %v700 = vpop.f32.mrb[0].mxu0
  %v701 = vadd.f32 %v124, %v700
  %v702 = vpop.f32.mrb[0].mxu0
  %v703 = vpop.f32.mrb[0].mxu0
  %v704 = vadd.f32 %v129, %v703
  %v705 = vpop.f32.mrb[0].mxu0
  %706 = vmatprep.mubr.bf16.mxu0 %v198
  %707 = vmatmul.mubr.bf16.gmra.mrb[0].mxu0 %v197
  %v708 = vpop.f32.mrb[0].mxu0
  %v709 = vadd.f32 %v134, %v708
  %v710 = vpop.f32.mrb[0].mxu0
  %v711 = vpop.f32.mrb[0].mxu0
  %v712 = vadd.f32 %v139, %v711
  %v713 = vpop.f32.mrb[0].mxu0
  %714 = vmatprep.mubr.bf16.mxu0 %v201
  %715 = vmatmul.mubr.bf16.gmra.mrb[0].mxu0 %v200
  %v716 = vpop.f32.mrb[0].mxu0
  %v717 = vadd.f32 %v144, %v716
  %v718 = vpop.f32.mrb[0].mxu0
  %v719 = vpop.f32.mrb[0].mxu0
  %v720 = vadd.f32 %v149, %v719
  %v721 = vpop.f32.mrb[0].mxu0
  %722 = vdwg.mxu0
  %723 = vmatprep.subr.bf16.mxu0 0
  %724 = vmatpush1.bf16.msra.mxu0 %v441
  %725 = vmatprep.subr.bf16.mxu0 0
  %726 = vmatpush1.bf16.msra.mxu0 %v444
  %727 = vmatprep.subr.bf16.mxu0 0
  %728 = vmatpush1.bf16.msra.mxu0 0
  %729 = vmatprep.subr.bf16.mxu0 0
  %730 = vmatpush1.bf16.msra.mxu0 0
  %731 = vmatprep.subr.bf16.mxu0 0
  %732 = vmatpush1.bf16.msra.mxu0 0
  %733 = vmatprep.subr.bf16.mxu0 0
  %734 = vmatpush1.bf16.msra.mxu0 0
  %735 = vmatprep.subr.bf16.mxu0 0
  %736 = vmatpush1.bf16.msra.mxu0 0
  %737 = vmatprep.subr.bf16.mxu0 0
  %738 = vmatpush1.bf16.msra.mxu0 0
  %739 = vmatprep.subr.bf16.mxu0 0
  %740 = vmatpush1.bf16.msra.mxu0 0
  %741 = vmatprep.subr.bf16.mxu0 0
  %742 = vmatpush1.bf16.msra.mxu0 0
  %743 = vmatprep.subr.bf16.mxu0 0
  %744 = vmatpush1.bf16.msra.mxu0 0
  %745 = vmatprep.subr.bf16.mxu0 0
  %746 = vmatpush1.bf16.msra.mxu0 0
  %747 = vmatprep.subr.bf16.mxu0 0
  %748 = vmatpush1.bf16.msra.mxu0 0
  %749 = vmatprep.subr.bf16.mxu0 0
  %750 = vmatpush1.bf16.msra.mxu0 0
  %751 = vmatprep.subr.bf16.mxu0 0
  %752 = vmatpush1.bf16.msra.mxu0 0
  %753 = vmatprep.subr.bf16.mxu0 0
  %754 = vmatpush1.bf16.msra.mxu0 0
  %755 = vmatprep.mubr.bf16.mxu0 0
  %756 = vmatmul.mubr.bf16.gmra.mrb[0].mxu0 %v501
  %v757 = vpop.f32.mrb[0].mxu0
  %v758 = vadd.f32 %v693, %v757
  %v759 = vpop.f32.mrb[0].mxu0
  %v760 = vpop.f32.mrb[0].mxu0
  %v761 = vadd.f32 %v696, %v760
  %v762 = vpop.f32.mrb[0].mxu0
  %763 = vmatprep.mubr.bf16.mxu0 0
  %764 = vmatmul.mubr.bf16.gmra.mrb[0].mxu0 %v504
  %v765 = vpop.f32.mrb[0].mxu0
  %v766 = vadd.f32 %v701, %v765
  %v767 = vpop.f32.mrb[0].mxu0
  %v768 = vpop.f32.mrb[0].mxu0
  %v769 = vadd.f32 %v704, %v768
  %v770 = vpop.f32.mrb[0].mxu0
  %771 = vmatprep.mubr.bf16.mxu0 0
  %772 = vmatmul.mubr.bf16.gmra.mrb[0].mxu0 %v507
  %v773 = vpop.f32.mrb[0].mxu0
  %v774 = vadd.f32 %v709, %v773
  %v775 = vpop.f32.mrb[0].mxu0
  %v776 = vpop.f32.mrb[0].mxu0
  %v777 = vadd.f32 %v712, %v776
  %v778 = vpop.f32.mrb[0].mxu0
  %779 = vmatprep.mubr.bf16.mxu0 0
  %780 = vmatmul.mubr.bf16.gmra.mrb[0].mxu0 %v510
  %v781 = vpop.f32.mrb[0].mxu0
  %v782 = vadd.f32 %v717, %v781
  %v783 = vpop.f32.mrb[0].mxu0
  %v784 = vpop.f32.mrb[0].mxu0
  %v785 = vadd.f32 %v720, %v784
  %v786 = vpop.f32.mrb[0].mxu0
  %787 = vdwg.mxu0
  %vm788 = vcmp.ge.f32.partialorder %v620, 0.0
  %vm789 = vcmp.ge.f32.partialorder %v622, 0.0
  %vm790 = vcmp.ge.f32.partialorder %v758, 0.0
  %vm791 = vcmp.ge.f32.partialorder %v624, 0.0
  %vm792 = vcmp.ge.f32.partialorder %v626, 0.0
  %vm793 = vcmp.ge.f32.partialorder %v761, 0.0
  %vm794 = vcmp.ge.f32.partialorder %v630, 0.0
  %vm795 = vcmp.ge.f32.partialorder %v632, 0.0
  %vm796 = vcmp.ge.f32.partialorder %v766, 0.0
  %vm797 = vcmp.ge.f32.partialorder %v634, 0.0
  %vm798 = vcmp.ge.f32.partialorder %v636, 0.0
  %vm799 = vcmp.ge.f32.partialorder %v769, 0.0
  %vm800 = vcmp.ge.f32.partialorder %v640, 0.0
  %vm801 = vcmp.ge.f32.partialorder %v642, 0.0
  %vm802 = vcmp.ge.f32.partialorder %v774, 0.0
  %vm803 = vcmp.ge.f32.partialorder %v644, 0.0
  %vm804 = vcmp.ge.f32.partialorder %v646, 0.0
  %vm805 = vcmp.ge.f32.partialorder %v777, 0.0
  %vm806 = vcmp.ge.f32.partialorder %v650, 0.0
  %vm807 = vcmp.ge.f32.partialorder %v652, 0.0
  %vm808 = vcmp.ge.f32.partialorder %v782, 0.0
  %vm809 = vcmp.ge.f32.partialorder %v654, 0.0
  %vm810 = vcmp.ge.f32.partialorder %v656, 0.0
  %vm811 = vcmp.ge.f32.partialorder %v785, 0.0
  %v812 = vmul.f32 %v620, 0.1
  %v813 = vmul.f32 %v622, 0.1
  %v814 = vmul.f32 %v758, 0.1
  %v815 = vmul.f32 %v624, 0.1
  %v816 = vmul.f32 %v626, 0.1
  %v817 = vmul.f32 %v761, 0.1
  %v818 = vmul.f32 %v630, 0.1
  %v819 = vmul.f32 %v632, 0.1
  %v820 = vmul.f32 %v766, 0.1
  %v821 = vmul.f32 %v634, 0.1
  %v822 = vmul.f32 %v636, 0.1
  %v823 = vmul.f32 %v769, 0.1
  %v824 = vmul.f32 %v640, 0.1
  %v825 = vmul.f32 %v642, 0.1
  %v826 = vmul.f32 %v774, 0.1
  %v827 = vmul.f32 %v644, 0.1
  %v828 = vmul.f32 %v646, 0.1
  %v829 = vmul.f32 %v777, 0.1
  %v830 = vmul.f32 %v650, 0.1
  %v831 = vmul.f32 %v652, 0.1
  %v832 = vmul.f32 %v782, 0.1
  %v833 = vmul.f32 %v654, 0.1
  %v834 = vmul.f32 %v656, 0.1
  %v835 = vmul.f32 %v785, 0.1
  %v836 = vsel %vm788, %v620, %v812
  %v837 = vsel %vm789, %v622, %v813
  %v838 = vsel %vm790, %v758, %v814
  %v839 = vsel %vm791, %v624, %v815
  %v840 = vsel %vm792, %v626, %v816
  %v841 = vsel %vm793, %v761, %v817
  %v842 = vsel %vm794, %v630, %v818
  %v843 = vsel %vm795, %v632, %v819
  %v844 = vsel %vm796, %v766, %v820
  %v845 = vsel %vm797, %v634, %v821
  %v846 = vsel %vm798, %v636, %v822
  %v847 = vsel %vm799, %v769, %v823
  %v848 = vsel %vm800, %v640, %v824
  %v849 = vsel %vm801, %v642, %v825
  %v850 = vsel %vm802, %v774, %v826
  %v851 = vsel %vm803, %v644, %v827
  %v852 = vsel %vm804, %v646, %v828
  %v853 = vsel %vm805, %v777, %v829
  %v854 = vsel %vm806, %v650, %v830
  %v855 = vsel %vm807, %v652, %v831
  %v856 = vsel %vm808, %v782, %v832
  %v857 = vsel %vm809, %v654, %v833
  %v858 = vsel %vm810, %v656, %v834
  %v859 = vsel %vm811, %v785, %v835
  %v860 = vpack.c.bf16 %v839, %v836
  %v861 = vpack.c.bf16 %v840, %v837
  %v862 = vpack.c.bf16 %v841, %v838
  %v863 = vpack.c.bf16 %v845, %v842
  %v864 = vpack.c.bf16 %v846, %v843
  %v865 = vpack.c.bf16 %v847, %v844
  %v866 = vpack.c.bf16 %v851, %v848
  %v867 = vpack.c.bf16 %v852, %v849
  %v868 = vpack.c.bf16 %v853, %v850
  %v869 = vpack.c.bf16 %v857, %v854
  %v870 = vpack.c.bf16 %v858, %v855
  %v871 = vpack.c.bf16 %v859, %v856
  %v884 = vunpack.c.l.b16 %v860
  %v885 = vunpack.c.l.b16 %v861
  %v886 = vunpack.c.l.b16 %v862
  %v887 = vunpack.c.h.b16 %v860
  %v888 = vunpack.c.h.b16 %v861
  %v889 = vunpack.c.h.b16 %v862
  %v890 = vunpack.c.l.b16 %v863
  %v891 = vunpack.c.l.b16 %v864
  %v892 = vunpack.c.l.b16 %v865
  %v893 = vunpack.c.h.b16 %v863
  %v894 = vunpack.c.h.b16 %v864
  %v895 = vunpack.c.h.b16 %v865
  %v896 = vunpack.c.l.b16 %v866
  %v897 = vunpack.c.l.b16 %v867
  %v898 = vunpack.c.l.b16 %v868
  %v899 = vunpack.c.h.b16 %v866
  %v900 = vunpack.c.h.b16 %v867
  %v901 = vunpack.c.h.b16 %v868
  %v902 = vunpack.c.l.b16 %v869
  %v903 = vunpack.c.l.b16 %v870
  %v904 = vunpack.c.l.b16 %v871
  %v905 = vunpack.c.h.b16 %v869
  %v906 = vunpack.c.h.b16 %v870
  %v907 = vunpack.c.h.b16 %v871
  %v908 = vpack.c.b16 %v885, %v884
  %v909 = vpack.c.b16 %v886, %v886
  %v910 = vpack.c.b16 %v888, %v887
  %v911 = vpack.c.b16 %v889, %v889
  %v912 = vpack.c.b16 %v891, %v890
  %v913 = vpack.c.b16 %v892, %v892
  %v914 = vpack.c.b16 %v894, %v893
  %v915 = vpack.c.b16 %v895, %v895
  %v916 = vpack.c.b16 %v897, %v896
  %v917 = vpack.c.b16 %v898, %v898
  %v918 = vpack.c.b16 %v900, %v899
  %v919 = vpack.c.b16 %v901, %v901
  %v920 = vpack.c.b16 %v903, %v902
  %v921 = vpack.c.b16 %v904, %v904
  %v922 = vpack.c.b16 %v906, %v905
  %v923 = vpack.c.b16 %v907, %v907
  %940 = vst [vmem:[%s3] sm:$0xff] %v908
  %vm941 = vcmask 257024
  %942 = vst.msk [vmem:[%s3 + $0x8] sm:$0xf] %vm941, %v909
  %943 = vst [vmem:[%s3 + $0xc] sm:$0xff] %v910
  %944 = vst.msk [vmem:[%s3 + $0x14] sm:$0xf] %vm941, %v911
  %945 = vst [vmem:[%s3 + $0x18] sm:$0xff] %v912
  %946 = vst.msk [vmem:[%s3 + $0x20] sm:$0xf] %vm941, %v913
  %947 = vst [vmem:[%s3 + $0x24] sm:$0xff] %v914
  %948 = vst.msk [vmem:[%s3 + $0x2c] sm:$0xf] %vm941, %v915
  %949 = vst [vmem:[%s3 + $0x30] sm:$0xff] %v916
  %950 = vst.msk [vmem:[%s3 + $0x38] sm:$0xf] %vm941, %v917
  %951 = vst [vmem:[%s3 + $0x3c] sm:$0xff] %v918
  %952 = vst.msk [vmem:[%s3 + $0x44] sm:$0xf] %vm941, %v919
  %953 = vst [vmem:[%s3 + $0x48] sm:$0xff] %v920
  %954 = vst.msk [vmem:[%s3 + $0x50] sm:$0xf] %vm941, %v921
  %955 = vst [vmem:[%s3 + $0x54] sm:$0xff] %v922
  %956 = vst.msk [vmem:[%s3 + $0x5c] sm:$0xf] %vm941, %v923
  // Predicated region
  $region14: #{critic_forward.6} parent=0 // pred_check
    _
  $region15: #{critic_forward.6} parent=0 // pred_check_branch
    %958 = sbr.rel (0) target = $region17
  $region16: #{critic_forward.6} parent=0 // pred_region
    _
  $region17: #{critic_forward.6} parent=0 // pred_fallthru
    _
  // Predicated region
  $region18: #{critic_forward.6} parent=0 // pred_check
    _
  $region19: #{critic_forward.6} parent=0 // pred_check_branch
    %960 = sbr.rel (0) target = $region21
  $region20: #{critic_forward.6} parent=0 // pred_region
    _
  $region21: #{critic_forward.6} parent=0 // pred_fallthru
    _

// kernel: critic_forward.7
$region0: #{critic_forward.7}
  #allocation0 [shape = 'u32[]', space=smem, size = 0x4, offset = 0x4, fixed_abs, tag = 'smem constant byte address 0x4 - core index']
  #allocation1 [shape = 'u32[144,128]{1,0:T(1,128)}', space=vmem, size = 0x12000, scoped, tag = 'internal scratch']
  #allocation2 [shape = 'f32[1,1]{1,0:T(1,128)S(1)}', space=vmem, size = 0x200, scoped, tag = 'scoped memory for critic_forward.7']
  %s0 = inlined_call_operand.vmem [shape: bf16[2,256], index: 0, kind: input, shape index: {}]
  %s1 = inlined_call_operand.vmem [shape: bf16[2,2304], index: 1, kind: input, shape index: {}]
  %s2 = inlined_call_operand.vmem [shape: f32[2,8], index: 2, kind: input, shape index: {}]
  %s3 = inlined_call_operand.vmem [shape: bf16[256,1024], index: 3, kind: input, shape index: {}]
  %s4 = inlined_call_operand.vmem [shape: bf16[2304,1024], index: 4, kind: input, shape index: {}]
  %s5 = inlined_call_operand.vmem [shape: f32[1,1024], index: 5, kind: input, shape index: {}]
  %s6 = inlined_call_operand.vmem [shape: bf16[1024,512], index: 6, kind: input, shape index: {}]
  %s7 = inlined_call_operand.vmem [shape: f32[1,512], index: 7, kind: input, shape index: {}]
  %s8 = inlined_call_operand.vmem [shape: bf16[512,256], index: 8, kind: input, shape index: {}]
  %s9 = inlined_call_operand.vmem [shape: f32[8,256], index: 9, kind: input, shape index: {}]
  %s10 = inlined_call_operand.vmem [shape: f32[1,256], index: 10, kind: input, shape index: {}]
  %s11 = inlined_call_operand.vmem [shape: bf16[256,128], index: 11, kind: input, shape index: {}]
  %s12 = inlined_call_operand.vmem [shape: f32[1,128], index: 12, kind: input, shape index: {}]
  %s13 = inlined_call_operand.vmem [shape: f32[1,128], index: 13, kind: input, shape index: {}]
  %s14 = inlined_call_operand.<no memory space> [shape: f32[1,1], index: 14, kind: input, shape index: {}]
  %s15 = inlined_call_operand.vmem [shape: f32[2,1], index: 15, kind: output, shape index: {}]
  %s16 = sld [smem:[#allocation0]]
  $region70: #{critic_forward.7} parent=0
    _
  %s18 = ssub.s32 1, %s16
  %s19 = scalar_select 0, %s18, %s16
  %v20 = vstv %s14
  %21 = vst [vmem:[#allocation2] sm:$0x1] %v20
  // Predicated region
  $region2: #{critic_forward.7} parent=0 // pred_check
    _
  $region3: #{critic_forward.7} parent=0 // pred_check_branch
    %23 = sbr.rel (0) target = $region5
  $region4: #{critic_forward.7} parent=0 // pred_region
    _
  $region5: #{critic_forward.7} parent=0 // pred_fallthru
    _
  // Predicated region
  $region6: #{critic_forward.7} parent=0 // pred_check
    _
  $region7: #{critic_forward.7} parent=0 // pred_check_branch
    %25 = sbr.rel (0) target = $region9
  $region8: #{critic_forward.7} parent=0 // pred_region
    _
  $region9: #{critic_forward.7} parent=0 // pred_fallthru
    _
  // Predicated region
  $region10: #{critic_forward.7} parent=0 // pred_check
    _
  $region11: #{critic_forward.7} parent=0 // pred_check_branch
    %27 = sbr.rel (0) target = $region13
  $region12: #{critic_forward.7} parent=0 // pred_region
    _
  $region13: #{critic_forward.7} parent=0 // pred_fallthru
    _
  // Predicated region
  $region14: #{critic_forward.7} parent=0 // pred_check
    _
  $region15: #{critic_forward.7} parent=0 // pred_check_branch
    %29 = sbr.rel (0) target = $region17
  $region16: #{critic_forward.7} parent=0 // pred_region
    _
  $region17: #{critic_forward.7} parent=0 // pred_fallthru
    _
  // Predicated region
  $region18: #{critic_forward.7} parent=0 // pred_check
    _
  $region19: #{critic_forward.7} parent=0 // pred_check_branch
    %31 = sbr.rel (0) target = $region21
  $region20: #{critic_forward.7} parent=0 // pred_region
    _
  $region21: #{critic_forward.7} parent=0 // pred_fallthru
    _
  // Predicated region
  $region22: #{critic_forward.7} parent=0 // pred_check
    _
  $region23: #{critic_forward.7} parent=0 // pred_check_branch
    %33 = sbr.rel (0) target = $region25
  $region24: #{critic_forward.7} parent=0 // pred_region
    _
  $region25: #{critic_forward.7} parent=0 // pred_fallthru
    _
  // Predicated region
  $region26: #{critic_forward.7} parent=0 // pred_check
    _
  $region27: #{critic_forward.7} parent=0 // pred_check_branch
    %35 = sbr.rel (0) target = $region29
  $region28: #{critic_forward.7} parent=0 // pred_region
    _
  $region29: #{critic_forward.7} parent=0 // pred_fallthru
    _
  // Predicated region
  $region30: #{critic_forward.7} parent=0 // pred_check
    _
  $region31: #{critic_forward.7} parent=0 // pred_check_branch
    %37 = sbr.rel (0) target = $region33
  $region32: #{critic_forward.7} parent=0 // pred_region
    _
  $region33: #{critic_forward.7} parent=0 // pred_fallthru
    _
  // Predicated region
  $region34: #{critic_forward.7} parent=0 // pred_check
    _
  $region35: #{critic_forward.7} parent=0 // pred_check_branch
    %39 = sbr.rel (0) target = $region37
  $region36: #{critic_forward.7} parent=0 // pred_region
    _
  $region37: #{critic_forward.7} parent=0 // pred_fallthru
    _
  // Predicated region
  $region38: #{critic_forward.7} parent=0 // pred_check
    _
  $region39: #{critic_forward.7} parent=0 // pred_check_branch
    %41 = sbr.rel (0) target = $region41
  $region40: #{critic_forward.7} parent=0 // pred_region
    _
  $region41: #{critic_forward.7} parent=0 // pred_fallthru
    _
  // Predicated region
  $region42: #{critic_forward.7} parent=0 // pred_check
    _
  $region43: #{critic_forward.7} parent=0 // pred_check_branch
    %43 = sbr.rel (0) target = $region45
  $region44: #{critic_forward.7} parent=0 // pred_region
    _
  $region45: #{critic_forward.7} parent=0 // pred_fallthru
    _
  // Predicated region
  $region46: #{critic_forward.7} parent=0 // pred_check
    _
  $region47: #{critic_forward.7} parent=0 // pred_check_branch
    %45 = sbr.rel (0) target = $region49
  $region48: #{critic_forward.7} parent=0 // pred_region
    _
  $region49: #{critic_forward.7} parent=0 // pred_fallthru
    _
  // Predicated region
  $region50: #{critic_forward.7} parent=0 // pred_check
    _
  $region51: #{critic_forward.7} parent=0 // pred_check_branch
    %47 = sbr.rel (0) target = $region53
  $region52: #{critic_forward.7} parent=0 // pred_region
    _
  $region53: #{critic_forward.7} parent=0 // pred_fallthru
    _
  // Predicated region
  $region54: #{critic_forward.7} parent=0 // pred_check
    _
  $region55: #{critic_forward.7} parent=0 // pred_check_branch
    %49 = sbr.rel (0) target = $region57
  $region56: #{critic_forward.7} parent=0 // pred_region
    _
  $region57: #{critic_forward.7} parent=0 // pred_fallthru
    _
  // Predicated region
  $region58: #{critic_forward.7} parent=0 // pred_check
    _
  $region59: #{critic_forward.7} parent=0 // pred_check_branch
    %51 = sbr.rel (0) target = $region61
  $region60: #{critic_forward.7} parent=0 // pred_region
    _
  $region61: #{critic_forward.7} parent=0 // pred_fallthru
    _
  %v53 = vld [vmem:[%s0] sm:$0x3]
  %v54 = vld [vmem:[%s3] sm:$0xff]
  %v55 = vld [vmem:[%s3 + $0x8] sm:$0xff]
  %v56 = vld [vmem:[%s3 + $0x10] sm:$0xff]
  %v57 = vld [vmem:[%s3 + $0x18] sm:$0xff]
  %v58 = vld [vmem:[%s3 + $0x20] sm:$0xff]
  %v59 = vld [vmem:[%s3 + $0x28] sm:$0xff]
  %v60 = vld [vmem:[%s3 + $0x30] sm:$0xff]
  %v61 = vld [vmem:[%s3 + $0x38] sm:$0xff]
  %v62 = vld [vmem:[%s3 + $0x40] sm:$0xff]
  %v63 = vld [vmem:[%s3 + $0x48] sm:$0xff]
  %v64 = vld [vmem:[%s3 + $0x50] sm:$0xff]
  %v65 = vld [vmem:[%s3 + $0x58] sm:$0xff]
  %v66 = vld [vmem:[%s3 + $0x60] sm:$0xff]
  %v67 = vld [vmem:[%s3 + $0x68] sm:$0xff]
  %v68 = vld [vmem:[%s3 + $0x70] sm:$0xff]
  %v69 = vld [vmem:[%s3 + $0x78] sm:$0xff]
  %v70 = vld [vmem:[%s3 + $0x80] sm:$0xff]
  %v71 = vld [vmem:[%s3 + $0x88] sm:$0xff]
  %v72 = vld [vmem:[%s3 + $0x90] sm:$0xff]
  %v73 = vld [vmem:[%s3 + $0x98] sm:$0xff]
  %v74 = vld [vmem:[%s3 + $0xa0] sm:$0xff]
  %v75 = vld [vmem:[%s3 + $0xa8] sm:$0xff]
  %v76 = vld [vmem:[%s3 + $0xb0] sm:$0xff]
  %v77 = vld [vmem:[%s3 + $0xb8] sm:$0xff]
  %v78 = vld [vmem:[%s3 + $0xc0] sm:$0xff]
  %v79 = vld [vmem:[%s3 + $0xc8] sm:$0xff]
  %v80 = vld [vmem:[%s3 + $0xd0] sm:$0xff]
  %v81 = vld [vmem:[%s3 + $0xd8] sm:$0xff]
  %v82 = vld [vmem:[%s3 + $0xe0] sm:$0xff]
  %v83 = vld [vmem:[%s3 + $0xe8] sm:$0xff]
  %v84 = vld [vmem:[%s3 + $0xf0] sm:$0xff]
  %v85 = vld [vmem:[%s3 + $0xf8] sm:$0xff]
  %v86 = vld [vmem:[%s3 + $0x100] sm:$0xff]
  %v87 = vld [vmem:[%s3 + $0x108] sm:$0xff]
  %v88 = vld [vmem:[%s3 + $0x110] sm:$0xff]
  %v89 = vld [vmem:[%s3 + $0x118] sm:$0xff]
  %v90 = vld [vmem:[%s3 + $0x120] sm:$0xff]
  %v91 = vld [vmem:[%s3 + $0x128] sm:$0xff]
  %v92 = vld [vmem:[%s3 + $0x130] sm:$0xff]
  %v93 = vld [vmem:[%s3 + $0x138] sm:$0xff]
  %v94 = vld [vmem:[%s3 + $0x140] sm:$0xff]
  %v95 = vld [vmem:[%s3 + $0x148] sm:$0xff]
  %v96 = vld [vmem:[%s3 + $0x150] sm:$0xff]
  %v97 = vld [vmem:[%s3 + $0x158] sm:$0xff]
  %v98 = vld [vmem:[%s3 + $0x160] sm:$0xff]
  %v99 = vld [vmem:[%s3 + $0x168] sm:$0xff]
  %v100 = vld [vmem:[%s3 + $0x170] sm:$0xff]
  %v101 = vld [vmem:[%s3 + $0x178] sm:$0xff]
  %v102 = vld [vmem:[%s3 + $0x180] sm:$0xff]
  %v103 = vld [vmem:[%s3 + $0x188] sm:$0xff]
  %v104 = vld [vmem:[%s3 + $0x190] sm:$0xff]
  %v105 = vld [vmem:[%s3 + $0x198] sm:$0xff]
  %v106 = vld [vmem:[%s3 + $0x1a0] sm:$0xff]
  %v107 = vld [vmem:[%s3 + $0x1a8] sm:$0xff]
  %v108 = vld [vmem:[%s3 + $0x1b0] sm:$0xff]
  %v109 = vld [vmem:[%s3 + $0x1b8] sm:$0xff]
  %v110 = vld [vmem:[%s3 + $0x1c0] sm:$0xff]
  %v111 = vld [vmem:[%s3 + $0x1c8] sm:$0xff]
  %v112 = vld [vmem:[%s3 + $0x1d0] sm:$0xff]
  %v113 = vld [vmem:[%s3 + $0x1d8] sm:$0xff]
  %v114 = vld [vmem:[%s3 + $0x1e0] sm:$0xff]
  %v115 = vld [vmem:[%s3 + $0x1e8] sm:$0xff]
  %v116 = vld [vmem:[%s3 + $0x1f0] sm:$0xff]
  %v117 = vld [vmem:[%s3 + $0x1f8] sm:$0xff]
  %v118 = vld [vmem:[%s3 + $0x200] sm:$0xff]
  %v119 = vld [vmem:[%s3 + $0x208] sm:$0xff]
  %v120 = vld [vmem:[%s3 + $0x210] sm:$0xff]
  %v121 = vld [vmem:[%s3 + $0x218] sm:$0xff]
  %v122 = vld [vmem:[%s3 + $0x220] sm:$0xff]
  %v123 = vld [vmem:[%s3 + $0x228] sm:$0xff]
  %v124 = vld [vmem:[%s3 + $0x230] sm:$0xff]
  %v125 = vld [vmem:[%s3 + $0x238] sm:$0xff]
  %v126 = vld [vmem:[%s3 + $0x240] sm:$0xff]
  %v127 = vld [vmem:[%s3 + $0x248] sm:$0xff]
  %v128 = vld [vmem:[%s3 + $0x250] sm:$0xff]
  %v129 = vld [vmem:[%s3 + $0x258] sm:$0xff]
  %v130 = vld [vmem:[%s3 + $0x260] sm:$0xff]
  %v131 = vld [vmem:[%s3 + $0x268] sm:$0xff]
  %v132 = vld [vmem:[%s3 + $0x270] sm:$0xff]
  %v133 = vld [vmem:[%s3 + $0x278] sm:$0xff]
  %v134 = vld [vmem:[%s3 + $0x280] sm:$0xff]
  %v135 = vld [vmem:[%s3 + $0x288] sm:$0xff]
  %v136 = vld [vmem:[%s3 + $0x290] sm:$0xff]
  %v137 = vld [vmem:[%s3 + $0x298] sm:$0xff]
  %v138 = vld [vmem:[%s3 + $0x2a0] sm:$0xff]
  %v139 = vld [vmem:[%s3 + $0x2a8] sm:$0xff]
  %v140 = vld [vmem:[%s3 + $0x2b0] sm:$0xff]
  %v141 = vld [vmem:[%s3 + $0x2b8] sm:$0xff]
  %v142 = vld [vmem:[%s3 + $0x2c0] sm:$0xff]
  %v143 = vld [vmem:[%s3 + $0x2c8] sm:$0xff]
  %v144 = vld [vmem:[%s3 + $0x2d0] sm:$0xff]
  %v145 = vld [vmem:[%s3 + $0x2d8] sm:$0xff]
  %v146 = vld [vmem:[%s3 + $0x2e0] sm:$0xff]
  %v147 = vld [vmem:[%s3 + $0x2e8] sm:$0xff]
  %v148 = vld [vmem:[%s3 + $0x2f0] sm:$0xff]
  %v149 = vld [vmem:[%s3 + $0x2f8] sm:$0xff]
  %v150 = vld [vmem:[%s3 + $0x300] sm:$0xff]
  %v151 = vld [vmem:[%s3 + $0x308] sm:$0xff]
  %v152 = vld [vmem:[%s3 + $0x310] sm:$0xff]
  %v153 = vld [vmem:[%s3 + $0x318] sm:$0xff]
  %v154 = vld [vmem:[%s3 + $0x320] sm:$0xff]
  %v155 = vld [vmem:[%s3 + $0x328] sm:$0xff]
  %v156 = vld [vmem:[%s3 + $0x330] sm:$0xff]
  %v157 = vld [vmem:[%s3 + $0x338] sm:$0xff]
  %v158 = vld [vmem:[%s3 + $0x340] sm:$0xff]
  %v159 = vld [vmem:[%s3 + $0x348] sm:$0xff]
  %v160 = vld [vmem:[%s3 + $0x350] sm:$0xff]
  %v161 = vld [vmem:[%s3 + $0x358] sm:$0xff]
  %v162 = vld [vmem:[%s3 + $0x360] sm:$0xff]
  %v163 = vld [vmem:[%s3 + $0x368] sm:$0xff]
  %v164 = vld [vmem:[%s3 + $0x370] sm:$0xff]
  %v165 = vld [vmem:[%s3 + $0x378] sm:$0xff]
  %v166 = vld [vmem:[%s3 + $0x380] sm:$0xff]
  %v167 = vld [vmem:[%s3 + $0x388] sm:$0xff]
  %v168 = vld [vmem:[%s3 + $0x390] sm:$0xff]
  %v169 = vld [vmem:[%s3 + $0x398] sm:$0xff]
  %v170 = vld [vmem:[%s3 + $0x3a0] sm:$0xff]
  %v171 = vld [vmem:[%s3 + $0x3a8] sm:$0xff]
  %v172 = vld [vmem:[%s3 + $0x3b0] sm:$0xff]
  %v173 = vld [vmem:[%s3 + $0x3b8] sm:$0xff]
  %v174 = vld [vmem:[%s3 + $0x3c0] sm:$0xff]
  %v175 = vld [vmem:[%s3 + $0x3c8] sm:$0xff]
  %v176 = vld [vmem:[%s3 + $0x3d0] sm:$0xff]
  %v177 = vld [vmem:[%s3 + $0x3d8] sm:$0xff]
  %v178 = vld [vmem:[%s3 + $0x3e0] sm:$0xff]
  %v179 = vld [vmem:[%s3 + $0x3e8] sm:$0xff]
  %v180 = vld [vmem:[%s3 + $0x3f0] sm:$0xff]
  %v181 = vld [vmem:[%s3 + $0x3f8] sm:$0xff]
  %v182 = vld [vmem:[%s1] sm:$0xff]
  %v183 = vld [vmem:[%s1 + $0x8] sm:$0xff]
  %v184 = vld [vmem:[%s1 + $0x10] sm:$0x3]
  %v185 = vld [vmem:[%s4] sm:$0xff]
  %v186 = vld [vmem:[%s4 + $0x8] sm:$0xff]
  %v187 = vld [vmem:[%s4 + $0x10] sm:$0xff]
  %v188 = vld [vmem:[%s4 + $0x18] sm:$0xff]
  %v189 = vld [vmem:[%s4 + $0x20] sm:$0xff]
  %v190 = vld [vmem:[%s4 + $0x28] sm:$0xff]
  %v191 = vld [vmem:[%s4 + $0x30] sm:$0xff]
  %v192 = vld [vmem:[%s4 + $0x38] sm:$0xff]
  %v193 = vld [vmem:[%s4 + $0x40] sm:$0xff]
  %v194 = vld [vmem:[%s4 + $0x48] sm:$0xff]
  %v195 = vld [vmem:[%s4 + $0x50] sm:$0xff]
  %v196 = vld [vmem:[%s4 + $0x58] sm:$0xff]
  %v197 = vld [vmem:[%s4 + $0x60] sm:$0xff]
  %v198 = vld [vmem:[%s4 + $0x68] sm:$0xff]
  %v199 = vld [vmem:[%s4 + $0x70] sm:$0xff]
  %v200 = vld [vmem:[%s4 + $0x78] sm:$0xff]
  %v201 = vld [vmem:[%s4 + $0x80] sm:$0xff]
  %v202 = vld [vmem:[%s4 + $0x88] sm:$0xff]
  %v203 = vld [vmem:[%s4 + $0x90] sm:$0xff]
  %v204 = vld [vmem:[%s4 + $0x98] sm:$0xff]
  %v205 = vld [vmem:[%s4 + $0xa0] sm:$0xff]
  %v206 = vld [vmem:[%s4 + $0xa8] sm:$0xff]
  %v207 = vld [vmem:[%s4 + $0xb0] sm:$0xff]
  %v208 = vld [vmem:[%s4 + $0xb8] sm:$0xff]
  %v209 = vld [vmem:[%s4 + $0xc0] sm:$0xff]
  %v210 = vld [vmem:[%s4 + $0xc8] sm:$0xff]
  %v211 = vld [vmem:[%s4 + $0xd0] sm:$0xff]
  %v212 = vld [vmem:[%s4 + $0xd8] sm:$0xff]
  %v213 = vld [vmem:[%s4 + $0xe0] sm:$0xff]
  %v214 = vld [vmem:[%s4 + $0xe8] sm:$0xff]
  %v215 = vld [vmem:[%s4 + $0xf0] sm:$0xff]
  %v216 = vld [vmem:[%s4 + $0xf8] sm:$0xff]
  %v217 = vld [vmem:[%s4 + $0x100] sm:$0xff]
  %v218 = vld [vmem:[%s4 + $0x108] sm:$0xff]
  %v219 = vld [vmem:[%s4 + $0x110] sm:$0xff]
  %v220 = vld [vmem:[%s4 + $0x118] sm:$0xff]
  %v221 = vld [vmem:[%s4 + $0x120] sm:$0xff]
  %v222 = vld [vmem:[%s4 + $0x128] sm:$0xff]
  %v223 = vld [vmem:[%s4 + $0x130] sm:$0xff]
  %v224 = vld [vmem:[%s4 + $0x138] sm:$0xff]
  %v225 = vld [vmem:[%s4 + $0x140] sm:$0xff]
  %v226 = vld [vmem:[%s4 + $0x148] sm:$0xff]
  %v227 = vld [vmem:[%s4 + $0x150] sm:$0xff]
  %v228 = vld [vmem:[%s4 + $0x158] sm:$0xff]
  %v229 = vld [vmem:[%s4 + $0x160] sm:$0xff]
  %v230 = vld [vmem:[%s4 + $0x168] sm:$0xff]
  %v231 = vld [vmem:[%s4 + $0x170] sm:$0xff]
  %v232 = vld [vmem:[%s4 + $0x178] sm:$0xff]
  %v233 = vld [vmem:[%s4 + $0x180] sm:$0xff]
  %v234 = vld [vmem:[%s4 + $0x188] sm:$0xff]
  %v235 = vld [vmem:[%s4 + $0x190] sm:$0xff]
  %v236 = vld [vmem:[%s4 + $0x198] sm:$0xff]
  %v237 = vld [vmem:[%s4 + $0x1a0] sm:$0xff]
  %v238 = vld [vmem:[%s4 + $0x1a8] sm:$0xff]
  %v239 = vld [vmem:[%s4 + $0x1b0] sm:$0xff]
  %v240 = vld [vmem:[%s4 + $0x1b8] sm:$0xff]
  %v241 = vld [vmem:[%s4 + $0x1c0] sm:$0xff]
  %v242 = vld [vmem:[%s4 + $0x1c8] sm:$0xff]
  %v243 = vld [vmem:[%s4 + $0x1d0] sm:$0xff]
  %v244 = vld [vmem:[%s4 + $0x1d8] sm:$0xff]
  %v245 = vld [vmem:[%s4 + $0x1e0] sm:$0xff]
  %v246 = vld [vmem:[%s4 + $0x1e8] sm:$0xff]
  %v247 = vld [vmem:[%s4 + $0x1f0] sm:$0xff]
  %v248 = vld [vmem:[%s4 + $0x1f8] sm:$0xff]
  %v249 = vld [vmem:[%s4 + $0x200] sm:$0xff]
  %v250 = vld [vmem:[%s4 + $0x208] sm:$0xff]
  %v251 = vld [vmem:[%s4 + $0x210] sm:$0xff]
  %v252 = vld [vmem:[%s4 + $0x218] sm:$0xff]
  %v253 = vld [vmem:[%s4 + $0x220] sm:$0xff]
  %v254 = vld [vmem:[%s4 + $0x228] sm:$0xff]
  %v255 = vld [vmem:[%s4 + $0x230] sm:$0xff]
  %v256 = vld [vmem:[%s4 + $0x238] sm:$0xff]
  %v257 = vld [vmem:[%s4 + $0x240] sm:$0xff]
  %v258 = vld [vmem:[%s4 + $0x248] sm:$0xff]
  %v259 = vld [vmem:[%s4 + $0x250] sm:$0xff]
  %v260 = vld [vmem:[%s4 + $0x258] sm:$0xff]
  %v261 = vld [vmem:[%s4 + $0x260] sm:$0xff]
  %v262 = vld [vmem:[%s4 + $0x268] sm:$0xff]
  %v263 = vld [vmem:[%s4 + $0x270] sm:$0xff]
  %v264 = vld [vmem:[%s4 + $0x278] sm:$0xff]
  %v265 = vld [vmem:[%s4 + $0x280] sm:$0xff]
  %v266 = vld [vmem:[%s4 + $0x288] sm:$0xff]
  %v267 = vld [vmem:[%s4 + $0x290] sm:$0xff]
  %v268 = vld [vmem:[%s4 + $0x298] sm:$0xff]
  %v269 = vld [vmem:[%s4 + $0x2a0] sm:$0xff]
  %v270 = vld [vmem:[%s4 + $0x2a8] sm:$0xff]
  %v271 = vld [vmem:[%s4 + $0x2b0] sm:$0xff]
  %v272 = vld [vmem:[%s4 + $0x2b8] sm:$0xff]
  %v273 = vld [vmem:[%s4 + $0x2c0] sm:$0xff]
  %v274 = vld [vmem:[%s4 + $0x2c8] sm:$0xff]
  %v275 = vld [vmem:[%s4 + $0x2d0] sm:$0xff]
  %v276 = vld [vmem:[%s4 + $0x2d8] sm:$0xff]
  %v277 = vld [vmem:[%s4 + $0x2e0] sm:$0xff]
  %v278 = vld [vmem:[%s4 + $0x2e8] sm:$0xff]
  %v279 = vld [vmem:[%s4 + $0x2f0] sm:$0xff]
  %v280 = vld [vmem:[%s4 + $0x2f8] sm:$0xff]
  %v281 = vld [vmem:[%s4 + $0x300] sm:$0xff]
  %v282 = vld [vmem:[%s4 + $0x308] sm:$0xff]
  %v283 = vld [vmem:[%s4 + $0x310] sm:$0xff]
  %v284 = vld [vmem:[%s4 + $0x318] sm:$0xff]
  %v285 = vld [vmem:[%s4 + $0x320] sm:$0xff]
  %v286 = vld [vmem:[%s4 + $0x328] sm:$0xff]
  %v287 = vld [vmem:[%s4 + $0x330] sm:$0xff]
  %v288 = vld [vmem:[%s4 + $0x338] sm:$0xff]
  %v289 = vld [vmem:[%s4 + $0x340] sm:$0xff]
  %v290 = vld [vmem:[%s4 + $0x348] sm:$0xff]
  %v291 = vld [vmem:[%s4 + $0x350] sm:$0xff]
  %v292 = vld [vmem:[%s4 + $0x358] sm:$0xff]
  %v293 = vld [vmem:[%s4 + $0x360] sm:$0xff]
  %v294 = vld [vmem:[%s4 + $0x368] sm:$0xff]
  %v295 = vld [vmem:[%s4 + $0x370] sm:$0xff]
  %v296 = vld [vmem:[%s4 + $0x378] sm:$0xff]
  %v297 = vld [vmem:[%s4 + $0x380] sm:$0xff]
  %v298 = vld [vmem:[%s4 + $0x388] sm:$0xff]
  %v299 = vld [vmem:[%s4 + $0x390] sm:$0xff]
  %v300 = vld [vmem:[%s4 + $0x398] sm:$0xff]
  %v301 = vld [vmem:[%s4 + $0x3a0] sm:$0xff]
  %v302 = vld [vmem:[%s4 + $0x3a8] sm:$0xff]
  %v303 = vld [vmem:[%s4 + $0x3b0] sm:$0xff]
  %v304 = vld [vmem:[%s4 + $0x3b8] sm:$0xff]
  %v305 = vld [vmem:[%s4 + $0x3c0] sm:$0xff]
  %v306 = vld [vmem:[%s4 + $0x3c8] sm:$0xff]
  %v307 = vld [vmem:[%s4 + $0x3d0] sm:$0xff]
  %v308 = vld [vmem:[%s4 + $0x3d8] sm:$0xff]
  %v309 = vld [vmem:[%s4 + $0x3e0] sm:$0xff]
  %v310 = vld [vmem:[%s4 + $0x3e8] sm:$0xff]
  %v311 = vld [vmem:[%s4 + $0x3f0] sm:$0xff]
  %v312 = vld [vmem:[%s4 + $0x3f8] sm:$0xff]
  %v313 = vld [vmem:[%s4 + $0x400] sm:$0xff]
  %v314 = vld [vmem:[%s4 + $0x408] sm:$0xff]
  %v315 = vld [vmem:[%s4 + $0x410] sm:$0xff]
  %v316 = vld [vmem:[%s4 + $0x418] sm:$0xff]
  %v317 = vld [vmem:[%s4 + $0x420] sm:$0xff]
  %v318 = vld [vmem:[%s4 + $0x428] sm:$0xff]
  %v319 = vld [vmem:[%s4 + $0x430] sm:$0xff]
  %v320 = vld [vmem:[%s4 + $0x438] sm:$0xff]
  %v321 = vld [vmem:[%s4 + $0x440] sm:$0xff]
  %v322 = vld [vmem:[%s4 + $0x448] sm:$0xff]
  %v323 = vld [vmem:[%s4 + $0x450] sm:$0xff]
  %v324 = vld [vmem:[%s4 + $0x458] sm:$0xff]
  %v325 = vld [vmem:[%s4 + $0x460] sm:$0xff]
  %v326 = vld [vmem:[%s4 + $0x468] sm:$0xff]
  %v327 = vld [vmem:[%s4 + $0x470] sm:$0xff]
  %v328 = vld [vmem:[%s4 + $0x478] sm:$0xff]
  %v329 = vld [vmem:[%s4 + $0x480] sm:$0xff]
  %v330 = vld [vmem:[%s4 + $0x488] sm:$0xff]
  %v331 = vld [vmem:[%s4 + $0x490] sm:$0xff]
  %v332 = vld [vmem:[%s4 + $0x498] sm:$0xff]
  %v333 = vld [vmem:[%s4 + $0x4a0] sm:$0xff]
  %v334 = vld [vmem:[%s4 + $0x4a8] sm:$0xff]
  %v335 = vld [vmem:[%s4 + $0x4b0] sm:$0xff]
  %v336 = vld [vmem:[%s4 + $0x4b8] sm:$0xff]
  %v337 = vld [vmem:[%s4 + $0x4c0] sm:$0xff]
  %v338 = vld [vmem:[%s4 + $0x4c8] sm:$0xff]
  %v339 = vld [vmem:[%s4 + $0x4d0] sm:$0xff]
  %v340 = vld [vmem:[%s4 + $0x4d8] sm:$0xff]
  %v341 = vld [vmem:[%s4 + $0x4e0] sm:$0xff]
  %v342 = vld [vmem:[%s4 + $0x4e8] sm:$0xff]
  %v343 = vld [vmem:[%s4 + $0x4f0] sm:$0xff]
  %v344 = vld [vmem:[%s4 + $0x4f8] sm:$0xff]
  %v345 = vld [vmem:[%s4 + $0x500] sm:$0xff]
  %v346 = vld [vmem:[%s4 + $0x508] sm:$0xff]
  %v347 = vld [vmem:[%s4 + $0x510] sm:$0xff]
  %v348 = vld [vmem:[%s4 + $0x518] sm:$0xff]
  %v349 = vld [vmem:[%s4 + $0x520] sm:$0xff]
  %v350 = vld [vmem:[%s4 + $0x528] sm:$0xff]
  %v351 = vld [vmem:[%s4 + $0x530] sm:$0xff]
  %v352 = vld [vmem:[%s4 + $0x538] sm:$0xff]
  %v353 = vld [vmem:[%s4 + $0x540] sm:$0xff]
  %v354 = vld [vmem:[%s4 + $0x548] sm:$0xff]
  %v355 = vld [vmem:[%s4 + $0x550] sm:$0xff]
  %v356 = vld [vmem:[%s4 + $0x558] sm:$0xff]
  %v357 = vld [vmem:[%s4 + $0x560] sm:$0xff]
  %v358 = vld [vmem:[%s4 + $0x568] sm:$0xff]
  %v359 = vld [vmem:[%s4 + $0x570] sm:$0xff]
  %v360 = vld [vmem:[%s4 + $0x578] sm:$0xff]
  %v361 = vld [vmem:[%s4 + $0x580] sm:$0xff]
  %v362 = vld [vmem:[%s4 + $0x588] sm:$0xff]
  %v363 = vld [vmem:[%s4 + $0x590] sm:$0xff]
  %v364 = vld [vmem:[%s4 + $0x598] sm:$0xff]
  %v365 = vld [vmem:[%s4 + $0x5a0] sm:$0xff]
  %v366 = vld [vmem:[%s4 + $0x5a8] sm:$0xff]
  %v367 = vld [vmem:[%s4 + $0x5b0] sm:$0xff]
  %v368 = vld [vmem:[%s4 + $0x5b8] sm:$0xff]
  %v369 = vld [vmem:[%s4 + $0x5c0] sm:$0xff]
  %v370 = vld [vmem:[%s4 + $0x5c8] sm:$0xff]
  %v371 = vld [vmem:[%s4 + $0x5d0] sm:$0xff]
  %v372 = vld [vmem:[%s4 + $0x5d8] sm:$0xff]
  %v373 = vld [vmem:[%s4 + $0x5e0] sm:$0xff]
  %v374 = vld [vmem:[%s4 + $0x5e8] sm:$0xff]
  %v375 = vld [vmem:[%s4 + $0x5f0] sm:$0xff]
  %v376 = vld [vmem:[%s4 + $0x5f8] sm:$0xff]
  %v377 = vld [vmem:[%s4 + $0x600] sm:$0xff]
  %v378 = vld [vmem:[%s4 + $0x608] sm:$0xff]
  %v379 = vld [vmem:[%s4 + $0x610] sm:$0xff]
  %v380 = vld [vmem:[%s4 + $0x618] sm:$0xff]
  %v381 = vld [vmem:[%s4 + $0x620] sm:$0xff]
  %v382 = vld [vmem:[%s4 + $0x628] sm:$0xff]
  %v383 = vld [vmem:[%s4 + $0x630] sm:$0xff]
  %v384 = vld [vmem:[%s4 + $0x638] sm:$0xff]
  %v385 = vld [vmem:[%s4 + $0x640] sm:$0xff]
  %v386 = vld [vmem:[%s4 + $0x648] sm:$0xff]
  %v387 = vld [vmem:[%s4 + $0x650] sm:$0xff]
  %v388 = vld [vmem:[%s4 + $0x658] sm:$0xff]
  %v389 = vld [vmem:[%s4 + $0x660] sm:$0xff]
  %v390 = vld [vmem:[%s4 + $0x668] sm:$0xff]
  %v391 = vld [vmem:[%s4 + $0x670] sm:$0xff]
  %v392 = vld [vmem:[%s4 + $0x678] sm:$0xff]
  %v393 = vld [vmem:[%s4 + $0x680] sm:$0xff]
  %v394 = vld [vmem:[%s4 + $0x688] sm:$0xff]
  %v395 = vld [vmem:[%s4 + $0x690] sm:$0xff]
  %v396 = vld [vmem:[%s4 + $0x698] sm:$0xff]
  %v397 = vld [vmem:[%s4 + $0x6a0] sm:$0xff]
  %v398 = vld [vmem:[%s4 + $0x6a8] sm:$0xff]
  %v399 = vld [vmem:[%s4 + $0x6b0] sm:$0xff]
  %v400 = vld [vmem:[%s4 + $0x6b8] sm:$0xff]
  %v401 = vld [vmem:[%s4 + $0x6c0] sm:$0xff]
  %v402 = vld [vmem:[%s4 + $0x6c8] sm:$0xff]
  %v403 = vld [vmem:[%s4 + $0x6d0] sm:$0xff]
  %v404 = vld [vmem:[%s4 + $0x6d8] sm:$0xff]
  %v405 = vld [vmem:[%s4 + $0x6e0] sm:$0xff]
  %v406 = vld [vmem:[%s4 + $0x6e8] sm:$0xff]
  %v407 = vld [vmem:[%s4 + $0x6f0] sm:$0xff]
  %v408 = vld [vmem:[%s4 + $0x6f8] sm:$0xff]
  %v409 = vld [vmem:[%s4 + $0x700] sm:$0xff]
  %v410 = vld [vmem:[%s4 + $0x708] sm:$0xff]
  %v411 = vld [vmem:[%s4 + $0x710] sm:$0xff]
  %v412 = vld [vmem:[%s4 + $0x718] sm:$0xff]
  %v413 = vld [vmem:[%s4 + $0x720] sm:$0xff]
  %v414 = vld [vmem:[%s4 + $0x728] sm:$0xff]
  %v415 = vld [vmem:[%s4 + $0x730] sm:$0xff]
  %v416 = vld [vmem:[%s4 + $0x738] sm:$0xff]
  %v417 = vld [vmem:[%s4 + $0x740] sm:$0xff]
  %v418 = vld [vmem:[%s4 + $0x748] sm:$0xff]
  %v419 = vld [vmem:[%s4 + $0x750] sm:$0xff]
  %v420 = vld [vmem:[%s4 + $0x758] sm:$0xff]
  %v421 = vld [vmem:[%s4 + $0x760] sm:$0xff]
  %v422 = vld [vmem:[%s4 + $0x768] sm:$0xff]
  %v423 = vld [vmem:[%s4 + $0x770] sm:$0xff]
  %v424 = vld [vmem:[%s4 + $0x778] sm:$0xff]
  %v425 = vld [vmem:[%s4 + $0x780] sm:$0xff]
  %v426 = vld [vmem:[%s4 + $0x788] sm:$0xff]
  %v427 = vld [vmem:[%s4 + $0x790] sm:$0xff]
  %v428 = vld [vmem:[%s4 + $0x798] sm:$0xff]
  %v429 = vld [vmem:[%s4 + $0x7a0] sm:$0xff]
  %v430 = vld [vmem:[%s4 + $0x7a8] sm:$0xff]
  %v431 = vld [vmem:[%s4 + $0x7b0] sm:$0xff]
  %v432 = vld [vmem:[%s4 + $0x7b8] sm:$0xff]
  %v433 = vld [vmem:[%s4 + $0x7c0] sm:$0xff]
  %v434 = vld [vmem:[%s4 + $0x7c8] sm:$0xff]
  %v435 = vld [vmem:[%s4 + $0x7d0] sm:$0xff]
  %v436 = vld [vmem:[%s4 + $0x7d8] sm:$0xff]
  %v437 = vld [vmem:[%s4 + $0x7e0] sm:$0xff]
  %v438 = vld [vmem:[%s4 + $0x7e8] sm:$0xff]
  %v439 = vld [vmem:[%s4 + $0x7f0] sm:$0xff]
  %v440 = vld [vmem:[%s4 + $0x7f8] sm:$0xff]
  %v441 = vld [vmem:[%s4 + $0x800] sm:$0xff]
  %v442 = vld [vmem:[%s4 + $0x808] sm:$0xff]
  %v443 = vld [vmem:[%s4 + $0x810] sm:$0xff]
  %v444 = vld [vmem:[%s4 + $0x818] sm:$0xff]
  %v445 = vld [vmem:[%s4 + $0x820] sm:$0xff]
  %v446 = vld [vmem:[%s4 + $0x828] sm:$0xff]
  %v447 = vld [vmem:[%s4 + $0x830] sm:$0xff]
  %v448 = vld [vmem:[%s4 + $0x838] sm:$0xff]
  %v449 = vld [vmem:[%s4 + $0x840] sm:$0xff]
  %v450 = vld [vmem:[%s4 + $0x848] sm:$0xff]
  %v451 = vld [vmem:[%s4 + $0x850] sm:$0xff]
  %v452 = vld [vmem:[%s4 + $0x858] sm:$0xff]
  %v453 = vld [vmem:[%s4 + $0x860] sm:$0xff]
  %v454 = vld [vmem:[%s4 + $0x868] sm:$0xff]
  %v455 = vld [vmem:[%s4 + $0x870] sm:$0xff]
  %v456 = vld [vmem:[%s4 + $0x878] sm:$0xff]
  %v457 = vld [vmem:[%s4 + $0x880] sm:$0xff]
  %v458 = vld [vmem:[%s4 + $0x888] sm:$0xff]
  %v459 = vld [vmem:[%s4 + $0x890] sm:$0xff]
  %v460 = vld [vmem:[%s4 + $0x898] sm:$0xff]
  %v461 = vld [vmem:[%s4 + $0x8a0] sm:$0xff]
  %v462 = vld [vmem:[%s4 + $0x8a8] sm:$0xff]
  %v463 = vld [vmem:[%s4 + $0x8b0] sm:$0xff]
  %v464 = vld [vmem:[%s4 + $0x8b8] sm:$0xff]
  %v465 = vld [vmem:[%s4 + $0x8c0] sm:$0xff]
  %v466 = vld [vmem:[%s4 + $0x8c8] sm:$0xff]
  %v467 = vld [vmem:[%s4 + $0x8d0] sm:$0xff]
  %v468 = vld [vmem:[%s4 + $0x8d8] sm:$0xff]
  %v469 = vld [vmem:[%s4 + $0x8e0] sm:$0xff]
  %v470 = vld [vmem:[%s4 + $0x8e8] sm:$0xff]
  %v471 = vld [vmem:[%s4 + $0x8f0] sm:$0xff]
  %v472 = vld [vmem:[%s4 + $0x8f8] sm:$0xff]
  %v473 = vld [vmem:[%s4 + $0x900] sm:$0xff]
  %v474 = vld [vmem:[%s4 + $0x908] sm:$0xff]
  %v475 = vld [vmem:[%s4 + $0x910] sm:$0xff]
  %v476 = vld [vmem:[%s4 + $0x918] sm:$0xff]
  %v477 = vld [vmem:[%s4 + $0x920] sm:$0xff]
  %v478 = vld [vmem:[%s4 + $0x928] sm:$0xff]
  %v479 = vld [vmem:[%s4 + $0x930] sm:$0xff]
  %v480 = vld [vmem:[%s4 + $0x938] sm:$0xff]
  %v481 = vld [vmem:[%s4 + $0x940] sm:$0xff]
  %v482 = vld [vmem:[%s4 + $0x948] sm:$0xff]
  %v483 = vld [vmem:[%s4 + $0x950] sm:$0xff]
  %v484 = vld [vmem:[%s4 + $0x958] sm:$0xff]
  %v485 = vld [vmem:[%s4 + $0x960] sm:$0xff]
  %v486 = vld [vmem:[%s4 + $0x968] sm:$0xff]
  %v487 = vld [vmem:[%s4 + $0x970] sm:$0xff]
  %v488 = vld [vmem:[%s4 + $0x978] sm:$0xff]
  %v489 = vld [vmem:[%s4 + $0x980] sm:$0xff]
  %v490 = vld [vmem:[%s4 + $0x988] sm:$0xff]
  %v491 = vld [vmem:[%s4 + $0x990] sm:$0xff]
  %v492 = vld [vmem:[%s4 + $0x998] sm:$0xff]
  %v493 = vld [vmem:[%s4 + $0x9a0] sm:$0xff]
  %v494 = vld [vmem:[%s4 + $0x9a8] sm:$0xff]
  %v495 = vld [vmem:[%s4 + $0x9b0] sm:$0xff]
  %v496 = vld [vmem:[%s4 + $0x9b8] sm:$0xff]
  %v497 = vld [vmem:[%s4 + $0x9c0] sm:$0xff]
  %v498 = vld [vmem:[%s4 + $0x9c8] sm:$0xff]
  %v499 = vld [vmem:[%s4 + $0x9d0] sm:$0xff]
  %v500 = vld [vmem:[%s4 + $0x9d8] sm:$0xff]
  %v501 = vld [vmem:[%s4 + $0x9e0] sm:$0xff]
  %v502 = vld [vmem:[%s4 + $0x9e8] sm:$0xff]
  %v503 = vld [vmem:[%s4 + $0x9f0] sm:$0xff]
  %v504 = vld [vmem:[%s4 + $0x9f8] sm:$0xff]
  %v505 = vld [vmem:[%s4 + $0xa00] sm:$0xff]
  %v506 = vld [vmem:[%s4 + $0xa08] sm:$0xff]
  %v507 = vld [vmem:[%s4 + $0xa10] sm:$0xff]
  %v508 = vld [vmem:[%s4 + $0xa18] sm:$0xff]
  %v509 = vld [vmem:[%s4 + $0xa20] sm:$0xff]
  %v510 = vld [vmem:[%s4 + $0xa28] sm:$0xff]
  %v511 = vld [vmem:[%s4 + $0xa30] sm:$0xff]
  %v512 = vld [vmem:[%s4 + $0xa38] sm:$0xff]
  %v513 = vld [vmem:[%s4 + $0xa40] sm:$0xff]
  %v514 = vld [vmem:[%s4 + $0xa48] sm:$0xff]
  %v515 = vld [vmem:[%s4 + $0xa50] sm:$0xff]
  %v516 = vld [vmem:[%s4 + $0xa58] sm:$0xff]
  %v517 = vld [vmem:[%s4 + $0xa60] sm:$0xff]
  %v518 = vld [vmem:[%s4 + $0xa68] sm:$0xff]
  %v519 = vld [vmem:[%s4 + $0xa70] sm:$0xff]
  %v520 = vld [vmem:[%s4 + $0xa78] sm:$0xff]
  %v521 = vld [vmem:[%s4 + $0xa80] sm:$0xff]
  %v522 = vld [vmem:[%s4 + $0xa88] sm:$0xff]
  %v523 = vld [vmem:[%s4 + $0xa90] sm:$0xff]
  %v524 = vld [vmem:[%s4 + $0xa98] sm:$0xff]
  %v525 = vld [vmem:[%s4 + $0xaa0] sm:$0xff]
  %v526 = vld [vmem:[%s4 + $0xaa8] sm:$0xff]
  %v527 = vld [vmem:[%s4 + $0xab0] sm:$0xff]
  %v528 = vld [vmem:[%s4 + $0xab8] sm:$0xff]
  %v529 = vld [vmem:[%s4 + $0xac0] sm:$0xff]
  %v530 = vld [vmem:[%s4 + $0xac8] sm:$0xff]
  %v531 = vld [vmem:[%s4 + $0xad0] sm:$0xff]
  %v532 = vld [vmem:[%s4 + $0xad8] sm:$0xff]
  %v533 = vld [vmem:[%s4 + $0xae0] sm:$0xff]
  %v534 = vld [vmem:[%s4 + $0xae8] sm:$0xff]
  %v535 = vld [vmem:[%s4 + $0xaf0] sm:$0xff]
  %v536 = vld [vmem:[%s4 + $0xaf8] sm:$0xff]
  %v537 = vld [vmem:[%s4 + $0xb00] sm:$0xff]
  %v538 = vld [vmem:[%s4 + $0xb08] sm:$0xff]
  %v539 = vld [vmem:[%s4 + $0xb10] sm:$0xff]
  %v540 = vld [vmem:[%s4 + $0xb18] sm:$0xff]
  %v541 = vld [vmem:[%s4 + $0xb20] sm:$0xff]
  %v542 = vld [vmem:[%s4 + $0xb28] sm:$0xff]
  %v543 = vld [vmem:[%s4 + $0xb30] sm:$0xff]
  %v544 = vld [vmem:[%s4 + $0xb38] sm:$0xff]
  %v545 = vld [vmem:[%s4 + $0xb40] sm:$0xff]
  %v546 = vld [vmem:[%s4 + $0xb48] sm:$0xff]
  %v547 = vld [vmem:[%s4 + $0xb50] sm:$0xff]
  %v548 = vld [vmem:[%s4 + $0xb58] sm:$0xff]
  %v549 = vld [vmem:[%s4 + $0xb60] sm:$0xff]
  %v550 = vld [vmem:[%s4 + $0xb68] sm:$0xff]
  %v551 = vld [vmem:[%s4 + $0xb70] sm:$0xff]
  %v552 = vld [vmem:[%s4 + $0xb78] sm:$0xff]
  %v553 = vld [vmem:[%s4 + $0xb80] sm:$0xff]
  %v554 = vld [vmem:[%s4 + $0xb88] sm:$0xff]
  %v555 = vld [vmem:[%s4 + $0xb90] sm:$0xff]
  %v556 = vld [vmem:[%s4 + $0xb98] sm:$0xff]
  %v557 = vld [vmem:[%s4 + $0xba0] sm:$0xff]
  %v558 = vld [vmem:[%s4 + $0xba8] sm:$0xff]
  %v559 = vld [vmem:[%s4 + $0xbb0] sm:$0xff]
  %v560 = vld [vmem:[%s4 + $0xbb8] sm:$0xff]
  %v561 = vld [vmem:[%s4 + $0xbc0] sm:$0xff]
  %v562 = vld [vmem:[%s4 + $0xbc8] sm:$0xff]
  %v563 = vld [vmem:[%s4 + $0xbd0] sm:$0xff]
  %v564 = vld [vmem:[%s4 + $0xbd8] sm:$0xff]
  %v565 = vld [vmem:[%s4 + $0xbe0] sm:$0xff]
  %v566 = vld [vmem:[%s4 + $0xbe8] sm:$0xff]
  %v567 = vld [vmem:[%s4 + $0xbf0] sm:$0xff]
  %v568 = vld [vmem:[%s4 + $0xbf8] sm:$0xff]
  %v569 = vld [vmem:[%s4 + $0xc00] sm:$0xff]
  %v570 = vld [vmem:[%s4 + $0xc08] sm:$0xff]
  %v571 = vld [vmem:[%s4 + $0xc10] sm:$0xff]
  %v572 = vld [vmem:[%s4 + $0xc18] sm:$0xff]
  %v573 = vld [vmem:[%s4 + $0xc20] sm:$0xff]
  %v574 = vld [vmem:[%s4 + $0xc28] sm:$0xff]
  %v575 = vld [vmem:[%s4 + $0xc30] sm:$0xff]
  %v576 = vld [vmem:[%s4 + $0xc38] sm:$0xff]
  %v577 = vld [vmem:[%s4 + $0xc40] sm:$0xff]
  %v578 = vld [vmem:[%s4 + $0xc48] sm:$0xff]
  %v579 = vld [vmem:[%s4 + $0xc50] sm:$0xff]
  %v580 = vld [vmem:[%s4 + $0xc58] sm:$0xff]
  %v581 = vld [vmem:[%s4 + $0xc60] sm:$0xff]
  %v582 = vld [vmem:[%s4 + $0xc68] sm:$0xff]
  %v583 = vld [vmem:[%s4 + $0xc70] sm:$0xff]
  %v584 = vld [vmem:[%s4 + $0xc78] sm:$0xff]
  %v585 = vld [vmem:[%s4 + $0xc80] sm:$0xff]
  %v586 = vld [vmem:[%s4 + $0xc88] sm:$0xff]
  %v587 = vld [vmem:[%s4 + $0xc90] sm:$0xff]
  %v588 = vld [vmem:[%s4 + $0xc98] sm:$0xff]
  %v589 = vld [vmem:[%s4 + $0xca0] sm:$0xff]
  %v590 = vld [vmem:[%s4 + $0xca8] sm:$0xff]
  %v591 = vld [vmem:[%s4 + $0xcb0] sm:$0xff]
  %v592 = vld [vmem:[%s4 + $0xcb8] sm:$0xff]
  %v593 = vld [vmem:[%s4 + $0xcc0] sm:$0xff]
  %v594 = vld [vmem:[%s4 + $0xcc8] sm:$0xff]
  %v595 = vld [vmem:[%s4 + $0xcd0] sm:$0xff]
  %v596 = vld [vmem:[%s4 + $0xcd8] sm:$0xff]
  %v597 = vld [vmem:[%s4 + $0xce0] sm:$0xff]
  %v598 = vld [vmem:[%s4 + $0xce8] sm:$0xff]
  %v599 = vld [vmem:[%s4 + $0xcf0] sm:$0xff]
  %v600 = vld [vmem:[%s4 + $0xcf8] sm:$0xff]
  %v601 = vld [vmem:[%s4 + $0xd00] sm:$0xff]
  %v602 = vld [vmem:[%s4 + $0xd08] sm:$0xff]
  %v603 = vld [vmem:[%s4 + $0xd10] sm:$0xff]
  %v604 = vld [vmem:[%s4 + $0xd18] sm:$0xff]
  %v605 = vld [vmem:[%s4 + $0xd20] sm:$0xff]
  %v606 = vld [vmem:[%s4 + $0xd28] sm:$0xff]
  %v607 = vld [vmem:[%s4 + $0xd30] sm:$0xff]
  %v608 = vld [vmem:[%s4 + $0xd38] sm:$0xff]
  %v609 = vld [vmem:[%s4 + $0xd40] sm:$0xff]
  %v610 = vld [vmem:[%s4 + $0xd48] sm:$0xff]
  %v611 = vld [vmem:[%s4 + $0xd50] sm:$0xff]
  %v612 = vld [vmem:[%s4 + $0xd58] sm:$0xff]
  %v613 = vld [vmem:[%s4 + $0xd60] sm:$0xff]
  %v614 = vld [vmem:[%s4 + $0xd68] sm:$0xff]
  %v615 = vld [vmem:[%s4 + $0xd70] sm:$0xff]
  %v616 = vld [vmem:[%s4 + $0xd78] sm:$0xff]
  %v617 = vld [vmem:[%s4 + $0xd80] sm:$0xff]
  %v618 = vld [vmem:[%s4 + $0xd88] sm:$0xff]
  %v619 = vld [vmem:[%s4 + $0xd90] sm:$0xff]
  %v620 = vld [vmem:[%s4 + $0xd98] sm:$0xff]
  %v621 = vld [vmem:[%s4 + $0xda0] sm:$0xff]
  %v622 = vld [vmem:[%s4 + $0xda8] sm:$0xff]
  %v623 = vld [vmem:[%s4 + $0xdb0] sm:$0xff]
  %v624 = vld [vmem:[%s4 + $0xdb8] sm:$0xff]
  %v625 = vld [vmem:[%s4 + $0xdc0] sm:$0xff]
  %v626 = vld [vmem:[%s4 + $0xdc8] sm:$0xff]
  %v627 = vld [vmem:[%s4 + $0xdd0] sm:$0xff]
  %v628 = vld [vmem:[%s4 + $0xdd8] sm:$0xff]
  %v629 = vld [vmem:[%s4 + $0xde0] sm:$0xff]
  %v630 = vld [vmem:[%s4 + $0xde8] sm:$0xff]
  %v631 = vld [vmem:[%s4 + $0xdf0] sm:$0xff]
  %v632 = vld [vmem:[%s4 + $0xdf8] sm:$0xff]
  %v633 = vld [vmem:[%s4 + $0xe00] sm:$0xff]
  %v634 = vld [vmem:[%s4 + $0xe08] sm:$0xff]
  %v635 = vld [vmem:[%s4 + $0xe10] sm:$0xff]
  %v636 = vld [vmem:[%s4 + $0xe18] sm:$0xff]
  %v637 = vld [vmem:[%s4 + $0xe20] sm:$0xff]
  %v638 = vld [vmem:[%s4 + $0xe28] sm:$0xff]
  %v639 = vld [vmem:[%s4 + $0xe30] sm:$0xff]
  %v640 = vld [vmem:[%s4 + $0xe38] sm:$0xff]
  %v641 = vld [vmem:[%s4 + $0xe40] sm:$0xff]
  %v642 = vld [vmem:[%s4 + $0xe48] sm:$0xff]
  %v643 = vld [vmem:[%s4 + $0xe50] sm:$0xff]
  %v644 = vld [vmem:[%s4 + $0xe58] sm:$0xff]
  %v645 = vld [vmem:[%s4 + $0xe60] sm:$0xff]
  %v646 = vld [vmem:[%s4 + $0xe68] sm:$0xff]
  %v647 = vld [vmem:[%s4 + $0xe70] sm:$0xff]
  %v648 = vld [vmem:[%s4 + $0xe78] sm:$0xff]
  %v649 = vld [vmem:[%s4 + $0xe80] sm:$0xff]
  %v650 = vld [vmem:[%s4 + $0xe88] sm:$0xff]
  %v651 = vld [vmem:[%s4 + $0xe90] sm:$0xff]
  %v652 = vld [vmem:[%s4 + $0xe98] sm:$0xff]
  %v653 = vld [vmem:[%s4 + $0xea0] sm:$0xff]
  %v654 = vld [vmem:[%s4 + $0xea8] sm:$0xff]
  %v655 = vld [vmem:[%s4 + $0xeb0] sm:$0xff]
  %v656 = vld [vmem:[%s4 + $0xeb8] sm:$0xff]
  %v657 = vld [vmem:[%s4 + $0xec0] sm:$0xff]
  %v658 = vld [vmem:[%s4 + $0xec8] sm:$0xff]
  %v659 = vld [vmem:[%s4 + $0xed0] sm:$0xff]
  %v660 = vld [vmem:[%s4 + $0xed8] sm:$0xff]
  %v661 = vld [vmem:[%s4 + $0xee0] sm:$0xff]
  %v662 = vld [vmem:[%s4 + $0xee8] sm:$0xff]
  %v663 = vld [vmem:[%s4 + $0xef0] sm:$0xff]
  %v664 = vld [vmem:[%s4 + $0xef8] sm:$0xff]
  %v665 = vld [vmem:[%s4 + $0xf00] sm:$0xff]
  %v666 = vld [vmem:[%s4 + $0xf08] sm:$0xff]
  %v667 = vld [vmem:[%s4 + $0xf10] sm:$0xff]
  %v668 = vld [vmem:[%s4 + $0xf18] sm:$0xff]
  %v669 = vld [vmem:[%s4 + $0xf20] sm:$0xff]
  %v670 = vld [vmem:[%s4 + $0xf28] sm:$0xff]
  %v671 = vld [vmem:[%s4 + $0xf30] sm:$0xff]
  %v672 = vld [vmem:[%s4 + $0xf38] sm:$0xff]
  %v673 = vld [vmem:[%s4 + $0xf40] sm:$0xff]
  %v674 = vld [vmem:[%s4 + $0xf48] sm:$0xff]
  %v675 = vld [vmem:[%s4 + $0xf50] sm:$0xff]
  %v676 = vld [vmem:[%s4 + $0xf58] sm:$0xff]
  %v677 = vld [vmem:[%s4 + $0xf60] sm:$0xff]
  %v678 = vld [vmem:[%s4 + $0xf68] sm:$0xff]
  %v679 = vld [vmem:[%s4 + $0xf70] sm:$0xff]
  %v680 = vld [vmem:[%s4 + $0xf78] sm:$0xff]
  %v681 = vld [vmem:[%s4 + $0xf80] sm:$0xff]
  %v682 = vld [vmem:[%s4 + $0xf88] sm:$0xff]
  %v683 = vld [vmem:[%s4 + $0xf90] sm:$0xff]
  %v684 = vld [vmem:[%s4 + $0xf98] sm:$0xff]
  %v685 = vld [vmem:[%s4 + $0xfa0] sm:$0xff]
  %v686 = vld [vmem:[%s4 + $0xfa8] sm:$0xff]
  %v687 = vld [vmem:[%s4 + $0xfb0] sm:$0xff]
  %v688 = vld [vmem:[%s4 + $0xfb8] sm:$0xff]
  %v689 = vld [vmem:[%s4 + $0xfc0] sm:$0xff]
  %v690 = vld [vmem:[%s4 + $0xfc8] sm:$0xff]
  %v691 = vld [vmem:[%s4 + $0xfd0] sm:$0xff]
  %v692 = vld [vmem:[%s4 + $0xfd8] sm:$0xff]
  %v693 = vld [vmem:[%s4 + $0xfe0] sm:$0xff]
  %v694 = vld [vmem:[%s4 + $0xfe8] sm:$0xff]
  %v695 = vld [vmem:[%s4 + $0xff0] sm:$0xff]
  %v696 = vld [vmem:[%s4 + $0xff8] sm:$0xff]
  %v697 = vld [vmem:[%s4 + $0x1000] sm:$0xff]
  %v698 = vld [vmem:[%s4 + $0x1008] sm:$0xff]
  %v699 = vld [vmem:[%s4 + $0x1010] sm:$0xff]
  %v700 = vld [vmem:[%s4 + $0x1018] sm:$0xff]
  %v701 = vld [vmem:[%s4 + $0x1020] sm:$0xff]
  %v702 = vld [vmem:[%s4 + $0x1028] sm:$0xff]
  %v703 = vld [vmem:[%s4 + $0x1030] sm:$0xff]
  %v704 = vld [vmem:[%s4 + $0x1038] sm:$0xff]
  %v705 = vld [vmem:[%s4 + $0x1040] sm:$0xff]
  %v706 = vld [vmem:[%s4 + $0x1048] sm:$0xff]
  %v707 = vld [vmem:[%s4 + $0x1050] sm:$0xff]
  %v708 = vld [vmem:[%s4 + $0x1058] sm:$0xff]
  %v709 = vld [vmem:[%s4 + $0x1060] sm:$0xff]
  %v710 = vld [vmem:[%s4 + $0x1068] sm:$0xff]
  %v711 = vld [vmem:[%s4 + $0x1070] sm:$0xff]
  %v712 = vld [vmem:[%s4 + $0x1078] sm:$0xff]
  %v713 = vld [vmem:[%s4 + $0x1080] sm:$0xff]
  %v714 = vld [vmem:[%s4 + $0x1088] sm:$0xff]
  %v715 = vld [vmem:[%s4 + $0x1090] sm:$0xff]
  %v716 = vld [vmem:[%s4 + $0x1098] sm:$0xff]
  %v717 = vld [vmem:[%s4 + $0x10a0] sm:$0xff]
  %v718 = vld [vmem:[%s4 + $0x10a8] sm:$0xff]
  %v719 = vld [vmem:[%s4 + $0x10b0] sm:$0xff]
  %v720 = vld [vmem:[%s4 + $0x10b8] sm:$0xff]
  %v721 = vld [vmem:[%s4 + $0x10c0] sm:$0xff]
  %v722 = vld [vmem:[%s4 + $0x10c8] sm:$0xff]
  %v723 = vld [vmem:[%s4 + $0x10d0] sm:$0xff]
  %v724 = vld [vmem:[%s4 + $0x10d8] sm:$0xff]
  %v725 = vld [vmem:[%s4 + $0x10e0] sm:$0xff]
  %v726 = vld [vmem:[%s4 + $0x10e8] sm:$0xff]
  %v727 = vld [vmem:[%s4 + $0x10f0] sm:$0xff]
  %v728 = vld [vmem:[%s4 + $0x10f8] sm:$0xff]
  %v729 = vld [vmem:[%s4 + $0x1100] sm:$0xff]
  %v730 = vld [vmem:[%s4 + $0x1108] sm:$0xff]
  %v731 = vld [vmem:[%s4 + $0x1110] sm:$0xff]
  %v732 = vld [vmem:[%s4 + $0x1118] sm:$0xff]
  %v733 = vld [vmem:[%s4 + $0x1120] sm:$0xff]
  %v734 = vld [vmem:[%s4 + $0x1128] sm:$0xff]
  %v735 = vld [vmem:[%s4 + $0x1130] sm:$0xff]
  %v736 = vld [vmem:[%s4 + $0x1138] sm:$0xff]
  %v737 = vld [vmem:[%s4 + $0x1140] sm:$0xff]
  %v738 = vld [vmem:[%s4 + $0x1148] sm:$0xff]
  %v739 = vld [vmem:[%s4 + $0x1150] sm:$0xff]
  %v740 = vld [vmem:[%s4 + $0x1158] sm:$0xff]
  %v741 = vld [vmem:[%s4 + $0x1160] sm:$0xff]
  %v742 = vld [vmem:[%s4 + $0x1168] sm:$0xff]
  %v743 = vld [vmem:[%s4 + $0x1170] sm:$0xff]
  %v744 = vld [vmem:[%s4 + $0x1178] sm:$0xff]
  %v745 = vld [vmem:[%s4 + $0x1180] sm:$0xff]
  %v746 = vld [vmem:[%s4 + $0x1188] sm:$0xff]
  %v747 = vld [vmem:[%s4 + $0x1190] sm:$0xff]
  %v748 = vld [vmem:[%s4 + $0x1198] sm:$0xff]
  %v749 = vld [vmem:[%s4 + $0x11a0] sm:$0xff]
  %v750 = vld [vmem:[%s4 + $0x11a8] sm:$0xff]
  %v751 = vld [vmem:[%s4 + $0x11b0] sm:$0xff]
  %v752 = vld [vmem:[%s4 + $0x11b8] sm:$0xff]
  %v753 = vld [vmem:[%s4 + $0x11c0] sm:$0xff]
  %v754 = vld [vmem:[%s4 + $0x11c8] sm:$0xff]
  %v755 = vld [vmem:[%s4 + $0x11d0] sm:$0xff]
  %v756 = vld [vmem:[%s4 + $0x11d8] sm:$0xff]
  %v757 = vld [vmem:[%s4 + $0x11e0] sm:$0xff]
  %v758 = vld [vmem:[%s4 + $0x11e8] sm:$0xff]
  %v759 = vld [vmem:[%s4 + $0x11f0] sm:$0xff]
  %v760 = vld [vmem:[%s4 + $0x11f8] sm:$0xff]
  %v761 = vld [vmem:[%s4 + $0x1200] sm:$0xff]
  %v762 = vld [vmem:[%s4 + $0x1208] sm:$0xff]
  %v763 = vld [vmem:[%s4 + $0x1210] sm:$0xff]
  %v764 = vld [vmem:[%s4 + $0x1218] sm:$0xff]
  %v765 = vld [vmem:[%s4 + $0x1220] sm:$0xff]
  %v766 = vld [vmem:[%s4 + $0x1228] sm:$0xff]
  %v767 = vld [vmem:[%s4 + $0x1230] sm:$0xff]
  %v768 = vld [vmem:[%s4 + $0x1238] sm:$0xff]
  %v769 = vld [vmem:[%s4 + $0x1240] sm:$0xff]
  %v770 = vld [vmem:[%s4 + $0x1248] sm:$0xff]
  %v771 = vld [vmem:[%s4 + $0x1250] sm:$0xff]
  %v772 = vld [vmem:[%s4 + $0x1258] sm:$0xff]
  %v773 = vld [vmem:[%s4 + $0x1260] sm:$0xff]
  %v774 = vld [vmem:[%s4 + $0x1268] sm:$0xff]
  %v775 = vld [vmem:[%s4 + $0x1270] sm:$0xff]
  %v776 = vld [vmem:[%s4 + $0x1278] sm:$0xff]
  %v777 = vld [vmem:[%s4 + $0x1280] sm:$0xff]
  %v778 = vld [vmem:[%s4 + $0x1288] sm:$0xff]
  %v779 = vld [vmem:[%s4 + $0x1290] sm:$0xff]
  %v780 = vld [vmem:[%s4 + $0x1298] sm:$0xff]
  %v781 = vld [vmem:[%s4 + $0x12a0] sm:$0xff]
  %v782 = vld [vmem:[%s4 + $0x12a8] sm:$0xff]
  %v783 = vld [vmem:[%s4 + $0x12b0] sm:$0xff]
  %v784 = vld [vmem:[%s4 + $0x12b8] sm:$0xff]
  %v785 = vld [vmem:[%s4 + $0x12c0] sm:$0xff]
  %v786 = vld [vmem:[%s4 + $0x12c8] sm:$0xff]
  %v787 = vld [vmem:[%s4 + $0x12d0] sm:$0xff]
  %v788 = vld [vmem:[%s4 + $0x12d8] sm:$0xff]
  %v789 = vld [vmem:[%s4 + $0x12e0] sm:$0xff]
  %v790 = vld [vmem:[%s4 + $0x12e8] sm:$0xff]
  %v791 = vld [vmem:[%s4 + $0x12f0] sm:$0xff]
  %v792 = vld [vmem:[%s4 + $0x12f8] sm:$0xff]
  %v793 = vld [vmem:[%s4 + $0x1300] sm:$0xff]
  %v794 = vld [vmem:[%s4 + $0x1308] sm:$0xff]
  %v795 = vld [vmem:[%s4 + $0x1310] sm:$0xff]
  %v796 = vld [vmem:[%s4 + $0x1318] sm:$0xff]
  %v797 = vld [vmem:[%s4 + $0x1320] sm:$0xff]
  %v798 = vld [vmem:[%s4 + $0x1328] sm:$0xff]
  %v799 = vld [vmem:[%s4 + $0x1330] sm:$0xff]
  %v800 = vld [vmem:[%s4 + $0x1338] sm:$0xff]
  %v801 = vld [vmem:[%s4 + $0x1340] sm:$0xff]
  %v802 = vld [vmem:[%s4 + $0x1348] sm:$0xff]
  %v803 = vld [vmem:[%s4 + $0x1350] sm:$0xff]
  %v804 = vld [vmem:[%s4 + $0x1358] sm:$0xff]
  %v805 = vld [vmem:[%s4 + $0x1360] sm:$0xff]
  %v806 = vld [vmem:[%s4 + $0x1368] sm:$0xff]
  %v807 = vld [vmem:[%s4 + $0x1370] sm:$0xff]
  %v808 = vld [vmem:[%s4 + $0x1378] sm:$0xff]
  %v809 = vld [vmem:[%s4 + $0x1380] sm:$0xff]
  %v810 = vld [vmem:[%s4 + $0x1388] sm:$0xff]
  %v811 = vld [vmem:[%s4 + $0x1390] sm:$0xff]
  %v812 = vld [vmem:[%s4 + $0x1398] sm:$0xff]
  %v813 = vld [vmem:[%s4 + $0x13a0] sm:$0xff]
  %v814 = vld [vmem:[%s4 + $0x13a8] sm:$0xff]
  %v815 = vld [vmem:[%s4 + $0x13b0] sm:$0xff]
  %v816 = vld [vmem:[%s4 + $0x13b8] sm:$0xff]
  %v817 = vld [vmem:[%s4 + $0x13c0] sm:$0xff]
  %v818 = vld [vmem:[%s4 + $0x13c8] sm:$0xff]
  %v819 = vld [vmem:[%s4 + $0x13d0] sm:$0xff]
  %v820 = vld [vmem:[%s4 + $0x13d8] sm:$0xff]
  %v821 = vld [vmem:[%s4 + $0x13e0] sm:$0xff]
  %v822 = vld [vmem:[%s4 + $0x13e8] sm:$0xff]
  %v823 = vld [vmem:[%s4 + $0x13f0] sm:$0xff]
  %v824 = vld [vmem:[%s4 + $0x13f8] sm:$0xff]
  %v825 = vld [vmem:[%s4 + $0x1400] sm:$0xff]
  %v826 = vld [vmem:[%s4 + $0x1408] sm:$0xff]
  %v827 = vld [vmem:[%s4 + $0x1410] sm:$0xff]
  %v828 = vld [vmem:[%s4 + $0x1418] sm:$0xff]
  %v829 = vld [vmem:[%s4 + $0x1420] sm:$0xff]
  %v830 = vld [vmem:[%s4 + $0x1428] sm:$0xff]
  %v831 = vld [vmem:[%s4 + $0x1430] sm:$0xff]
  %v832 = vld [vmem:[%s4 + $0x1438] sm:$0xff]
  %v833 = vld [vmem:[%s4 + $0x1440] sm:$0xff]
  %v834 = vld [vmem:[%s4 + $0x1448] sm:$0xff]
  %v835 = vld [vmem:[%s4 + $0x1450] sm:$0xff]
  %v836 = vld [vmem:[%s4 + $0x1458] sm:$0xff]
  %v837 = vld [vmem:[%s4 + $0x1460] sm:$0xff]
  %v838 = vld [vmem:[%s4 + $0x1468] sm:$0xff]
  %v839 = vld [vmem:[%s4 + $0x1470] sm:$0xff]
  %v840 = vld [vmem:[%s4 + $0x1478] sm:$0xff]
  %v841 = vld [vmem:[%s4 + $0x1480] sm:$0xff]
  %v842 = vld [vmem:[%s4 + $0x1488] sm:$0xff]
  %v843 = vld [vmem:[%s4 + $0x1490] sm:$0xff]
  %v844 = vld [vmem:[%s4 + $0x1498] sm:$0xff]
  %v845 = vld [vmem:[%s4 + $0x14a0] sm:$0xff]
  %v846 = vld [vmem:[%s4 + $0x14a8] sm:$0xff]
  %v847 = vld [vmem:[%s4 + $0x14b0] sm:$0xff]
  %v848 = vld [vmem:[%s4 + $0x14b8] sm:$0xff]
  %v849 = vld [vmem:[%s4 + $0x14c0] sm:$0xff]
  %v850 = vld [vmem:[%s4 + $0x14c8] sm:$0xff]
  %v851 = vld [vmem:[%s4 + $0x14d0] sm:$0xff]
  %v852 = vld [vmem:[%s4 + $0x14d8] sm:$0xff]
  %v853 = vld [vmem:[%s4 + $0x14e0] sm:$0xff]
  %v854 = vld [vmem:[%s4 + $0x14e8] sm:$0xff]
  %v855 = vld [vmem:[%s4 + $0x14f0] sm:$0xff]
  %v856 = vld [vmem:[%s4 + $0x14f8] sm:$0xff]
  %v857 = vld [vmem:[%s4 + $0x1500] sm:$0xff]
  %v858 = vld [vmem:[%s4 + $0x1508] sm:$0xff]
  %v859 = vld [vmem:[%s4 + $0x1510] sm:$0xff]
  %v860 = vld [vmem:[%s4 + $0x1518] sm:$0xff]
  %v861 = vld [vmem:[%s4 + $0x1520] sm:$0xff]
  %v862 = vld [vmem:[%s4 + $0x1528] sm:$0xff]
  %v863 = vld [vmem:[%s4 + $0x1530] sm:$0xff]
  %v864 = vld [vmem:[%s4 + $0x1538] sm:$0xff]
  %v865 = vld [vmem:[%s4 + $0x1540] sm:$0xff]
  %v866 = vld [vmem:[%s4 + $0x1548] sm:$0xff]
  %v867 = vld [vmem:[%s4 + $0x1550] sm:$0xff]
  %v868 = vld [vmem:[%s4 + $0x1558] sm:$0xff]
  %v869 = vld [vmem:[%s4 + $0x1560] sm:$0xff]
  %v870 = vld [vmem:[%s4 + $0x1568] sm:$0xff]
  %v871 = vld [vmem:[%s4 + $0x1570] sm:$0xff]
  %v872 = vld [vmem:[%s4 + $0x1578] sm:$0xff]
  %v873 = vld [vmem:[%s4 + $0x1580] sm:$0xff]
  %v874 = vld [vmem:[%s4 + $0x1588] sm:$0xff]
  %v875 = vld [vmem:[%s4 + $0x1590] sm:$0xff]
  %v876 = vld [vmem:[%s4 + $0x1598] sm:$0xff]
  %v877 = vld [vmem:[%s4 + $0x15a0] sm:$0xff]
  %v878 = vld [vmem:[%s4 + $0x15a8] sm:$0xff]
  %v879 = vld [vmem:[%s4 + $0x15b0] sm:$0xff]
  %v880 = vld [vmem:[%s4 + $0x15b8] sm:$0xff]
  %v881 = vld [vmem:[%s4 + $0x15c0] sm:$0xff]
  %v882 = vld [vmem:[%s4 + $0x15c8] sm:$0xff]
  %v883 = vld [vmem:[%s4 + $0x15d0] sm:$0xff]
  %v884 = vld [vmem:[%s4 + $0x15d8] sm:$0xff]
  %v885 = vld [vmem:[%s4 + $0x15e0] sm:$0xff]
  %v886 = vld [vmem:[%s4 + $0x15e8] sm:$0xff]
  %v887 = vld [vmem:[%s4 + $0x15f0] sm:$0xff]
  %v888 = vld [vmem:[%s4 + $0x15f8] sm:$0xff]
  %v889 = vld [vmem:[%s4 + $0x1600] sm:$0xff]
  %v890 = vld [vmem:[%s4 + $0x1608] sm:$0xff]
  %v891 = vld [vmem:[%s4 + $0x1610] sm:$0xff]
  %v892 = vld [vmem:[%s4 + $0x1618] sm:$0xff]
  %v893 = vld [vmem:[%s4 + $0x1620] sm:$0xff]
  %v894 = vld [vmem:[%s4 + $0x1628] sm:$0xff]
  %v895 = vld [vmem:[%s4 + $0x1630] sm:$0xff]
  %v896 = vld [vmem:[%s4 + $0x1638] sm:$0xff]
  %v897 = vld [vmem:[%s4 + $0x1640] sm:$0xff]
  %v898 = vld [vmem:[%s4 + $0x1648] sm:$0xff]
  %v899 = vld [vmem:[%s4 + $0x1650] sm:$0xff]
  %v900 = vld [vmem:[%s4 + $0x1658] sm:$0xff]
  %v901 = vld [vmem:[%s4 + $0x1660] sm:$0xff]
  %v902 = vld [vmem:[%s4 + $0x1668] sm:$0xff]
  %v903 = vld [vmem:[%s4 + $0x1670] sm:$0xff]
  %v904 = vld [vmem:[%s4 + $0x1678] sm:$0xff]
  %v905 = vld [vmem:[%s4 + $0x1680] sm:$0xff]
  %v906 = vld [vmem:[%s4 + $0x1688] sm:$0xff]
  %v907 = vld [vmem:[%s4 + $0x1690] sm:$0xff]
  %v908 = vld [vmem:[%s4 + $0x1698] sm:$0xff]
  %v909 = vld [vmem:[%s4 + $0x16a0] sm:$0xff]
  %v910 = vld [vmem:[%s4 + $0x16a8] sm:$0xff]
  %v911 = vld [vmem:[%s4 + $0x16b0] sm:$0xff]
  %v912 = vld [vmem:[%s4 + $0x16b8] sm:$0xff]
  %v913 = vld [vmem:[%s4 + $0x16c0] sm:$0xff]
  %v914 = vld [vmem:[%s4 + $0x16c8] sm:$0xff]
  %v915 = vld [vmem:[%s4 + $0x16d0] sm:$0xff]
  %v916 = vld [vmem:[%s4 + $0x16d8] sm:$0xff]
  %v917 = vld [vmem:[%s4 + $0x16e0] sm:$0xff]
  %v918 = vld [vmem:[%s4 + $0x16e8] sm:$0xff]
  %v919 = vld [vmem:[%s4 + $0x16f0] sm:$0xff]
  %v920 = vld [vmem:[%s4 + $0x16f8] sm:$0xff]
  %v921 = vld [vmem:[%s4 + $0x1700] sm:$0xff]
  %v922 = vld [vmem:[%s4 + $0x1708] sm:$0xff]
  %v923 = vld [vmem:[%s4 + $0x1710] sm:$0xff]
  %v924 = vld [vmem:[%s4 + $0x1718] sm:$0xff]
  %v925 = vld [vmem:[%s4 + $0x1720] sm:$0xff]
  %v926 = vld [vmem:[%s4 + $0x1728] sm:$0xff]
  %v927 = vld [vmem:[%s4 + $0x1730] sm:$0xff]
  %v928 = vld [vmem:[%s4 + $0x1738] sm:$0xff]
  %v929 = vld [vmem:[%s4 + $0x1740] sm:$0xff]
  %v930 = vld [vmem:[%s4 + $0x1748] sm:$0xff]
  %v931 = vld [vmem:[%s4 + $0x1750] sm:$0xff]
  %v932 = vld [vmem:[%s4 + $0x1758] sm:$0xff]
  %v933 = vld [vmem:[%s4 + $0x1760] sm:$0xff]
  %v934 = vld [vmem:[%s4 + $0x1768] sm:$0xff]
  %v935 = vld [vmem:[%s4 + $0x1770] sm:$0xff]
  %v936 = vld [vmem:[%s4 + $0x1778] sm:$0xff]
  %v937 = vld [vmem:[%s4 + $0x1780] sm:$0xff]
  %v938 = vld [vmem:[%s4 + $0x1788] sm:$0xff]
  %v939 = vld [vmem:[%s4 + $0x1790] sm:$0xff]
  %v940 = vld [vmem:[%s4 + $0x1798] sm:$0xff]
  %v941 = vld [vmem:[%s4 + $0x17a0] sm:$0xff]
  %v942 = vld [vmem:[%s4 + $0x17a8] sm:$0xff]
  %v943 = vld [vmem:[%s4 + $0x17b0] sm:$0xff]
  %v944 = vld [vmem:[%s4 + $0x17b8] sm:$0xff]
  %v945 = vld [vmem:[%s4 + $0x17c0] sm:$0xff]
  %v946 = vld [vmem:[%s4 + $0x17c8] sm:$0xff]
  %v947 = vld [vmem:[%s4 + $0x17d0] sm:$0xff]
  %v948 = vld [vmem:[%s4 + $0x17d8] sm:$0xff]
  %v949 = vld [vmem:[%s4 + $0x17e0] sm:$0xff]
  %v950 = vld [vmem:[%s4 + $0x17e8] sm:$0xff]
  %v951 = vld [vmem:[%s4 + $0x17f0] sm:$0xff]
  %v952 = vld [vmem:[%s4 + $0x17f8] sm:$0xff]
  %v953 = vld [vmem:[%s4 + $0x1800] sm:$0xff]
  %v954 = vld [vmem:[%s4 + $0x1808] sm:$0xff]
  %v955 = vld [vmem:[%s4 + $0x1810] sm:$0xff]
  %v956 = vld [vmem:[%s4 + $0x1818] sm:$0xff]
  %v957 = vld [vmem:[%s4 + $0x1820] sm:$0xff]
  %v958 = vld [vmem:[%s4 + $0x1828] sm:$0xff]
  %v959 = vld [vmem:[%s4 + $0x1830] sm:$0xff]
  %v960 = vld [vmem:[%s4 + $0x1838] sm:$0xff]
  %v961 = vld [vmem:[%s4 + $0x1840] sm:$0xff]
  %v962 = vld [vmem:[%s4 + $0x1848] sm:$0xff]
  %v963 = vld [vmem:[%s4 + $0x1850] sm:$0xff]
  %v964 = vld [vmem:[%s4 + $0x1858] sm:$0xff]
  %v965 = vld [vmem:[%s4 + $0x1860] sm:$0xff]
  %v966 = vld [vmem:[%s4 + $0x1868] sm:$0xff]
  %v967 = vld [vmem:[%s4 + $0x1870] sm:$0xff]
  %v968 = vld [vmem:[%s4 + $0x1878] sm:$0xff]
  %v969 = vld [vmem:[%s4 + $0x1880] sm:$0xff]
  %v970 = vld [vmem:[%s4 + $0x1888] sm:$0xff]
  %v971 = vld [vmem:[%s4 + $0x1890] sm:$0xff]
  %v972 = vld [vmem:[%s4 + $0x1898] sm:$0xff]
  %v973 = vld [vmem:[%s4 + $0x18a0] sm:$0xff]
  %v974 = vld [vmem:[%s4 + $0x18a8] sm:$0xff]
  %v975 = vld [vmem:[%s4 + $0x18b0] sm:$0xff]
  %v976 = vld [vmem:[%s4 + $0x18b8] sm:$0xff]
  %v977 = vld [vmem:[%s4 + $0x18c0] sm:$0xff]
  %v978 = vld [vmem:[%s4 + $0x18c8] sm:$0xff]
  %v979 = vld [vmem:[%s4 + $0x18d0] sm:$0xff]
  %v980 = vld [vmem:[%s4 + $0x18d8] sm:$0xff]
  %v981 = vld [vmem:[%s4 + $0x18e0] sm:$0xff]
  %v982 = vld [vmem:[%s4 + $0x18e8] sm:$0xff]
  %v983 = vld [vmem:[%s4 + $0x18f0] sm:$0xff]
  %v984 = vld [vmem:[%s4 + $0x18f8] sm:$0xff]
  %v985 = vld [vmem:[%s4 + $0x1900] sm:$0xff]
  %v986 = vld [vmem:[%s4 + $0x1908] sm:$0xff]
  %v987 = vld [vmem:[%s4 + $0x1910] sm:$0xff]
  %v988 = vld [vmem:[%s4 + $0x1918] sm:$0xff]
  %v989 = vld [vmem:[%s4 + $0x1920] sm:$0xff]
  %v990 = vld [vmem:[%s4 + $0x1928] sm:$0xff]
  %v991 = vld [vmem:[%s4 + $0x1930] sm:$0xff]
  %v992 = vld [vmem:[%s4 + $0x1938] sm:$0xff]
  %v993 = vld [vmem:[%s4 + $0x1940] sm:$0xff]
  %v994 = vld [vmem:[%s4 + $0x1948] sm:$0xff]
  %v995 = vld [vmem:[%s4 + $0x1950] sm:$0xff]
  %v996 = vld [vmem:[%s4 + $0x1958] sm:$0xff]
  %v997 = vld [vmem:[%s4 + $0x1960] sm:$0xff]
  %v998 = vld [vmem:[%s4 + $0x1968] sm:$0xff]
  %v999 = vld [vmem:[%s4 + $0x1970] sm:$0xff]
  %v1000 = vld [vmem:[%s4 + $0x1978] sm:$0xff]
  %v1001 = vld [vmem:[%s4 + $0x1980] sm:$0xff]
  %v1002 = vld [vmem:[%s4 + $0x1988] sm:$0xff]
  %v1003 = vld [vmem:[%s4 + $0x1990] sm:$0xff]
  %v1004 = vld [vmem:[%s4 + $0x1998] sm:$0xff]
  %v1005 = vld [vmem:[%s4 + $0x19a0] sm:$0xff]
  %v1006 = vld [vmem:[%s4 + $0x19a8] sm:$0xff]
  %v1007 = vld [vmem:[%s4 + $0x19b0] sm:$0xff]
  %v1008 = vld [vmem:[%s4 + $0x19b8] sm:$0xff]
  %v1009 = vld [vmem:[%s4 + $0x19c0] sm:$0xff]
  %v1010 = vld [vmem:[%s4 + $0x19c8] sm:$0xff]
  %v1011 = vld [vmem:[%s4 + $0x19d0] sm:$0xff]
  %v1012 = vld [vmem:[%s4 + $0x19d8] sm:$0xff]
  %v1013 = vld [vmem:[%s4 + $0x19e0] sm:$0xff]
  %v1014 = vld [vmem:[%s4 + $0x19e8] sm:$0xff]
  %v1015 = vld [vmem:[%s4 + $0x19f0] sm:$0xff]
  %v1016 = vld [vmem:[%s4 + $0x19f8] sm:$0xff]
  %v1017 = vld [vmem:[%s4 + $0x1a00] sm:$0xff]
  %v1018 = vld [vmem:[%s4 + $0x1a08] sm:$0xff]
  %v1019 = vld [vmem:[%s4 + $0x1a10] sm:$0xff]
  %v1020 = vld [vmem:[%s4 + $0x1a18] sm:$0xff]
  %v1021 = vld [vmem:[%s4 + $0x1a20] sm:$0xff]
  %v1022 = vld [vmem:[%s4 + $0x1a28] sm:$0xff]
  %v1023 = vld [vmem:[%s4 + $0x1a30] sm:$0xff]
  %v1024 = vld [vmem:[%s4 + $0x1a38] sm:$0xff]
  %v1025 = vld [vmem:[%s4 + $0x1a40] sm:$0xff]
  %v1026 = vld [vmem:[%s4 + $0x1a48] sm:$0xff]
  %v1027 = vld [vmem:[%s4 + $0x1a50] sm:$0xff]
  %v1028 = vld [vmem:[%s4 + $0x1a58] sm:$0xff]
  %v1029 = vld [vmem:[%s4 + $0x1a60] sm:$0xff]
  %v1030 = vld [vmem:[%s4 + $0x1a68] sm:$0xff]
  %v1031 = vld [vmem:[%s4 + $0x1a70] sm:$0xff]
  %v1032 = vld [vmem:[%s4 + $0x1a78] sm:$0xff]
  %v1033 = vld [vmem:[%s4 + $0x1a80] sm:$0xff]
  %v1034 = vld [vmem:[%s4 + $0x1a88] sm:$0xff]
  %v1035 = vld [vmem:[%s4 + $0x1a90] sm:$0xff]
  %v1036 = vld [vmem:[%s4 + $0x1a98] sm:$0xff]
  %v1037 = vld [vmem:[%s4 + $0x1aa0] sm:$0xff]
  %v1038 = vld [vmem:[%s4 + $0x1aa8] sm:$0xff]
  %v1039 = vld [vmem:[%s4 + $0x1ab0] sm:$0xff]
  %v1040 = vld [vmem:[%s4 + $0x1ab8] sm:$0xff]
  %v1041 = vld [vmem:[%s4 + $0x1ac0] sm:$0xff]
  %v1042 = vld [vmem:[%s4 + $0x1ac8] sm:$0xff]
  %v1043 = vld [vmem:[%s4 + $0x1ad0] sm:$0xff]
  %v1044 = vld [vmem:[%s4 + $0x1ad8] sm:$0xff]
  %v1045 = vld [vmem:[%s4 + $0x1ae0] sm:$0xff]
  %v1046 = vld [vmem:[%s4 + $0x1ae8] sm:$0xff]
  %v1047 = vld [vmem:[%s4 + $0x1af0] sm:$0xff]
  %v1048 = vld [vmem:[%s4 + $0x1af8] sm:$0xff]
  %v1049 = vld [vmem:[%s4 + $0x1b00] sm:$0xff]
  %v1050 = vld [vmem:[%s4 + $0x1b08] sm:$0xff]
  %v1051 = vld [vmem:[%s4 + $0x1b10] sm:$0xff]
  %v1052 = vld [vmem:[%s4 + $0x1b18] sm:$0xff]
  %v1053 = vld [vmem:[%s4 + $0x1b20] sm:$0xff]
  %v1054 = vld [vmem:[%s4 + $0x1b28] sm:$0xff]
  %v1055 = vld [vmem:[%s4 + $0x1b30] sm:$0xff]
  %v1056 = vld [vmem:[%s4 + $0x1b38] sm:$0xff]
  %v1057 = vld [vmem:[%s4 + $0x1b40] sm:$0xff]
  %v1058 = vld [vmem:[%s4 + $0x1b48] sm:$0xff]
  %v1059 = vld [vmem:[%s4 + $0x1b50] sm:$0xff]
  %v1060 = vld [vmem:[%s4 + $0x1b58] sm:$0xff]
  %v1061 = vld [vmem:[%s4 + $0x1b60] sm:$0xff]
  %v1062 = vld [vmem:[%s4 + $0x1b68] sm:$0xff]
  %v1063 = vld [vmem:[%s4 + $0x1b70] sm:$0xff]
  %v1064 = vld [vmem:[%s4 + $0x1b78] sm:$0xff]
  %v1065 = vld [vmem:[%s4 + $0x1b80] sm:$0xff]
  %v1066 = vld [vmem:[%s4 + $0x1b88] sm:$0xff]
  %v1067 = vld [vmem:[%s4 + $0x1b90] sm:$0xff]
  %v1068 = vld [vmem:[%s4 + $0x1b98] sm:$0xff]
  %v1069 = vld [vmem:[%s4 + $0x1ba0] sm:$0xff]
  %v1070 = vld [vmem:[%s4 + $0x1ba8] sm:$0xff]
  %v1071 = vld [vmem:[%s4 + $0x1bb0] sm:$0xff]
  %v1072 = vld [vmem:[%s4 + $0x1bb8] sm:$0xff]
  %v1073 = vld [vmem:[%s4 + $0x1bc0] sm:$0xff]
  %v1074 = vld [vmem:[%s4 + $0x1bc8] sm:$0xff]
  %v1075 = vld [vmem:[%s4 + $0x1bd0] sm:$0xff]
  %v1076 = vld [vmem:[%s4 + $0x1bd8] sm:$0xff]
  %v1077 = vld [vmem:[%s4 + $0x1be0] sm:$0xff]
  %v1078 = vld [vmem:[%s4 + $0x1be8] sm:$0xff]
  %v1079 = vld [vmem:[%s4 + $0x1bf0] sm:$0xff]
  %v1080 = vld [vmem:[%s4 + $0x1bf8] sm:$0xff]
  %v1081 = vld [vmem:[%s4 + $0x1c00] sm:$0xff]
  %v1082 = vld [vmem:[%s4 + $0x1c08] sm:$0xff]
  %v1083 = vld [vmem:[%s4 + $0x1c10] sm:$0xff]
  %v1084 = vld [vmem:[%s4 + $0x1c18] sm:$0xff]
  %v1085 = vld [vmem:[%s4 + $0x1c20] sm:$0xff]
  %v1086 = vld [vmem:[%s4 + $0x1c28] sm:$0xff]
  %v1087 = vld [vmem:[%s4 + $0x1c30] sm:$0xff]
  %v1088 = vld [vmem:[%s4 + $0x1c38] sm:$0xff]
  %v1089 = vld [vmem:[%s4 + $0x1c40] sm:$0xff]
  %v1090 = vld [vmem:[%s4 + $0x1c48] sm:$0xff]
  %v1091 = vld [vmem:[%s4 + $0x1c50] sm:$0xff]
  %v1092 = vld [vmem:[%s4 + $0x1c58] sm:$0xff]
  %v1093 = vld [vmem:[%s4 + $0x1c60] sm:$0xff]
  %v1094 = vld [vmem:[%s4 + $0x1c68] sm:$0xff]
  %v1095 = vld [vmem:[%s4 + $0x1c70] sm:$0xff]
  %v1096 = vld [vmem:[%s4 + $0x1c78] sm:$0xff]
  %v1097 = vld [vmem:[%s4 + $0x1c80] sm:$0xff]
  %v1098 = vld [vmem:[%s4 + $0x1c88] sm:$0xff]
  %v1099 = vld [vmem:[%s4 + $0x1c90] sm:$0xff]
  %v1100 = vld [vmem:[%s4 + $0x1c98] sm:$0xff]
  %v1101 = vld [vmem:[%s4 + $0x1ca0] sm:$0xff]
  %v1102 = vld [vmem:[%s4 + $0x1ca8] sm:$0xff]
  %v1103 = vld [vmem:[%s4 + $0x1cb0] sm:$0xff]
  %v1104 = vld [vmem:[%s4 + $0x1cb8] sm:$0xff]
  %v1105 = vld [vmem:[%s4 + $0x1cc0] sm:$0xff]
  %v1106 = vld [vmem:[%s4 + $0x1cc8] sm:$0xff]
  %v1107 = vld [vmem:[%s4 + $0x1cd0] sm:$0xff]
  %v1108 = vld [vmem:[%s4 + $0x1cd8] sm:$0xff]
  %v1109 = vld [vmem:[%s4 + $0x1ce0] sm:$0xff]
  %v1110 = vld [vmem:[%s4 + $0x1ce8] sm:$0xff]
  %v1111 = vld [vmem:[%s4 + $0x1cf0] sm:$0xff]
  %v1112 = vld [vmem:[%s4 + $0x1cf8] sm:$0xff]
  %v1113 = vld [vmem:[%s4 + $0x1d00] sm:$0xff]
  %v1114 = vld [vmem:[%s4 + $0x1d08] sm:$0xff]
  %v1115 = vld [vmem:[%s4 + $0x1d10] sm:$0xff]
  %v1116 = vld [vmem:[%s4 + $0x1d18] sm:$0xff]
  %v1117 = vld [vmem:[%s4 + $0x1d20] sm:$0xff]
  %v1118 = vld [vmem:[%s4 + $0x1d28] sm:$0xff]
  %v1119 = vld [vmem:[%s4 + $0x1d30] sm:$0xff]
  %v1120 = vld [vmem:[%s4 + $0x1d38] sm:$0xff]
  %v1121 = vld [vmem:[%s4 + $0x1d40] sm:$0xff]
  %v1122 = vld [vmem:[%s4 + $0x1d48] sm:$0xff]
  %v1123 = vld [vmem:[%s4 + $0x1d50] sm:$0xff]
  %v1124 = vld [vmem:[%s4 + $0x1d58] sm:$0xff]
  %v1125 = vld [vmem:[%s4 + $0x1d60] sm:$0xff]
  %v1126 = vld [vmem:[%s4 + $0x1d68] sm:$0xff]
  %v1127 = vld [vmem:[%s4 + $0x1d70] sm:$0xff]
  %v1128 = vld [vmem:[%s4 + $0x1d78] sm:$0xff]
  %v1129 = vld [vmem:[%s4 + $0x1d80] sm:$0xff]
  %v1130 = vld [vmem:[%s4 + $0x1d88] sm:$0xff]
  %v1131 = vld [vmem:[%s4 + $0x1d90] sm:$0xff]
  %v1132 = vld [vmem:[%s4 + $0x1d98] sm:$0xff]
  %v1133 = vld [vmem:[%s4 + $0x1da0] sm:$0xff]
  %v1134 = vld [vmem:[%s4 + $0x1da8] sm:$0xff]
  %v1135 = vld [vmem:[%s4 + $0x1db0] sm:$0xff]
  %v1136 = vld [vmem:[%s4 + $0x1db8] sm:$0xff]
  %v1137 = vld [vmem:[%s4 + $0x1dc0] sm:$0xff]
  %v1138 = vld [vmem:[%s4 + $0x1dc8] sm:$0xff]
  %v1139 = vld [vmem:[%s4 + $0x1dd0] sm:$0xff]
  %v1140 = vld [vmem:[%s4 + $0x1dd8] sm:$0xff]
  %v1141 = vld [vmem:[%s4 + $0x1de0] sm:$0xff]
  %v1142 = vld [vmem:[%s4 + $0x1de8] sm:$0xff]
  %v1143 = vld [vmem:[%s4 + $0x1df0] sm:$0xff]
  %v1144 = vld [vmem:[%s4 + $0x1df8] sm:$0xff]
  %v1145 = vld [vmem:[%s4 + $0x1e00] sm:$0xff]
  %v1146 = vld [vmem:[%s4 + $0x1e08] sm:$0xff]
  %v1147 = vld [vmem:[%s4 + $0x1e10] sm:$0xff]
  %v1148 = vld [vmem:[%s4 + $0x1e18] sm:$0xff]
  %v1149 = vld [vmem:[%s4 + $0x1e20] sm:$0xff]
  %v1150 = vld [vmem:[%s4 + $0x1e28] sm:$0xff]
  %v1151 = vld [vmem:[%s4 + $0x1e30] sm:$0xff]
  %v1152 = vld [vmem:[%s4 + $0x1e38] sm:$0xff]
  %v1153 = vld [vmem:[%s4 + $0x1e40] sm:$0xff]
  %v1154 = vld [vmem:[%s4 + $0x1e48] sm:$0xff]
  %v1155 = vld [vmem:[%s4 + $0x1e50] sm:$0xff]
  %v1156 = vld [vmem:[%s4 + $0x1e58] sm:$0xff]
  %v1157 = vld [vmem:[%s4 + $0x1e60] sm:$0xff]
  %v1158 = vld [vmem:[%s4 + $0x1e68] sm:$0xff]
  %v1159 = vld [vmem:[%s4 + $0x1e70] sm:$0xff]
  %v1160 = vld [vmem:[%s4 + $0x1e78] sm:$0xff]
  %v1161 = vld [vmem:[%s4 + $0x1e80] sm:$0xff]
  %v1162 = vld [vmem:[%s4 + $0x1e88] sm:$0xff]
  %v1163 = vld [vmem:[%s4 + $0x1e90] sm:$0xff]
  %v1164 = vld [vmem:[%s4 + $0x1e98] sm:$0xff]
  %v1165 = vld [vmem:[%s4 + $0x1ea0] sm:$0xff]
  %v1166 = vld [vmem:[%s4 + $0x1ea8] sm:$0xff]
  %v1167 = vld [vmem:[%s4 + $0x1eb0] sm:$0xff]
  %v1168 = vld [vmem:[%s4 + $0x1eb8] sm:$0xff]
  %v1169 = vld [vmem:[%s4 + $0x1ec0] sm:$0xff]
  %v1170 = vld [vmem:[%s4 + $0x1ec8] sm:$0xff]
  %v1171 = vld [vmem:[%s4 + $0x1ed0] sm:$0xff]
  %v1172 = vld [vmem:[%s4 + $0x1ed8] sm:$0xff]
  %v1173 = vld [vmem:[%s4 + $0x1ee0] sm:$0xff]
  %v1174 = vld [vmem:[%s4 + $0x1ee8] sm:$0xff]
  %v1175 = vld [vmem:[%s4 + $0x1ef0] sm:$0xff]
  %v1176 = vld [vmem:[%s4 + $0x1ef8] sm:$0xff]
  %v1177 = vld [vmem:[%s4 + $0x1f00] sm:$0xff]
  %v1178 = vld [vmem:[%s4 + $0x1f08] sm:$0xff]
  %v1179 = vld [vmem:[%s4 + $0x1f10] sm:$0xff]
  %v1180 = vld [vmem:[%s4 + $0x1f18] sm:$0xff]
  %v1181 = vld [vmem:[%s4 + $0x1f20] sm:$0xff]
  %v1182 = vld [vmem:[%s4 + $0x1f28] sm:$0xff]
  %v1183 = vld [vmem:[%s4 + $0x1f30] sm:$0xff]
  %v1184 = vld [vmem:[%s4 + $0x1f38] sm:$0xff]
  %v1185 = vld [vmem:[%s4 + $0x1f40] sm:$0xff]
  %v1186 = vld [vmem:[%s4 + $0x1f48] sm:$0xff]
  %v1187 = vld [vmem:[%s4 + $0x1f50] sm:$0xff]
  %v1188 = vld [vmem:[%s4 + $0x1f58] sm:$0xff]
  %v1189 = vld [vmem:[%s4 + $0x1f60] sm:$0xff]
  %v1190 = vld [vmem:[%s4 + $0x1f68] sm:$0xff]
  %v1191 = vld [vmem:[%s4 + $0x1f70] sm:$0xff]
  %v1192 = vld [vmem:[%s4 + $0x1f78] sm:$0xff]
  %v1193 = vld [vmem:[%s4 + $0x1f80] sm:$0xff]
  %v1194 = vld [vmem:[%s4 + $0x1f88] sm:$0xff]
  %v1195 = vld [vmem:[%s4 + $0x1f90] sm:$0xff]
  %v1196 = vld [vmem:[%s4 + $0x1f98] sm:$0xff]
  %v1197 = vld [vmem:[%s4 + $0x1fa0] sm:$0xff]
  %v1198 = vld [vmem:[%s4 + $0x1fa8] sm:$0xff]
  %v1199 = vld [vmem:[%s4 + $0x1fb0] sm:$0xff]
  %v1200 = vld [vmem:[%s4 + $0x1fb8] sm:$0xff]
  %v1201 = vld [vmem:[%s4 + $0x1fc0] sm:$0xff]
  %v1202 = vld [vmem:[%s4 + $0x1fc8] sm:$0xff]
  %v1203 = vld [vmem:[%s4 + $0x1fd0] sm:$0xff]
  %v1204 = vld [vmem:[%s4 + $0x1fd8] sm:$0xff]
  %v1205 = vld [vmem:[%s4 + $0x1fe0] sm:$0xff]
  %v1206 = vld [vmem:[%s4 + $0x1fe8] sm:$0xff]
  %v1207 = vld [vmem:[%s4 + $0x1ff0] sm:$0xff]
  %v1208 = vld [vmem:[%s4 + $0x1ff8] sm:$0xff]
  %v1209 = vld [vmem:[%s4 + $0x2000] sm:$0xff]
  %v1210 = vld [vmem:[%s4 + $0x2008] sm:$0xff]
  %v1211 = vld [vmem:[%s4 + $0x2010] sm:$0xff]
  %v1212 = vld [vmem:[%s4 + $0x2018] sm:$0xff]
  %v1213 = vld [vmem:[%s4 + $0x2020] sm:$0xff]
  %v1214 = vld [vmem:[%s4 + $0x2028] sm:$0xff]
  %v1215 = vld [vmem:[%s4 + $0x2030] sm:$0xff]
  %v1216 = vld [vmem:[%s4 + $0x2038] sm:$0xff]
  %v1217 = vld [vmem:[%s4 + $0x2040] sm:$0xff]
  %v1218 = vld [vmem:[%s4 + $0x2048] sm:$0xff]
  %v1219 = vld [vmem:[%s4 + $0x2050] sm:$0xff]
  %v1220 = vld [vmem:[%s4 + $0x2058] sm:$0xff]
  %v1221 = vld [vmem:[%s4 + $0x2060] sm:$0xff]
  %v1222 = vld [vmem:[%s4 + $0x2068] sm:$0xff]
  %v1223 = vld [vmem:[%s4 + $0x2070] sm:$0xff]
  %v1224 = vld [vmem:[%s4 + $0x2078] sm:$0xff]
  %v1225 = vld [vmem:[%s4 + $0x2080] sm:$0xff]
  %v1226 = vld [vmem:[%s4 + $0x2088] sm:$0xff]
  %v1227 = vld [vmem:[%s4 + $0x2090] sm:$0xff]
  %v1228 = vld [vmem:[%s4 + $0x2098] sm:$0xff]
  %v1229 = vld [vmem:[%s4 + $0x20a0] sm:$0xff]
  %v1230 = vld [vmem:[%s4 + $0x20a8] sm:$0xff]
  %v1231 = vld [vmem:[%s4 + $0x20b0] sm:$0xff]
  %v1232 = vld [vmem:[%s4 + $0x20b8] sm:$0xff]
  %v1233 = vld [vmem:[%s4 + $0x20c0] sm:$0xff]
  %v1234 = vld [vmem:[%s4 + $0x20c8] sm:$0xff]
  %v1235 = vld [vmem:[%s4 + $0x20d0] sm:$0xff]
  %v1236 = vld [vmem:[%s4 + $0x20d8] sm:$0xff]
  %v1237 = vld [vmem:[%s4 + $0x20e0] sm:$0xff]
  %v1238 = vld [vmem:[%s4 + $0x20e8] sm:$0xff]
  %v1239 = vld [vmem:[%s4 + $0x20f0] sm:$0xff]
  %v1240 = vld [vmem:[%s4 + $0x20f8] sm:$0xff]
  %v1241 = vld [vmem:[%s4 + $0x2100] sm:$0xff]
  %v1242 = vld [vmem:[%s4 + $0x2108] sm:$0xff]
  %v1243 = vld [vmem:[%s4 + $0x2110] sm:$0xff]
  %v1244 = vld [vmem:[%s4 + $0x2118] sm:$0xff]
  %v1245 = vld [vmem:[%s4 + $0x2120] sm:$0xff]
  %v1246 = vld [vmem:[%s4 + $0x2128] sm:$0xff]
  %v1247 = vld [vmem:[%s4 + $0x2130] sm:$0xff]
  %v1248 = vld [vmem:[%s4 + $0x2138] sm:$0xff]
  %v1249 = vld [vmem:[%s4 + $0x2140] sm:$0xff]
  %v1250 = vld [vmem:[%s4 + $0x2148] sm:$0xff]
  %v1251 = vld [vmem:[%s4 + $0x2150] sm:$0xff]
  %v1252 = vld [vmem:[%s4 + $0x2158] sm:$0xff]
  %v1253 = vld [vmem:[%s4 + $0x2160] sm:$0xff]
  %v1254 = vld [vmem:[%s4 + $0x2168] sm:$0xff]
  %v1255 = vld [vmem:[%s4 + $0x2170] sm:$0xff]
  %v1256 = vld [vmem:[%s4 + $0x2178] sm:$0xff]
  %v1257 = vld [vmem:[%s4 + $0x2180] sm:$0xff]
  %v1258 = vld [vmem:[%s4 + $0x2188] sm:$0xff]
  %v1259 = vld [vmem:[%s4 + $0x2190] sm:$0xff]
  %v1260 = vld [vmem:[%s4 + $0x2198] sm:$0xff]
  %v1261 = vld [vmem:[%s4 + $0x21a0] sm:$0xff]
  %v1262 = vld [vmem:[%s4 + $0x21a8] sm:$0xff]
  %v1263 = vld [vmem:[%s4 + $0x21b0] sm:$0xff]
  %v1264 = vld [vmem:[%s4 + $0x21b8] sm:$0xff]
  %v1265 = vld [vmem:[%s4 + $0x21c0] sm:$0xff]
  %v1266 = vld [vmem:[%s4 + $0x21c8] sm:$0xff]
  %v1267 = vld [vmem:[%s4 + $0x21d0] sm:$0xff]
  %v1268 = vld [vmem:[%s4 + $0x21d8] sm:$0xff]
  %v1269 = vld [vmem:[%s4 + $0x21e0] sm:$0xff]
  %v1270 = vld [vmem:[%s4 + $0x21e8] sm:$0xff]
  %v1271 = vld [vmem:[%s4 + $0x21f0] sm:$0xff]
  %v1272 = vld [vmem:[%s4 + $0x21f8] sm:$0xff]
  %v1273 = vld [vmem:[%s4 + $0x2200] sm:$0xff]
  %v1274 = vld [vmem:[%s4 + $0x2208] sm:$0xff]
  %v1275 = vld [vmem:[%s4 + $0x2210] sm:$0xff]
  %v1276 = vld [vmem:[%s4 + $0x2218] sm:$0xff]
  %v1277 = vld [vmem:[%s4 + $0x2220] sm:$0xff]
  %v1278 = vld [vmem:[%s4 + $0x2228] sm:$0xff]
  %v1279 = vld [vmem:[%s4 + $0x2230] sm:$0xff]
  %v1280 = vld [vmem:[%s4 + $0x2238] sm:$0xff]
  %v1281 = vld [vmem:[%s4 + $0x2240] sm:$0xff]
  %v1282 = vld [vmem:[%s4 + $0x2248] sm:$0xff]
  %v1283 = vld [vmem:[%s4 + $0x2250] sm:$0xff]
  %v1284 = vld [vmem:[%s4 + $0x2258] sm:$0xff]
  %v1285 = vld [vmem:[%s4 + $0x2260] sm:$0xff]
  %v1286 = vld [vmem:[%s4 + $0x2268] sm:$0xff]
  %v1287 = vld [vmem:[%s4 + $0x2270] sm:$0xff]
  %v1288 = vld [vmem:[%s4 + $0x2278] sm:$0xff]
  %v1289 = vld [vmem:[%s4 + $0x2280] sm:$0xff]
  %v1290 = vld [vmem:[%s4 + $0x2288] sm:$0xff]
  %v1291 = vld [vmem:[%s4 + $0x2290] sm:$0xff]
  %v1292 = vld [vmem:[%s4 + $0x2298] sm:$0xff]
  %v1293 = vld [vmem:[%s4 + $0x22a0] sm:$0xff]
  %v1294 = vld [vmem:[%s4 + $0x22a8] sm:$0xff]
  %v1295 = vld [vmem:[%s4 + $0x22b0] sm:$0xff]
  %v1296 = vld [vmem:[%s4 + $0x22b8] sm:$0xff]
  %v1297 = vld [vmem:[%s4 + $0x22c0] sm:$0xff]
  %v1298 = vld [vmem:[%s4 + $0x22c8] sm:$0xff]
  %v1299 = vld [vmem:[%s4 + $0x22d0] sm:$0xff]
  %v1300 = vld [vmem:[%s4 + $0x22d8] sm:$0xff]
  %v1301 = vld [vmem:[%s4 + $0x22e0] sm:$0xff]
  %v1302 = vld [vmem:[%s4 + $0x22e8] sm:$0xff]
  %v1303 = vld [vmem:[%s4 + $0x22f0] sm:$0xff]
  %v1304 = vld [vmem:[%s4 + $0x22f8] sm:$0xff]
  %v1305 = vld [vmem:[%s4 + $0x2300] sm:$0xff]
  %v1306 = vld [vmem:[%s4 + $0x2308] sm:$0xff]
  %v1307 = vld [vmem:[%s4 + $0x2310] sm:$0xff]
  %v1308 = vld [vmem:[%s4 + $0x2318] sm:$0xff]
  %v1309 = vld [vmem:[%s4 + $0x2320] sm:$0xff]
  %v1310 = vld [vmem:[%s4 + $0x2328] sm:$0xff]
  %v1311 = vld [vmem:[%s4 + $0x2330] sm:$0xff]
  %v1312 = vld [vmem:[%s4 + $0x2338] sm:$0xff]
  %v1313 = vld [vmem:[%s4 + $0x2340] sm:$0xff]
  %v1314 = vld [vmem:[%s4 + $0x2348] sm:$0xff]
  %v1315 = vld [vmem:[%s4 + $0x2350] sm:$0xff]
  %v1316 = vld [vmem:[%s4 + $0x2358] sm:$0xff]
  %v1317 = vld [vmem:[%s4 + $0x2360] sm:$0xff]
  %v1318 = vld [vmem:[%s4 + $0x2368] sm:$0xff]
  %v1319 = vld [vmem:[%s4 + $0x2370] sm:$0xff]
  %v1320 = vld [vmem:[%s4 + $0x2378] sm:$0xff]
  %v1321 = vld [vmem:[%s4 + $0x2380] sm:$0xff]
  %v1322 = vld [vmem:[%s4 + $0x2388] sm:$0xff]
  %v1323 = vld [vmem:[%s4 + $0x2390] sm:$0xff]
  %v1324 = vld [vmem:[%s4 + $0x2398] sm:$0xff]
  %v1325 = vld [vmem:[%s4 + $0x23a0] sm:$0xff]
  %v1326 = vld [vmem:[%s4 + $0x23a8] sm:$0xff]
  %v1327 = vld [vmem:[%s4 + $0x23b0] sm:$0xff]
  %v1328 = vld [vmem:[%s4 + $0x23b8] sm:$0xff]
  %v1329 = vld [vmem:[%s4 + $0x23c0] sm:$0xff]
  %v1330 = vld [vmem:[%s4 + $0x23c8] sm:$0xff]
  %v1331 = vld [vmem:[%s4 + $0x23d0] sm:$0xff]
  %v1332 = vld [vmem:[%s4 + $0x23d8] sm:$0xff]
  %v1333 = vld [vmem:[%s4 + $0x23e0] sm:$0xff]
  %v1334 = vld [vmem:[%s4 + $0x23e8] sm:$0xff]
  %v1335 = vld [vmem:[%s4 + $0x23f0] sm:$0xff]
  %v1336 = vld [vmem:[%s4 + $0x23f8] sm:$0xff]
  %v1340 = vcombine.high %v182, %v182
  %v1342 = vunpack.c.l.s4 1966171168
  %v1343 = vunpack.c.0.s8 %v1342
  %v1344 = vlaneseq
  %v1345 = vshrl.u32 %v1344, 7
  %v1346 = vsub.s32 %v1343, %v1345
  %v1347 = vrot.slane %v182, %v1346
  %v1349 = vunpack.c.l.s4 1966171168
  %v1350 = vunpack.c.0.s8 %v1349
  %v1351 = vlaneseq
  %v1352 = vshrl.u32 %v1351, 7
  %v1353 = vsub.s32 %v1350, %v1352
  %v1354 = vrot.slane %v1340, %v1353
  %v1355 = vcombine.high %v1347, %v1347
  %v1356 = vcombine.high %v1354, %v1354
  %v1358 = vunpack.c.l.s4 1966171168
  %v1359 = vunpack.c.0.s8 %v1358
  %v1360 = vlaneseq
  %v1361 = vshrl.u32 %v1360, 7
  %v1362 = vsub.s32 %v1359, %v1361
  %v1363 = vrot.slane %v1347, %v1362
  %v1365 = vunpack.c.l.s4 1966171168
  %v1366 = vunpack.c.0.s8 %v1365
  %v1367 = vlaneseq
  %v1368 = vshrl.u32 %v1367, 7
  %v1369 = vsub.s32 %v1366, %v1368
  %v1370 = vrot.slane %v1354, %v1369
  %v1372 = vunpack.c.l.s4 1966171168
  %v1373 = vunpack.c.0.s8 %v1372
  %v1374 = vlaneseq
  %v1375 = vshrl.u32 %v1374, 7
  %v1376 = vsub.s32 %v1373, %v1375
  %v1377 = vrot.slane %v1355, %v1376
  %v1379 = vunpack.c.l.s4 1966171168
  %v1380 = vunpack.c.0.s8 %v1379
  %v1381 = vlaneseq
  %v1382 = vshrl.u32 %v1381, 7
  %v1383 = vsub.s32 %v1380, %v1382
  %v1384 = vrot.slane %v1356, %v1383
  %v1385 = vcombine.high %v1363, %v1363
  %v1386 = vcombine.high %v1370, %v1370
  %v1387 = vcombine.high %v1377, %v1377
  %v1388 = vcombine.high %v1384, %v1384
  %v1389 = vcombine.high %v183, %v183
  %v1391 = vunpack.c.l.s4 1966171168
  %v1392 = vunpack.c.0.s8 %v1391
  %v1393 = vlaneseq
  %v1394 = vshrl.u32 %v1393, 7
  %v1395 = vsub.s32 %v1392, %v1394
  %v1396 = vrot.slane %v183, %v1395
  %v1398 = vunpack.c.l.s4 1966171168
  %v1399 = vunpack.c.0.s8 %v1398
  %v1400 = vlaneseq
  %v1401 = vshrl.u32 %v1400, 7
  %v1402 = vsub.s32 %v1399, %v1401
  %v1403 = vrot.slane %v1389, %v1402
  %v1404 = vcombine.high %v1396, %v1396
  %v1405 = vcombine.high %v1403, %v1403
  %v1407 = vunpack.c.l.s4 1966171168
  %v1408 = vunpack.c.0.s8 %v1407
  %v1409 = vlaneseq
  %v1410 = vshrl.u32 %v1409, 7
  %v1411 = vsub.s32 %v1408, %v1410
  %v1412 = vrot.slane %v1396, %v1411
  %v1414 = vunpack.c.l.s4 1966171168
  %v1415 = vunpack.c.0.s8 %v1414
  %v1416 = vlaneseq
  %v1417 = vshrl.u32 %v1416, 7
  %v1418 = vsub.s32 %v1415, %v1417
  %v1419 = vrot.slane %v1403, %v1418
  %v1421 = vunpack.c.l.s4 1966171168
  %v1422 = vunpack.c.0.s8 %v1421
  %v1423 = vlaneseq
  %v1424 = vshrl.u32 %v1423, 7
  %v1425 = vsub.s32 %v1422, %v1424
  %v1426 = vrot.slane %v1404, %v1425
  %v1428 = vunpack.c.l.s4 1966171168
  %v1429 = vunpack.c.0.s8 %v1428
  %v1430 = vlaneseq
  %v1431 = vshrl.u32 %v1430, 7
  %v1432 = vsub.s32 %v1429, %v1431
  %v1433 = vrot.slane %v1405, %v1432
  %v1434 = vcombine.high %v1412, %v1412
  %v1435 = vcombine.high %v1419, %v1419
  %v1436 = vcombine.high %v1426, %v1426
  %v1437 = vcombine.high %v1433, %v1433
  %v1439 = vunpack.c.l.s4 1966171168
  %v1440 = vunpack.c.0.s8 %v1439
  %v1441 = vlaneseq
  %v1442 = vshrl.u32 %v1441, 7
  %v1443 = vsub.s32 %v1440, %v1442
  %v1444 = vrot.slane %v184, %v1443
  %v1445 = vcombine.high %v1444, %v1444
  %v1447 = vunpack.c.l.s4 1966171168
  %v1448 = vunpack.c.0.s8 %v1447
  %v1449 = vlaneseq
  %v1450 = vshrl.u32 %v1449, 7
  %v1451 = vsub.s32 %v1448, %v1450
  %v1452 = vrot.slane %v1444, %v1451
  %v1454 = vunpack.c.l.s4 1966171168
  %v1455 = vunpack.c.0.s8 %v1454
  %v1456 = vlaneseq
  %v1457 = vshrl.u32 %v1456, 7
  %v1458 = vsub.s32 %v1455, %v1457
  %v1459 = vrot.slane %v1445, %v1458
  %v2630 = vunpack.c.l.b16 %v185
  %v2631 = vunpack.c.h.b16 %v185
  %v2632 = vunpack.c.l.b16 %v186
  %v2633 = vunpack.c.h.b16 %v186
  %v2634 = vunpack.c.l.b16 %v187
  %v2635 = vunpack.c.h.b16 %v187
  %v2636 = vunpack.c.l.b16 %v188
  %v2637 = vunpack.c.h.b16 %v188
  %v2638 = vunpack.c.l.b16 %v189
  %v2639 = vunpack.c.h.b16 %v189
  %v2640 = vunpack.c.l.b16 %v190
  %v2641 = vunpack.c.h.b16 %v190
  %v2642 = vunpack.c.l.b16 %v191
  %v2643 = vunpack.c.h.b16 %v191
  %v2644 = vunpack.c.l.b16 %v192
  %v2645 = vunpack.c.h.b16 %v192
  %v2646 = vunpack.c.l.b16 %v193
  %v2647 = vunpack.c.h.b16 %v193
  %v2648 = vunpack.c.l.b16 %v194
  %v2649 = vunpack.c.h.b16 %v194
  %v2650 = vunpack.c.l.b16 %v195
  %v2651 = vunpack.c.h.b16 %v195
  %v2652 = vunpack.c.l.b16 %v196
  %v2653 = vunpack.c.h.b16 %v196
  %v2654 = vunpack.c.l.b16 %v197
  %v2655 = vunpack.c.h.b16 %v197
  %v2656 = vunpack.c.l.b16 %v198
  %v2657 = vunpack.c.h.b16 %v198
  %v2658 = vunpack.c.l.b16 %v199
  %v2659 = vunpack.c.h.b16 %v199
  %v2660 = vunpack.c.l.b16 %v200
  %v2661 = vunpack.c.h.b16 %v200
  %v2662 = vunpack.c.l.b16 %v201
  %v2663 = vunpack.c.h.b16 %v201
  %v2664 = vunpack.c.l.b16 %v202
  %v2665 = vunpack.c.h.b16 %v202
  %v2666 = vunpack.c.l.b16 %v203
  %v2667 = vunpack.c.h.b16 %v203
  %v2668 = vunpack.c.l.b16 %v204
  %v2669 = vunpack.c.h.b16 %v204
  %v2670 = vunpack.c.l.b16 %v205
  %v2671 = vunpack.c.h.b16 %v205
  %v2672 = vunpack.c.l.b16 %v206
  %v2673 = vunpack.c.h.b16 %v206
  %v2674 = vunpack.c.l.b16 %v207
  %v2675 = vunpack.c.h.b16 %v207
  %v2676 = vunpack.c.l.b16 %v208
  %v2677 = vunpack.c.h.b16 %v208
  %v2678 = vunpack.c.l.b16 %v209
  %v2679 = vunpack.c.h.b16 %v209
  %v2680 = vunpack.c.l.b16 %v210
  %v2681 = vunpack.c.h.b16 %v210
  %v2682 = vunpack.c.l.b16 %v211
  %v2683 = vunpack.c.h.b16 %v211
  %v2684 = vunpack.c.l.b16 %v212
  %v2685 = vunpack.c.h.b16 %v212
  %v2686 = vunpack.c.l.b16 %v213
  %v2687 = vunpack.c.h.b16 %v213
  %v2688 = vunpack.c.l.b16 %v214
  %v2689 = vunpack.c.h.b16 %v214
  %v2690 = vunpack.c.l.b16 %v215
  %v2691 = vunpack.c.h.b16 %v215
  %v2692 = vunpack.c.l.b16 %v216
  %v2693 = vunpack.c.h.b16 %v216
  %v2694 = vunpack.c.l.b16 %v217
  %v2695 = vunpack.c.h.b16 %v217
  %v2696 = vunpack.c.l.b16 %v218
  %v2697 = vunpack.c.h.b16 %v218
  %v2698 = vunpack.c.l.b16 %v219
  %v2699 = vunpack.c.h.b16 %v219
  %v2700 = vunpack.c.l.b16 %v220
  %v2701 = vunpack.c.h.b16 %v220
  %v2702 = vunpack.c.l.b16 %v221
  %v2703 = vunpack.c.h.b16 %v221
  %v2704 = vunpack.c.l.b16 %v222
  %v2705 = vunpack.c.h.b16 %v222
  %v2706 = vunpack.c.l.b16 %v223
  %v2707 = vunpack.c.h.b16 %v223
  %v2708 = vunpack.c.l.b16 %v224
  %v2709 = vunpack.c.h.b16 %v224
  %v2710 = vunpack.c.l.b16 %v225
  %v2711 = vunpack.c.h.b16 %v225
  %v2712 = vunpack.c.l.b16 %v226
  %v2713 = vunpack.c.h.b16 %v226
  %v2714 = vunpack.c.l.b16 %v227
  %v2715 = vunpack.c.h.b16 %v227
  %v2716 = vunpack.c.l.b16 %v228
  %v2717 = vunpack.c.h.b16 %v228
  %v2718 = vunpack.c.l.b16 %v229
  %v2719 = vunpack.c.h.b16 %v229
  %v2720 = vunpack.c.l.b16 %v230
  %v2721 = vunpack.c.h.b16 %v230
  %v2722 = vunpack.c.l.b16 %v231
  %v2723 = vunpack.c.h.b16 %v231
  %v2724 = vunpack.c.l.b16 %v232
  %v2725 = vunpack.c.h.b16 %v232
  %v2726 = vunpack.c.l.b16 %v233
  %v2727 = vunpack.c.h.b16 %v233
  %v2728 = vunpack.c.l.b16 %v234
  %v2729 = vunpack.c.h.b16 %v234
  %v2730 = vunpack.c.l.b16 %v235
  %v2731 = vunpack.c.h.b16 %v235
  %v2732 = vunpack.c.l.b16 %v236
  %v2733 = vunpack.c.h.b16 %v236
  %v2734 = vunpack.c.l.b16 %v237
  %v2735 = vunpack.c.h.b16 %v237
  %v2736 = vunpack.c.l.b16 %v238
  %v2737 = vunpack.c.h.b16 %v238
  %v2738 = vunpack.c.l.b16 %v239
  %v2739 = vunpack.c.h.b16 %v239
  %v2740 = vunpack.c.l.b16 %v240
  %v2741 = vunpack.c.h.b16 %v240
  %v2742 = vunpack.c.l.b16 %v241
  %v2743 = vunpack.c.h.b16 %v241
  %v2744 = vunpack.c.l.b16 %v242
  %v2745 = vunpack.c.h.b16 %v242
  %v2746 = vunpack.c.l.b16 %v243
  %v2747 = vunpack.c.h.b16 %v243
  %v2748 = vunpack.c.l.b16 %v244
  %v2749 = vunpack.c.h.b16 %v244
  %v2750 = vunpack.c.l.b16 %v245
  %v2751 = vunpack.c.h.b16 %v245
  %v2752 = vunpack.c.l.b16 %v246
  %v2753 = vunpack.c.h.b16 %v246
  %v2754 = vunpack.c.l.b16 %v247
  %v2755 = vunpack.c.h.b16 %v247
  %v2756 = vunpack.c.l.b16 %v248
  %v2757 = vunpack.c.h.b16 %v248
  %v2758 = vunpack.c.l.b16 %v249
  %v2759 = vunpack.c.h.b16 %v249
  %v2760 = vunpack.c.l.b16 %v250
  %v2761 = vunpack.c.h.b16 %v250
  %v2762 = vunpack.c.l.b16 %v251
  %v2763 = vunpack.c.h.b16 %v251
  %v2764 = vunpack.c.l.b16 %v252
  %v2765 = vunpack.c.h.b16 %v252
  %v2766 = vunpack.c.l.b16 %v253
  %v2767 = vunpack.c.h.b16 %v253
  %v2768 = vunpack.c.l.b16 %v254
  %v2769 = vunpack.c.h.b16 %v254
  %v2770 = vunpack.c.l.b16 %v255
  %v2771 = vunpack.c.h.b16 %v255
  %v2772 = vunpack.c.l.b16 %v256
  %v2773 = vunpack.c.h.b16 %v256
  %v2774 = vunpack.c.l.b16 %v257
  %v2775 = vunpack.c.h.b16 %v257
  %v2776 = vunpack.c.l.b16 %v258
  %v2777 = vunpack.c.h.b16 %v258
  %v2778 = vunpack.c.l.b16 %v259
  %v2779 = vunpack.c.h.b16 %v259
  %v2780 = vunpack.c.l.b16 %v260
  %v2781 = vunpack.c.h.b16 %v260
  %v2782 = vunpack.c.l.b16 %v261
  %v2783 = vunpack.c.h.b16 %v261
  %v2784 = vunpack.c.l.b16 %v262
  %v2785 = vunpack.c.h.b16 %v262
  %v2786 = vunpack.c.l.b16 %v263
  %v2787 = vunpack.c.h.b16 %v263
  %v2788 = vunpack.c.l.b16 %v264
  %v2789 = vunpack.c.h.b16 %v264
  %v2790 = vunpack.c.l.b16 %v265
  %v2791 = vunpack.c.h.b16 %v265
  %v2792 = vunpack.c.l.b16 %v266
  %v2793 = vunpack.c.h.b16 %v266
  %v2794 = vunpack.c.l.b16 %v267
  %v2795 = vunpack.c.h.b16 %v267
  %v2796 = vunpack.c.l.b16 %v268
  %v2797 = vunpack.c.h.b16 %v268
  %v2798 = vunpack.c.l.b16 %v269
  %v2799 = vunpack.c.h.b16 %v269
  %v2800 = vunpack.c.l.b16 %v270
  %v2801 = vunpack.c.h.b16 %v270
  %v2802 = vunpack.c.l.b16 %v271
  %v2803 = vunpack.c.h.b16 %v271
  %v2804 = vunpack.c.l.b16 %v272
  %v2805 = vunpack.c.h.b16 %v272
  %v2806 = vunpack.c.l.b16 %v273
  %v2807 = vunpack.c.h.b16 %v273
  %v2808 = vunpack.c.l.b16 %v274
  %v2809 = vunpack.c.h.b16 %v274
  %v2810 = vunpack.c.l.b16 %v275
  %v2811 = vunpack.c.h.b16 %v275
  %v2812 = vunpack.c.l.b16 %v276
  %v2813 = vunpack.c.h.b16 %v276
  %v2814 = vunpack.c.l.b16 %v277
  %v2815 = vunpack.c.h.b16 %v277
  %v2816 = vunpack.c.l.b16 %v278
  %v2817 = vunpack.c.h.b16 %v278
  %v2818 = vunpack.c.l.b16 %v279
  %v2819 = vunpack.c.h.b16 %v279
  %v2820 = vunpack.c.l.b16 %v280
  %v2821 = vunpack.c.h.b16 %v280
  %v2822 = vunpack.c.l.b16 %v281
  %v2823 = vunpack.c.h.b16 %v281
  %v2824 = vunpack.c.l.b16 %v282
  %v2825 = vunpack.c.h.b16 %v282
  %v2826 = vunpack.c.l.b16 %v283
  %v2827 = vunpack.c.h.b16 %v283
  %v2828 = vunpack.c.l.b16 %v284
  %v2829 = vunpack.c.h.b16 %v284
  %v2830 = vunpack.c.l.b16 %v285
  %v2831 = vunpack.c.h.b16 %v285
  %v2832 = vunpack.c.l.b16 %v286
  %v2833 = vunpack.c.h.b16 %v286
  %v2834 = vunpack.c.l.b16 %v287
  %v2835 = vunpack.c.h.b16 %v287
  %v2836 = vunpack.c.l.b16 %v288
  %v2837 = vunpack.c.h.b16 %v288
  %v2838 = vunpack.c.l.b16 %v289
  %v2839 = vunpack.c.h.b16 %v289
  %v2840 = vunpack.c.l.b16 %v290
  %v2841 = vunpack.c.h.b16 %v290
  %v2842 = vunpack.c.l.b16 %v291
  %v2843 = vunpack.c.h.b16 %v291
  %v2844 = vunpack.c.l.b16 %v292
  %v2845 = vunpack.c.h.b16 %v292
  %v2846 = vunpack.c.l.b16 %v293
  %v2847 = vunpack.c.h.b16 %v293
  %v2848 = vunpack.c.l.b16 %v294
  %v2849 = vunpack.c.h.b16 %v294
  %v2850 = vunpack.c.l.b16 %v295
  %v2851 = vunpack.c.h.b16 %v295
  %v2852 = vunpack.c.l.b16 %v296
  %v2853 = vunpack.c.h.b16 %v296
  %v2854 = vunpack.c.l.b16 %v297
  %v2855 = vunpack.c.h.b16 %v297
  %v2856 = vunpack.c.l.b16 %v298
  %v2857 = vunpack.c.h.b16 %v298
  %v2858 = vunpack.c.l.b16 %v299
  %v2859 = vunpack.c.h.b16 %v299
  %v2860 = vunpack.c.l.b16 %v300
  %v2861 = vunpack.c.h.b16 %v300
  %v2862 = vunpack.c.l.b16 %v301
  %v2863 = vunpack.c.h.b16 %v301
  %v2864 = vunpack.c.l.b16 %v302
  %v2865 = vunpack.c.h.b16 %v302
  %v2866 = vunpack.c.l.b16 %v303
  %v2867 = vunpack.c.h.b16 %v303
  %v2868 = vunpack.c.l.b16 %v304
  %v2869 = vunpack.c.h.b16 %v304
  %v2870 = vunpack.c.l.b16 %v305
  %v2871 = vunpack.c.h.b16 %v305
  %v2872 = vunpack.c.l.b16 %v306
  %v2873 = vunpack.c.h.b16 %v306
  %v2874 = vunpack.c.l.b16 %v307
  %v2875 = vunpack.c.h.b16 %v307
  %v2876 = vunpack.c.l.b16 %v308
  %v2877 = vunpack.c.h.b16 %v308
  %v2878 = vunpack.c.l.b16 %v309
  %v2879 = vunpack.c.h.b16 %v309
  %v2880 = vunpack.c.l.b16 %v310
  %v2881 = vunpack.c.h.b16 %v310
  %v2882 = vunpack.c.l.b16 %v311
  %v2883 = vunpack.c.h.b16 %v311
  %v2884 = vunpack.c.l.b16 %v312
  %v2885 = vunpack.c.h.b16 %v312
  %v2886 = vunpack.c.l.b16 %v313
  %v2887 = vunpack.c.h.b16 %v313
  %v2888 = vunpack.c.l.b16 %v314
  %v2889 = vunpack.c.h.b16 %v314
  %v2890 = vunpack.c.l.b16 %v315
  %v2891 = vunpack.c.h.b16 %v315
  %v2892 = vunpack.c.l.b16 %v316
  %v2893 = vunpack.c.h.b16 %v316
  %v2894 = vunpack.c.l.b16 %v317
  %v2895 = vunpack.c.h.b16 %v317
  %v2896 = vunpack.c.l.b16 %v318
  %v2897 = vunpack.c.h.b16 %v318
  %v2898 = vunpack.c.l.b16 %v319
  %v2899 = vunpack.c.h.b16 %v319
  %v2900 = vunpack.c.l.b16 %v320
  %v2901 = vunpack.c.h.b16 %v320
  %v2902 = vunpack.c.l.b16 %v321
  %v2903 = vunpack.c.h.b16 %v321
  %v2904 = vunpack.c.l.b16 %v322
  %v2905 = vunpack.c.h.b16 %v322
  %v2906 = vunpack.c.l.b16 %v323
  %v2907 = vunpack.c.h.b16 %v323
  %v2908 = vunpack.c.l.b16 %v324
  %v2909 = vunpack.c.h.b16 %v324
  %v2910 = vunpack.c.l.b16 %v325
  %v2911 = vunpack.c.h.b16 %v325
  %v2912 = vunpack.c.l.b16 %v326
  %v2913 = vunpack.c.h.b16 %v326
  %v2914 = vunpack.c.l.b16 %v327
  %v2915 = vunpack.c.h.b16 %v327
  %v2916 = vunpack.c.l.b16 %v328
  %v2917 = vunpack.c.h.b16 %v328
  %v2918 = vunpack.c.l.b16 %v329
  %v2919 = vunpack.c.h.b16 %v329
  %v2920 = vunpack.c.l.b16 %v330
  %v2921 = vunpack.c.h.b16 %v330
  %v2922 = vunpack.c.l.b16 %v331
  %v2923 = vunpack.c.h.b16 %v331
  %v2924 = vunpack.c.l.b16 %v332
  %v2925 = vunpack.c.h.b16 %v332
  %v2926 = vunpack.c.l.b16 %v333
  %v2927 = vunpack.c.h.b16 %v333
  %v2928 = vunpack.c.l.b16 %v334
  %v2929 = vunpack.c.h.b16 %v334
  %v2930 = vunpack.c.l.b16 %v335
  %v2931 = vunpack.c.h.b16 %v335
  %v2932 = vunpack.c.l.b16 %v336
  %v2933 = vunpack.c.h.b16 %v336
  %v2934 = vunpack.c.l.b16 %v337
  %v2935 = vunpack.c.h.b16 %v337
  %v2936 = vunpack.c.l.b16 %v338
  %v2937 = vunpack.c.h.b16 %v338
  %v2938 = vunpack.c.l.b16 %v339
  %v2939 = vunpack.c.h.b16 %v339
  %v2940 = vunpack.c.l.b16 %v340
  %v2941 = vunpack.c.h.b16 %v340
  %v2942 = vunpack.c.l.b16 %v341
  %v2943 = vunpack.c.h.b16 %v341
  %v2944 = vunpack.c.l.b16 %v342
  %v2945 = vunpack.c.h.b16 %v342
  %v2946 = vunpack.c.l.b16 %v343
  %v2947 = vunpack.c.h.b16 %v343
  %v2948 = vunpack.c.l.b16 %v344
  %v2949 = vunpack.c.h.b16 %v344
  %v2950 = vunpack.c.l.b16 %v345
  %v2951 = vunpack.c.h.b16 %v345
  %v2952 = vunpack.c.l.b16 %v346
  %v2953 = vunpack.c.h.b16 %v346
  %v2954 = vunpack.c.l.b16 %v347
  %v2955 = vunpack.c.h.b16 %v347
  %v2956 = vunpack.c.l.b16 %v348
  %v2957 = vunpack.c.h.b16 %v348
  %v2958 = vunpack.c.l.b16 %v349
  %v2959 = vunpack.c.h.b16 %v349
  %v2960 = vunpack.c.l.b16 %v350
  %v2961 = vunpack.c.h.b16 %v350
  %v2962 = vunpack.c.l.b16 %v351
  %v2963 = vunpack.c.h.b16 %v351
  %v2964 = vunpack.c.l.b16 %v352
  %v2965 = vunpack.c.h.b16 %v352
  %v2966 = vunpack.c.l.b16 %v353
  %v2967 = vunpack.c.h.b16 %v353
  %v2968 = vunpack.c.l.b16 %v354
  %v2969 = vunpack.c.h.b16 %v354
  %v2970 = vunpack.c.l.b16 %v355
  %v2971 = vunpack.c.h.b16 %v355
  %v2972 = vunpack.c.l.b16 %v356
  %v2973 = vunpack.c.h.b16 %v356
  %v2974 = vunpack.c.l.b16 %v357
  %v2975 = vunpack.c.h.b16 %v357
  %v2976 = vunpack.c.l.b16 %v358
  %v2977 = vunpack.c.h.b16 %v358
  %v2978 = vunpack.c.l.b16 %v359
  %v2979 = vunpack.c.h.b16 %v359
  %v2980 = vunpack.c.l.b16 %v360
  %v2981 = vunpack.c.h.b16 %v360
  %v2982 = vunpack.c.l.b16 %v361
  %v2983 = vunpack.c.h.b16 %v361
  %v2984 = vunpack.c.l.b16 %v362
  %v2985 = vunpack.c.h.b16 %v362
  %v2986 = vunpack.c.l.b16 %v363
  %v2987 = vunpack.c.h.b16 %v363
  %v2988 = vunpack.c.l.b16 %v364
  %v2989 = vunpack.c.h.b16 %v364
  %v2990 = vunpack.c.l.b16 %v365
  %v2991 = vunpack.c.h.b16 %v365
  %v2992 = vunpack.c.l.b16 %v366
  %v2993 = vunpack.c.h.b16 %v366
  %v2994 = vunpack.c.l.b16 %v367
  %v2995 = vunpack.c.h.b16 %v367
  %v2996 = vunpack.c.l.b16 %v368
  %v2997 = vunpack.c.h.b16 %v368
  %v2998 = vunpack.c.l.b16 %v369
  %v2999 = vunpack.c.h.b16 %v369
  %v3000 = vunpack.c.l.b16 %v370
  %v3001 = vunpack.c.h.b16 %v370
  %v3002 = vunpack.c.l.b16 %v371
  %v3003 = vunpack.c.h.b16 %v371
  %v3004 = vunpack.c.l.b16 %v372
  %v3005 = vunpack.c.h.b16 %v372
  %v3006 = vunpack.c.l.b16 %v373
  %v3007 = vunpack.c.h.b16 %v373
  %v3008 = vunpack.c.l.b16 %v374
  %v3009 = vunpack.c.h.b16 %v374
  %v3010 = vunpack.c.l.b16 %v375
  %v3011 = vunpack.c.h.b16 %v375
  %v3012 = vunpack.c.l.b16 %v376
  %v3013 = vunpack.c.h.b16 %v376
  %v3014 = vunpack.c.l.b16 %v377
  %v3015 = vunpack.c.h.b16 %v377
  %v3016 = vunpack.c.l.b16 %v378
  %v3017 = vunpack.c.h.b16 %v378
  %v3018 = vunpack.c.l.b16 %v379
  %v3019 = vunpack.c.h.b16 %v379
  %v3020 = vunpack.c.l.b16 %v380
  %v3021 = vunpack.c.h.b16 %v380
  %v3022 = vunpack.c.l.b16 %v381
  %v3023 = vunpack.c.h.b16 %v381
  %v3024 = vunpack.c.l.b16 %v382
  %v3025 = vunpack.c.h.b16 %v382
  %v3026 = vunpack.c.l.b16 %v383
  %v3027 = vunpack.c.h.b16 %v383
  %v3028 = vunpack.c.l.b16 %v384
  %v3029 = vunpack.c.h.b16 %v384
  %v3030 = vunpack.c.l.b16 %v385
  %v3031 = vunpack.c.h.b16 %v385
  %v3032 = vunpack.c.l.b16 %v386
  %v3033 = vunpack.c.h.b16 %v386
  %v3034 = vunpack.c.l.b16 %v387
  %v3035 = vunpack.c.h.b16 %v387
  %v3036 = vunpack.c.l.b16 %v388
  %v3037 = vunpack.c.h.b16 %v388
  %v3038 = vunpack.c.l.b16 %v389
  %v3039 = vunpack.c.h.b16 %v389
  %v3040 = vunpack.c.l.b16 %v390
  %v3041 = vunpack.c.h.b16 %v390
  %v3042 = vunpack.c.l.b16 %v391
  %v3043 = vunpack.c.h.b16 %v391
  %v3044 = vunpack.c.l.b16 %v392
  %v3045 = vunpack.c.h.b16 %v392
  %v3046 = vunpack.c.l.b16 %v393
  %v3047 = vunpack.c.h.b16 %v393
  %v3048 = vunpack.c.l.b16 %v394
  %v3049 = vunpack.c.h.b16 %v394
  %v3050 = vunpack.c.l.b16 %v395
  %v3051 = vunpack.c.h.b16 %v395
  %v3052 = vunpack.c.l.b16 %v396
  %v3053 = vunpack.c.h.b16 %v396
  %v3054 = vunpack.c.l.b16 %v397
  %v3055 = vunpack.c.h.b16 %v397
  %v3056 = vunpack.c.l.b16 %v398
  %v3057 = vunpack.c.h.b16 %v398
  %v3058 = vunpack.c.l.b16 %v399
  %v3059 = vunpack.c.h.b16 %v399
  %v3060 = vunpack.c.l.b16 %v400
  %v3061 = vunpack.c.h.b16 %v400
  %v3062 = vunpack.c.l.b16 %v401
  %v3063 = vunpack.c.h.b16 %v401
  %v3064 = vunpack.c.l.b16 %v402
  %v3065 = vunpack.c.h.b16 %v402
  %v3066 = vunpack.c.l.b16 %v403
  %v3067 = vunpack.c.h.b16 %v403
  %v3068 = vunpack.c.l.b16 %v404
  %v3069 = vunpack.c.h.b16 %v404
  %v3070 = vunpack.c.l.b16 %v405
  %v3071 = vunpack.c.h.b16 %v405
  %v3072 = vunpack.c.l.b16 %v406
  %v3073 = vunpack.c.h.b16 %v406
  %v3074 = vunpack.c.l.b16 %v407
  %v3075 = vunpack.c.h.b16 %v407
  %v3076 = vunpack.c.l.b16 %v408
  %v3077 = vunpack.c.h.b16 %v408
  %v3078 = vunpack.c.l.b16 %v409
  %v3079 = vunpack.c.h.b16 %v409
  %v3080 = vunpack.c.l.b16 %v410
  %v3081 = vunpack.c.h.b16 %v410
  %v3082 = vunpack.c.l.b16 %v411
  %v3083 = vunpack.c.h.b16 %v411
  %v3084 = vunpack.c.l.b16 %v412
  %v3085 = vunpack.c.h.b16 %v412
  %v3086 = vunpack.c.l.b16 %v413
  %v3087 = vunpack.c.h.b16 %v413
  %v3088 = vunpack.c.l.b16 %v414
  %v3089 = vunpack.c.h.b16 %v414
  %v3090 = vunpack.c.l.b16 %v415
  %v3091 = vunpack.c.h.b16 %v415
  %v3092 = vunpack.c.l.b16 %v416
  %v3093 = vunpack.c.h.b16 %v416
  %v3094 = vunpack.c.l.b16 %v417
  %v3095 = vunpack.c.h.b16 %v417
  %v3096 = vunpack.c.l.b16 %v418
  %v3097 = vunpack.c.h.b16 %v418
  %v3098 = vunpack.c.l.b16 %v419
  %v3099 = vunpack.c.h.b16 %v419
  %v3100 = vunpack.c.l.b16 %v420
  %v3101 = vunpack.c.h.b16 %v420
  %v3102 = vunpack.c.l.b16 %v421
  %v3103 = vunpack.c.h.b16 %v421
  %v3104 = vunpack.c.l.b16 %v422
  %v3105 = vunpack.c.h.b16 %v422
  %v3106 = vunpack.c.l.b16 %v423
  %v3107 = vunpack.c.h.b16 %v423
  %v3108 = vunpack.c.l.b16 %v424
  %v3109 = vunpack.c.h.b16 %v424
  %v3110 = vunpack.c.l.b16 %v425
  %v3111 = vunpack.c.h.b16 %v425
  %v3112 = vunpack.c.l.b16 %v426
  %v3113 = vunpack.c.h.b16 %v426
  %v3114 = vunpack.c.l.b16 %v427
  %v3115 = vunpack.c.h.b16 %v427
  %v3116 = vunpack.c.l.b16 %v428
  %v3117 = vunpack.c.h.b16 %v428
  %v3118 = vunpack.c.l.b16 %v429
  %v3119 = vunpack.c.h.b16 %v429
  %v3120 = vunpack.c.l.b16 %v430
  %v3121 = vunpack.c.h.b16 %v430
  %v3122 = vunpack.c.l.b16 %v431
  %v3123 = vunpack.c.h.b16 %v431
  %v3124 = vunpack.c.l.b16 %v432
  %v3125 = vunpack.c.h.b16 %v432
  %v3126 = vunpack.c.l.b16 %v433
  %v3127 = vunpack.c.h.b16 %v433
  %v3128 = vunpack.c.l.b16 %v434
  %v3129 = vunpack.c.h.b16 %v434
  %v3130 = vunpack.c.l.b16 %v435
  %v3131 = vunpack.c.h.b16 %v435
  %v3132 = vunpack.c.l.b16 %v436
  %v3133 = vunpack.c.h.b16 %v436
  %v3134 = vunpack.c.l.b16 %v437
  %v3135 = vunpack.c.h.b16 %v437
  %v3136 = vunpack.c.l.b16 %v438
  %v3137 = vunpack.c.h.b16 %v438
  %v3138 = vunpack.c.l.b16 %v439
  %v3139 = vunpack.c.h.b16 %v439
  %v3140 = vunpack.c.l.b16 %v440
  %v3141 = vunpack.c.h.b16 %v440
  %v3142 = vunpack.c.l.b16 %v441
  %v3143 = vunpack.c.h.b16 %v441
  %v3144 = vunpack.c.l.b16 %v442
  %v3145 = vunpack.c.h.b16 %v442
  %v3146 = vunpack.c.l.b16 %v443
  %v3147 = vunpack.c.h.b16 %v443
  %v3148 = vunpack.c.l.b16 %v444
  %v3149 = vunpack.c.h.b16 %v444
  %v3150 = vunpack.c.l.b16 %v445
  %v3151 = vunpack.c.h.b16 %v445
  %v3152 = vunpack.c.l.b16 %v446
  %v3153 = vunpack.c.h.b16 %v446
  %v3154 = vunpack.c.l.b16 %v447
  %v3155 = vunpack.c.h.b16 %v447
  %v3156 = vunpack.c.l.b16 %v448
  %v3157 = vunpack.c.h.b16 %v448
  %v3158 = vunpack.c.l.b16 %v449
  %v3159 = vunpack.c.h.b16 %v449
  %v3160 = vunpack.c.l.b16 %v450
  %v3161 = vunpack.c.h.b16 %v450
  %v3162 = vunpack.c.l.b16 %v451
  %v3163 = vunpack.c.h.b16 %v451
  %v3164 = vunpack.c.l.b16 %v452
  %v3165 = vunpack.c.h.b16 %v452
  %v3166 = vunpack.c.l.b16 %v453
  %v3167 = vunpack.c.h.b16 %v453
  %v3168 = vunpack.c.l.b16 %v454
  %v3169 = vunpack.c.h.b16 %v454
  %v3170 = vunpack.c.l.b16 %v455
  %v3171 = vunpack.c.h.b16 %v455
  %v3172 = vunpack.c.l.b16 %v456
  %v3173 = vunpack.c.h.b16 %v456
  %v3174 = vunpack.c.l.b16 %v457
  %v3175 = vunpack.c.h.b16 %v457
  %v3176 = vunpack.c.l.b16 %v458
  %v3177 = vunpack.c.h.b16 %v458
  %v3178 = vunpack.c.l.b16 %v459
  %v3179 = vunpack.c.h.b16 %v459
  %v3180 = vunpack.c.l.b16 %v460
  %v3181 = vunpack.c.h.b16 %v460
  %v3182 = vunpack.c.l.b16 %v461
  %v3183 = vunpack.c.h.b16 %v461
  %v3184 = vunpack.c.l.b16 %v462
  %v3185 = vunpack.c.h.b16 %v462
  %v3186 = vunpack.c.l.b16 %v463
  %v3187 = vunpack.c.h.b16 %v463
  %v3188 = vunpack.c.l.b16 %v464
  %v3189 = vunpack.c.h.b16 %v464
  %v3190 = vunpack.c.l.b16 %v465
  %v3191 = vunpack.c.h.b16 %v465
  %v3192 = vunpack.c.l.b16 %v466
  %v3193 = vunpack.c.h.b16 %v466
  %v3194 = vunpack.c.l.b16 %v467
  %v3195 = vunpack.c.h.b16 %v467
  %v3196 = vunpack.c.l.b16 %v468
  %v3197 = vunpack.c.h.b16 %v468
  %v3198 = vunpack.c.l.b16 %v469
  %v3199 = vunpack.c.h.b16 %v469
  %v3200 = vunpack.c.l.b16 %v470
  %v3201 = vunpack.c.h.b16 %v470
  %v3202 = vunpack.c.l.b16 %v471
  %v3203 = vunpack.c.h.b16 %v471
  %v3204 = vunpack.c.l.b16 %v472
  %v3205 = vunpack.c.h.b16 %v472
  %v3206 = vunpack.c.l.b16 %v473
  %v3207 = vunpack.c.h.b16 %v473
  %v3208 = vunpack.c.l.b16 %v474
  %v3209 = vunpack.c.h.b16 %v474
  %v3210 = vunpack.c.l.b16 %v475
  %v3211 = vunpack.c.h.b16 %v475
  %v3212 = vunpack.c.l.b16 %v476
  %v3213 = vunpack.c.h.b16 %v476
  %v3214 = vunpack.c.l.b16 %v477
  %v3215 = vunpack.c.h.b16 %v477
  %v3216 = vunpack.c.l.b16 %v478
  %v3217 = vunpack.c.h.b16 %v478
  %v3218 = vunpack.c.l.b16 %v479
  %v3219 = vunpack.c.h.b16 %v479
  %v3220 = vunpack.c.l.b16 %v480
  %v3221 = vunpack.c.h.b16 %v480
  %v3222 = vunpack.c.l.b16 %v481
  %v3223 = vunpack.c.h.b16 %v481
  %v3224 = vunpack.c.l.b16 %v482
  %v3225 = vunpack.c.h.b16 %v482
  %v3226 = vunpack.c.l.b16 %v483
  %v3227 = vunpack.c.h.b16 %v483
  %v3228 = vunpack.c.l.b16 %v484
  %v3229 = vunpack.c.h.b16 %v484
  %v3230 = vunpack.c.l.b16 %v485
  %v3231 = vunpack.c.h.b16 %v485
  %v3232 = vunpack.c.l.b16 %v486
  %v3233 = vunpack.c.h.b16 %v486
  %v3234 = vunpack.c.l.b16 %v487
  %v3235 = vunpack.c.h.b16 %v487
  %v3236 = vunpack.c.l.b16 %v488
  %v3237 = vunpack.c.h.b16 %v488
  %v3238 = vunpack.c.l.b16 %v489
  %v3239 = vunpack.c.h.b16 %v489
  %v3240 = vunpack.c.l.b16 %v490
  %v3241 = vunpack.c.h.b16 %v490
  %v3242 = vunpack.c.l.b16 %v491
  %v3243 = vunpack.c.h.b16 %v491
  %v3244 = vunpack.c.l.b16 %v492
  %v3245 = vunpack.c.h.b16 %v492
  %v3246 = vunpack.c.l.b16 %v493
  %v3247 = vunpack.c.h.b16 %v493
  %v3248 = vunpack.c.l.b16 %v494
  %v3249 = vunpack.c.h.b16 %v494
  %v3250 = vunpack.c.l.b16 %v495
  %v3251 = vunpack.c.h.b16 %v495
  %v3252 = vunpack.c.l.b16 %v496
  %v3253 = vunpack.c.h.b16 %v496
  %v3254 = vunpack.c.l.b16 %v497
  %v3255 = vunpack.c.h.b16 %v497
  %v3256 = vunpack.c.l.b16 %v498
  %v3257 = vunpack.c.h.b16 %v498
  %v3258 = vunpack.c.l.b16 %v499
  %v3259 = vunpack.c.h.b16 %v499
  %v3260 = vunpack.c.l.b16 %v500
  %v3261 = vunpack.c.h.b16 %v500
  %v3262 = vunpack.c.l.b16 %v501
  %v3263 = vunpack.c.h.b16 %v501
  %v3264 = vunpack.c.l.b16 %v502
  %v3265 = vunpack.c.h.b16 %v502
  %v3266 = vunpack.c.l.b16 %v503
  %v3267 = vunpack.c.h.b16 %v503
  %v3268 = vunpack.c.l.b16 %v504
  %v3269 = vunpack.c.h.b16 %v504
  %v3270 = vunpack.c.l.b16 %v505
  %v3271 = vunpack.c.h.b16 %v505
  %v3272 = vunpack.c.l.b16 %v506
  %v3273 = vunpack.c.h.b16 %v506
  %v3274 = vunpack.c.l.b16 %v507
  %v3275 = vunpack.c.h.b16 %v507
  %v3276 = vunpack.c.l.b16 %v508
  %v3277 = vunpack.c.h.b16 %v508
  %v3278 = vunpack.c.l.b16 %v509
  %v3279 = vunpack.c.h.b16 %v509
  %v3280 = vunpack.c.l.b16 %v510
  %v3281 = vunpack.c.h.b16 %v510
  %v3282 = vunpack.c.l.b16 %v511
  %v3283 = vunpack.c.h.b16 %v511
  %v3284 = vunpack.c.l.b16 %v512
  %v3285 = vunpack.c.h.b16 %v512
  %v3286 = vunpack.c.l.b16 %v513
  %v3287 = vunpack.c.h.b16 %v513
  %v3288 = vunpack.c.l.b16 %v514
  %v3289 = vunpack.c.h.b16 %v514
  %v3290 = vunpack.c.l.b16 %v515
  %v3291 = vunpack.c.h.b16 %v515
  %v3292 = vunpack.c.l.b16 %v516
  %v3293 = vunpack.c.h.b16 %v516
  %v3294 = vunpack.c.l.b16 %v517
  %v3295 = vunpack.c.h.b16 %v517
  %v3296 = vunpack.c.l.b16 %v518
  %v3297 = vunpack.c.h.b16 %v518
  %v3298 = vunpack.c.l.b16 %v519
  %v3299 = vunpack.c.h.b16 %v519
  %v3300 = vunpack.c.l.b16 %v520
  %v3301 = vunpack.c.h.b16 %v520
  %v3302 = vunpack.c.l.b16 %v521
  %v3303 = vunpack.c.h.b16 %v521
  %v3304 = vunpack.c.l.b16 %v522
  %v3305 = vunpack.c.h.b16 %v522
  %v3306 = vunpack.c.l.b16 %v523
  %v3307 = vunpack.c.h.b16 %v523
  %v3308 = vunpack.c.l.b16 %v524
  %v3309 = vunpack.c.h.b16 %v524
  %v3310 = vunpack.c.l.b16 %v525
  %v3311 = vunpack.c.h.b16 %v525
  %v3312 = vunpack.c.l.b16 %v526
  %v3313 = vunpack.c.h.b16 %v526
  %v3314 = vunpack.c.l.b16 %v527
  %v3315 = vunpack.c.h.b16 %v527
  %v3316 = vunpack.c.l.b16 %v528
  %v3317 = vunpack.c.h.b16 %v528
  %v3318 = vunpack.c.l.b16 %v529
  %v3319 = vunpack.c.h.b16 %v529
  %v3320 = vunpack.c.l.b16 %v530
  %v3321 = vunpack.c.h.b16 %v530
  %v3322 = vunpack.c.l.b16 %v531
  %v3323 = vunpack.c.h.b16 %v531
  %v3324 = vunpack.c.l.b16 %v532
  %v3325 = vunpack.c.h.b16 %v532
  %v3326 = vunpack.c.l.b16 %v533
  %v3327 = vunpack.c.h.b16 %v533
  %v3328 = vunpack.c.l.b16 %v534
  %v3329 = vunpack.c.h.b16 %v534
  %v3330 = vunpack.c.l.b16 %v535
  %v3331 = vunpack.c.h.b16 %v535
  %v3332 = vunpack.c.l.b16 %v536
  %v3333 = vunpack.c.h.b16 %v536
  %v3334 = vunpack.c.l.b16 %v537
  %v3335 = vunpack.c.h.b16 %v537
  %v3336 = vunpack.c.l.b16 %v538
  %v3337 = vunpack.c.h.b16 %v538
  %v3338 = vunpack.c.l.b16 %v539
  %v3339 = vunpack.c.h.b16 %v539
  %v3340 = vunpack.c.l.b16 %v540
  %v3341 = vunpack.c.h.b16 %v540
  %v3342 = vunpack.c.l.b16 %v541
  %v3343 = vunpack.c.h.b16 %v541
  %v3344 = vunpack.c.l.b16 %v542
  %v3345 = vunpack.c.h.b16 %v542
  %v3346 = vunpack.c.l.b16 %v543
  %v3347 = vunpack.c.h.b16 %v543
  %v3348 = vunpack.c.l.b16 %v544
  %v3349 = vunpack.c.h.b16 %v544
  %v3350 = vunpack.c.l.b16 %v545
  %v3351 = vunpack.c.h.b16 %v545
  %v3352 = vunpack.c.l.b16 %v546
  %v3353 = vunpack.c.h.b16 %v546
  %v3354 = vunpack.c.l.b16 %v547
  %v3355 = vunpack.c.h.b16 %v547
  %v3356 = vunpack.c.l.b16 %v548
  %v3357 = vunpack.c.h.b16 %v548
  %v3358 = vunpack.c.l.b16 %v549
  %v3359 = vunpack.c.h.b16 %v549
  %v3360 = vunpack.c.l.b16 %v550
  %v3361 = vunpack.c.h.b16 %v550
  %v3362 = vunpack.c.l.b16 %v551
  %v3363 = vunpack.c.h.b16 %v551
  %v3364 = vunpack.c.l.b16 %v552
  %v3365 = vunpack.c.h.b16 %v552
  %v3366 = vunpack.c.l.b16 %v553
  %v3367 = vunpack.c.h.b16 %v553
  %v3368 = vunpack.c.l.b16 %v554
  %v3369 = vunpack.c.h.b16 %v554
  %v3370 = vunpack.c.l.b16 %v555
  %v3371 = vunpack.c.h.b16 %v555
  %v3372 = vunpack.c.l.b16 %v556
  %v3373 = vunpack.c.h.b16 %v556
  %v3374 = vunpack.c.l.b16 %v557
  %v3375 = vunpack.c.h.b16 %v557
  %v3376 = vunpack.c.l.b16 %v558
  %v3377 = vunpack.c.h.b16 %v558
  %v3378 = vunpack.c.l.b16 %v559
  %v3379 = vunpack.c.h.b16 %v559
  %v3380 = vunpack.c.l.b16 %v560
  %v3381 = vunpack.c.h.b16 %v560
  %v3382 = vunpack.c.l.b16 %v561
  %v3383 = vunpack.c.h.b16 %v561
  %v3384 = vunpack.c.l.b16 %v562
  %v3385 = vunpack.c.h.b16 %v562
  %v3386 = vunpack.c.l.b16 %v563
  %v3387 = vunpack.c.h.b16 %v563
  %v3388 = vunpack.c.l.b16 %v564
  %v3389 = vunpack.c.h.b16 %v564
  %v3390 = vunpack.c.l.b16 %v565
  %v3391 = vunpack.c.h.b16 %v565
  %v3392 = vunpack.c.l.b16 %v566
  %v3393 = vunpack.c.h.b16 %v566
  %v3394 = vunpack.c.l.b16 %v567
  %v3395 = vunpack.c.h.b16 %v567
  %v3396 = vunpack.c.l.b16 %v568
  %v3397 = vunpack.c.h.b16 %v568
  %v3398 = vunpack.c.l.b16 %v569
  %v3399 = vunpack.c.h.b16 %v569
  %v3400 = vunpack.c.l.b16 %v570
  %v3401 = vunpack.c.h.b16 %v570
  %v3402 = vunpack.c.l.b16 %v571
  %v3403 = vunpack.c.h.b16 %v571
  %v3404 = vunpack.c.l.b16 %v572
  %v3405 = vunpack.c.h.b16 %v572
  %v3406 = vunpack.c.l.b16 %v573
  %v3407 = vunpack.c.h.b16 %v573
  %v3408 = vunpack.c.l.b16 %v574
  %v3409 = vunpack.c.h.b16 %v574
  %v3410 = vunpack.c.l.b16 %v575
  %v3411 = vunpack.c.h.b16 %v575
  %v3412 = vunpack.c.l.b16 %v576
  %v3413 = vunpack.c.h.b16 %v576
  %v3414 = vunpack.c.l.b16 %v577
  %v3415 = vunpack.c.h.b16 %v577
  %v3416 = vunpack.c.l.b16 %v578
  %v3417 = vunpack.c.h.b16 %v578
  %v3418 = vunpack.c.l.b16 %v579
  %v3419 = vunpack.c.h.b16 %v579
  %v3420 = vunpack.c.l.b16 %v580
  %v3421 = vunpack.c.h.b16 %v580
  %v3422 = vunpack.c.l.b16 %v581
  %v3423 = vunpack.c.h.b16 %v581
  %v3424 = vunpack.c.l.b16 %v582
  %v3425 = vunpack.c.h.b16 %v582
  %v3426 = vunpack.c.l.b16 %v583
  %v3427 = vunpack.c.h.b16 %v583
  %v3428 = vunpack.c.l.b16 %v584
  %v3429 = vunpack.c.h.b16 %v584
  %v3430 = vunpack.c.l.b16 %v585
  %v3431 = vunpack.c.h.b16 %v585
  %v3432 = vunpack.c.l.b16 %v586
  %v3433 = vunpack.c.h.b16 %v586
  %v3434 = vunpack.c.l.b16 %v587
  %v3435 = vunpack.c.h.b16 %v587
  %v3436 = vunpack.c.l.b16 %v588
  %v3437 = vunpack.c.h.b16 %v588
  %v3438 = vunpack.c.l.b16 %v589
  %v3439 = vunpack.c.h.b16 %v589
  %v3440 = vunpack.c.l.b16 %v590
  %v3441 = vunpack.c.h.b16 %v590
  %v3442 = vunpack.c.l.b16 %v591
  %v3443 = vunpack.c.h.b16 %v591
  %v3444 = vunpack.c.l.b16 %v592
  %v3445 = vunpack.c.h.b16 %v592
  %v3446 = vunpack.c.l.b16 %v593
  %v3447 = vunpack.c.h.b16 %v593
  %v3448 = vunpack.c.l.b16 %v594
  %v3449 = vunpack.c.h.b16 %v594
  %v3450 = vunpack.c.l.b16 %v595
  %v3451 = vunpack.c.h.b16 %v595
  %v3452 = vunpack.c.l.b16 %v596
  %v3453 = vunpack.c.h.b16 %v596
  %v3454 = vunpack.c.l.b16 %v597
  %v3455 = vunpack.c.h.b16 %v597
  %v3456 = vunpack.c.l.b16 %v598
  %v3457 = vunpack.c.h.b16 %v598
  %v3458 = vunpack.c.l.b16 %v599
  %v3459 = vunpack.c.h.b16 %v599
  %v3460 = vunpack.c.l.b16 %v600
  %v3461 = vunpack.c.h.b16 %v600
  %v3462 = vunpack.c.l.b16 %v601
  %v3463 = vunpack.c.h.b16 %v601
  %v3464 = vunpack.c.l.b16 %v602
  %v3465 = vunpack.c.h.b16 %v602
  %v3466 = vunpack.c.l.b16 %v603
  %v3467 = vunpack.c.h.b16 %v603
  %v3468 = vunpack.c.l.b16 %v604
  %v3469 = vunpack.c.h.b16 %v604
  %v3470 = vunpack.c.l.b16 %v605
  %v3471 = vunpack.c.h.b16 %v605
  %v3472 = vunpack.c.l.b16 %v606
  %v3473 = vunpack.c.h.b16 %v606
  %v3474 = vunpack.c.l.b16 %v607
  %v3475 = vunpack.c.h.b16 %v607
  %v3476 = vunpack.c.l.b16 %v608
  %v3477 = vunpack.c.h.b16 %v608
  %v3478 = vunpack.c.l.b16 %v609
  %v3479 = vunpack.c.h.b16 %v609
  %v3480 = vunpack.c.l.b16 %v610
  %v3481 = vunpack.c.h.b16 %v610
  %v3482 = vunpack.c.l.b16 %v611
  %v3483 = vunpack.c.h.b16 %v611
  %v3484 = vunpack.c.l.b16 %v612
  %v3485 = vunpack.c.h.b16 %v612
  %v3486 = vunpack.c.l.b16 %v613
  %v3487 = vunpack.c.h.b16 %v613
  %v3488 = vunpack.c.l.b16 %v614
  %v3489 = vunpack.c.h.b16 %v614
  %v3490 = vunpack.c.l.b16 %v615
  %v3491 = vunpack.c.h.b16 %v615
  %v3492 = vunpack.c.l.b16 %v616
  %v3493 = vunpack.c.h.b16 %v616
  %v3494 = vunpack.c.l.b16 %v617
  %v3495 = vunpack.c.h.b16 %v617
  %v3496 = vunpack.c.l.b16 %v618
  %v3497 = vunpack.c.h.b16 %v618
  %v3498 = vunpack.c.l.b16 %v619
  %v3499 = vunpack.c.h.b16 %v619
  %v3500 = vunpack.c.l.b16 %v620
  %v3501 = vunpack.c.h.b16 %v620
  %v3502 = vunpack.c.l.b16 %v621
  %v3503 = vunpack.c.h.b16 %v621
  %v3504 = vunpack.c.l.b16 %v622
  %v3505 = vunpack.c.h.b16 %v622
  %v3506 = vunpack.c.l.b16 %v623
  %v3507 = vunpack.c.h.b16 %v623
  %v3508 = vunpack.c.l.b16 %v624
  %v3509 = vunpack.c.h.b16 %v624
  %v3510 = vunpack.c.l.b16 %v625
  %v3511 = vunpack.c.h.b16 %v625
  %v3512 = vunpack.c.l.b16 %v626
  %v3513 = vunpack.c.h.b16 %v626
  %v3514 = vunpack.c.l.b16 %v627
  %v3515 = vunpack.c.h.b16 %v627
  %v3516 = vunpack.c.l.b16 %v628
  %v3517 = vunpack.c.h.b16 %v628
  %v3518 = vunpack.c.l.b16 %v629
  %v3519 = vunpack.c.h.b16 %v629
  %v3520 = vunpack.c.l.b16 %v630
  %v3521 = vunpack.c.h.b16 %v630
  %v3522 = vunpack.c.l.b16 %v631
  %v3523 = vunpack.c.h.b16 %v631
  %v3524 = vunpack.c.l.b16 %v632
  %v3525 = vunpack.c.h.b16 %v632
  %v3526 = vunpack.c.l.b16 %v633
  %v3527 = vunpack.c.h.b16 %v633
  %v3528 = vunpack.c.l.b16 %v634
  %v3529 = vunpack.c.h.b16 %v634
  %v3530 = vunpack.c.l.b16 %v635
  %v3531 = vunpack.c.h.b16 %v635
  %v3532 = vunpack.c.l.b16 %v636
  %v3533 = vunpack.c.h.b16 %v636
  %v3534 = vunpack.c.l.b16 %v637
  %v3535 = vunpack.c.h.b16 %v637
  %v3536 = vunpack.c.l.b16 %v638
  %v3537 = vunpack.c.h.b16 %v638
  %v3538 = vunpack.c.l.b16 %v639
  %v3539 = vunpack.c.h.b16 %v639
  %v3540 = vunpack.c.l.b16 %v640
  %v3541 = vunpack.c.h.b16 %v640
  %v3542 = vunpack.c.l.b16 %v641
  %v3543 = vunpack.c.h.b16 %v641
  %v3544 = vunpack.c.l.b16 %v642
  %v3545 = vunpack.c.h.b16 %v642
  %v3546 = vunpack.c.l.b16 %v643
  %v3547 = vunpack.c.h.b16 %v643
  %v3548 = vunpack.c.l.b16 %v644
  %v3549 = vunpack.c.h.b16 %v644
  %v3550 = vunpack.c.l.b16 %v645
  %v3551 = vunpack.c.h.b16 %v645
  %v3552 = vunpack.c.l.b16 %v646
  %v3553 = vunpack.c.h.b16 %v646
  %v3554 = vunpack.c.l.b16 %v647
  %v3555 = vunpack.c.h.b16 %v647
  %v3556 = vunpack.c.l.b16 %v648
  %v3557 = vunpack.c.h.b16 %v648
  %v3558 = vunpack.c.l.b16 %v649
  %v3559 = vunpack.c.h.b16 %v649
  %v3560 = vunpack.c.l.b16 %v650
  %v3561 = vunpack.c.h.b16 %v650
  %v3562 = vunpack.c.l.b16 %v651
  %v3563 = vunpack.c.h.b16 %v651
  %v3564 = vunpack.c.l.b16 %v652
  %v3565 = vunpack.c.h.b16 %v652
  %v3566 = vunpack.c.l.b16 %v653
  %v3567 = vunpack.c.h.b16 %v653
  %v3568 = vunpack.c.l.b16 %v654
  %v3569 = vunpack.c.h.b16 %v654
  %v3570 = vunpack.c.l.b16 %v655
  %v3571 = vunpack.c.h.b16 %v655
  %v3572 = vunpack.c.l.b16 %v656
  %v3573 = vunpack.c.h.b16 %v656
  %v3574 = vunpack.c.l.b16 %v657
  %v3575 = vunpack.c.h.b16 %v657
  %v3576 = vunpack.c.l.b16 %v658
  %v3577 = vunpack.c.h.b16 %v658
  %v3578 = vunpack.c.l.b16 %v659
  %v3579 = vunpack.c.h.b16 %v659
  %v3580 = vunpack.c.l.b16 %v660
  %v3581 = vunpack.c.h.b16 %v660
  %v3582 = vunpack.c.l.b16 %v661
  %v3583 = vunpack.c.h.b16 %v661
  %v3584 = vunpack.c.l.b16 %v662
  %v3585 = vunpack.c.h.b16 %v662
  %v3586 = vunpack.c.l.b16 %v663
  %v3587 = vunpack.c.h.b16 %v663
  %v3588 = vunpack.c.l.b16 %v664
  %v3589 = vunpack.c.h.b16 %v664
  %v3590 = vunpack.c.l.b16 %v665
  %v3591 = vunpack.c.h.b16 %v665
  %v3592 = vunpack.c.l.b16 %v666
  %v3593 = vunpack.c.h.b16 %v666
  %v3594 = vunpack.c.l.b16 %v667
  %v3595 = vunpack.c.h.b16 %v667
  %v3596 = vunpack.c.l.b16 %v668
  %v3597 = vunpack.c.h.b16 %v668
  %v3598 = vunpack.c.l.b16 %v669
  %v3599 = vunpack.c.h.b16 %v669
  %v3600 = vunpack.c.l.b16 %v670
  %v3601 = vunpack.c.h.b16 %v670
  %v3602 = vunpack.c.l.b16 %v671
  %v3603 = vunpack.c.h.b16 %v671
  %v3604 = vunpack.c.l.b16 %v672
  %v3605 = vunpack.c.h.b16 %v672
  %v3606 = vunpack.c.l.b16 %v673
  %v3607 = vunpack.c.h.b16 %v673
  %v3608 = vunpack.c.l.b16 %v674
  %v3609 = vunpack.c.h.b16 %v674
  %v3610 = vunpack.c.l.b16 %v675
  %v3611 = vunpack.c.h.b16 %v675
  %v3612 = vunpack.c.l.b16 %v676
  %v3613 = vunpack.c.h.b16 %v676
  %v3614 = vunpack.c.l.b16 %v677
  %v3615 = vunpack.c.h.b16 %v677
  %v3616 = vunpack.c.l.b16 %v678
  %v3617 = vunpack.c.h.b16 %v678
  %v3618 = vunpack.c.l.b16 %v679
  %v3619 = vunpack.c.h.b16 %v679
  %v3620 = vunpack.c.l.b16 %v680
  %v3621 = vunpack.c.h.b16 %v680
  %v3622 = vunpack.c.l.b16 %v681
  %v3623 = vunpack.c.h.b16 %v681
  %v3624 = vunpack.c.l.b16 %v682
  %v3625 = vunpack.c.h.b16 %v682
  %v3626 = vunpack.c.l.b16 %v683
  %v3627 = vunpack.c.h.b16 %v683
  %v3628 = vunpack.c.l.b16 %v684
  %v3629 = vunpack.c.h.b16 %v684
  %v3630 = vunpack.c.l.b16 %v685
  %v3631 = vunpack.c.h.b16 %v685
  %v3632 = vunpack.c.l.b16 %v686
  %v3633 = vunpack.c.h.b16 %v686
  %v3634 = vunpack.c.l.b16 %v687
  %v3635 = vunpack.c.h.b16 %v687
  %v3636 = vunpack.c.l.b16 %v688
  %v3637 = vunpack.c.h.b16 %v688
  %v3638 = vunpack.c.l.b16 %v689
  %v3639 = vunpack.c.h.b16 %v689
  %v3640 = vunpack.c.l.b16 %v690
  %v3641 = vunpack.c.h.b16 %v690
  %v3642 = vunpack.c.l.b16 %v691
  %v3643 = vunpack.c.h.b16 %v691
  %v3644 = vunpack.c.l.b16 %v692
  %v3645 = vunpack.c.h.b16 %v692
  %v3646 = vunpack.c.l.b16 %v693
  %v3647 = vunpack.c.h.b16 %v693
  %v3648 = vunpack.c.l.b16 %v694
  %v3649 = vunpack.c.h.b16 %v694
  %v3650 = vunpack.c.l.b16 %v695
  %v3651 = vunpack.c.h.b16 %v695
  %v3652 = vunpack.c.l.b16 %v696
  %v3653 = vunpack.c.h.b16 %v696
  %v3654 = vunpack.c.l.b16 %v697
  %v3655 = vunpack.c.h.b16 %v697
  %v3656 = vunpack.c.l.b16 %v698
  %v3657 = vunpack.c.h.b16 %v698
  %v3658 = vunpack.c.l.b16 %v699
  %v3659 = vunpack.c.h.b16 %v699
  %v3660 = vunpack.c.l.b16 %v700
  %v3661 = vunpack.c.h.b16 %v700
  %v3662 = vunpack.c.l.b16 %v701
  %v3663 = vunpack.c.h.b16 %v701
  %v3664 = vunpack.c.l.b16 %v702
  %v3665 = vunpack.c.h.b16 %v702
  %v3666 = vunpack.c.l.b16 %v703
  %v3667 = vunpack.c.h.b16 %v703
  %v3668 = vunpack.c.l.b16 %v704
  %v3669 = vunpack.c.h.b16 %v704
  %v3670 = vunpack.c.l.b16 %v705
  %v3671 = vunpack.c.h.b16 %v705
  %v3672 = vunpack.c.l.b16 %v706
  %v3673 = vunpack.c.h.b16 %v706
  %v3674 = vunpack.c.l.b16 %v707
  %v3675 = vunpack.c.h.b16 %v707
  %v3676 = vunpack.c.l.b16 %v708
  %v3677 = vunpack.c.h.b16 %v708
  %v3678 = vunpack.c.l.b16 %v709
  %v3679 = vunpack.c.h.b16 %v709
  %v3680 = vunpack.c.l.b16 %v710
  %v3681 = vunpack.c.h.b16 %v710
  %v3682 = vunpack.c.l.b16 %v711
  %v3683 = vunpack.c.h.b16 %v711
  %v3684 = vunpack.c.l.b16 %v712
  %v3685 = vunpack.c.h.b16 %v712
  %v3686 = vunpack.c.l.b16 %v713
  %v3687 = vunpack.c.h.b16 %v713
  %v3688 = vunpack.c.l.b16 %v714
  %v3689 = vunpack.c.h.b16 %v714
  %v3690 = vunpack.c.l.b16 %v715
  %v3691 = vunpack.c.h.b16 %v715
  %v3692 = vunpack.c.l.b16 %v716
  %v3693 = vunpack.c.h.b16 %v716
  %v3694 = vunpack.c.l.b16 %v717
  %v3695 = vunpack.c.h.b16 %v717
  %v3696 = vunpack.c.l.b16 %v718
  %v3697 = vunpack.c.h.b16 %v718
  %v3698 = vunpack.c.l.b16 %v719
  %v3699 = vunpack.c.h.b16 %v719
  %v3700 = vunpack.c.l.b16 %v720
  %v3701 = vunpack.c.h.b16 %v720
  %v3702 = vunpack.c.l.b16 %v721
  %v3703 = vunpack.c.h.b16 %v721
  %v3704 = vunpack.c.l.b16 %v722
  %v3705 = vunpack.c.h.b16 %v722
  %v3706 = vunpack.c.l.b16 %v723
  %v3707 = vunpack.c.h.b16 %v723
  %v3708 = vunpack.c.l.b16 %v724
  %v3709 = vunpack.c.h.b16 %v724
  %v3710 = vunpack.c.l.b16 %v725
  %v3711 = vunpack.c.h.b16 %v725
  %v3712 = vunpack.c.l.b16 %v726
  %v3713 = vunpack.c.h.b16 %v726
  %v3714 = vunpack.c.l.b16 %v727
  %v3715 = vunpack.c.h.b16 %v727
  %v3716 = vunpack.c.l.b16 %v728
  %v3717 = vunpack.c.h.b16 %v728
  %v3718 = vunpack.c.l.b16 %v729
  %v3719 = vunpack.c.h.b16 %v729
  %v3720 = vunpack.c.l.b16 %v730
  %v3721 = vunpack.c.h.b16 %v730
  %v3722 = vunpack.c.l.b16 %v731
  %v3723 = vunpack.c.h.b16 %v731
  %v3724 = vunpack.c.l.b16 %v732
  %v3725 = vunpack.c.h.b16 %v732
  %v3726 = vunpack.c.l.b16 %v733
  %v3727 = vunpack.c.h.b16 %v733
  %v3728 = vunpack.c.l.b16 %v734
  %v3729 = vunpack.c.h.b16 %v734
  %v3730 = vunpack.c.l.b16 %v735
  %v3731 = vunpack.c.h.b16 %v735
  %v3732 = vunpack.c.l.b16 %v736
  %v3733 = vunpack.c.h.b16 %v736
  %v3734 = vunpack.c.l.b16 %v737
  %v3735 = vunpack.c.h.b16 %v737
  %v3736 = vunpack.c.l.b16 %v738
  %v3737 = vunpack.c.h.b16 %v738
  %v3738 = vunpack.c.l.b16 %v739
  %v3739 = vunpack.c.h.b16 %v739
  %v3740 = vunpack.c.l.b16 %v740
  %v3741 = vunpack.c.h.b16 %v740
  %v3742 = vunpack.c.l.b16 %v741
  %v3743 = vunpack.c.h.b16 %v741
  %v3744 = vunpack.c.l.b16 %v742
  %v3745 = vunpack.c.h.b16 %v742
  %v3746 = vunpack.c.l.b16 %v743
  %v3747 = vunpack.c.h.b16 %v743
  %v3748 = vunpack.c.l.b16 %v744
  %v3749 = vunpack.c.h.b16 %v744
  %v3750 = vunpack.c.l.b16 %v745
  %v3751 = vunpack.c.h.b16 %v745
  %v3752 = vunpack.c.l.b16 %v746
  %v3753 = vunpack.c.h.b16 %v746
  %v3754 = vunpack.c.l.b16 %v747
  %v3755 = vunpack.c.h.b16 %v747
  %v3756 = vunpack.c.l.b16 %v748
  %v3757 = vunpack.c.h.b16 %v748
  %v3758 = vunpack.c.l.b16 %v749
  %v3759 = vunpack.c.h.b16 %v749
  %v3760 = vunpack.c.l.b16 %v750
  %v3761 = vunpack.c.h.b16 %v750
  %v3762 = vunpack.c.l.b16 %v751
  %v3763 = vunpack.c.h.b16 %v751
  %v3764 = vunpack.c.l.b16 %v752
  %v3765 = vunpack.c.h.b16 %v752
  %v3766 = vunpack.c.l.b16 %v753
  %v3767 = vunpack.c.h.b16 %v753
  %v3768 = vunpack.c.l.b16 %v754
  %v3769 = vunpack.c.h.b16 %v754
  %v3770 = vunpack.c.l.b16 %v755
  %v3771 = vunpack.c.h.b16 %v755
  %v3772 = vunpack.c.l.b16 %v756
  %v3773 = vunpack.c.h.b16 %v756
  %v3774 = vunpack.c.l.b16 %v757
  %v3775 = vunpack.c.h.b16 %v757
  %v3776 = vunpack.c.l.b16 %v758
  %v3777 = vunpack.c.h.b16 %v758
  %v3778 = vunpack.c.l.b16 %v759
  %v3779 = vunpack.c.h.b16 %v759
  %v3780 = vunpack.c.l.b16 %v760
  %v3781 = vunpack.c.h.b16 %v760
  %v3782 = vunpack.c.l.b16 %v761
  %v3783 = vunpack.c.h.b16 %v761
  %v3784 = vunpack.c.l.b16 %v762
  %v3785 = vunpack.c.h.b16 %v762
  %v3786 = vunpack.c.l.b16 %v763
  %v3787 = vunpack.c.h.b16 %v763
  %v3788 = vunpack.c.l.b16 %v764
  %v3789 = vunpack.c.h.b16 %v764
  %v3790 = vunpack.c.l.b16 %v765
  %v3791 = vunpack.c.h.b16 %v765
  %v3792 = vunpack.c.l.b16 %v766
  %v3793 = vunpack.c.h.b16 %v766
  %v3794 = vunpack.c.l.b16 %v767
  %v3795 = vunpack.c.h.b16 %v767
  %v3796 = vunpack.c.l.b16 %v768
  %v3797 = vunpack.c.h.b16 %v768
  %v3798 = vunpack.c.l.b16 %v769
  %v3799 = vunpack.c.h.b16 %v769
  %v3800 = vunpack.c.l.b16 %v770
  %v3801 = vunpack.c.h.b16 %v770
  %v3802 = vunpack.c.l.b16 %v771
  %v3803 = vunpack.c.h.b16 %v771
  %v3804 = vunpack.c.l.b16 %v772
  %v3805 = vunpack.c.h.b16 %v772
  %v3806 = vunpack.c.l.b16 %v773
  %v3807 = vunpack.c.h.b16 %v773
  %v3808 = vunpack.c.l.b16 %v774
  %v3809 = vunpack.c.h.b16 %v774
  %v3810 = vunpack.c.l.b16 %v775
  %v3811 = vunpack.c.h.b16 %v775
  %v3812 = vunpack.c.l.b16 %v776
  %v3813 = vunpack.c.h.b16 %v776
  %v3814 = vunpack.c.l.b16 %v777
  %v3815 = vunpack.c.h.b16 %v777
  %v3816 = vunpack.c.l.b16 %v778
  %v3817 = vunpack.c.h.b16 %v778
  %v3818 = vunpack.c.l.b16 %v779
  %v3819 = vunpack.c.h.b16 %v779
  %v3820 = vunpack.c.l.b16 %v780
  %v3821 = vunpack.c.h.b16 %v780
  %v3822 = vunpack.c.l.b16 %v781
  %v3823 = vunpack.c.h.b16 %v781
  %v3824 = vunpack.c.l.b16 %v782
  %v3825 = vunpack.c.h.b16 %v782
  %v3826 = vunpack.c.l.b16 %v783
  %v3827 = vunpack.c.h.b16 %v783
  %v3828 = vunpack.c.l.b16 %v784
  %v3829 = vunpack.c.h.b16 %v784
  %v3830 = vunpack.c.l.b16 %v785
  %v3831 = vunpack.c.h.b16 %v785
  %v3832 = vunpack.c.l.b16 %v786
  %v3833 = vunpack.c.h.b16 %v786
  %v3834 = vunpack.c.l.b16 %v787
  %v3835 = vunpack.c.h.b16 %v787
  %v3836 = vunpack.c.l.b16 %v788
  %v3837 = vunpack.c.h.b16 %v788
  %v3838 = vunpack.c.l.b16 %v789
  %v3839 = vunpack.c.h.b16 %v789
  %v3840 = vunpack.c.l.b16 %v790
  %v3841 = vunpack.c.h.b16 %v790
  %v3842 = vunpack.c.l.b16 %v791
  %v3843 = vunpack.c.h.b16 %v791
  %v3844 = vunpack.c.l.b16 %v792
  %v3845 = vunpack.c.h.b16 %v792
  %v3846 = vunpack.c.l.b16 %v793
  %v3847 = vunpack.c.h.b16 %v793
  %v3848 = vunpack.c.l.b16 %v794
  %v3849 = vunpack.c.h.b16 %v794
  %v3850 = vunpack.c.l.b16 %v795
  %v3851 = vunpack.c.h.b16 %v795
  %v3852 = vunpack.c.l.b16 %v796
  %v3853 = vunpack.c.h.b16 %v796
  %v3854 = vunpack.c.l.b16 %v797
  %v3855 = vunpack.c.h.b16 %v797
  %v3856 = vunpack.c.l.b16 %v798
  %v3857 = vunpack.c.h.b16 %v798
  %v3858 = vunpack.c.l.b16 %v799
  %v3859 = vunpack.c.h.b16 %v799
  %v3860 = vunpack.c.l.b16 %v800
  %v3861 = vunpack.c.h.b16 %v800
  %v3862 = vunpack.c.l.b16 %v801
  %v3863 = vunpack.c.h.b16 %v801
  %v3864 = vunpack.c.l.b16 %v802
  %v3865 = vunpack.c.h.b16 %v802
  %v3866 = vunpack.c.l.b16 %v803
  %v3867 = vunpack.c.h.b16 %v803
  %v3868 = vunpack.c.l.b16 %v804
  %v3869 = vunpack.c.h.b16 %v804
  %v3870 = vunpack.c.l.b16 %v805
  %v3871 = vunpack.c.h.b16 %v805
  %v3872 = vunpack.c.l.b16 %v806
  %v3873 = vunpack.c.h.b16 %v806
  %v3874 = vunpack.c.l.b16 %v807
  %v3875 = vunpack.c.h.b16 %v807
  %v3876 = vunpack.c.l.b16 %v808
  %v3877 = vunpack.c.h.b16 %v808
  %v3878 = vunpack.c.l.b16 %v809
  %v3879 = vunpack.c.h.b16 %v809
  %v3880 = vunpack.c.l.b16 %v810
  %v3881 = vunpack.c.h.b16 %v810
  %v3882 = vunpack.c.l.b16 %v811
  %v3883 = vunpack.c.h.b16 %v811
  %v3884 = vunpack.c.l.b16 %v812
  %v3885 = vunpack.c.h.b16 %v812
  %v3886 = vunpack.c.l.b16 %v813
  %v3887 = vunpack.c.h.b16 %v813
  %v3888 = vunpack.c.l.b16 %v814
  %v3889 = vunpack.c.h.b16 %v814
  %v3890 = vunpack.c.l.b16 %v815
  %v3891 = vunpack.c.h.b16 %v815
  %v3892 = vunpack.c.l.b16 %v816
  %v3893 = vunpack.c.h.b16 %v816
  %v3894 = vunpack.c.l.b16 %v817
  %v3895 = vunpack.c.h.b16 %v817
  %v3896 = vunpack.c.l.b16 %v818
  %v3897 = vunpack.c.h.b16 %v818
  %v3898 = vunpack.c.l.b16 %v819
  %v3899 = vunpack.c.h.b16 %v819
  %v3900 = vunpack.c.l.b16 %v820
  %v3901 = vunpack.c.h.b16 %v820
  %v3902 = vunpack.c.l.b16 %v821
  %v3903 = vunpack.c.h.b16 %v821
  %v3904 = vunpack.c.l.b16 %v822
  %v3905 = vunpack.c.h.b16 %v822
  %v3906 = vunpack.c.l.b16 %v823
  %v3907 = vunpack.c.h.b16 %v823
  %v3908 = vunpack.c.l.b16 %v824
  %v3909 = vunpack.c.h.b16 %v824
  %v3910 = vunpack.c.l.b16 %v825
  %v3911 = vunpack.c.h.b16 %v825
  %v3912 = vunpack.c.l.b16 %v826
  %v3913 = vunpack.c.h.b16 %v826
  %v3914 = vunpack.c.l.b16 %v827
  %v3915 = vunpack.c.h.b16 %v827
  %v3916 = vunpack.c.l.b16 %v828
  %v3917 = vunpack.c.h.b16 %v828
  %v3918 = vunpack.c.l.b16 %v829
  %v3919 = vunpack.c.h.b16 %v829
  %v3920 = vunpack.c.l.b16 %v830
  %v3921 = vunpack.c.h.b16 %v830
  %v3922 = vunpack.c.l.b16 %v831
  %v3923 = vunpack.c.h.b16 %v831
  %v3924 = vunpack.c.l.b16 %v832
  %v3925 = vunpack.c.h.b16 %v832
  %v3926 = vunpack.c.l.b16 %v833
  %v3927 = vunpack.c.h.b16 %v833
  %v3928 = vunpack.c.l.b16 %v834
  %v3929 = vunpack.c.h.b16 %v834
  %v3930 = vunpack.c.l.b16 %v835
  %v3931 = vunpack.c.h.b16 %v835
  %v3932 = vunpack.c.l.b16 %v836
  %v3933 = vunpack.c.h.b16 %v836
  %v3934 = vunpack.c.l.b16 %v837
  %v3935 = vunpack.c.h.b16 %v837
  %v3936 = vunpack.c.l.b16 %v838
  %v3937 = vunpack.c.h.b16 %v838
  %v3938 = vunpack.c.l.b16 %v839
  %v3939 = vunpack.c.h.b16 %v839
  %v3940 = vunpack.c.l.b16 %v840
  %v3941 = vunpack.c.h.b16 %v840
  %v3942 = vunpack.c.l.b16 %v841
  %v3943 = vunpack.c.h.b16 %v841
  %v3944 = vunpack.c.l.b16 %v842
  %v3945 = vunpack.c.h.b16 %v842
  %v3946 = vunpack.c.l.b16 %v843
  %v3947 = vunpack.c.h.b16 %v843
  %v3948 = vunpack.c.l.b16 %v844
  %v3949 = vunpack.c.h.b16 %v844
  %v3950 = vunpack.c.l.b16 %v845
  %v3951 = vunpack.c.h.b16 %v845
  %v3952 = vunpack.c.l.b16 %v846
  %v3953 = vunpack.c.h.b16 %v846
  %v3954 = vunpack.c.l.b16 %v847
  %v3955 = vunpack.c.h.b16 %v847
  %v3956 = vunpack.c.l.b16 %v848
  %v3957 = vunpack.c.h.b16 %v848
  %v3958 = vunpack.c.l.b16 %v849
  %v3959 = vunpack.c.h.b16 %v849
  %v3960 = vunpack.c.l.b16 %v850
  %v3961 = vunpack.c.h.b16 %v850
  %v3962 = vunpack.c.l.b16 %v851
  %v3963 = vunpack.c.h.b16 %v851
  %v3964 = vunpack.c.l.b16 %v852
  %v3965 = vunpack.c.h.b16 %v852
  %v3966 = vunpack.c.l.b16 %v853
  %v3967 = vunpack.c.h.b16 %v853
  %v3968 = vunpack.c.l.b16 %v854
  %v3969 = vunpack.c.h.b16 %v854
  %v3970 = vunpack.c.l.b16 %v855
  %v3971 = vunpack.c.h.b16 %v855
  %v3972 = vunpack.c.l.b16 %v856
  %v3973 = vunpack.c.h.b16 %v856
  %v3974 = vunpack.c.l.b16 %v857
  %v3975 = vunpack.c.h.b16 %v857
  %v3976 = vunpack.c.l.b16 %v858
  %v3977 = vunpack.c.h.b16 %v858
  %v3978 = vunpack.c.l.b16 %v859
  %v3979 = vunpack.c.h.b16 %v859
  %v3980 = vunpack.c.l.b16 %v860
  %v3981 = vunpack.c.h.b16 %v860
  %v3982 = vunpack.c.l.b16 %v861
  %v3983 = vunpack.c.h.b16 %v861
  %v3984 = vunpack.c.l.b16 %v862
  %v3985 = vunpack.c.h.b16 %v862
  %v3986 = vunpack.c.l.b16 %v863
  %v3987 = vunpack.c.h.b16 %v863
  %v3988 = vunpack.c.l.b16 %v864
  %v3989 = vunpack.c.h.b16 %v864
  %v3990 = vunpack.c.l.b16 %v865
  %v3991 = vunpack.c.h.b16 %v865
  %v3992 = vunpack.c.l.b16 %v866
  %v3993 = vunpack.c.h.b16 %v866
  %v3994 = vunpack.c.l.b16 %v867
  %v3995 = vunpack.c.h.b16 %v867
  %v3996 = vunpack.c.l.b16 %v868
  %v3997 = vunpack.c.h.b16 %v868
  %v3998 = vunpack.c.l.b16 %v869
  %v3999 = vunpack.c.h.b16 %v869
  %v4000 = vunpack.c.l.b16 %v870
  %v4001 = vunpack.c.h.b16 %v870
  %v4002 = vunpack.c.l.b16 %v871
  %v4003 = vunpack.c.h.b16 %v871
  %v4004 = vunpack.c.l.b16 %v872
  %v4005 = vunpack.c.h.b16 %v872
  %v4006 = vunpack.c.l.b16 %v873
  %v4007 = vunpack.c.h.b16 %v873
  %v4008 = vunpack.c.l.b16 %v874
  %v4009 = vunpack.c.h.b16 %v874
  %v4010 = vunpack.c.l.b16 %v875
  %v4011 = vunpack.c.h.b16 %v875
  %v4012 = vunpack.c.l.b16 %v876
  %v4013 = vunpack.c.h.b16 %v876
  %v4014 = vunpack.c.l.b16 %v877
  %v4015 = vunpack.c.h.b16 %v877
  %v4016 = vunpack.c.l.b16 %v878
  %v4017 = vunpack.c.h.b16 %v878
  %v4018 = vunpack.c.l.b16 %v879
  %v4019 = vunpack.c.h.b16 %v879
  %v4020 = vunpack.c.l.b16 %v880
  %v4021 = vunpack.c.h.b16 %v880
  %v4022 = vunpack.c.l.b16 %v881
  %v4023 = vunpack.c.h.b16 %v881
  %v4024 = vunpack.c.l.b16 %v882
  %v4025 = vunpack.c.h.b16 %v882
  %v4026 = vunpack.c.l.b16 %v883
  %v4027 = vunpack.c.h.b16 %v883
  %v4028 = vunpack.c.l.b16 %v884
  %v4029 = vunpack.c.h.b16 %v884
  %v4030 = vunpack.c.l.b16 %v885
  %v4031 = vunpack.c.h.b16 %v885
  %v4032 = vunpack.c.l.b16 %v886
  %v4033 = vunpack.c.h.b16 %v886
  %v4034 = vunpack.c.l.b16 %v887
  %v4035 = vunpack.c.h.b16 %v887
  %v4036 = vunpack.c.l.b16 %v888
  %v4037 = vunpack.c.h.b16 %v888
  %v4038 = vunpack.c.l.b16 %v889
  %v4039 = vunpack.c.h.b16 %v889
  %v4040 = vunpack.c.l.b16 %v890
  %v4041 = vunpack.c.h.b16 %v890
  %v4042 = vunpack.c.l.b16 %v891
  %v4043 = vunpack.c.h.b16 %v891
  %v4044 = vunpack.c.l.b16 %v892
  %v4045 = vunpack.c.h.b16 %v892
  %v4046 = vunpack.c.l.b16 %v893
  %v4047 = vunpack.c.h.b16 %v893
  %v4048 = vunpack.c.l.b16 %v894
  %v4049 = vunpack.c.h.b16 %v894
  %v4050 = vunpack.c.l.b16 %v895
  %v4051 = vunpack.c.h.b16 %v895
  %v4052 = vunpack.c.l.b16 %v896
  %v4053 = vunpack.c.h.b16 %v896
  %v4054 = vunpack.c.l.b16 %v897
  %v4055 = vunpack.c.h.b16 %v897
  %v4056 = vunpack.c.l.b16 %v898
  %v4057 = vunpack.c.h.b16 %v898
  %v4058 = vunpack.c.l.b16 %v899
  %v4059 = vunpack.c.h.b16 %v899
  %v4060 = vunpack.c.l.b16 %v900
  %v4061 = vunpack.c.h.b16 %v900
  %v4062 = vunpack.c.l.b16 %v901
  %v4063 = vunpack.c.h.b16 %v901
  %v4064 = vunpack.c.l.b16 %v902
  %v4065 = vunpack.c.h.b16 %v902
  %v4066 = vunpack.c.l.b16 %v903
  %v4067 = vunpack.c.h.b16 %v903
  %v4068 = vunpack.c.l.b16 %v904
  %v4069 = vunpack.c.h.b16 %v904
  %v4070 = vunpack.c.l.b16 %v905
  %v4071 = vunpack.c.h.b16 %v905
  %v4072 = vunpack.c.l.b16 %v906
  %v4073 = vunpack.c.h.b16 %v906
  %v4074 = vunpack.c.l.b16 %v907
  %v4075 = vunpack.c.h.b16 %v907
  %v4076 = vunpack.c.l.b16 %v908
  %v4077 = vunpack.c.h.b16 %v908
  %v4078 = vunpack.c.l.b16 %v909
  %v4079 = vunpack.c.h.b16 %v909
  %v4080 = vunpack.c.l.b16 %v910
  %v4081 = vunpack.c.h.b16 %v910
  %v4082 = vunpack.c.l.b16 %v911
  %v4083 = vunpack.c.h.b16 %v911
  %v4084 = vunpack.c.l.b16 %v912
  %v4085 = vunpack.c.h.b16 %v912
  %v4086 = vunpack.c.l.b16 %v913
  %v4087 = vunpack.c.h.b16 %v913
  %v4088 = vunpack.c.l.b16 %v914
  %v4089 = vunpack.c.h.b16 %v914
  %v4090 = vunpack.c.l.b16 %v915
  %v4091 = vunpack.c.h.b16 %v915
  %v4092 = vunpack.c.l.b16 %v916
  %v4093 = vunpack.c.h.b16 %v916
  %v4094 = vunpack.c.l.b16 %v917
  %v4095 = vunpack.c.h.b16 %v917
  %v4096 = vunpack.c.l.b16 %v918
  %v4097 = vunpack.c.h.b16 %v918
  %v4098 = vunpack.c.l.b16 %v919
  %v4099 = vunpack.c.h.b16 %v919
  %v4100 = vunpack.c.l.b16 %v920
  %v4101 = vunpack.c.h.b16 %v920
  %v4102 = vunpack.c.l.b16 %v921
  %v4103 = vunpack.c.h.b16 %v921
  %v4104 = vunpack.c.l.b16 %v922
  %v4105 = vunpack.c.h.b16 %v922
  %v4106 = vunpack.c.l.b16 %v923
  %v4107 = vunpack.c.h.b16 %v923
  %v4108 = vunpack.c.l.b16 %v924
  %v4109 = vunpack.c.h.b16 %v924
  %v4110 = vunpack.c.l.b16 %v925
  %v4111 = vunpack.c.h.b16 %v925
  %v4112 = vunpack.c.l.b16 %v926
  %v4113 = vunpack.c.h.b16 %v926
  %v4114 = vunpack.c.l.b16 %v927
  %v4115 = vunpack.c.h.b16 %v927
  %v4116 = vunpack.c.l.b16 %v928
  %v4117 = vunpack.c.h.b16 %v928
  %v4118 = vunpack.c.l.b16 %v929
  %v4119 = vunpack.c.h.b16 %v929
  %v4120 = vunpack.c.l.b16 %v930
  %v4121 = vunpack.c.h.b16 %v930
  %v4122 = vunpack.c.l.b16 %v931
  %v4123 = vunpack.c.h.b16 %v931
  %v4124 = vunpack.c.l.b16 %v932
  %v4125 = vunpack.c.h.b16 %v932
  %v4126 = vunpack.c.l.b16 %v933
  %v4127 = vunpack.c.h.b16 %v933
  %v4128 = vunpack.c.l.b16 %v934
  %v4129 = vunpack.c.h.b16 %v934
  %v4130 = vunpack.c.l.b16 %v935
  %v4131 = vunpack.c.h.b16 %v935
  %v4132 = vunpack.c.l.b16 %v936
  %v4133 = vunpack.c.h.b16 %v936
  %v4134 = vunpack.c.l.b16 %v937
  %v4135 = vunpack.c.h.b16 %v937
  %v4136 = vunpack.c.l.b16 %v938
  %v4137 = vunpack.c.h.b16 %v938
  %v4138 = vunpack.c.l.b16 %v939
  %v4139 = vunpack.c.h.b16 %v939
  %v4140 = vunpack.c.l.b16 %v940
  %v4141 = vunpack.c.h.b16 %v940
  %v4142 = vunpack.c.l.b16 %v941
  %v4143 = vunpack.c.h.b16 %v941
  %v4144 = vunpack.c.l.b16 %v942
  %v4145 = vunpack.c.h.b16 %v942
  %v4146 = vunpack.c.l.b16 %v943
  %v4147 = vunpack.c.h.b16 %v943
  %v4148 = vunpack.c.l.b16 %v944
  %v4149 = vunpack.c.h.b16 %v944
  %v4150 = vunpack.c.l.b16 %v945
  %v4151 = vunpack.c.h.b16 %v945
  %v4152 = vunpack.c.l.b16 %v946
  %v4153 = vunpack.c.h.b16 %v946
  %v4154 = vunpack.c.l.b16 %v947
  %v4155 = vunpack.c.h.b16 %v947
  %v4156 = vunpack.c.l.b16 %v948
  %v4157 = vunpack.c.h.b16 %v948
  %v4158 = vunpack.c.l.b16 %v949
  %v4159 = vunpack.c.h.b16 %v949
  %v4160 = vunpack.c.l.b16 %v950
  %v4161 = vunpack.c.h.b16 %v950
  %v4162 = vunpack.c.l.b16 %v951
  %v4163 = vunpack.c.h.b16 %v951
  %v4164 = vunpack.c.l.b16 %v952
  %v4165 = vunpack.c.h.b16 %v952
  %v4166 = vunpack.c.l.b16 %v953
  %v4167 = vunpack.c.h.b16 %v953
  %v4168 = vunpack.c.l.b16 %v954
  %v4169 = vunpack.c.h.b16 %v954
  %v4170 = vunpack.c.l.b16 %v955
  %v4171 = vunpack.c.h.b16 %v955
  %v4172 = vunpack.c.l.b16 %v956
  %v4173 = vunpack.c.h.b16 %v956
  %v4174 = vunpack.c.l.b16 %v957
  %v4175 = vunpack.c.h.b16 %v957
  %v4176 = vunpack.c.l.b16 %v958
  %v4177 = vunpack.c.h.b16 %v958
  %v4178 = vunpack.c.l.b16 %v959
  %v4179 = vunpack.c.h.b16 %v959
  %v4180 = vunpack.c.l.b16 %v960
  %v4181 = vunpack.c.h.b16 %v960
  %v4182 = vunpack.c.l.b16 %v961
  %v4183 = vunpack.c.h.b16 %v961
  %v4184 = vunpack.c.l.b16 %v962
  %v4185 = vunpack.c.h.b16 %v962
  %v4186 = vunpack.c.l.b16 %v963
  %v4187 = vunpack.c.h.b16 %v963
  %v4188 = vunpack.c.l.b16 %v964
  %v4189 = vunpack.c.h.b16 %v964
  %v4190 = vunpack.c.l.b16 %v965
  %v4191 = vunpack.c.h.b16 %v965
  %v4192 = vunpack.c.l.b16 %v966
  %v4193 = vunpack.c.h.b16 %v966
  %v4194 = vunpack.c.l.b16 %v967
  %v4195 = vunpack.c.h.b16 %v967
  %v4196 = vunpack.c.l.b16 %v968
  %v4197 = vunpack.c.h.b16 %v968
  %v4198 = vunpack.c.l.b16 %v969
  %v4199 = vunpack.c.h.b16 %v969
  %v4200 = vunpack.c.l.b16 %v970
  %v4201 = vunpack.c.h.b16 %v970
  %v4202 = vunpack.c.l.b16 %v971
  %v4203 = vunpack.c.h.b16 %v971
  %v4204 = vunpack.c.l.b16 %v972
  %v4205 = vunpack.c.h.b16 %v972
  %v4206 = vunpack.c.l.b16 %v973
  %v4207 = vunpack.c.h.b16 %v973
  %v4208 = vunpack.c.l.b16 %v974
  %v4209 = vunpack.c.h.b16 %v974
  %v4210 = vunpack.c.l.b16 %v975
  %v4211 = vunpack.c.h.b16 %v975
  %v4212 = vunpack.c.l.b16 %v976
  %v4213 = vunpack.c.h.b16 %v976
  %v4214 = vunpack.c.l.b16 %v977
  %v4215 = vunpack.c.h.b16 %v977
  %v4216 = vunpack.c.l.b16 %v978
  %v4217 = vunpack.c.h.b16 %v978
  %v4218 = vunpack.c.l.b16 %v979
  %v4219 = vunpack.c.h.b16 %v979
  %v4220 = vunpack.c.l.b16 %v980
  %v4221 = vunpack.c.h.b16 %v980
  %v4222 = vunpack.c.l.b16 %v981
  %v4223 = vunpack.c.h.b16 %v981
  %v4224 = vunpack.c.l.b16 %v982
  %v4225 = vunpack.c.h.b16 %v982
  %v4226 = vunpack.c.l.b16 %v983
  %v4227 = vunpack.c.h.b16 %v983
  %v4228 = vunpack.c.l.b16 %v984
  %v4229 = vunpack.c.h.b16 %v984
  %v4230 = vunpack.c.l.b16 %v985
  %v4231 = vunpack.c.h.b16 %v985
  %v4232 = vunpack.c.l.b16 %v986
  %v4233 = vunpack.c.h.b16 %v986
  %v4234 = vunpack.c.l.b16 %v987
  %v4235 = vunpack.c.h.b16 %v987
  %v4236 = vunpack.c.l.b16 %v988
  %v4237 = vunpack.c.h.b16 %v988
  %v4238 = vunpack.c.l.b16 %v989
  %v4239 = vunpack.c.h.b16 %v989
  %v4240 = vunpack.c.l.b16 %v990
  %v4241 = vunpack.c.h.b16 %v990
  %v4242 = vunpack.c.l.b16 %v991
  %v4243 = vunpack.c.h.b16 %v991
  %v4244 = vunpack.c.l.b16 %v992
  %v4245 = vunpack.c.h.b16 %v992
  %v4246 = vunpack.c.l.b16 %v993
  %v4247 = vunpack.c.h.b16 %v993
  %v4248 = vunpack.c.l.b16 %v994
  %v4249 = vunpack.c.h.b16 %v994
  %v4250 = vunpack.c.l.b16 %v995
  %v4251 = vunpack.c.h.b16 %v995
  %v4252 = vunpack.c.l.b16 %v996
  %v4253 = vunpack.c.h.b16 %v996
  %v4254 = vunpack.c.l.b16 %v997
  %v4255 = vunpack.c.h.b16 %v997
  %v4256 = vunpack.c.l.b16 %v998
  %v4257 = vunpack.c.h.b16 %v998
  %v4258 = vunpack.c.l.b16 %v999
  %v4259 = vunpack.c.h.b16 %v999
  %v4260 = vunpack.c.l.b16 %v1000
  %v4261 = vunpack.c.h.b16 %v1000
  %v4262 = vunpack.c.l.b16 %v1001
  %v4263 = vunpack.c.h.b16 %v1001
  %v4264 = vunpack.c.l.b16 %v1002
  %v4265 = vunpack.c.h.b16 %v1002
  %v4266 = vunpack.c.l.b16 %v1003
  %v4267 = vunpack.c.h.b16 %v1003
  %v4268 = vunpack.c.l.b16 %v1004
  %v4269 = vunpack.c.h.b16 %v1004
  %v4270 = vunpack.c.l.b16 %v1005
  %v4271 = vunpack.c.h.b16 %v1005
  %v4272 = vunpack.c.l.b16 %v1006
  %v4273 = vunpack.c.h.b16 %v1006
  %v4274 = vunpack.c.l.b16 %v1007
  %v4275 = vunpack.c.h.b16 %v1007
  %v4276 = vunpack.c.l.b16 %v1008
  %v4277 = vunpack.c.h.b16 %v1008
  %v4278 = vunpack.c.l.b16 %v1009
  %v4279 = vunpack.c.h.b16 %v1009
  %v4280 = vunpack.c.l.b16 %v1010
  %v4281 = vunpack.c.h.b16 %v1010
  %v4282 = vunpack.c.l.b16 %v1011
  %v4283 = vunpack.c.h.b16 %v1011
  %v4284 = vunpack.c.l.b16 %v1012
  %v4285 = vunpack.c.h.b16 %v1012
  %v4286 = vunpack.c.l.b16 %v1013
  %v4287 = vunpack.c.h.b16 %v1013
  %v4288 = vunpack.c.l.b16 %v1014
  %v4289 = vunpack.c.h.b16 %v1014
  %v4290 = vunpack.c.l.b16 %v1015
  %v4291 = vunpack.c.h.b16 %v1015
  %v4292 = vunpack.c.l.b16 %v1016
  %v4293 = vunpack.c.h.b16 %v1016
  %v4294 = vunpack.c.l.b16 %v1017
  %v4295 = vunpack.c.h.b16 %v1017
  %v4296 = vunpack.c.l.b16 %v1018
  %v4297 = vunpack.c.h.b16 %v1018
  %v4298 = vunpack.c.l.b16 %v1019
  %v4299 = vunpack.c.h.b16 %v1019
  %v4300 = vunpack.c.l.b16 %v1020
  %v4301 = vunpack.c.h.b16 %v1020
  %v4302 = vunpack.c.l.b16 %v1021
  %v4303 = vunpack.c.h.b16 %v1021
  %v4304 = vunpack.c.l.b16 %v1022
  %v4305 = vunpack.c.h.b16 %v1022
  %v4306 = vunpack.c.l.b16 %v1023
  %v4307 = vunpack.c.h.b16 %v1023
  %v4308 = vunpack.c.l.b16 %v1024
  %v4309 = vunpack.c.h.b16 %v1024
  %v4310 = vunpack.c.l.b16 %v1025
  %v4311 = vunpack.c.h.b16 %v1025
  %v4312 = vunpack.c.l.b16 %v1026
  %v4313 = vunpack.c.h.b16 %v1026
  %v4314 = vunpack.c.l.b16 %v1027
  %v4315 = vunpack.c.h.b16 %v1027
  %v4316 = vunpack.c.l.b16 %v1028
  %v4317 = vunpack.c.h.b16 %v1028
  %v4318 = vunpack.c.l.b16 %v1029
  %v4319 = vunpack.c.h.b16 %v1029
  %v4320 = vunpack.c.l.b16 %v1030
  %v4321 = vunpack.c.h.b16 %v1030
  %v4322 = vunpack.c.l.b16 %v1031
  %v4323 = vunpack.c.h.b16 %v1031
  %v4324 = vunpack.c.l.b16 %v1032
  %v4325 = vunpack.c.h.b16 %v1032
  %v4326 = vunpack.c.l.b16 %v1033
  %v4327 = vunpack.c.h.b16 %v1033
  %v4328 = vunpack.c.l.b16 %v1034
  %v4329 = vunpack.c.h.b16 %v1034
  %v4330 = vunpack.c.l.b16 %v1035
  %v4331 = vunpack.c.h.b16 %v1035
  %v4332 = vunpack.c.l.b16 %v1036
  %v4333 = vunpack.c.h.b16 %v1036
  %v4334 = vunpack.c.l.b16 %v1037
  %v4335 = vunpack.c.h.b16 %v1037
  %v4336 = vunpack.c.l.b16 %v1038
  %v4337 = vunpack.c.h.b16 %v1038
  %v4338 = vunpack.c.l.b16 %v1039
  %v4339 = vunpack.c.h.b16 %v1039
  %v4340 = vunpack.c.l.b16 %v1040
  %v4341 = vunpack.c.h.b16 %v1040
  %v4342 = vunpack.c.l.b16 %v1041
  %v4343 = vunpack.c.h.b16 %v1041
  %v4344 = vunpack.c.l.b16 %v1042
  %v4345 = vunpack.c.h.b16 %v1042
  %v4346 = vunpack.c.l.b16 %v1043
  %v4347 = vunpack.c.h.b16 %v1043
  %v4348 = vunpack.c.l.b16 %v1044
  %v4349 = vunpack.c.h.b16 %v1044
  %v4350 = vunpack.c.l.b16 %v1045
  %v4351 = vunpack.c.h.b16 %v1045
  %v4352 = vunpack.c.l.b16 %v1046
  %v4353 = vunpack.c.h.b16 %v1046
  %v4354 = vunpack.c.l.b16 %v1047
  %v4355 = vunpack.c.h.b16 %v1047
  %v4356 = vunpack.c.l.b16 %v1048
  %v4357 = vunpack.c.h.b16 %v1048
  %v4358 = vunpack.c.l.b16 %v1049
  %v4359 = vunpack.c.h.b16 %v1049
  %v4360 = vunpack.c.l.b16 %v1050
  %v4361 = vunpack.c.h.b16 %v1050
  %v4362 = vunpack.c.l.b16 %v1051
  %v4363 = vunpack.c.h.b16 %v1051
  %v4364 = vunpack.c.l.b16 %v1052
  %v4365 = vunpack.c.h.b16 %v1052
  %v4366 = vunpack.c.l.b16 %v1053
  %v4367 = vunpack.c.h.b16 %v1053
  %v4368 = vunpack.c.l.b16 %v1054
  %v4369 = vunpack.c.h.b16 %v1054
  %v4370 = vunpack.c.l.b16 %v1055
  %v4371 = vunpack.c.h.b16 %v1055
  %v4372 = vunpack.c.l.b16 %v1056
  %v4373 = vunpack.c.h.b16 %v1056
  %v4374 = vunpack.c.l.b16 %v1057
  %v4375 = vunpack.c.h.b16 %v1057
  %v4376 = vunpack.c.l.b16 %v1058
  %v4377 = vunpack.c.h.b16 %v1058
  %v4378 = vunpack.c.l.b16 %v1059
  %v4379 = vunpack.c.h.b16 %v1059
  %v4380 = vunpack.c.l.b16 %v1060
  %v4381 = vunpack.c.h.b16 %v1060
  %v4382 = vunpack.c.l.b16 %v1061
  %v4383 = vunpack.c.h.b16 %v1061
  %v4384 = vunpack.c.l.b16 %v1062
  %v4385 = vunpack.c.h.b16 %v1062
  %v4386 = vunpack.c.l.b16 %v1063
  %v4387 = vunpack.c.h.b16 %v1063
  %v4388 = vunpack.c.l.b16 %v1064
  %v4389 = vunpack.c.h.b16 %v1064
  %v4390 = vunpack.c.l.b16 %v1065
  %v4391 = vunpack.c.h.b16 %v1065
  %v4392 = vunpack.c.l.b16 %v1066
  %v4393 = vunpack.c.h.b16 %v1066
  %v4394 = vunpack.c.l.b16 %v1067
  %v4395 = vunpack.c.h.b16 %v1067
  %v4396 = vunpack.c.l.b16 %v1068
  %v4397 = vunpack.c.h.b16 %v1068
  %v4398 = vunpack.c.l.b16 %v1069
  %v4399 = vunpack.c.h.b16 %v1069
  %v4400 = vunpack.c.l.b16 %v1070
  %v4401 = vunpack.c.h.b16 %v1070
  %v4402 = vunpack.c.l.b16 %v1071
  %v4403 = vunpack.c.h.b16 %v1071
  %v4404 = vunpack.c.l.b16 %v1072
  %v4405 = vunpack.c.h.b16 %v1072
  %v4406 = vunpack.c.l.b16 %v1073
  %v4407 = vunpack.c.h.b16 %v1073
  %v4408 = vunpack.c.l.b16 %v1074
  %v4409 = vunpack.c.h.b16 %v1074
  %v4410 = vunpack.c.l.b16 %v1075
  %v4411 = vunpack.c.h.b16 %v1075
  %v4412 = vunpack.c.l.b16 %v1076
  %v4413 = vunpack.c.h.b16 %v1076
  %v4414 = vunpack.c.l.b16 %v1077
  %v4415 = vunpack.c.h.b16 %v1077
  %v4416 = vunpack.c.l.b16 %v1078
  %v4417 = vunpack.c.h.b16 %v1078
  %v4418 = vunpack.c.l.b16 %v1079
  %v4419 = vunpack.c.h.b16 %v1079
  %v4420 = vunpack.c.l.b16 %v1080
  %v4421 = vunpack.c.h.b16 %v1080
  %v4422 = vunpack.c.l.b16 %v1081
  %v4423 = vunpack.c.h.b16 %v1081
  %v4424 = vunpack.c.l.b16 %v1082
  %v4425 = vunpack.c.h.b16 %v1082
  %v4426 = vunpack.c.l.b16 %v1083
  %v4427 = vunpack.c.h.b16 %v1083
  %v4428 = vunpack.c.l.b16 %v1084
  %v4429 = vunpack.c.h.b16 %v1084
  %v4430 = vunpack.c.l.b16 %v1085
  %v4431 = vunpack.c.h.b16 %v1085
  %v4432 = vunpack.c.l.b16 %v1086
  %v4433 = vunpack.c.h.b16 %v1086
  %v4434 = vunpack.c.l.b16 %v1087
  %v4435 = vunpack.c.h.b16 %v1087
  %v4436 = vunpack.c.l.b16 %v1088
  %v4437 = vunpack.c.h.b16 %v1088
  %v4438 = vunpack.c.l.b16 %v1089
  %v4439 = vunpack.c.h.b16 %v1089
  %v4440 = vunpack.c.l.b16 %v1090
  %v4441 = vunpack.c.h.b16 %v1090
  %v4442 = vunpack.c.l.b16 %v1091
  %v4443 = vunpack.c.h.b16 %v1091
  %v4444 = vunpack.c.l.b16 %v1092
  %v4445 = vunpack.c.h.b16 %v1092
  %v4446 = vunpack.c.l.b16 %v1093
  %v4447 = vunpack.c.h.b16 %v1093
  %v4448 = vunpack.c.l.b16 %v1094
  %v4449 = vunpack.c.h.b16 %v1094
  %v4450 = vunpack.c.l.b16 %v1095
  %v4451 = vunpack.c.h.b16 %v1095
  %v4452 = vunpack.c.l.b16 %v1096
  %v4453 = vunpack.c.h.b16 %v1096
  %v4454 = vunpack.c.l.b16 %v1097
  %v4455 = vunpack.c.h.b16 %v1097
  %v4456 = vunpack.c.l.b16 %v1098
  %v4457 = vunpack.c.h.b16 %v1098
  %v4458 = vunpack.c.l.b16 %v1099
  %v4459 = vunpack.c.h.b16 %v1099
  %v4460 = vunpack.c.l.b16 %v1100
  %v4461 = vunpack.c.h.b16 %v1100
  %v4462 = vunpack.c.l.b16 %v1101
  %v4463 = vunpack.c.h.b16 %v1101
  %v4464 = vunpack.c.l.b16 %v1102
  %v4465 = vunpack.c.h.b16 %v1102
  %v4466 = vunpack.c.l.b16 %v1103
  %v4467 = vunpack.c.h.b16 %v1103
  %v4468 = vunpack.c.l.b16 %v1104
  %v4469 = vunpack.c.h.b16 %v1104
  %v4470 = vunpack.c.l.b16 %v1105
  %v4471 = vunpack.c.h.b16 %v1105
  %v4472 = vunpack.c.l.b16 %v1106
  %v4473 = vunpack.c.h.b16 %v1106
  %v4474 = vunpack.c.l.b16 %v1107
  %v4475 = vunpack.c.h.b16 %v1107
  %v4476 = vunpack.c.l.b16 %v1108
  %v4477 = vunpack.c.h.b16 %v1108
  %v4478 = vunpack.c.l.b16 %v1109
  %v4479 = vunpack.c.h.b16 %v1109
  %v4480 = vunpack.c.l.b16 %v1110
  %v4481 = vunpack.c.h.b16 %v1110
  %v4482 = vunpack.c.l.b16 %v1111
  %v4483 = vunpack.c.h.b16 %v1111
  %v4484 = vunpack.c.l.b16 %v1112
  %v4485 = vunpack.c.h.b16 %v1112
  %v4486 = vunpack.c.l.b16 %v1113
  %v4487 = vunpack.c.h.b16 %v1113
  %v4488 = vunpack.c.l.b16 %v1114
  %v4489 = vunpack.c.h.b16 %v1114
  %v4490 = vunpack.c.l.b16 %v1115
  %v4491 = vunpack.c.h.b16 %v1115
  %v4492 = vunpack.c.l.b16 %v1116
  %v4493 = vunpack.c.h.b16 %v1116
  %v4494 = vunpack.c.l.b16 %v1117
  %v4495 = vunpack.c.h.b16 %v1117
  %v4496 = vunpack.c.l.b16 %v1118
  %v4497 = vunpack.c.h.b16 %v1118
  %v4498 = vunpack.c.l.b16 %v1119
  %v4499 = vunpack.c.h.b16 %v1119
  %v4500 = vunpack.c.l.b16 %v1120
  %v4501 = vunpack.c.h.b16 %v1120
  %v4502 = vunpack.c.l.b16 %v1121
  %v4503 = vunpack.c.h.b16 %v1121
  %v4504 = vunpack.c.l.b16 %v1122
  %v4505 = vunpack.c.h.b16 %v1122
  %v4506 = vunpack.c.l.b16 %v1123
  %v4507 = vunpack.c.h.b16 %v1123
  %v4508 = vunpack.c.l.b16 %v1124
  %v4509 = vunpack.c.h.b16 %v1124
  %v4510 = vunpack.c.l.b16 %v1125
  %v4511 = vunpack.c.h.b16 %v1125
  %v4512 = vunpack.c.l.b16 %v1126
  %v4513 = vunpack.c.h.b16 %v1126
  %v4514 = vunpack.c.l.b16 %v1127
  %v4515 = vunpack.c.h.b16 %v1127
  %v4516 = vunpack.c.l.b16 %v1128
  %v4517 = vunpack.c.h.b16 %v1128
  %v4518 = vunpack.c.l.b16 %v1129
  %v4519 = vunpack.c.h.b16 %v1129
  %v4520 = vunpack.c.l.b16 %v1130
  %v4521 = vunpack.c.h.b16 %v1130
  %v4522 = vunpack.c.l.b16 %v1131
  %v4523 = vunpack.c.h.b16 %v1131
  %v4524 = vunpack.c.l.b16 %v1132
  %v4525 = vunpack.c.h.b16 %v1132
  %v4526 = vunpack.c.l.b16 %v1133
  %v4527 = vunpack.c.h.b16 %v1133
  %v4528 = vunpack.c.l.b16 %v1134
  %v4529 = vunpack.c.h.b16 %v1134
  %v4530 = vunpack.c.l.b16 %v1135
  %v4531 = vunpack.c.h.b16 %v1135
  %v4532 = vunpack.c.l.b16 %v1136
  %v4533 = vunpack.c.h.b16 %v1136
  %v4534 = vunpack.c.l.b16 %v1137
  %v4535 = vunpack.c.h.b16 %v1137
  %v4536 = vunpack.c.l.b16 %v1138
  %v4537 = vunpack.c.h.b16 %v1138
  %v4538 = vunpack.c.l.b16 %v1139
  %v4539 = vunpack.c.h.b16 %v1139
  %v4540 = vunpack.c.l.b16 %v1140
  %v4541 = vunpack.c.h.b16 %v1140
  %v4542 = vunpack.c.l.b16 %v1141
  %v4543 = vunpack.c.h.b16 %v1141
  %v4544 = vunpack.c.l.b16 %v1142
  %v4545 = vunpack.c.h.b16 %v1142
  %v4546 = vunpack.c.l.b16 %v1143
  %v4547 = vunpack.c.h.b16 %v1143
  %v4548 = vunpack.c.l.b16 %v1144
  %v4549 = vunpack.c.h.b16 %v1144
  %v4550 = vunpack.c.l.b16 %v1145
  %v4551 = vunpack.c.h.b16 %v1145
  %v4552 = vunpack.c.l.b16 %v1146
  %v4553 = vunpack.c.h.b16 %v1146
  %v4554 = vunpack.c.l.b16 %v1147
  %v4555 = vunpack.c.h.b16 %v1147
  %v4556 = vunpack.c.l.b16 %v1148
  %v4557 = vunpack.c.h.b16 %v1148
  %v4558 = vunpack.c.l.b16 %v1149
  %v4559 = vunpack.c.h.b16 %v1149
  %v4560 = vunpack.c.l.b16 %v1150
  %v4561 = vunpack.c.h.b16 %v1150
  %v4562 = vunpack.c.l.b16 %v1151
  %v4563 = vunpack.c.h.b16 %v1151
  %v4564 = vunpack.c.l.b16 %v1152
  %v4565 = vunpack.c.h.b16 %v1152
  %v4566 = vunpack.c.l.b16 %v1153
  %v4567 = vunpack.c.h.b16 %v1153
  %v4568 = vunpack.c.l.b16 %v1154
  %v4569 = vunpack.c.h.b16 %v1154
  %v4570 = vunpack.c.l.b16 %v1155
  %v4571 = vunpack.c.h.b16 %v1155
  %v4572 = vunpack.c.l.b16 %v1156
  %v4573 = vunpack.c.h.b16 %v1156
  %v4574 = vunpack.c.l.b16 %v1157
  %v4575 = vunpack.c.h.b16 %v1157
  %v4576 = vunpack.c.l.b16 %v1158
  %v4577 = vunpack.c.h.b16 %v1158
  %v4578 = vunpack.c.l.b16 %v1159
  %v4579 = vunpack.c.h.b16 %v1159
  %v4580 = vunpack.c.l.b16 %v1160
  %v4581 = vunpack.c.h.b16 %v1160
  %v4582 = vunpack.c.l.b16 %v1161
  %v4583 = vunpack.c.h.b16 %v1161
  %v4584 = vunpack.c.l.b16 %v1162
  %v4585 = vunpack.c.h.b16 %v1162
  %v4586 = vunpack.c.l.b16 %v1163
  %v4587 = vunpack.c.h.b16 %v1163
  %v4588 = vunpack.c.l.b16 %v1164
  %v4589 = vunpack.c.h.b16 %v1164
  %v4590 = vunpack.c.l.b16 %v1165
  %v4591 = vunpack.c.h.b16 %v1165
  %v4592 = vunpack.c.l.b16 %v1166
  %v4593 = vunpack.c.h.b16 %v1166
  %v4594 = vunpack.c.l.b16 %v1167
  %v4595 = vunpack.c.h.b16 %v1167
  %v4596 = vunpack.c.l.b16 %v1168
  %v4597 = vunpack.c.h.b16 %v1168
  %v4598 = vunpack.c.l.b16 %v1169
  %v4599 = vunpack.c.h.b16 %v1169
  %v4600 = vunpack.c.l.b16 %v1170
  %v4601 = vunpack.c.h.b16 %v1170
  %v4602 = vunpack.c.l.b16 %v1171
  %v4603 = vunpack.c.h.b16 %v1171
  %v4604 = vunpack.c.l.b16 %v1172
  %v4605 = vunpack.c.h.b16 %v1172
  %v4606 = vunpack.c.l.b16 %v1173
  %v4607 = vunpack.c.h.b16 %v1173
  %v4608 = vunpack.c.l.b16 %v1174
  %v4609 = vunpack.c.h.b16 %v1174
  %v4610 = vunpack.c.l.b16 %v1175
  %v4611 = vunpack.c.h.b16 %v1175
  %v4612 = vunpack.c.l.b16 %v1176
  %v4613 = vunpack.c.h.b16 %v1176
  %v4614 = vunpack.c.l.b16 %v1177
  %v4615 = vunpack.c.h.b16 %v1177
  %v4616 = vunpack.c.l.b16 %v1178
  %v4617 = vunpack.c.h.b16 %v1178
  %v4618 = vunpack.c.l.b16 %v1179
  %v4619 = vunpack.c.h.b16 %v1179
  %v4620 = vunpack.c.l.b16 %v1180
  %v4621 = vunpack.c.h.b16 %v1180
  %v4622 = vunpack.c.l.b16 %v1181
  %v4623 = vunpack.c.h.b16 %v1181
  %v4624 = vunpack.c.l.b16 %v1182
  %v4625 = vunpack.c.h.b16 %v1182
  %v4626 = vunpack.c.l.b16 %v1183
  %v4627 = vunpack.c.h.b16 %v1183
  %v4628 = vunpack.c.l.b16 %v1184
  %v4629 = vunpack.c.h.b16 %v1184
  %v4630 = vunpack.c.l.b16 %v1185
  %v4631 = vunpack.c.h.b16 %v1185
  %v4632 = vunpack.c.l.b16 %v1186
  %v4633 = vunpack.c.h.b16 %v1186
  %v4634 = vunpack.c.l.b16 %v1187
  %v4635 = vunpack.c.h.b16 %v1187
  %v4636 = vunpack.c.l.b16 %v1188
  %v4637 = vunpack.c.h.b16 %v1188
  %v4638 = vunpack.c.l.b16 %v1189
  %v4639 = vunpack.c.h.b16 %v1189
  %v4640 = vunpack.c.l.b16 %v1190
  %v4641 = vunpack.c.h.b16 %v1190
  %v4642 = vunpack.c.l.b16 %v1191
  %v4643 = vunpack.c.h.b16 %v1191
  %v4644 = vunpack.c.l.b16 %v1192
  %v4645 = vunpack.c.h.b16 %v1192
  %v4646 = vunpack.c.l.b16 %v1193
  %v4647 = vunpack.c.h.b16 %v1193
  %v4648 = vunpack.c.l.b16 %v1194
  %v4649 = vunpack.c.h.b16 %v1194
  %v4650 = vunpack.c.l.b16 %v1195
  %v4651 = vunpack.c.h.b16 %v1195
  %v4652 = vunpack.c.l.b16 %v1196
  %v4653 = vunpack.c.h.b16 %v1196
  %v4654 = vunpack.c.l.b16 %v1197
  %v4655 = vunpack.c.h.b16 %v1197
  %v4656 = vunpack.c.l.b16 %v1198
  %v4657 = vunpack.c.h.b16 %v1198
  %v4658 = vunpack.c.l.b16 %v1199
  %v4659 = vunpack.c.h.b16 %v1199
  %v4660 = vunpack.c.l.b16 %v1200
  %v4661 = vunpack.c.h.b16 %v1200
  %v4662 = vunpack.c.l.b16 %v1201
  %v4663 = vunpack.c.h.b16 %v1201
  %v4664 = vunpack.c.l.b16 %v1202
  %v4665 = vunpack.c.h.b16 %v1202
  %v4666 = vunpack.c.l.b16 %v1203
  %v4667 = vunpack.c.h.b16 %v1203
  %v4668 = vunpack.c.l.b16 %v1204
  %v4669 = vunpack.c.h.b16 %v1204
  %v4670 = vunpack.c.l.b16 %v1205
  %v4671 = vunpack.c.h.b16 %v1205
  %v4672 = vunpack.c.l.b16 %v1206
  %v4673 = vunpack.c.h.b16 %v1206
  %v4674 = vunpack.c.l.b16 %v1207
  %v4675 = vunpack.c.h.b16 %v1207
  %v4676 = vunpack.c.l.b16 %v1208
  %v4677 = vunpack.c.h.b16 %v1208
  %v4678 = vunpack.c.l.b16 %v1209
  %v4679 = vunpack.c.h.b16 %v1209
  %v4680 = vunpack.c.l.b16 %v1210
  %v4681 = vunpack.c.h.b16 %v1210
  %v4682 = vunpack.c.l.b16 %v1211
  %v4683 = vunpack.c.h.b16 %v1211
  %v4684 = vunpack.c.l.b16 %v1212
  %v4685 = vunpack.c.h.b16 %v1212
  %v4686 = vunpack.c.l.b16 %v1213
  %v4687 = vunpack.c.h.b16 %v1213
  %v4688 = vunpack.c.l.b16 %v1214
  %v4689 = vunpack.c.h.b16 %v1214
  %v4690 = vunpack.c.l.b16 %v1215
  %v4691 = vunpack.c.h.b16 %v1215
  %v4692 = vunpack.c.l.b16 %v1216
  %v4693 = vunpack.c.h.b16 %v1216
  %v4694 = vunpack.c.l.b16 %v1217
  %v4695 = vunpack.c.h.b16 %v1217
  %v4696 = vunpack.c.l.b16 %v1218
  %v4697 = vunpack.c.h.b16 %v1218
  %v4698 = vunpack.c.l.b16 %v1219
  %v4699 = vunpack.c.h.b16 %v1219
  %v4700 = vunpack.c.l.b16 %v1220
  %v4701 = vunpack.c.h.b16 %v1220
  %v4702 = vunpack.c.l.b16 %v1221
  %v4703 = vunpack.c.h.b16 %v1221
  %v4704 = vunpack.c.l.b16 %v1222
  %v4705 = vunpack.c.h.b16 %v1222
  %v4706 = vunpack.c.l.b16 %v1223
  %v4707 = vunpack.c.h.b16 %v1223
  %v4708 = vunpack.c.l.b16 %v1224
  %v4709 = vunpack.c.h.b16 %v1224
  %v4710 = vunpack.c.l.b16 %v1225
  %v4711 = vunpack.c.h.b16 %v1225
  %v4712 = vunpack.c.l.b16 %v1226
  %v4713 = vunpack.c.h.b16 %v1226
  %v4714 = vunpack.c.l.b16 %v1227
  %v4715 = vunpack.c.h.b16 %v1227
  %v4716 = vunpack.c.l.b16 %v1228
  %v4717 = vunpack.c.h.b16 %v1228
  %v4718 = vunpack.c.l.b16 %v1229
  %v4719 = vunpack.c.h.b16 %v1229
  %v4720 = vunpack.c.l.b16 %v1230
  %v4721 = vunpack.c.h.b16 %v1230
  %v4722 = vunpack.c.l.b16 %v1231
  %v4723 = vunpack.c.h.b16 %v1231
  %v4724 = vunpack.c.l.b16 %v1232
  %v4725 = vunpack.c.h.b16 %v1232
  %v4726 = vunpack.c.l.b16 %v1233
  %v4727 = vunpack.c.h.b16 %v1233
  %v4728 = vunpack.c.l.b16 %v1234
  %v4729 = vunpack.c.h.b16 %v1234
  %v4730 = vunpack.c.l.b16 %v1235
  %v4731 = vunpack.c.h.b16 %v1235
  %v4732 = vunpack.c.l.b16 %v1236
  %v4733 = vunpack.c.h.b16 %v1236
  %v4734 = vunpack.c.l.b16 %v1237
  %v4735 = vunpack.c.h.b16 %v1237
  %v4736 = vunpack.c.l.b16 %v1238
  %v4737 = vunpack.c.h.b16 %v1238
  %v4738 = vunpack.c.l.b16 %v1239
  %v4739 = vunpack.c.h.b16 %v1239
  %v4740 = vunpack.c.l.b16 %v1240
  %v4741 = vunpack.c.h.b16 %v1240
  %v4742 = vunpack.c.l.b16 %v1241
  %v4743 = vunpack.c.h.b16 %v1241
  %v4744 = vunpack.c.l.b16 %v1242
  %v4745 = vunpack.c.h.b16 %v1242
  %v4746 = vunpack.c.l.b16 %v1243
  %v4747 = vunpack.c.h.b16 %v1243
  %v4748 = vunpack.c.l.b16 %v1244
  %v4749 = vunpack.c.h.b16 %v1244
  %v4750 = vunpack.c.l.b16 %v1245
  %v4751 = vunpack.c.h.b16 %v1245
  %v4752 = vunpack.c.l.b16 %v1246
  %v4753 = vunpack.c.h.b16 %v1246
  %v4754 = vunpack.c.l.b16 %v1247
  %v4755 = vunpack.c.h.b16 %v1247
  %v4756 = vunpack.c.l.b16 %v1248
  %v4757 = vunpack.c.h.b16 %v1248
  %v4758 = vunpack.c.l.b16 %v1249
  %v4759 = vunpack.c.h.b16 %v1249
  %v4760 = vunpack.c.l.b16 %v1250
  %v4761 = vunpack.c.h.b16 %v1250
  %v4762 = vunpack.c.l.b16 %v1251
  %v4763 = vunpack.c.h.b16 %v1251
  %v4764 = vunpack.c.l.b16 %v1252
  %v4765 = vunpack.c.h.b16 %v1252
  %v4766 = vunpack.c.l.b16 %v1253
  %v4767 = vunpack.c.h.b16 %v1253
  %v4768 = vunpack.c.l.b16 %v1254
  %v4769 = vunpack.c.h.b16 %v1254
  %v4770 = vunpack.c.l.b16 %v1255
  %v4771 = vunpack.c.h.b16 %v1255
  %v4772 = vunpack.c.l.b16 %v1256
  %v4773 = vunpack.c.h.b16 %v1256
  %v4774 = vunpack.c.l.b16 %v1257
  %v4775 = vunpack.c.h.b16 %v1257
  %v4776 = vunpack.c.l.b16 %v1258
  %v4777 = vunpack.c.h.b16 %v1258
  %v4778 = vunpack.c.l.b16 %v1259
  %v4779 = vunpack.c.h.b16 %v1259
  %v4780 = vunpack.c.l.b16 %v1260
  %v4781 = vunpack.c.h.b16 %v1260
  %v4782 = vunpack.c.l.b16 %v1261
  %v4783 = vunpack.c.h.b16 %v1261
  %v4784 = vunpack.c.l.b16 %v1262
  %v4785 = vunpack.c.h.b16 %v1262
  %v4786 = vunpack.c.l.b16 %v1263
  %v4787 = vunpack.c.h.b16 %v1263
  %v4788 = vunpack.c.l.b16 %v1264
  %v4789 = vunpack.c.h.b16 %v1264
  %v4790 = vunpack.c.l.b16 %v1265
  %v4791 = vunpack.c.h.b16 %v1265
  %v4792 = vunpack.c.l.b16 %v1266
  %v4793 = vunpack.c.h.b16 %v1266
  %v4794 = vunpack.c.l.b16 %v1267
  %v4795 = vunpack.c.h.b16 %v1267
  %v4796 = vunpack.c.l.b16 %v1268
  %v4797 = vunpack.c.h.b16 %v1268
  %v4798 = vunpack.c.l.b16 %v1269
  %v4799 = vunpack.c.h.b16 %v1269
  %v4800 = vunpack.c.l.b16 %v1270
  %v4801 = vunpack.c.h.b16 %v1270
  %v4802 = vunpack.c.l.b16 %v1271
  %v4803 = vunpack.c.h.b16 %v1271
  %v4804 = vunpack.c.l.b16 %v1272
  %v4805 = vunpack.c.h.b16 %v1272
  %v4806 = vunpack.c.l.b16 %v1273
  %v4807 = vunpack.c.h.b16 %v1273
  %v4808 = vunpack.c.l.b16 %v1274
  %v4809 = vunpack.c.h.b16 %v1274
  %v4810 = vunpack.c.l.b16 %v1275
  %v4811 = vunpack.c.h.b16 %v1275
  %v4812 = vunpack.c.l.b16 %v1276
  %v4813 = vunpack.c.h.b16 %v1276
  %v4814 = vunpack.c.l.b16 %v1277
  %v4815 = vunpack.c.h.b16 %v1277
  %v4816 = vunpack.c.l.b16 %v1278
  %v4817 = vunpack.c.h.b16 %v1278
  %v4818 = vunpack.c.l.b16 %v1279
  %v4819 = vunpack.c.h.b16 %v1279
  %v4820 = vunpack.c.l.b16 %v1280
  %v4821 = vunpack.c.h.b16 %v1280
  %v4822 = vunpack.c.l.b16 %v1281
  %v4823 = vunpack.c.h.b16 %v1281
  %v4824 = vunpack.c.l.b16 %v1282
  %v4825 = vunpack.c.h.b16 %v1282
  %v4826 = vunpack.c.l.b16 %v1283
  %v4827 = vunpack.c.h.b16 %v1283
  %v4828 = vunpack.c.l.b16 %v1284
  %v4829 = vunpack.c.h.b16 %v1284
  %v4830 = vunpack.c.l.b16 %v1285
  %v4831 = vunpack.c.h.b16 %v1285
  %v4832 = vunpack.c.l.b16 %v1286
  %v4833 = vunpack.c.h.b16 %v1286
  %v4834 = vunpack.c.l.b16 %v1287
  %v4835 = vunpack.c.h.b16 %v1287
  %v4836 = vunpack.c.l.b16 %v1288
  %v4837 = vunpack.c.h.b16 %v1288
  %v4838 = vunpack.c.l.b16 %v1289
  %v4839 = vunpack.c.h.b16 %v1289
  %v4840 = vunpack.c.l.b16 %v1290
  %v4841 = vunpack.c.h.b16 %v1290
  %v4842 = vunpack.c.l.b16 %v1291
  %v4843 = vunpack.c.h.b16 %v1291
  %v4844 = vunpack.c.l.b16 %v1292
  %v4845 = vunpack.c.h.b16 %v1292
  %v4846 = vunpack.c.l.b16 %v1293
  %v4847 = vunpack.c.h.b16 %v1293
  %v4848 = vunpack.c.l.b16 %v1294
  %v4849 = vunpack.c.h.b16 %v1294
  %v4850 = vunpack.c.l.b16 %v1295
  %v4851 = vunpack.c.h.b16 %v1295
  %v4852 = vunpack.c.l.b16 %v1296
  %v4853 = vunpack.c.h.b16 %v1296
  %v4854 = vunpack.c.l.b16 %v1297
  %v4855 = vunpack.c.h.b16 %v1297
  %v4856 = vunpack.c.l.b16 %v1298
  %v4857 = vunpack.c.h.b16 %v1298
  %v4858 = vunpack.c.l.b16 %v1299
  %v4859 = vunpack.c.h.b16 %v1299
  %v4860 = vunpack.c.l.b16 %v1300
  %v4861 = vunpack.c.h.b16 %v1300
  %v4862 = vunpack.c.l.b16 %v1301
  %v4863 = vunpack.c.h.b16 %v1301
  %v4864 = vunpack.c.l.b16 %v1302
  %v4865 = vunpack.c.h.b16 %v1302
  %v4866 = vunpack.c.l.b16 %v1303
  %v4867 = vunpack.c.h.b16 %v1303
  %v4868 = vunpack.c.l.b16 %v1304
  %v4869 = vunpack.c.h.b16 %v1304
  %v4870 = vunpack.c.l.b16 %v1305
  %v4871 = vunpack.c.h.b16 %v1305
  %v4872 = vunpack.c.l.b16 %v1306
  %v4873 = vunpack.c.h.b16 %v1306
  %v4874 = vunpack.c.l.b16 %v1307
  %v4875 = vunpack.c.h.b16 %v1307
  %v4876 = vunpack.c.l.b16 %v1308
  %v4877 = vunpack.c.h.b16 %v1308
  %v4878 = vunpack.c.l.b16 %v1309
  %v4879 = vunpack.c.h.b16 %v1309
  %v4880 = vunpack.c.l.b16 %v1310
  %v4881 = vunpack.c.h.b16 %v1310
  %v4882 = vunpack.c.l.b16 %v1311
  %v4883 = vunpack.c.h.b16 %v1311
  %v4884 = vunpack.c.l.b16 %v1312
  %v4885 = vunpack.c.h.b16 %v1312
  %v4886 = vunpack.c.l.b16 %v1313
  %v4887 = vunpack.c.h.b16 %v1313
  %v4888 = vunpack.c.l.b16 %v1314
  %v4889 = vunpack.c.h.b16 %v1314
  %v4890 = vunpack.c.l.b16 %v1315
  %v4891 = vunpack.c.h.b16 %v1315
  %v4892 = vunpack.c.l.b16 %v1316
  %v4893 = vunpack.c.h.b16 %v1316
  %v4894 = vunpack.c.l.b16 %v1317
  %v4895 = vunpack.c.h.b16 %v1317
  %v4896 = vunpack.c.l.b16 %v1318
  %v4897 = vunpack.c.h.b16 %v1318
  %v4898 = vunpack.c.l.b16 %v1319
  %v4899 = vunpack.c.h.b16 %v1319
  %v4900 = vunpack.c.l.b16 %v1320
  %v4901 = vunpack.c.h.b16 %v1320
  %v4902 = vunpack.c.l.b16 %v1321
  %v4903 = vunpack.c.h.b16 %v1321
  %v4904 = vunpack.c.l.b16 %v1322
  %v4905 = vunpack.c.h.b16 %v1322
  %v4906 = vunpack.c.l.b16 %v1323
  %v4907 = vunpack.c.h.b16 %v1323
  %v4908 = vunpack.c.l.b16 %v1324
  %v4909 = vunpack.c.h.b16 %v1324
  %v4910 = vunpack.c.l.b16 %v1325
  %v4911 = vunpack.c.h.b16 %v1325
  %v4912 = vunpack.c.l.b16 %v1326
  %v4913 = vunpack.c.h.b16 %v1326
  %v4914 = vunpack.c.l.b16 %v1327
  %v4915 = vunpack.c.h.b16 %v1327
  %v4916 = vunpack.c.l.b16 %v1328
  %v4917 = vunpack.c.h.b16 %v1328
  %v4918 = vunpack.c.l.b16 %v1329
  %v4919 = vunpack.c.h.b16 %v1329
  %v4920 = vunpack.c.l.b16 %v1330
  %v4921 = vunpack.c.h.b16 %v1330
  %v4922 = vunpack.c.l.b16 %v1331
  %v4923 = vunpack.c.h.b16 %v1331
  %v4924 = vunpack.c.l.b16 %v1332
  %v4925 = vunpack.c.h.b16 %v1332
  %v4926 = vunpack.c.l.b16 %v1333
  %v4927 = vunpack.c.h.b16 %v1333
  %v4928 = vunpack.c.l.b16 %v1334
  %v4929 = vunpack.c.h.b16 %v1334
  %v4930 = vunpack.c.l.b16 %v1335
  %v4931 = vunpack.c.h.b16 %v1335
  %v4932 = vunpack.c.l.b16 %v1336
  %v4933 = vunpack.c.h.b16 %v1336
  %v4934 = vpack.c.b16 %v2638, %v2630
  %v4935 = vpack.c.b16 %v2639, %v2631
  %v4936 = vpack.c.b16 %v2640, %v2632
  %v4937 = vpack.c.b16 %v2641, %v2633
  %v4938 = vpack.c.b16 %v2642, %v2634
  %v4939 = vpack.c.b16 %v2643, %v2635
  %v4940 = vpack.c.b16 %v2644, %v2636
  %v4941 = vpack.c.b16 %v2645, %v2637
  %v4942 = vpack.c.b16 %v2654, %v2646
  %v4943 = vpack.c.b16 %v2655, %v2647
  %v4944 = vpack.c.b16 %v2656, %v2648
  %v4945 = vpack.c.b16 %v2657, %v2649
  %v4946 = vpack.c.b16 %v2658, %v2650
  %v4947 = vpack.c.b16 %v2659, %v2651
  %v4948 = vpack.c.b16 %v2660, %v2652
  %v4949 = vpack.c.b16 %v2661, %v2653
  %v4950 = vpack.c.b16 %v2670, %v2662
  %v4951 = vpack.c.b16 %v2671, %v2663
  %v4952 = vpack.c.b16 %v2672, %v2664
  %v4953 = vpack.c.b16 %v2673, %v2665
  %v4954 = vpack.c.b16 %v2674, %v2666
  %v4955 = vpack.c.b16 %v2675, %v2667
  %v4956 = vpack.c.b16 %v2676, %v2668
  %v4957 = vpack.c.b16 %v2677, %v2669
  %v4958 = vpack.c.b16 %v2686, %v2678
  %v4959 = vpack.c.b16 %v2687, %v2679
  %v4960 = vpack.c.b16 %v2688, %v2680
  %v4961 = vpack.c.b16 %v2689, %v2681
  %v4962 = vpack.c.b16 %v2690, %v2682
  %v4963 = vpack.c.b16 %v2691, %v2683
  %v4964 = vpack.c.b16 %v2692, %v2684
  %v4965 = vpack.c.b16 %v2693, %v2685
  %v4966 = vpack.c.b16 %v2702, %v2694
  %v4967 = vpack.c.b16 %v2703, %v2695
  %v4968 = vpack.c.b16 %v2704, %v2696
  %v4969 = vpack.c.b16 %v2705, %v2697
  %v4970 = vpack.c.b16 %v2706, %v2698
  %v4971 = vpack.c.b16 %v2707, %v2699
  %v4972 = vpack.c.b16 %v2708, %v2700
  %v4973 = vpack.c.b16 %v2709, %v2701
  %v4974 = vpack.c.b16 %v2718, %v2710
  %v4975 = vpack.c.b16 %v2719, %v2711
  %v4976 = vpack.c.b16 %v2720, %v2712
  %v4977 = vpack.c.b16 %v2721, %v2713
  %v4978 = vpack.c.b16 %v2722, %v2714
  %v4979 = vpack.c.b16 %v2723, %v2715
  %v4980 = vpack.c.b16 %v2724, %v2716
  %v4981 = vpack.c.b16 %v2725, %v2717
  %v4982 = vpack.c.b16 %v2734, %v2726
  %v4983 = vpack.c.b16 %v2735, %v2727
  %v4984 = vpack.c.b16 %v2736, %v2728
  %v4985 = vpack.c.b16 %v2737, %v2729
  %v4986 = vpack.c.b16 %v2738, %v2730
  %v4987 = vpack.c.b16 %v2739, %v2731
  %v4988 = vpack.c.b16 %v2740, %v2732
  %v4989 = vpack.c.b16 %v2741, %v2733
  %v4990 = vpack.c.b16 %v2750, %v2742
  %v4991 = vpack.c.b16 %v2751, %v2743
  %v4992 = vpack.c.b16 %v2752, %v2744
  %v4993 = vpack.c.b16 %v2753, %v2745
  %v4994 = vpack.c.b16 %v2754, %v2746
  %v4995 = vpack.c.b16 %v2755, %v2747
  %v4996 = vpack.c.b16 %v2756, %v2748
  %v4997 = vpack.c.b16 %v2757, %v2749
  %v4998 = vpack.c.b16 %v2766, %v2758
  %v4999 = vpack.c.b16 %v2767, %v2759
  %v5000 = vpack.c.b16 %v2768, %v2760
  %v5001 = vpack.c.b16 %v2769, %v2761
  %v5002 = vpack.c.b16 %v2770, %v2762
  %v5003 = vpack.c.b16 %v2771, %v2763
  %v5004 = vpack.c.b16 %v2772, %v2764
  %v5005 = vpack.c.b16 %v2773, %v2765
  %v5006 = vpack.c.b16 %v2782, %v2774
  %v5007 = vpack.c.b16 %v2783, %v2775
  %v5008 = vpack.c.b16 %v2784, %v2776
  %v5009 = vpack.c.b16 %v2785, %v2777
  %v5010 = vpack.c.b16 %v2786, %v2778
  %v5011 = vpack.c.b16 %v2787, %v2779
  %v5012 = vpack.c.b16 %v2788, %v2780
  %v5013 = vpack.c.b16 %v2789, %v2781
  %v5014 = vpack.c.b16 %v2798, %v2790
  %v5015 = vpack.c.b16 %v2799, %v2791
  %v5016 = vpack.c.b16 %v2800, %v2792
  %v5017 = vpack.c.b16 %v2801, %v2793
  %v5018 = vpack.c.b16 %v2802, %v2794
  %v5019 = vpack.c.b16 %v2803, %v2795
  %v5020 = vpack.c.b16 %v2804, %v2796
  %v5021 = vpack.c.b16 %v2805, %v2797
  %v5022 = vpack.c.b16 %v2814, %v2806
  %v5023 = vpack.c.b16 %v2815, %v2807
  %v5024 = vpack.c.b16 %v2816, %v2808
  %v5025 = vpack.c.b16 %v2817, %v2809
  %v5026 = vpack.c.b16 %v2818, %v2810
  %v5027 = vpack.c.b16 %v2819, %v2811
  %v5028 = vpack.c.b16 %v2820, %v2812
  %v5029 = vpack.c.b16 %v2821, %v2813
  %v5030 = vpack.c.b16 %v2830, %v2822
  %v5031 = vpack.c.b16 %v2831, %v2823
  %v5032 = vpack.c.b16 %v2832, %v2824
  %v5033 = vpack.c.b16 %v2833, %v2825
  %v5034 = vpack.c.b16 %v2834, %v2826
  %v5035 = vpack.c.b16 %v2835, %v2827
  %v5036 = vpack.c.b16 %v2836, %v2828
  %v5037 = vpack.c.b16 %v2837, %v2829
  %v5038 = vpack.c.b16 %v2846, %v2838
  %v5039 = vpack.c.b16 %v2847, %v2839
  %v5040 = vpack.c.b16 %v2848, %v2840
  %v5041 = vpack.c.b16 %v2849, %v2841
  %v5042 = vpack.c.b16 %v2850, %v2842
  %v5043 = vpack.c.b16 %v2851, %v2843
  %v5044 = vpack.c.b16 %v2852, %v2844
  %v5045 = vpack.c.b16 %v2853, %v2845
  %v5046 = vpack.c.b16 %v2862, %v2854
  %v5047 = vpack.c.b16 %v2863, %v2855
  %v5048 = vpack.c.b16 %v2864, %v2856
  %v5049 = vpack.c.b16 %v2865, %v2857
  %v5050 = vpack.c.b16 %v2866, %v2858
  %v5051 = vpack.c.b16 %v2867, %v2859
  %v5052 = vpack.c.b16 %v2868, %v2860
  %v5053 = vpack.c.b16 %v2869, %v2861
  %v5054 = vpack.c.b16 %v2878, %v2870
  %v5055 = vpack.c.b16 %v2879, %v2871
  %v5056 = vpack.c.b16 %v2880, %v2872
  %v5057 = vpack.c.b16 %v2881, %v2873
  %v5058 = vpack.c.b16 %v2882, %v2874
  %v5059 = vpack.c.b16 %v2883, %v2875
  %v5060 = vpack.c.b16 %v2884, %v2876
  %v5061 = vpack.c.b16 %v2885, %v2877
  %v5062 = vpack.c.b16 %v2894, %v2886
  %v5063 = vpack.c.b16 %v2895, %v2887
  %v5064 = vpack.c.b16 %v2896, %v2888
  %v5065 = vpack.c.b16 %v2897, %v2889
  %v5066 = vpack.c.b16 %v2898, %v2890
  %v5067 = vpack.c.b16 %v2899, %v2891
  %v5068 = vpack.c.b16 %v2900, %v2892
  %v5069 = vpack.c.b16 %v2901, %v2893
  %v5070 = vpack.c.b16 %v2910, %v2902
  %v5071 = vpack.c.b16 %v2911, %v2903
  %v5072 = vpack.c.b16 %v2912, %v2904
  %v5073 = vpack.c.b16 %v2913, %v2905
  %v5074 = vpack.c.b16 %v2914, %v2906
  %v5075 = vpack.c.b16 %v2915, %v2907
  %v5076 = vpack.c.b16 %v2916, %v2908
  %v5077 = vpack.c.b16 %v2917, %v2909
  %v5078 = vpack.c.b16 %v2926, %v2918
  %v5079 = vpack.c.b16 %v2927, %v2919
  %v5080 = vpack.c.b16 %v2928, %v2920
  %v5081 = vpack.c.b16 %v2929, %v2921
  %v5082 = vpack.c.b16 %v2930, %v2922
  %v5083 = vpack.c.b16 %v2931, %v2923
  %v5084 = vpack.c.b16 %v2932, %v2924
  %v5085 = vpack.c.b16 %v2933, %v2925
  %v5086 = vpack.c.b16 %v2942, %v2934
  %v5087 = vpack.c.b16 %v2943, %v2935
  %v5088 = vpack.c.b16 %v2944, %v2936
  %v5089 = vpack.c.b16 %v2945, %v2937
  %v5090 = vpack.c.b16 %v2946, %v2938
  %v5091 = vpack.c.b16 %v2947, %v2939
  %v5092 = vpack.c.b16 %v2948, %v2940
  %v5093 = vpack.c.b16 %v2949, %v2941
  %v5094 = vpack.c.b16 %v2958, %v2950
  %v5095 = vpack.c.b16 %v2959, %v2951
  %v5096 = vpack.c.b16 %v2960, %v2952
  %v5097 = vpack.c.b16 %v2961, %v2953
  %v5098 = vpack.c.b16 %v2962, %v2954
  %v5099 = vpack.c.b16 %v2963, %v2955
  %v5100 = vpack.c.b16 %v2964, %v2956
  %v5101 = vpack.c.b16 %v2965, %v2957
  %v5102 = vpack.c.b16 %v2974, %v2966
  %v5103 = vpack.c.b16 %v2975, %v2967
  %v5104 = vpack.c.b16 %v2976, %v2968
  %v5105 = vpack.c.b16 %v2977, %v2969
  %v5106 = vpack.c.b16 %v2978, %v2970
  %v5107 = vpack.c.b16 %v2979, %v2971
  %v5108 = vpack.c.b16 %v2980, %v2972
  %v5109 = vpack.c.b16 %v2981, %v2973
  %v5110 = vpack.c.b16 %v2990, %v2982
  %v5111 = vpack.c.b16 %v2991, %v2983
  %v5112 = vpack.c.b16 %v2992, %v2984
  %v5113 = vpack.c.b16 %v2993, %v2985
  %v5114 = vpack.c.b16 %v2994, %v2986
  %v5115 = vpack.c.b16 %v2995, %v2987
  %v5116 = vpack.c.b16 %v2996, %v2988
  %v5117 = vpack.c.b16 %v2997, %v2989
  %v5118 = vpack.c.b16 %v3006, %v2998
  %v5119 = vpack.c.b16 %v3007, %v2999
  %v5120 = vpack.c.b16 %v3008, %v3000
  %v5121 = vpack.c.b16 %v3009, %v3001
  %v5122 = vpack.c.b16 %v3010, %v3002
  %v5123 = vpack.c.b16 %v3011, %v3003
  %v5124 = vpack.c.b16 %v3012, %v3004
  %v5125 = vpack.c.b16 %v3013, %v3005
  %v5126 = vpack.c.b16 %v3022, %v3014
  %v5127 = vpack.c.b16 %v3023, %v3015
  %v5128 = vpack.c.b16 %v3024, %v3016
  %v5129 = vpack.c.b16 %v3025, %v3017
  %v5130 = vpack.c.b16 %v3026, %v3018
  %v5131 = vpack.c.b16 %v3027, %v3019
  %v5132 = vpack.c.b16 %v3028, %v3020
  %v5133 = vpack.c.b16 %v3029, %v3021
  %v5134 = vpack.c.b16 %v3038, %v3030
  %v5135 = vpack.c.b16 %v3039, %v3031
  %v5136 = vpack.c.b16 %v3040, %v3032
  %v5137 = vpack.c.b16 %v3041, %v3033
  %v5138 = vpack.c.b16 %v3042, %v3034
  %v5139 = vpack.c.b16 %v3043, %v3035
  %v5140 = vpack.c.b16 %v3044, %v3036
  %v5141 = vpack.c.b16 %v3045, %v3037
  %v5142 = vpack.c.b16 %v3054, %v3046
  %v5143 = vpack.c.b16 %v3055, %v3047
  %v5144 = vpack.c.b16 %v3056, %v3048
  %v5145 = vpack.c.b16 %v3057, %v3049
  %v5146 = vpack.c.b16 %v3058, %v3050
  %v5147 = vpack.c.b16 %v3059, %v3051
  %v5148 = vpack.c.b16 %v3060, %v3052
  %v5149 = vpack.c.b16 %v3061, %v3053
  %v5150 = vpack.c.b16 %v3070, %v3062
  %v5151 = vpack.c.b16 %v3071, %v3063
  %v5152 = vpack.c.b16 %v3072, %v3064
  %v5153 = vpack.c.b16 %v3073, %v3065
  %v5154 = vpack.c.b16 %v3074, %v3066
  %v5155 = vpack.c.b16 %v3075, %v3067
  %v5156 = vpack.c.b16 %v3076, %v3068
  %v5157 = vpack.c.b16 %v3077, %v3069
  %v5158 = vpack.c.b16 %v3086, %v3078
  %v5159 = vpack.c.b16 %v3087, %v3079
  %v5160 = vpack.c.b16 %v3088, %v3080
  %v5161 = vpack.c.b16 %v3089, %v3081
  %v5162 = vpack.c.b16 %v3090, %v3082
  %v5163 = vpack.c.b16 %v3091, %v3083
  %v5164 = vpack.c.b16 %v3092, %v3084
  %v5165 = vpack.c.b16 %v3093, %v3085
  %v5166 = vpack.c.b16 %v3102, %v3094
  %v5167 = vpack.c.b16 %v3103, %v3095
  %v5168 = vpack.c.b16 %v3104, %v3096
  %v5169 = vpack.c.b16 %v3105, %v3097
  %v5170 = vpack.c.b16 %v3106, %v3098
  %v5171 = vpack.c.b16 %v3107, %v3099
  %v5172 = vpack.c.b16 %v3108, %v3100
  %v5173 = vpack.c.b16 %v3109, %v3101
  %v5174 = vpack.c.b16 %v3118, %v3110
  %v5175 = vpack.c.b16 %v3119, %v3111
  %v5176 = vpack.c.b16 %v3120, %v3112
  %v5177 = vpack.c.b16 %v3121, %v3113
  %v5178 = vpack.c.b16 %v3122, %v3114
  %v5179 = vpack.c.b16 %v3123, %v3115
  %v5180 = vpack.c.b16 %v3124, %v3116
  %v5181 = vpack.c.b16 %v3125, %v3117
  %v5182 = vpack.c.b16 %v3134, %v3126
  %v5183 = vpack.c.b16 %v3135, %v3127
  %v5184 = vpack.c.b16 %v3136, %v3128
  %v5185 = vpack.c.b16 %v3137, %v3129
  %v5186 = vpack.c.b16 %v3138, %v3130
  %v5187 = vpack.c.b16 %v3139, %v3131
  %v5188 = vpack.c.b16 %v3140, %v3132
  %v5189 = vpack.c.b16 %v3141, %v3133
  %v5190 = vpack.c.b16 %v3150, %v3142
  %v5191 = vpack.c.b16 %v3151, %v3143
  %v5192 = vpack.c.b16 %v3152, %v3144
  %v5193 = vpack.c.b16 %v3153, %v3145
  %v5194 = vpack.c.b16 %v3154, %v3146
  %v5195 = vpack.c.b16 %v3155, %v3147
  %v5196 = vpack.c.b16 %v3156, %v3148
  %v5197 = vpack.c.b16 %v3157, %v3149
  %v5198 = vpack.c.b16 %v3166, %v3158
  %v5199 = vpack.c.b16 %v3167, %v3159
  %v5200 = vpack.c.b16 %v3168, %v3160
  %v5201 = vpack.c.b16 %v3169, %v3161
  %v5202 = vpack.c.b16 %v3170, %v3162
  %v5203 = vpack.c.b16 %v3171, %v3163
  %v5204 = vpack.c.b16 %v3172, %v3164
  %v5205 = vpack.c.b16 %v3173, %v3165
  %v5206 = vpack.c.b16 %v3182, %v3174
  %v5207 = vpack.c.b16 %v3183, %v3175
  %v5208 = vpack.c.b16 %v3184, %v3176
  %v5209 = vpack.c.b16 %v3185, %v3177
  %v5210 = vpack.c.b16 %v3186, %v3178
  %v5211 = vpack.c.b16 %v3187, %v3179
  %v5212 = vpack.c.b16 %v3188, %v3180
  %v5213 = vpack.c.b16 %v3189, %v3181
  %v5214 = vpack.c.b16 %v3198, %v3190
  %v5215 = vpack.c.b16 %v3199, %v3191
  %v5216 = vpack.c.b16 %v3200, %v3192
  %v5217 = vpack.c.b16 %v3201, %v3193
  %v5218 = vpack.c.b16 %v3202, %v3194
  %v5219 = vpack.c.b16 %v3203, %v3195
  %v5220 = vpack.c.b16 %v3204, %v3196
  %v5221 = vpack.c.b16 %v3205, %v3197
  %v5222 = vpack.c.b16 %v3214, %v3206
  %v5223 = vpack.c.b16 %v3215, %v3207
  %v5224 = vpack.c.b16 %v3216, %v3208
  %v5225 = vpack.c.b16 %v3217, %v3209
  %v5226 = vpack.c.b16 %v3218, %v3210
  %v5227 = vpack.c.b16 %v3219, %v3211
  %v5228 = vpack.c.b16 %v3220, %v3212
  %v5229 = vpack.c.b16 %v3221, %v3213
  %v5230 = vpack.c.b16 %v3230, %v3222
  %v5231 = vpack.c.b16 %v3231, %v3223
  %v5232 = vpack.c.b16 %v3232, %v3224
  %v5233 = vpack.c.b16 %v3233, %v3225
  %v5234 = vpack.c.b16 %v3234, %v3226
  %v5235 = vpack.c.b16 %v3235, %v3227
  %v5236 = vpack.c.b16 %v3236, %v3228
  %v5237 = vpack.c.b16 %v3237, %v3229
  %v5238 = vpack.c.b16 %v3246, %v3238
  %v5239 = vpack.c.b16 %v3247, %v3239
  %v5240 = vpack.c.b16 %v3248, %v3240
  %v5241 = vpack.c.b16 %v3249, %v3241
  %v5242 = vpack.c.b16 %v3250, %v3242
  %v5243 = vpack.c.b16 %v3251, %v3243
  %v5244 = vpack.c.b16 %v3252, %v3244
  %v5245 = vpack.c.b16 %v3253, %v3245
  %v5246 = vpack.c.b16 %v3262, %v3254
  %v5247 = vpack.c.b16 %v3263, %v3255
  %v5248 = vpack.c.b16 %v3264, %v3256
  %v5249 = vpack.c.b16 %v3265, %v3257
  %v5250 = vpack.c.b16 %v3266, %v3258
  %v5251 = vpack.c.b16 %v3267, %v3259
  %v5252 = vpack.c.b16 %v3268, %v3260
  %v5253 = vpack.c.b16 %v3269, %v3261
  %v5254 = vpack.c.b16 %v3278, %v3270
  %v5255 = vpack.c.b16 %v3279, %v3271
  %v5256 = vpack.c.b16 %v3280, %v3272
  %v5257 = vpack.c.b16 %v3281, %v3273
  %v5258 = vpack.c.b16 %v3282, %v3274
  %v5259 = vpack.c.b16 %v3283, %v3275
  %v5260 = vpack.c.b16 %v3284, %v3276
  %v5261 = vpack.c.b16 %v3285, %v3277
  %v5262 = vpack.c.b16 %v3294, %v3286
  %v5263 = vpack.c.b16 %v3295, %v3287
  %v5264 = vpack.c.b16 %v3296, %v3288
  %v5265 = vpack.c.b16 %v3297, %v3289
  %v5266 = vpack.c.b16 %v3298, %v3290
  %v5267 = vpack.c.b16 %v3299, %v3291
  %v5268 = vpack.c.b16 %v3300, %v3292
  %v5269 = vpack.c.b16 %v3301, %v3293
  %v5270 = vpack.c.b16 %v3310, %v3302
  %v5271 = vpack.c.b16 %v3311, %v3303
  %v5272 = vpack.c.b16 %v3312, %v3304
  %v5273 = vpack.c.b16 %v3313, %v3305
  %v5274 = vpack.c.b16 %v3314, %v3306
  %v5275 = vpack.c.b16 %v3315, %v3307
  %v5276 = vpack.c.b16 %v3316, %v3308
  %v5277 = vpack.c.b16 %v3317, %v3309
  %v5278 = vpack.c.b16 %v3326, %v3318
  %v5279 = vpack.c.b16 %v3327, %v3319
  %v5280 = vpack.c.b16 %v3328, %v3320
  %v5281 = vpack.c.b16 %v3329, %v3321
  %v5282 = vpack.c.b16 %v3330, %v3322
  %v5283 = vpack.c.b16 %v3331, %v3323
  %v5284 = vpack.c.b16 %v3332, %v3324
  %v5285 = vpack.c.b16 %v3333, %v3325
  %v5286 = vpack.c.b16 %v3342, %v3334
  %v5287 = vpack.c.b16 %v3343, %v3335
  %v5288 = vpack.c.b16 %v3344, %v3336
  %v5289 = vpack.c.b16 %v3345, %v3337
  %v5290 = vpack.c.b16 %v3346, %v3338
  %v5291 = vpack.c.b16 %v3347, %v3339
  %v5292 = vpack.c.b16 %v3348, %v3340
  %v5293 = vpack.c.b16 %v3349, %v3341
  %v5294 = vpack.c.b16 %v3358, %v3350
  %v5295 = vpack.c.b16 %v3359, %v3351
  %v5296 = vpack.c.b16 %v3360, %v3352
  %v5297 = vpack.c.b16 %v3361, %v3353
  %v5298 = vpack.c.b16 %v3362, %v3354
  %v5299 = vpack.c.b16 %v3363, %v3355
  %v5300 = vpack.c.b16 %v3364, %v3356
  %v5301 = vpack.c.b16 %v3365, %v3357
  %v5302 = vpack.c.b16 %v3374, %v3366
  %v5303 = vpack.c.b16 %v3375, %v3367
  %v5304 = vpack.c.b16 %v3376, %v3368
  %v5305 = vpack.c.b16 %v3377, %v3369
  %v5306 = vpack.c.b16 %v3378, %v3370
  %v5307 = vpack.c.b16 %v3379, %v3371
  %v5308 = vpack.c.b16 %v3380, %v3372
  %v5309 = vpack.c.b16 %v3381, %v3373
  %v5310 = vpack.c.b16 %v3390, %v3382
  %v5311 = vpack.c.b16 %v3391, %v3383
  %v5312 = vpack.c.b16 %v3392, %v3384
  %v5313 = vpack.c.b16 %v3393, %v3385
  %v5314 = vpack.c.b16 %v3394, %v3386
  %v5315 = vpack.c.b16 %v3395, %v3387
  %v5316 = vpack.c.b16 %v3396, %v3388
  %v5317 = vpack.c.b16 %v3397, %v3389
  %v5318 = vpack.c.b16 %v3406, %v3398
  %v5319 = vpack.c.b16 %v3407, %v3399
  %v5320 = vpack.c.b16 %v3408, %v3400
  %v5321 = vpack.c.b16 %v3409, %v3401
  %v5322 = vpack.c.b16 %v3410, %v3402
  %v5323 = vpack.c.b16 %v3411, %v3403
  %v5324 = vpack.c.b16 %v3412, %v3404
  %v5325 = vpack.c.b16 %v3413, %v3405
  %v5326 = vpack.c.b16 %v3422, %v3414
  %v5327 = vpack.c.b16 %v3423, %v3415
  %v5328 = vpack.c.b16 %v3424, %v3416
  %v5329 = vpack.c.b16 %v3425, %v3417
  %v5330 = vpack.c.b16 %v3426, %v3418
  %v5331 = vpack.c.b16 %v3427, %v3419
  %v5332 = vpack.c.b16 %v3428, %v3420
  %v5333 = vpack.c.b16 %v3429, %v3421
  %v5334 = vpack.c.b16 %v3438, %v3430
  %v5335 = vpack.c.b16 %v3439, %v3431
  %v5336 = vpack.c.b16 %v3440, %v3432
  %v5337 = vpack.c.b16 %v3441, %v3433
  %v5338 = vpack.c.b16 %v3442, %v3434
  %v5339 = vpack.c.b16 %v3443, %v3435
  %v5340 = vpack.c.b16 %v3444, %v3436
  %v5341 = vpack.c.b16 %v3445, %v3437
  %v5342 = vpack.c.b16 %v3454, %v3446
  %v5343 = vpack.c.b16 %v3455, %v3447
  %v5344 = vpack.c.b16 %v3456, %v3448
  %v5345 = vpack.c.b16 %v3457, %v3449
  %v5346 = vpack.c.b16 %v3458, %v3450
  %v5347 = vpack.c.b16 %v3459, %v3451
  %v5348 = vpack.c.b16 %v3460, %v3452
  %v5349 = vpack.c.b16 %v3461, %v3453
  %v5350 = vpack.c.b16 %v3470, %v3462
  %v5351 = vpack.c.b16 %v3471, %v3463
  %v5352 = vpack.c.b16 %v3472, %v3464
  %v5353 = vpack.c.b16 %v3473, %v3465
  %v5354 = vpack.c.b16 %v3474, %v3466
  %v5355 = vpack.c.b16 %v3475, %v3467
  %v5356 = vpack.c.b16 %v3476, %v3468
  %v5357 = vpack.c.b16 %v3477, %v3469
  %v5358 = vpack.c.b16 %v3486, %v3478
  %v5359 = vpack.c.b16 %v3487, %v3479
  %v5360 = vpack.c.b16 %v3488, %v3480
  %v5361 = vpack.c.b16 %v3489, %v3481
  %v5362 = vpack.c.b16 %v3490, %v3482
  %v5363 = vpack.c.b16 %v3491, %v3483
  %v5364 = vpack.c.b16 %v3492, %v3484
  %v5365 = vpack.c.b16 %v3493, %v3485
  %v5366 = vpack.c.b16 %v3502, %v3494
  %v5367 = vpack.c.b16 %v3503, %v3495
  %v5368 = vpack.c.b16 %v3504, %v3496
  %v5369 = vpack.c.b16 %v3505, %v3497
  %v5370 = vpack.c.b16 %v3506, %v3498
  %v5371 = vpack.c.b16 %v3507, %v3499
  %v5372 = vpack.c.b16 %v3508, %v3500
  %v5373 = vpack.c.b16 %v3509, %v3501
  %v5374 = vpack.c.b16 %v3518, %v3510
  %v5375 = vpack.c.b16 %v3519, %v3511
  %v5376 = vpack.c.b16 %v3520, %v3512
  %v5377 = vpack.c.b16 %v3521, %v3513
  %v5378 = vpack.c.b16 %v3522, %v3514
  %v5379 = vpack.c.b16 %v3523, %v3515
  %v5380 = vpack.c.b16 %v3524, %v3516
  %v5381 = vpack.c.b16 %v3525, %v3517
  %v5382 = vpack.c.b16 %v3534, %v3526
  %v5383 = vpack.c.b16 %v3535, %v3527
  %v5384 = vpack.c.b16 %v3536, %v3528
  %v5385 = vpack.c.b16 %v3537, %v3529
  %v5386 = vpack.c.b16 %v3538, %v3530
  %v5387 = vpack.c.b16 %v3539, %v3531
  %v5388 = vpack.c.b16 %v3540, %v3532
  %v5389 = vpack.c.b16 %v3541, %v3533
  %v5390 = vpack.c.b16 %v3550, %v3542
  %v5391 = vpack.c.b16 %v3551, %v3543
  %v5392 = vpack.c.b16 %v3552, %v3544
  %v5393 = vpack.c.b16 %v3553, %v3545
  %v5394 = vpack.c.b16 %v3554, %v3546
  %v5395 = vpack.c.b16 %v3555, %v3547
  %v5396 = vpack.c.b16 %v3556, %v3548
  %v5397 = vpack.c.b16 %v3557, %v3549
  %v5398 = vpack.c.b16 %v3566, %v3558
  %v5399 = vpack.c.b16 %v3567, %v3559
  %v5400 = vpack.c.b16 %v3568, %v3560
  %v5401 = vpack.c.b16 %v3569, %v3561
  %v5402 = vpack.c.b16 %v3570, %v3562
  %v5403 = vpack.c.b16 %v3571, %v3563
  %v5404 = vpack.c.b16 %v3572, %v3564
  %v5405 = vpack.c.b16 %v3573, %v3565
  %v5406 = vpack.c.b16 %v3582, %v3574
  %v5407 = vpack.c.b16 %v3583, %v3575
  %v5408 = vpack.c.b16 %v3584, %v3576
  %v5409 = vpack.c.b16 %v3585, %v3577
  %v5410 = vpack.c.b16 %v3586, %v3578
  %v5411 = vpack.c.b16 %v3587, %v3579
  %v5412 = vpack.c.b16 %v3588, %v3580
  %v5413 = vpack.c.b16 %v3589, %v3581
  %v5414 = vpack.c.b16 %v3598, %v3590
  %v5415 = vpack.c.b16 %v3599, %v3591
  %v5416 = vpack.c.b16 %v3600, %v3592
  %v5417 = vpack.c.b16 %v3601, %v3593
  %v5418 = vpack.c.b16 %v3602, %v3594
  %v5419 = vpack.c.b16 %v3603, %v3595
  %v5420 = vpack.c.b16 %v3604, %v3596
  %v5421 = vpack.c.b16 %v3605, %v3597
  %v5422 = vpack.c.b16 %v3614, %v3606
  %v5423 = vpack.c.b16 %v3615, %v3607
  %v5424 = vpack.c.b16 %v3616, %v3608
  %v5425 = vpack.c.b16 %v3617, %v3609
  %v5426 = vpack.c.b16 %v3618, %v3610
  %v5427 = vpack.c.b16 %v3619, %v3611
  %v5428 = vpack.c.b16 %v3620, %v3612
  %v5429 = vpack.c.b16 %v3621, %v3613
  %v5430 = vpack.c.b16 %v3630, %v3622
  %v5431 = vpack.c.b16 %v3631, %v3623
  %v5432 = vpack.c.b16 %v3632, %v3624
  %v5433 = vpack.c.b16 %v3633, %v3625
  %v5434 = vpack.c.b16 %v3634, %v3626
  %v5435 = vpack.c.b16 %v3635, %v3627
  %v5436 = vpack.c.b16 %v3636, %v3628
  %v5437 = vpack.c.b16 %v3637, %v3629
  %v5438 = vpack.c.b16 %v3646, %v3638
  %v5439 = vpack.c.b16 %v3647, %v3639
  %v5440 = vpack.c.b16 %v3648, %v3640
  %v5441 = vpack.c.b16 %v3649, %v3641
  %v5442 = vpack.c.b16 %v3650, %v3642
  %v5443 = vpack.c.b16 %v3651, %v3643
  %v5444 = vpack.c.b16 %v3652, %v3644
  %v5445 = vpack.c.b16 %v3653, %v3645
  %v5446 = vpack.c.b16 %v3662, %v3654
  %v5447 = vpack.c.b16 %v3663, %v3655
  %v5448 = vpack.c.b16 %v3664, %v3656
  %v5449 = vpack.c.b16 %v3665, %v3657
  %v5450 = vpack.c.b16 %v3666, %v3658
  %v5451 = vpack.c.b16 %v3667, %v3659
  %v5452 = vpack.c.b16 %v3668, %v3660
  %v5453 = vpack.c.b16 %v3669, %v3661
  %v5454 = vpack.c.b16 %v3678, %v3670
  %v5455 = vpack.c.b16 %v3679, %v3671
  %v5456 = vpack.c.b16 %v3680, %v3672
  %v5457 = vpack.c.b16 %v3681, %v3673
  %v5458 = vpack.c.b16 %v3682, %v3674
  %v5459 = vpack.c.b16 %v3683, %v3675
  %v5460 = vpack.c.b16 %v3684, %v3676
  %v5461 = vpack.c.b16 %v3685, %v3677
  %v5462 = vpack.c.b16 %v3694, %v3686
  %v5463 = vpack.c.b16 %v3695, %v3687
  %v5464 = vpack.c.b16 %v3696, %v3688
  %v5465 = vpack.c.b16 %v3697, %v3689
  %v5466 = vpack.c.b16 %v3698, %v3690
  %v5467 = vpack.c.b16 %v3699, %v3691
  %v5468 = vpack.c.b16 %v3700, %v3692
  %v5469 = vpack.c.b16 %v3701, %v3693
  %v5470 = vpack.c.b16 %v3710, %v3702
  %v5471 = vpack.c.b16 %v3711, %v3703
  %v5472 = vpack.c.b16 %v3712, %v3704
  %v5473 = vpack.c.b16 %v3713, %v3705
  %v5474 = vpack.c.b16 %v3714, %v3706
  %v5475 = vpack.c.b16 %v3715, %v3707
  %v5476 = vpack.c.b16 %v3716, %v3708
  %v5477 = vpack.c.b16 %v3717, %v3709
  %v5478 = vpack.c.b16 %v3726, %v3718
  %v5479 = vpack.c.b16 %v3727, %v3719
  %v5480 = vpack.c.b16 %v3728, %v3720
  %v5481 = vpack.c.b16 %v3729, %v3721
  %v5482 = vpack.c.b16 %v3730, %v3722
  %v5483 = vpack.c.b16 %v3731, %v3723
  %v5484 = vpack.c.b16 %v3732, %v3724
  %v5485 = vpack.c.b16 %v3733, %v3725
  %v5486 = vpack.c.b16 %v3742, %v3734
  %v5487 = vpack.c.b16 %v3743, %v3735
  %v5488 = vpack.c.b16 %v3744, %v3736
  %v5489 = vpack.c.b16 %v3745, %v3737
  %v5490 = vpack.c.b16 %v3746, %v3738
  %v5491 = vpack.c.b16 %v3747, %v3739
  %v5492 = vpack.c.b16 %v3748, %v3740
  %v5493 = vpack.c.b16 %v3749, %v3741
  %v5494 = vpack.c.b16 %v3758, %v3750
  %v5495 = vpack.c.b16 %v3759, %v3751
  %v5496 = vpack.c.b16 %v3760, %v3752
  %v5497 = vpack.c.b16 %v3761, %v3753
  %v5498 = vpack.c.b16 %v3762, %v3754
  %v5499 = vpack.c.b16 %v3763, %v3755
  %v5500 = vpack.c.b16 %v3764, %v3756
  %v5501 = vpack.c.b16 %v3765, %v3757
  %v5502 = vpack.c.b16 %v3774, %v3766
  %v5503 = vpack.c.b16 %v3775, %v3767
  %v5504 = vpack.c.b16 %v3776, %v3768
  %v5505 = vpack.c.b16 %v3777, %v3769
  %v5506 = vpack.c.b16 %v3778, %v3770
  %v5507 = vpack.c.b16 %v3779, %v3771
  %v5508 = vpack.c.b16 %v3780, %v3772
  %v5509 = vpack.c.b16 %v3781, %v3773
  %v5510 = vpack.c.b16 %v3790, %v3782
  %v5511 = vpack.c.b16 %v3791, %v3783
  %v5512 = vpack.c.b16 %v3792, %v3784
  %v5513 = vpack.c.b16 %v3793, %v3785
  %v5514 = vpack.c.b16 %v3794, %v3786
  %v5515 = vpack.c.b16 %v3795, %v3787
  %v5516 = vpack.c.b16 %v3796, %v3788
  %v5517 = vpack.c.b16 %v3797, %v3789
  %v5518 = vpack.c.b16 %v3806, %v3798
  %v5519 = vpack.c.b16 %v3807, %v3799
  %v5520 = vpack.c.b16 %v3808, %v3800
  %v5521 = vpack.c.b16 %v3809, %v3801
  %v5522 = vpack.c.b16 %v3810, %v3802
  %v5523 = vpack.c.b16 %v3811, %v3803
  %v5524 = vpack.c.b16 %v3812, %v3804
  %v5525 = vpack.c.b16 %v3813, %v3805
  %v5526 = vpack.c.b16 %v3822, %v3814
  %v5527 = vpack.c.b16 %v3823, %v3815
  %v5528 = vpack.c.b16 %v3824, %v3816
  %v5529 = vpack.c.b16 %v3825, %v3817
  %v5530 = vpack.c.b16 %v3826, %v3818
  %v5531 = vpack.c.b16 %v3827, %v3819
  %v5532 = vpack.c.b16 %v3828, %v3820
  %v5533 = vpack.c.b16 %v3829, %v3821
  %v5534 = vpack.c.b16 %v3838, %v3830
  %v5535 = vpack.c.b16 %v3839, %v3831
  %v5536 = vpack.c.b16 %v3840, %v3832
  %v5537 = vpack.c.b16 %v3841, %v3833
  %v5538 = vpack.c.b16 %v3842, %v3834
  %v5539 = vpack.c.b16 %v3843, %v3835
  %v5540 = vpack.c.b16 %v3844, %v3836
  %v5541 = vpack.c.b16 %v3845, %v3837
  %v5542 = vpack.c.b16 %v3854, %v3846
  %v5543 = vpack.c.b16 %v3855, %v3847
  %v5544 = vpack.c.b16 %v3856, %v3848
  %v5545 = vpack.c.b16 %v3857, %v3849
  %v5546 = vpack.c.b16 %v3858, %v3850
  %v5547 = vpack.c.b16 %v3859, %v3851
  %v5548 = vpack.c.b16 %v3860, %v3852
  %v5549 = vpack.c.b16 %v3861, %v3853
  %v5550 = vpack.c.b16 %v3870, %v3862
  %v5551 = vpack.c.b16 %v3871, %v3863
  %v5552 = vpack.c.b16 %v3872, %v3864
  %v5553 = vpack.c.b16 %v3873, %v3865
  %v5554 = vpack.c.b16 %v3874, %v3866
  %v5555 = vpack.c.b16 %v3875, %v3867
  %v5556 = vpack.c.b16 %v3876, %v3868
  %v5557 = vpack.c.b16 %v3877, %v3869
  %v5558 = vpack.c.b16 %v3886, %v3878
  %v5559 = vpack.c.b16 %v3887, %v3879
  %v5560 = vpack.c.b16 %v3888, %v3880
  %v5561 = vpack.c.b16 %v3889, %v3881
  %v5562 = vpack.c.b16 %v3890, %v3882
  %v5563 = vpack.c.b16 %v3891, %v3883
  %v5564 = vpack.c.b16 %v3892, %v3884
  %v5565 = vpack.c.b16 %v3893, %v3885
  %v5566 = vpack.c.b16 %v3902, %v3894
  %v5567 = vpack.c.b16 %v3903, %v3895
  %v5568 = vpack.c.b16 %v3904, %v3896
  %v5569 = vpack.c.b16 %v3905, %v3897
  %v5570 = vpack.c.b16 %v3906, %v3898
  %v5571 = vpack.c.b16 %v3907, %v3899
  %v5572 = vpack.c.b16 %v3908, %v3900
  %v5573 = vpack.c.b16 %v3909, %v3901
  %v5574 = vpack.c.b16 %v3918, %v3910
  %v5575 = vpack.c.b16 %v3919, %v3911
  %v5576 = vpack.c.b16 %v3920, %v3912
  %v5577 = vpack.c.b16 %v3921, %v3913
  %v5578 = vpack.c.b16 %v3922, %v3914
  %v5579 = vpack.c.b16 %v3923, %v3915
  %v5580 = vpack.c.b16 %v3924, %v3916
  %v5581 = vpack.c.b16 %v3925, %v3917
  %v5582 = vpack.c.b16 %v3934, %v3926
  %v5583 = vpack.c.b16 %v3935, %v3927
  %v5584 = vpack.c.b16 %v3936, %v3928
  %v5585 = vpack.c.b16 %v3937, %v3929
  %v5586 = vpack.c.b16 %v3938, %v3930
  %v5587 = vpack.c.b16 %v3939, %v3931
  %v5588 = vpack.c.b16 %v3940, %v3932
  %v5589 = vpack.c.b16 %v3941, %v3933
  %v5590 = vpack.c.b16 %v3950, %v3942
  %v5591 = vpack.c.b16 %v3951, %v3943
  %v5592 = vpack.c.b16 %v3952, %v3944
  %v5593 = vpack.c.b16 %v3953, %v3945
  %v5594 = vpack.c.b16 %v3954, %v3946
  %v5595 = vpack.c.b16 %v3955, %v3947
  %v5596 = vpack.c.b16 %v3956, %v3948
  %v5597 = vpack.c.b16 %v3957, %v3949
  %v5598 = vpack.c.b16 %v3966, %v3958
  %v5599 = vpack.c.b16 %v3967, %v3959
  %v5600 = vpack.c.b16 %v3968, %v3960
  %v5601 = vpack.c.b16 %v3969, %v3961
  %v5602 = vpack.c.b16 %v3970, %v3962
  %v5603 = vpack.c.b16 %v3971, %v3963
  %v5604 = vpack.c.b16 %v3972, %v3964
  %v5605 = vpack.c.b16 %v3973, %v3965
  %v5606 = vpack.c.b16 %v3982, %v3974
  %v5607 = vpack.c.b16 %v3983, %v3975
  %v5608 = vpack.c.b16 %v3984, %v3976
  %v5609 = vpack.c.b16 %v3985, %v3977
  %v5610 = vpack.c.b16 %v3986, %v3978
  %v5611 = vpack.c.b16 %v3987, %v3979
  %v5612 = vpack.c.b16 %v3988, %v3980
  %v5613 = vpack.c.b16 %v3989, %v3981
  %v5614 = vpack.c.b16 %v3998, %v3990
  %v5615 = vpack.c.b16 %v3999, %v3991
  %v5616 = vpack.c.b16 %v4000, %v3992
  %v5617 = vpack.c.b16 %v4001, %v3993
  %v5618 = vpack.c.b16 %v4002, %v3994
  %v5619 = vpack.c.b16 %v4003, %v3995
  %v5620 = vpack.c.b16 %v4004, %v3996
  %v5621 = vpack.c.b16 %v4005, %v3997
  %v5622 = vpack.c.b16 %v4014, %v4006
  %v5623 = vpack.c.b16 %v4015, %v4007
  %v5624 = vpack.c.b16 %v4016, %v4008
  %v5625 = vpack.c.b16 %v4017, %v4009
  %v5626 = vpack.c.b16 %v4018, %v4010
  %v5627 = vpack.c.b16 %v4019, %v4011
  %v5628 = vpack.c.b16 %v4020, %v4012
  %v5629 = vpack.c.b16 %v4021, %v4013
  %v5630 = vpack.c.b16 %v4030, %v4022
  %v5631 = vpack.c.b16 %v4031, %v4023
  %v5632 = vpack.c.b16 %v4032, %v4024
  %v5633 = vpack.c.b16 %v4033, %v4025
  %v5634 = vpack.c.b16 %v4034, %v4026
  %v5635 = vpack.c.b16 %v4035, %v4027
  %v5636 = vpack.c.b16 %v4036, %v4028
  %v5637 = vpack.c.b16 %v4037, %v4029
  %v5638 = vpack.c.b16 %v4046, %v4038
  %v5639 = vpack.c.b16 %v4047, %v4039
  %v5640 = vpack.c.b16 %v4048, %v4040
  %v5641 = vpack.c.b16 %v4049, %v4041
  %v5642 = vpack.c.b16 %v4050, %v4042
  %v5643 = vpack.c.b16 %v4051, %v4043
  %v5644 = vpack.c.b16 %v4052, %v4044
  %v5645 = vpack.c.b16 %v4053, %v4045
  %v5646 = vpack.c.b16 %v4062, %v4054
  %v5647 = vpack.c.b16 %v4063, %v4055
  %v5648 = vpack.c.b16 %v4064, %v4056
  %v5649 = vpack.c.b16 %v4065, %v4057
  %v5650 = vpack.c.b16 %v4066, %v4058
  %v5651 = vpack.c.b16 %v4067, %v4059
  %v5652 = vpack.c.b16 %v4068, %v4060
  %v5653 = vpack.c.b16 %v4069, %v4061
  %v5654 = vpack.c.b16 %v4078, %v4070
  %v5655 = vpack.c.b16 %v4079, %v4071
  %v5656 = vpack.c.b16 %v4080, %v4072
  %v5657 = vpack.c.b16 %v4081, %v4073
  %v5658 = vpack.c.b16 %v4082, %v4074
  %v5659 = vpack.c.b16 %v4083, %v4075
  %v5660 = vpack.c.b16 %v4084, %v4076
  %v5661 = vpack.c.b16 %v4085, %v4077
  %v5662 = vpack.c.b16 %v4094, %v4086
  %v5663 = vpack.c.b16 %v4095, %v4087
  %v5664 = vpack.c.b16 %v4096, %v4088
  %v5665 = vpack.c.b16 %v4097, %v4089
  %v5666 = vpack.c.b16 %v4098, %v4090
  %v5667 = vpack.c.b16 %v4099, %v4091
  %v5668 = vpack.c.b16 %v4100, %v4092
  %v5669 = vpack.c.b16 %v4101, %v4093
  %v5670 = vpack.c.b16 %v4110, %v4102
  %v5671 = vpack.c.b16 %v4111, %v4103
  %v5672 = vpack.c.b16 %v4112, %v4104
  %v5673 = vpack.c.b16 %v4113, %v4105
  %v5674 = vpack.c.b16 %v4114, %v4106
  %v5675 = vpack.c.b16 %v4115, %v4107
  %v5676 = vpack.c.b16 %v4116, %v4108
  %v5677 = vpack.c.b16 %v4117, %v4109
  %v5678 = vpack.c.b16 %v4126, %v4118
  %v5679 = vpack.c.b16 %v4127, %v4119
  %v5680 = vpack.c.b16 %v4128, %v4120
  %v5681 = vpack.c.b16 %v4129, %v4121
  %v5682 = vpack.c.b16 %v4130, %v4122
  %v5683 = vpack.c.b16 %v4131, %v4123
  %v5684 = vpack.c.b16 %v4132, %v4124
  %v5685 = vpack.c.b16 %v4133, %v4125
  %v5686 = vpack.c.b16 %v4142, %v4134
  %v5687 = vpack.c.b16 %v4143, %v4135
  %v5688 = vpack.c.b16 %v4144, %v4136
  %v5689 = vpack.c.b16 %v4145, %v4137
  %v5690 = vpack.c.b16 %v4146, %v4138
  %v5691 = vpack.c.b16 %v4147, %v4139
  %v5692 = vpack.c.b16 %v4148, %v4140
  %v5693 = vpack.c.b16 %v4149, %v4141
  %v5694 = vpack.c.b16 %v4158, %v4150
  %v5695 = vpack.c.b16 %v4159, %v4151
  %v5696 = vpack.c.b16 %v4160, %v4152
  %v5697 = vpack.c.b16 %v4161, %v4153
  %v5698 = vpack.c.b16 %v4162, %v4154
  %v5699 = vpack.c.b16 %v4163, %v4155
  %v5700 = vpack.c.b16 %v4164, %v4156
  %v5701 = vpack.c.b16 %v4165, %v4157
  %v5702 = vpack.c.b16 %v4174, %v4166
  %v5703 = vpack.c.b16 %v4175, %v4167
  %v5704 = vpack.c.b16 %v4176, %v4168
  %v5705 = vpack.c.b16 %v4177, %v4169
  %v5706 = vpack.c.b16 %v4178, %v4170
  %v5707 = vpack.c.b16 %v4179, %v4171
  %v5708 = vpack.c.b16 %v4180, %v4172
  %v5709 = vpack.c.b16 %v4181, %v4173
  %v5710 = vpack.c.b16 %v4190, %v4182
  %v5711 = vpack.c.b16 %v4191, %v4183
  %v5712 = vpack.c.b16 %v4192, %v4184
  %v5713 = vpack.c.b16 %v4193, %v4185
  %v5714 = vpack.c.b16 %v4194, %v4186
  %v5715 = vpack.c.b16 %v4195, %v4187
  %v5716 = vpack.c.b16 %v4196, %v4188
  %v5717 = vpack.c.b16 %v4197, %v4189
  %v5718 = vpack.c.b16 %v4206, %v4198
  %v5719 = vpack.c.b16 %v4207, %v4199
  %v5720 = vpack.c.b16 %v4208, %v4200
  %v5721 = vpack.c.b16 %v4209, %v4201
  %v5722 = vpack.c.b16 %v4210, %v4202
  %v5723 = vpack.c.b16 %v4211, %v4203
  %v5724 = vpack.c.b16 %v4212, %v4204
  %v5725 = vpack.c.b16 %v4213, %v4205
  %v5726 = vpack.c.b16 %v4222, %v4214
  %v5727 = vpack.c.b16 %v4223, %v4215
  %v5728 = vpack.c.b16 %v4224, %v4216
  %v5729 = vpack.c.b16 %v4225, %v4217
  %v5730 = vpack.c.b16 %v4226, %v4218
  %v5731 = vpack.c.b16 %v4227, %v4219
  %v5732 = vpack.c.b16 %v4228, %v4220
  %v5733 = vpack.c.b16 %v4229, %v4221
  %v5734 = vpack.c.b16 %v4238, %v4230
  %v5735 = vpack.c.b16 %v4239, %v4231
  %v5736 = vpack.c.b16 %v4240, %v4232
  %v5737 = vpack.c.b16 %v4241, %v4233
  %v5738 = vpack.c.b16 %v4242, %v4234
  %v5739 = vpack.c.b16 %v4243, %v4235
  %v5740 = vpack.c.b16 %v4244, %v4236
  %v5741 = vpack.c.b16 %v4245, %v4237
  %v5742 = vpack.c.b16 %v4254, %v4246
  %v5743 = vpack.c.b16 %v4255, %v4247
  %v5744 = vpack.c.b16 %v4256, %v4248
  %v5745 = vpack.c.b16 %v4257, %v4249
  %v5746 = vpack.c.b16 %v4258, %v4250
  %v5747 = vpack.c.b16 %v4259, %v4251
  %v5748 = vpack.c.b16 %v4260, %v4252
  %v5749 = vpack.c.b16 %v4261, %v4253
  %v5750 = vpack.c.b16 %v4270, %v4262
  %v5751 = vpack.c.b16 %v4271, %v4263
  %v5752 = vpack.c.b16 %v4272, %v4264
  %v5753 = vpack.c.b16 %v4273, %v4265
  %v5754 = vpack.c.b16 %v4274, %v4266
  %v5755 = vpack.c.b16 %v4275, %v4267
  %v5756 = vpack.c.b16 %v4276, %v4268
  %v5757 = vpack.c.b16 %v4277, %v4269
  %v5758 = vpack.c.b16 %v4286, %v4278
  %v5759 = vpack.c.b16 %v4287, %v4279
  %v5760 = vpack.c.b16 %v4288, %v4280
  %v5761 = vpack.c.b16 %v4289, %v4281
  %v5762 = vpack.c.b16 %v4290, %v4282
  %v5763 = vpack.c.b16 %v4291, %v4283
  %v5764 = vpack.c.b16 %v4292, %v4284
  %v5765 = vpack.c.b16 %v4293, %v4285
  %v5766 = vpack.c.b16 %v4302, %v4294
  %v5767 = vpack.c.b16 %v4303, %v4295
  %v5768 = vpack.c.b16 %v4304, %v4296
  %v5769 = vpack.c.b16 %v4305, %v4297
  %v5770 = vpack.c.b16 %v4306, %v4298
  %v5771 = vpack.c.b16 %v4307, %v4299
  %v5772 = vpack.c.b16 %v4308, %v4300
  %v5773 = vpack.c.b16 %v4309, %v4301
  %v5774 = vpack.c.b16 %v4318, %v4310
  %v5775 = vpack.c.b16 %v4319, %v4311
  %v5776 = vpack.c.b16 %v4320, %v4312
  %v5777 = vpack.c.b16 %v4321, %v4313
  %v5778 = vpack.c.b16 %v4322, %v4314
  %v5779 = vpack.c.b16 %v4323, %v4315
  %v5780 = vpack.c.b16 %v4324, %v4316
  %v5781 = vpack.c.b16 %v4325, %v4317
  %v5782 = vpack.c.b16 %v4334, %v4326
  %v5783 = vpack.c.b16 %v4335, %v4327
  %v5784 = vpack.c.b16 %v4336, %v4328
  %v5785 = vpack.c.b16 %v4337, %v4329
  %v5786 = vpack.c.b16 %v4338, %v4330
  %v5787 = vpack.c.b16 %v4339, %v4331
  %v5788 = vpack.c.b16 %v4340, %v4332
  %v5789 = vpack.c.b16 %v4341, %v4333
  %v5790 = vpack.c.b16 %v4350, %v4342
  %v5791 = vpack.c.b16 %v4351, %v4343
  %v5792 = vpack.c.b16 %v4352, %v4344
  %v5793 = vpack.c.b16 %v4353, %v4345
  %v5794 = vpack.c.b16 %v4354, %v4346
  %v5795 = vpack.c.b16 %v4355, %v4347
  %v5796 = vpack.c.b16 %v4356, %v4348
  %v5797 = vpack.c.b16 %v4357, %v4349
  %v5798 = vpack.c.b16 %v4366, %v4358
  %v5799 = vpack.c.b16 %v4367, %v4359
  %v5800 = vpack.c.b16 %v4368, %v4360
  %v5801 = vpack.c.b16 %v4369, %v4361
  %v5802 = vpack.c.b16 %v4370, %v4362
  %v5803 = vpack.c.b16 %v4371, %v4363
  %v5804 = vpack.c.b16 %v4372, %v4364
  %v5805 = vpack.c.b16 %v4373, %v4365
  %v5806 = vpack.c.b16 %v4382, %v4374
  %v5807 = vpack.c.b16 %v4383, %v4375
  %v5808 = vpack.c.b16 %v4384, %v4376
  %v5809 = vpack.c.b16 %v4385, %v4377
  %v5810 = vpack.c.b16 %v4386, %v4378
  %v5811 = vpack.c.b16 %v4387, %v4379
  %v5812 = vpack.c.b16 %v4388, %v4380
  %v5813 = vpack.c.b16 %v4389, %v4381
  %v5814 = vpack.c.b16 %v4398, %v4390
  %v5815 = vpack.c.b16 %v4399, %v4391
  %v5816 = vpack.c.b16 %v4400, %v4392
  %v5817 = vpack.c.b16 %v4401, %v4393
  %v5818 = vpack.c.b16 %v4402, %v4394
  %v5819 = vpack.c.b16 %v4403, %v4395
  %v5820 = vpack.c.b16 %v4404, %v4396
  %v5821 = vpack.c.b16 %v4405, %v4397
  %v5822 = vpack.c.b16 %v4414, %v4406
  %v5823 = vpack.c.b16 %v4415, %v4407
  %v5824 = vpack.c.b16 %v4416, %v4408
  %v5825 = vpack.c.b16 %v4417, %v4409
  %v5826 = vpack.c.b16 %v4418, %v4410
  %v5827 = vpack.c.b16 %v4419, %v4411
  %v5828 = vpack.c.b16 %v4420, %v4412
  %v5829 = vpack.c.b16 %v4421, %v4413
  %v5830 = vpack.c.b16 %v4430, %v4422
  %v5831 = vpack.c.b16 %v4431, %v4423
  %v5832 = vpack.c.b16 %v4432, %v4424
  %v5833 = vpack.c.b16 %v4433, %v4425
  %v5834 = vpack.c.b16 %v4434, %v4426
  %v5835 = vpack.c.b16 %v4435, %v4427
  %v5836 = vpack.c.b16 %v4436, %v4428
  %v5837 = vpack.c.b16 %v4437, %v4429
  %v5838 = vpack.c.b16 %v4446, %v4438
  %v5839 = vpack.c.b16 %v4447, %v4439
  %v5840 = vpack.c.b16 %v4448, %v4440
  %v5841 = vpack.c.b16 %v4449, %v4441
  %v5842 = vpack.c.b16 %v4450, %v4442
  %v5843 = vpack.c.b16 %v4451, %v4443
  %v5844 = vpack.c.b16 %v4452, %v4444
  %v5845 = vpack.c.b16 %v4453, %v4445
  %v5846 = vpack.c.b16 %v4462, %v4454
  %v5847 = vpack.c.b16 %v4463, %v4455
  %v5848 = vpack.c.b16 %v4464, %v4456
  %v5849 = vpack.c.b16 %v4465, %v4457
  %v5850 = vpack.c.b16 %v4466, %v4458
  %v5851 = vpack.c.b16 %v4467, %v4459
  %v5852 = vpack.c.b16 %v4468, %v4460
  %v5853 = vpack.c.b16 %v4469, %v4461
  %v5854 = vpack.c.b16 %v4478, %v4470
  %v5855 = vpack.c.b16 %v4479, %v4471
  %v5856 = vpack.c.b16 %v4480, %v4472
  %v5857 = vpack.c.b16 %v4481, %v4473
  %v5858 = vpack.c.b16 %v4482, %v4474
  %v5859 = vpack.c.b16 %v4483, %v4475
  %v5860 = vpack.c.b16 %v4484, %v4476
  %v5861 = vpack.c.b16 %v4485, %v4477
  %v5862 = vpack.c.b16 %v4494, %v4486
  %v5863 = vpack.c.b16 %v4495, %v4487
  %v5864 = vpack.c.b16 %v4496, %v4488
  %v5865 = vpack.c.b16 %v4497, %v4489
  %v5866 = vpack.c.b16 %v4498, %v4490
  %v5867 = vpack.c.b16 %v4499, %v4491
  %v5868 = vpack.c.b16 %v4500, %v4492
  %v5869 = vpack.c.b16 %v4501, %v4493
  %v5870 = vpack.c.b16 %v4510, %v4502
  %v5871 = vpack.c.b16 %v4511, %v4503
  %v5872 = vpack.c.b16 %v4512, %v4504
  %v5873 = vpack.c.b16 %v4513, %v4505
  %v5874 = vpack.c.b16 %v4514, %v4506
  %v5875 = vpack.c.b16 %v4515, %v4507
  %v5876 = vpack.c.b16 %v4516, %v4508
  %v5877 = vpack.c.b16 %v4517, %v4509
  %v5878 = vpack.c.b16 %v4526, %v4518
  %v5879 = vpack.c.b16 %v4527, %v4519
  %v5880 = vpack.c.b16 %v4528, %v4520
  %v5881 = vpack.c.b16 %v4529, %v4521
  %v5882 = vpack.c.b16 %v4530, %v4522
  %v5883 = vpack.c.b16 %v4531, %v4523
  %v5884 = vpack.c.b16 %v4532, %v4524
  %v5885 = vpack.c.b16 %v4533, %v4525
  %v5886 = vpack.c.b16 %v4542, %v4534
  %v5887 = vpack.c.b16 %v4543, %v4535
  %v5888 = vpack.c.b16 %v4544, %v4536
  %v5889 = vpack.c.b16 %v4545, %v4537
  %v5890 = vpack.c.b16 %v4546, %v4538
  %v5891 = vpack.c.b16 %v4547, %v4539
  %v5892 = vpack.c.b16 %v4548, %v4540
  %v5893 = vpack.c.b16 %v4549, %v4541
  %v5894 = vpack.c.b16 %v4558, %v4550
  %v5895 = vpack.c.b16 %v4559, %v4551
  %v5896 = vpack.c.b16 %v4560, %v4552
  %v5897 = vpack.c.b16 %v4561, %v4553
  %v5898 = vpack.c.b16 %v4562, %v4554
  %v5899 = vpack.c.b16 %v4563, %v4555
  %v5900 = vpack.c.b16 %v4564, %v4556
  %v5901 = vpack.c.b16 %v4565, %v4557
  %v5902 = vpack.c.b16 %v4574, %v4566
  %v5903 = vpack.c.b16 %v4575, %v4567
  %v5904 = vpack.c.b16 %v4576, %v4568
  %v5905 = vpack.c.b16 %v4577, %v4569
  %v5906 = vpack.c.b16 %v4578, %v4570
  %v5907 = vpack.c.b16 %v4579, %v4571
  %v5908 = vpack.c.b16 %v4580, %v4572
  %v5909 = vpack.c.b16 %v4581, %v4573
  %v5910 = vpack.c.b16 %v4590, %v4582
  %v5911 = vpack.c.b16 %v4591, %v4583
  %v5912 = vpack.c.b16 %v4592, %v4584
  %v5913 = vpack.c.b16 %v4593, %v4585
  %v5914 = vpack.c.b16 %v4594, %v4586
  %v5915 = vpack.c.b16 %v4595, %v4587
  %v5916 = vpack.c.b16 %v4596, %v4588
  %v5917 = vpack.c.b16 %v4597, %v4589
  %v5918 = vpack.c.b16 %v4606, %v4598
  %v5919 = vpack.c.b16 %v4607, %v4599
  %v5920 = vpack.c.b16 %v4608, %v4600
  %v5921 = vpack.c.b16 %v4609, %v4601
  %v5922 = vpack.c.b16 %v4610, %v4602
  %v5923 = vpack.c.b16 %v4611, %v4603
  %v5924 = vpack.c.b16 %v4612, %v4604
  %v5925 = vpack.c.b16 %v4613, %v4605
  %v5926 = vpack.c.b16 %v4622, %v4614
  %v5927 = vpack.c.b16 %v4623, %v4615
  %v5928 = vpack.c.b16 %v4624, %v4616
  %v5929 = vpack.c.b16 %v4625, %v4617
  %v5930 = vpack.c.b16 %v4626, %v4618
  %v5931 = vpack.c.b16 %v4627, %v4619
  %v5932 = vpack.c.b16 %v4628, %v4620
  %v5933 = vpack.c.b16 %v4629, %v4621
  %v5934 = vpack.c.b16 %v4638, %v4630
  %v5935 = vpack.c.b16 %v4639, %v4631
  %v5936 = vpack.c.b16 %v4640, %v4632
  %v5937 = vpack.c.b16 %v4641, %v4633
  %v5938 = vpack.c.b16 %v4642, %v4634
  %v5939 = vpack.c.b16 %v4643, %v4635
  %v5940 = vpack.c.b16 %v4644, %v4636
  %v5941 = vpack.c.b16 %v4645, %v4637
  %v5942 = vpack.c.b16 %v4654, %v4646
  %v5943 = vpack.c.b16 %v4655, %v4647
  %v5944 = vpack.c.b16 %v4656, %v4648
  %v5945 = vpack.c.b16 %v4657, %v4649
  %v5946 = vpack.c.b16 %v4658, %v4650
  %v5947 = vpack.c.b16 %v4659, %v4651
  %v5948 = vpack.c.b16 %v4660, %v4652
  %v5949 = vpack.c.b16 %v4661, %v4653
  %v5950 = vpack.c.b16 %v4670, %v4662
  %v5951 = vpack.c.b16 %v4671, %v4663
  %v5952 = vpack.c.b16 %v4672, %v4664
  %v5953 = vpack.c.b16 %v4673, %v4665
  %v5954 = vpack.c.b16 %v4674, %v4666
  %v5955 = vpack.c.b16 %v4675, %v4667
  %v5956 = vpack.c.b16 %v4676, %v4668
  %v5957 = vpack.c.b16 %v4677, %v4669
  %v5958 = vpack.c.b16 %v4686, %v4678
  %v5959 = vpack.c.b16 %v4687, %v4679
  %v5960 = vpack.c.b16 %v4688, %v4680
  %v5961 = vpack.c.b16 %v4689, %v4681
  %v5962 = vpack.c.b16 %v4690, %v4682
  %v5963 = vpack.c.b16 %v4691, %v4683
  %v5964 = vpack.c.b16 %v4692, %v4684
  %v5965 = vpack.c.b16 %v4693, %v4685
  %v5966 = vpack.c.b16 %v4702, %v4694
  %v5967 = vpack.c.b16 %v4703, %v4695
  %v5968 = vpack.c.b16 %v4704, %v4696
  %v5969 = vpack.c.b16 %v4705, %v4697
  %v5970 = vpack.c.b16 %v4706, %v4698
  %v5971 = vpack.c.b16 %v4707, %v4699
  %v5972 = vpack.c.b16 %v4708, %v4700
  %v5973 = vpack.c.b16 %v4709, %v4701
  %v5974 = vpack.c.b16 %v4718, %v4710
  %v5975 = vpack.c.b16 %v4719, %v4711
  %v5976 = vpack.c.b16 %v4720, %v4712
  %v5977 = vpack.c.b16 %v4721, %v4713
  %v5978 = vpack.c.b16 %v4722, %v4714
  %v5979 = vpack.c.b16 %v4723, %v4715
  %v5980 = vpack.c.b16 %v4724, %v4716
  %v5981 = vpack.c.b16 %v4725, %v4717
  %v5982 = vpack.c.b16 %v4734, %v4726
  %v5983 = vpack.c.b16 %v4735, %v4727
  %v5984 = vpack.c.b16 %v4736, %v4728
  %v5985 = vpack.c.b16 %v4737, %v4729
  %v5986 = vpack.c.b16 %v4738, %v4730
  %v5987 = vpack.c.b16 %v4739, %v4731
  %v5988 = vpack.c.b16 %v4740, %v4732
  %v5989 = vpack.c.b16 %v4741, %v4733
  %v5990 = vpack.c.b16 %v4750, %v4742
  %v5991 = vpack.c.b16 %v4751, %v4743
  %v5992 = vpack.c.b16 %v4752, %v4744
  %v5993 = vpack.c.b16 %v4753, %v4745
  %v5994 = vpack.c.b16 %v4754, %v4746
  %v5995 = vpack.c.b16 %v4755, %v4747
  %v5996 = vpack.c.b16 %v4756, %v4748
  %v5997 = vpack.c.b16 %v4757, %v4749
  %v5998 = vpack.c.b16 %v4766, %v4758
  %v5999 = vpack.c.b16 %v4767, %v4759
  %v6000 = vpack.c.b16 %v4768, %v4760
  %v6001 = vpack.c.b16 %v4769, %v4761
  %v6002 = vpack.c.b16 %v4770, %v4762
  %v6003 = vpack.c.b16 %v4771, %v4763
  %v6004 = vpack.c.b16 %v4772, %v4764
  %v6005 = vpack.c.b16 %v4773, %v4765
  %v6006 = vpack.c.b16 %v4782, %v4774
  %v6007 = vpack.c.b16 %v4783, %v4775
  %v6008 = vpack.c.b16 %v4784, %v4776
  %v6009 = vpack.c.b16 %v4785, %v4777
  %v6010 = vpack.c.b16 %v4786, %v4778
  %v6011 = vpack.c.b16 %v4787, %v4779
  %v6012 = vpack.c.b16 %v4788, %v4780
  %v6013 = vpack.c.b16 %v4789, %v4781
  %v6014 = vpack.c.b16 %v4798, %v4790
  %v6015 = vpack.c.b16 %v4799, %v4791
  %v6016 = vpack.c.b16 %v4800, %v4792
  %v6017 = vpack.c.b16 %v4801, %v4793
  %v6018 = vpack.c.b16 %v4802, %v4794
  %v6019 = vpack.c.b16 %v4803, %v4795
  %v6020 = vpack.c.b16 %v4804, %v4796
  %v6021 = vpack.c.b16 %v4805, %v4797
  %v6022 = vpack.c.b16 %v4814, %v4806
  %v6023 = vpack.c.b16 %v4815, %v4807
  %v6024 = vpack.c.b16 %v4816, %v4808
  %v6025 = vpack.c.b16 %v4817, %v4809
  %v6026 = vpack.c.b16 %v4818, %v4810
  %v6027 = vpack.c.b16 %v4819, %v4811
  %v6028 = vpack.c.b16 %v4820, %v4812
  %v6029 = vpack.c.b16 %v4821, %v4813
  %v6030 = vpack.c.b16 %v4830, %v4822
  %v6031 = vpack.c.b16 %v4831, %v4823
  %v6032 = vpack.c.b16 %v4832, %v4824
  %v6033 = vpack.c.b16 %v4833, %v4825
  %v6034 = vpack.c.b16 %v4834, %v4826
  %v6035 = vpack.c.b16 %v4835, %v4827
  %v6036 = vpack.c.b16 %v4836, %v4828
  %v6037 = vpack.c.b16 %v4837, %v4829
  %v6038 = vpack.c.b16 %v4846, %v4838
  %v6039 = vpack.c.b16 %v4847, %v4839
  %v6040 = vpack.c.b16 %v4848, %v4840
  %v6041 = vpack.c.b16 %v4849, %v4841
  %v6042 = vpack.c.b16 %v4850, %v4842
  %v6043 = vpack.c.b16 %v4851, %v4843
  %v6044 = vpack.c.b16 %v4852, %v4844
  %v6045 = vpack.c.b16 %v4853, %v4845
  %v6046 = vpack.c.b16 %v4862, %v4854
  %v6047 = vpack.c.b16 %v4863, %v4855
  %v6048 = vpack.c.b16 %v4864, %v4856
  %v6049 = vpack.c.b16 %v4865, %v4857
  %v6050 = vpack.c.b16 %v4866, %v4858
  %v6051 = vpack.c.b16 %v4867, %v4859
  %v6052 = vpack.c.b16 %v4868, %v4860
  %v6053 = vpack.c.b16 %v4869, %v4861
  %v6054 = vpack.c.b16 %v4878, %v4870
  %v6055 = vpack.c.b16 %v4879, %v4871
  %v6056 = vpack.c.b16 %v4880, %v4872
  %v6057 = vpack.c.b16 %v4881, %v4873
  %v6058 = vpack.c.b16 %v4882, %v4874
  %v6059 = vpack.c.b16 %v4883, %v4875
  %v6060 = vpack.c.b16 %v4884, %v4876
  %v6061 = vpack.c.b16 %v4885, %v4877
  %v6062 = vpack.c.b16 %v4894, %v4886
  %v6063 = vpack.c.b16 %v4895, %v4887
  %v6064 = vpack.c.b16 %v4896, %v4888
  %v6065 = vpack.c.b16 %v4897, %v4889
  %v6066 = vpack.c.b16 %v4898, %v4890
  %v6067 = vpack.c.b16 %v4899, %v4891
  %v6068 = vpack.c.b16 %v4900, %v4892
  %v6069 = vpack.c.b16 %v4901, %v4893
  %v6070 = vpack.c.b16 %v4910, %v4902
  %v6071 = vpack.c.b16 %v4911, %v4903
  %v6072 = vpack.c.b16 %v4912, %v4904
  %v6073 = vpack.c.b16 %v4913, %v4905
  %v6074 = vpack.c.b16 %v4914, %v4906
  %v6075 = vpack.c.b16 %v4915, %v4907
  %v6076 = vpack.c.b16 %v4916, %v4908
  %v6077 = vpack.c.b16 %v4917, %v4909
  %v6078 = vpack.c.b16 %v4926, %v4918
  %v6079 = vpack.c.b16 %v4927, %v4919
  %v6080 = vpack.c.b16 %v4928, %v4920
  %v6081 = vpack.c.b16 %v4929, %v4921
  %v6082 = vpack.c.b16 %v4930, %v4922
  %v6083 = vpack.c.b16 %v4931, %v4923
  %v6084 = vpack.c.b16 %v4932, %v4924
  %v6085 = vpack.c.b16 %v4933, %v4925
  %7238 = vmatprep.subr.bf16.mxu0 %v4935
  %7239 = vmatpush1.bf16.msra.mxu0 %v4934
  %7240 = vmatprep.subr.bf16.mxu0 %v4943
  %7241 = vmatpush1.bf16.msra.mxu0 %v4942
  %7242 = vmatprep.subr.bf16.mxu0 %v4951
  %7243 = vmatpush1.bf16.msra.mxu0 %v4950
  %7244 = vmatprep.subr.bf16.mxu0 %v4959
  %7245 = vmatpush1.bf16.msra.mxu0 %v4958
  %7246 = vmatprep.subr.bf16.mxu0 %v4967
  %7247 = vmatpush1.bf16.msra.mxu0 %v4966
  %7248 = vmatprep.subr.bf16.mxu0 %v4975
  %7249 = vmatpush1.bf16.msra.mxu0 %v4974
  %7250 = vmatprep.subr.bf16.mxu0 %v4983
  %7251 = vmatpush1.bf16.msra.mxu0 %v4982
  %7252 = vmatprep.subr.bf16.mxu0 %v4991
  %7253 = vmatpush1.bf16.msra.mxu0 %v4990
  %7254 = vmatprep.subr.bf16.mxu0 %v4999
  %7255 = vmatpush1.bf16.msra.mxu0 %v4998
  %7256 = vmatprep.subr.bf16.mxu0 %v5007
  %7257 = vmatpush1.bf16.msra.mxu0 %v5006
  %7258 = vmatprep.subr.bf16.mxu0 %v5015
  %7259 = vmatpush1.bf16.msra.mxu0 %v5014
  %7260 = vmatprep.subr.bf16.mxu0 %v5023
  %7261 = vmatpush1.bf16.msra.mxu0 %v5022
  %7262 = vmatprep.subr.bf16.mxu0 %v5031
  %7263 = vmatpush1.bf16.msra.mxu0 %v5030
  %7264 = vmatprep.subr.bf16.mxu0 %v5039
  %7265 = vmatpush1.bf16.msra.mxu0 %v5038
  %7266 = vmatprep.subr.bf16.mxu0 %v5047
  %7267 = vmatpush1.bf16.msra.mxu0 %v5046
  %7268 = vmatprep.subr.bf16.mxu0 %v5055
  %7269 = vmatpush1.bf16.msra.mxu0 %v5054
  %7270 = vmatprep.mubr.bf16.mxu0 %v1377
  %7271 = vmatmul.mubr.bf16.gmra.mrb[0].mxu0 %v1363
  %v7272 = vpop.f32.mrb[0].mxu0
  %v7273 = vadd.f32 0.0, %v7272
  %v7274 = vpop.f32.mrb[0].mxu0
  %v7275 = vadd.f32 0.0, %v7274
  %v7276 = vpop.f32.mrb[0].mxu0
  %v7277 = vpop.f32.mrb[0].mxu0
  %7278 = vdwg.mxu0
  %7279 = vmatprep.subr.bf16.mxu0 %v5063
  %7280 = vmatpush1.bf16.msra.mxu0 %v5062
  %7281 = vmatprep.subr.bf16.mxu0 %v5071
  %7282 = vmatpush1.bf16.msra.mxu0 %v5070
  %7283 = vmatprep.subr.bf16.mxu0 %v5079
  %7284 = vmatpush1.bf16.msra.mxu0 %v5078
  %7285 = vmatprep.subr.bf16.mxu0 %v5087
  %7286 = vmatpush1.bf16.msra.mxu0 %v5086
  %7287 = vmatprep.subr.bf16.mxu0 %v5095
  %7288 = vmatpush1.bf16.msra.mxu0 %v5094
  %7289 = vmatprep.subr.bf16.mxu0 %v5103
  %7290 = vmatpush1.bf16.msra.mxu0 %v5102
  %7291 = vmatprep.subr.bf16.mxu0 %v5111
  %7292 = vmatpush1.bf16.msra.mxu0 %v5110
  %7293 = vmatprep.subr.bf16.mxu0 %v5119
  %7294 = vmatpush1.bf16.msra.mxu0 %v5118
  %7295 = vmatprep.subr.bf16.mxu0 %v5127
  %7296 = vmatpush1.bf16.msra.mxu0 %v5126
  %7297 = vmatprep.subr.bf16.mxu0 %v5135
  %7298 = vmatpush1.bf16.msra.mxu0 %v5134
  %7299 = vmatprep.subr.bf16.mxu0 %v5143
  %7300 = vmatpush1.bf16.msra.mxu0 %v5142
  %7301 = vmatprep.subr.bf16.mxu0 %v5151
  %7302 = vmatpush1.bf16.msra.mxu0 %v5150
  %7303 = vmatprep.subr.bf16.mxu0 %v5159
  %7304 = vmatpush1.bf16.msra.mxu0 %v5158
  %7305 = vmatprep.subr.bf16.mxu0 %v5167
  %7306 = vmatpush1.bf16.msra.mxu0 %v5166
  %7307 = vmatprep.subr.bf16.mxu0 %v5175
  %7308 = vmatpush1.bf16.msra.mxu0 %v5174
  %7309 = vmatprep.subr.bf16.mxu0 %v5183
  %7310 = vmatpush1.bf16.msra.mxu0 %v5182
  %7311 = vmatprep.mubr.bf16.mxu0 %v1387
  %7312 = vmatmul.mubr.bf16.gmra.mrb[0].mxu0 %v1385
  %v7313 = vpop.f32.mrb[0].mxu0
  %v7314 = vadd.f32 %v7273, %v7313
  %v7315 = vpop.f32.mrb[0].mxu0
  %v7316 = vadd.f32 %v7275, %v7315
  %v7317 = vpop.f32.mrb[0].mxu0
  %v7318 = vpop.f32.mrb[0].mxu0
  %7319 = vdwg.mxu0
  %7320 = vmatprep.subr.bf16.mxu0 %v5191
  %7321 = vmatpush1.bf16.msra.mxu0 %v5190
  %7322 = vmatprep.subr.bf16.mxu0 %v5199
  %7323 = vmatpush1.bf16.msra.mxu0 %v5198
  %7324 = vmatprep.subr.bf16.mxu0 %v5207
  %7325 = vmatpush1.bf16.msra.mxu0 %v5206
  %7326 = vmatprep.subr.bf16.mxu0 %v5215
  %7327 = vmatpush1.bf16.msra.mxu0 %v5214
  %7328 = vmatprep.subr.bf16.mxu0 %v5223
  %7329 = vmatpush1.bf16.msra.mxu0 %v5222
  %7330 = vmatprep.subr.bf16.mxu0 %v5231
  %7331 = vmatpush1.bf16.msra.mxu0 %v5230
  %7332 = vmatprep.subr.bf16.mxu0 %v5239
  %7333 = vmatpush1.bf16.msra.mxu0 %v5238
  %7334 = vmatprep.subr.bf16.mxu0 %v5247
  %7335 = vmatpush1.bf16.msra.mxu0 %v5246
  %7336 = vmatprep.subr.bf16.mxu0 %v5255
  %7337 = vmatpush1.bf16.msra.mxu0 %v5254
  %7338 = vmatprep.subr.bf16.mxu0 %v5263
  %7339 = vmatpush1.bf16.msra.mxu0 %v5262
  %7340 = vmatprep.subr.bf16.mxu0 %v5271
  %7341 = vmatpush1.bf16.msra.mxu0 %v5270
  %7342 = vmatprep.subr.bf16.mxu0 %v5279
  %7343 = vmatpush1.bf16.msra.mxu0 %v5278
  %7344 = vmatprep.subr.bf16.mxu0 %v5287
  %7345 = vmatpush1.bf16.msra.mxu0 %v5286
  %7346 = vmatprep.subr.bf16.mxu0 %v5295
  %7347 = vmatpush1.bf16.msra.mxu0 %v5294
  %7348 = vmatprep.subr.bf16.mxu0 %v5303
  %7349 = vmatpush1.bf16.msra.mxu0 %v5302
  %7350 = vmatprep.subr.bf16.mxu0 %v5311
  %7351 = vmatpush1.bf16.msra.mxu0 %v5310
  %7352 = vmatprep.mubr.bf16.mxu0 %v1384
  %7353 = vmatmul.mubr.bf16.gmra.mrb[0].mxu0 %v1370
  %v7354 = vpop.f32.mrb[0].mxu0
  %v7355 = vadd.f32 %v7314, %v7354
  %v7356 = vpop.f32.mrb[0].mxu0
  %v7357 = vadd.f32 %v7316, %v7356
  %v7358 = vpop.f32.mrb[0].mxu0
  %v7359 = vpop.f32.mrb[0].mxu0
  %7360 = vdwg.mxu0
  %7361 = vmatprep.subr.bf16.mxu0 %v5319
  %7362 = vmatpush1.bf16.msra.mxu0 %v5318
  %7363 = vmatprep.subr.bf16.mxu0 %v5327
  %7364 = vmatpush1.bf16.msra.mxu0 %v5326
  %7365 = vmatprep.subr.bf16.mxu0 %v5335
  %7366 = vmatpush1.bf16.msra.mxu0 %v5334
  %7367 = vmatprep.subr.bf16.mxu0 %v5343
  %7368 = vmatpush1.bf16.msra.mxu0 %v5342
  %7369 = vmatprep.subr.bf16.mxu0 %v5351
  %7370 = vmatpush1.bf16.msra.mxu0 %v5350
  %7371 = vmatprep.subr.bf16.mxu0 %v5359
  %7372 = vmatpush1.bf16.msra.mxu0 %v5358
  %7373 = vmatprep.subr.bf16.mxu0 %v5367
  %7374 = vmatpush1.bf16.msra.mxu0 %v5366
  %7375 = vmatprep.subr.bf16.mxu0 %v5375
  %7376 = vmatpush1.bf16.msra.mxu0 %v5374
  %7377 = vmatprep.subr.bf16.mxu0 %v5383
  %7378 = vmatpush1.bf16.msra.mxu0 %v5382
  %7379 = vmatprep.subr.bf16.mxu0 %v5391
  %7380 = vmatpush1.bf16.msra.mxu0 %v5390
  %7381 = vmatprep.subr.bf16.mxu0 %v5399
  %7382 = vmatpush1.bf16.msra.mxu0 %v5398
  %7383 = vmatprep.subr.bf16.mxu0 %v5407
  %7384 = vmatpush1.bf16.msra.mxu0 %v5406
  %7385 = vmatprep.subr.bf16.mxu0 %v5415
  %7386 = vmatpush1.bf16.msra.mxu0 %v5414
  %7387 = vmatprep.subr.bf16.mxu0 %v5423
  %7388 = vmatpush1.bf16.msra.mxu0 %v5422
  %7389 = vmatprep.subr.bf16.mxu0 %v5431
  %7390 = vmatpush1.bf16.msra.mxu0 %v5430
  %7391 = vmatprep.subr.bf16.mxu0 %v5439
  %7392 = vmatpush1.bf16.msra.mxu0 %v5438
  %7393 = vmatprep.mubr.bf16.mxu0 %v1388
  %7394 = vmatmul.mubr.bf16.gmra.mrb[0].mxu0 %v1386
  %v7395 = vpop.f32.mrb[0].mxu0
  %v7396 = vadd.f32 %v7355, %v7395
  %v7397 = vpop.f32.mrb[0].mxu0
  %v7398 = vadd.f32 %v7357, %v7397
  %v7399 = vpop.f32.mrb[0].mxu0
  %v7400 = vpop.f32.mrb[0].mxu0
  %7401 = vdwg.mxu0
  %7402 = vmatprep.subr.bf16.mxu0 %v5447
  %7403 = vmatpush1.bf16.msra.mxu0 %v5446
  %7404 = vmatprep.subr.bf16.mxu0 %v5455
  %7405 = vmatpush1.bf16.msra.mxu0 %v5454
  %7406 = vmatprep.subr.bf16.mxu0 %v5463
  %7407 = vmatpush1.bf16.msra.mxu0 %v5462
  %7408 = vmatprep.subr.bf16.mxu0 %v5471
  %7409 = vmatpush1.bf16.msra.mxu0 %v5470
  %7410 = vmatprep.subr.bf16.mxu0 %v5479
  %7411 = vmatpush1.bf16.msra.mxu0 %v5478
  %7412 = vmatprep.subr.bf16.mxu0 %v5487
  %7413 = vmatpush1.bf16.msra.mxu0 %v5486
  %7414 = vmatprep.subr.bf16.mxu0 %v5495
  %7415 = vmatpush1.bf16.msra.mxu0 %v5494
  %7416 = vmatprep.subr.bf16.mxu0 %v5503
  %7417 = vmatpush1.bf16.msra.mxu0 %v5502
  %7418 = vmatprep.subr.bf16.mxu0 %v5511
  %7419 = vmatpush1.bf16.msra.mxu0 %v5510
  %7420 = vmatprep.subr.bf16.mxu0 %v5519
  %7421 = vmatpush1.bf16.msra.mxu0 %v5518
  %7422 = vmatprep.subr.bf16.mxu0 %v5527
  %7423 = vmatpush1.bf16.msra.mxu0 %v5526
  %7424 = vmatprep.subr.bf16.mxu0 %v5535
  %7425 = vmatpush1.bf16.msra.mxu0 %v5534
  %7426 = vmatprep.subr.bf16.mxu0 %v5543
  %7427 = vmatpush1.bf16.msra.mxu0 %v5542
  %7428 = vmatprep.subr.bf16.mxu0 %v5551
  %7429 = vmatpush1.bf16.msra.mxu0 %v5550
  %7430 = vmatprep.subr.bf16.mxu0 %v5559
  %7431 = vmatpush1.bf16.msra.mxu0 %v5558
  %7432 = vmatprep.subr.bf16.mxu0 %v5567
  %7433 = vmatpush1.bf16.msra.mxu0 %v5566
  %7434 = vmatprep.mubr.bf16.mxu0 %v1426
  %7435 = vmatmul.mubr.bf16.gmra.mrb[0].mxu0 %v1412
  %v7436 = vpop.f32.mrb[0].mxu0
  %v7437 = vadd.f32 %v7396, %v7436
  %v7438 = vpop.f32.mrb[0].mxu0
  %v7439 = vadd.f32 %v7398, %v7438
  %v7440 = vpop.f32.mrb[0].mxu0
  %v7441 = vpop.f32.mrb[0].mxu0
  %7442 = vdwg.mxu0
  %7443 = vmatprep.subr.bf16.mxu0 %v5575
  %7444 = vmatpush1.bf16.msra.mxu0 %v5574
  %7445 = vmatprep.subr.bf16.mxu0 %v5583
  %7446 = vmatpush1.bf16.msra.mxu0 %v5582
  %7447 = vmatprep.subr.bf16.mxu0 %v5591
  %7448 = vmatpush1.bf16.msra.mxu0 %v5590
  %7449 = vmatprep.subr.bf16.mxu0 %v5599
  %7450 = vmatpush1.bf16.msra.mxu0 %v5598
  %7451 = vmatprep.subr.bf16.mxu0 %v5607
  %7452 = vmatpush1.bf16.msra.mxu0 %v5606
  %7453 = vmatprep.subr.bf16.mxu0 %v5615
  %7454 = vmatpush1.bf16.msra.mxu0 %v5614
  %7455 = vmatprep.subr.bf16.mxu0 %v5623
  %7456 = vmatpush1.bf16.msra.mxu0 %v5622
  %7457 = vmatprep.subr.bf16.mxu0 %v5631
  %7458 = vmatpush1.bf16.msra.mxu0 %v5630
  %7459 = vmatprep.subr.bf16.mxu0 %v5639
  %7460 = vmatpush1.bf16.msra.mxu0 %v5638
  %7461 = vmatprep.subr.bf16.mxu0 %v5647
  %7462 = vmatpush1.bf16.msra.mxu0 %v5646
  %7463 = vmatprep.subr.bf16.mxu0 %v5655
  %7464 = vmatpush1.bf16.msra.mxu0 %v5654
  %7465 = vmatprep.subr.bf16.mxu0 %v5663
  %7466 = vmatpush1.bf16.msra.mxu0 %v5662
  %7467 = vmatprep.subr.bf16.mxu0 %v5671
  %7468 = vmatpush1.bf16.msra.mxu0 %v5670
  %7469 = vmatprep.subr.bf16.mxu0 %v5679
  %7470 = vmatpush1.bf16.msra.mxu0 %v5678
  %7471 = vmatprep.subr.bf16.mxu0 %v5687
  %7472 = vmatpush1.bf16.msra.mxu0 %v5686
  %7473 = vmatprep.subr.bf16.mxu0 %v5695
  %7474 = vmatpush1.bf16.msra.mxu0 %v5694
  %7475 = vmatprep.mubr.bf16.mxu0 %v1436
  %7476 = vmatmul.mubr.bf16.gmra.mrb[0].mxu0 %v1434
  %v7477 = vpop.f32.mrb[0].mxu0
  %v7478 = vadd.f32 %v7437, %v7477
  %v7479 = vpop.f32.mrb[0].mxu0
  %v7480 = vadd.f32 %v7439, %v7479
  %v7481 = vpop.f32.mrb[0].mxu0
  %v7482 = vpop.f32.mrb[0].mxu0
  %7483 = vdwg.mxu0
  %7484 = vmatprep.subr.bf16.mxu0 %v5703
  %7485 = vmatpush1.bf16.msra.mxu0 %v5702
  %7486 = vmatprep.subr.bf16.mxu0 %v5711
  %7487 = vmatpush1.bf16.msra.mxu0 %v5710
  %7488 = vmatprep.subr.bf16.mxu0 %v5719
  %7489 = vmatpush1.bf16.msra.mxu0 %v5718
  %7490 = vmatprep.subr.bf16.mxu0 %v5727
  %7491 = vmatpush1.bf16.msra.mxu0 %v5726
  %7492 = vmatprep.subr.bf16.mxu0 %v5735
  %7493 = vmatpush1.bf16.msra.mxu0 %v5734
  %7494 = vmatprep.subr.bf16.mxu0 %v5743
  %7495 = vmatpush1.bf16.msra.mxu0 %v5742
  %7496 = vmatprep.subr.bf16.mxu0 %v5751
  %7497 = vmatpush1.bf16.msra.mxu0 %v5750
  %7498 = vmatprep.subr.bf16.mxu0 %v5759
  %7499 = vmatpush1.bf16.msra.mxu0 %v5758
  %7500 = vmatprep.subr.bf16.mxu0 %v5767
  %7501 = vmatpush1.bf16.msra.mxu0 %v5766
  %7502 = vmatprep.subr.bf16.mxu0 %v5775
  %7503 = vmatpush1.bf16.msra.mxu0 %v5774
  %7504 = vmatprep.subr.bf16.mxu0 %v5783
  %7505 = vmatpush1.bf16.msra.mxu0 %v5782
  %7506 = vmatprep.subr.bf16.mxu0 %v5791
  %7507 = vmatpush1.bf16.msra.mxu0 %v5790
  %7508 = vmatprep.subr.bf16.mxu0 %v5799
  %7509 = vmatpush1.bf16.msra.mxu0 %v5798
  %7510 = vmatprep.subr.bf16.mxu0 %v5807
  %7511 = vmatpush1.bf16.msra.mxu0 %v5806
  %7512 = vmatprep.subr.bf16.mxu0 %v5815
  %7513 = vmatpush1.bf16.msra.mxu0 %v5814
  %7514 = vmatprep.subr.bf16.mxu0 %v5823
  %7515 = vmatpush1.bf16.msra.mxu0 %v5822
  %7516 = vmatprep.mubr.bf16.mxu0 %v1433
  %7517 = vmatmul.mubr.bf16.gmra.mrb[0].mxu0 %v1419
  %v7518 = vpop.f32.mrb[0].mxu0
  %v7519 = vadd.f32 %v7478, %v7518
  %v7520 = vpop.f32.mrb[0].mxu0
  %v7521 = vadd.f32 %v7480, %v7520
  %v7522 = vpop.f32.mrb[0].mxu0
  %v7523 = vpop.f32.mrb[0].mxu0
  %7524 = vdwg.mxu0
  %7525 = vmatprep.subr.bf16.mxu0 %v5831
  %7526 = vmatpush1.bf16.msra.mxu0 %v5830
  %7527 = vmatprep.subr.bf16.mxu0 %v5839
  %7528 = vmatpush1.bf16.msra.mxu0 %v5838
  %7529 = vmatprep.subr.bf16.mxu0 %v5847
  %7530 = vmatpush1.bf16.msra.mxu0 %v5846
  %7531 = vmatprep.subr.bf16.mxu0 %v5855
  %7532 = vmatpush1.bf16.msra.mxu0 %v5854
  %7533 = vmatprep.subr.bf16.mxu0 %v5863
  %7534 = vmatpush1.bf16.msra.mxu0 %v5862
  %7535 = vmatprep.subr.bf16.mxu0 %v5871
  %7536 = vmatpush1.bf16.msra.mxu0 %v5870
  %7537 = vmatprep.subr.bf16.mxu0 %v5879
  %7538 = vmatpush1.bf16.msra.mxu0 %v5878
  %7539 = vmatprep.subr.bf16.mxu0 %v5887
  %7540 = vmatpush1.bf16.msra.mxu0 %v5886
  %7541 = vmatprep.subr.bf16.mxu0 %v5895
  %7542 = vmatpush1.bf16.msra.mxu0 %v5894
  %7543 = vmatprep.subr.bf16.mxu0 %v5903
  %7544 = vmatpush1.bf16.msra.mxu0 %v5902
  %7545 = vmatprep.subr.bf16.mxu0 %v5911
  %7546 = vmatpush1.bf16.msra.mxu0 %v5910
  %7547 = vmatprep.subr.bf16.mxu0 %v5919
  %7548 = vmatpush1.bf16.msra.mxu0 %v5918
  %7549 = vmatprep.subr.bf16.mxu0 %v5927
  %7550 = vmatpush1.bf16.msra.mxu0 %v5926
  %7551 = vmatprep.subr.bf16.mxu0 %v5935
  %7552 = vmatpush1.bf16.msra.mxu0 %v5934
  %7553 = vmatprep.subr.bf16.mxu0 %v5943
  %7554 = vmatpush1.bf16.msra.mxu0 %v5942
  %7555 = vmatprep.subr.bf16.mxu0 %v5951
  %7556 = vmatpush1.bf16.msra.mxu0 %v5950
  %7557 = vmatprep.mubr.bf16.mxu0 %v1437
  %7558 = vmatmul.mubr.bf16.gmra.mrb[0].mxu0 %v1435
  %v7559 = vpop.f32.mrb[0].mxu0
  %v7560 = vadd.f32 %v7519, %v7559
  %v7561 = vpop.f32.mrb[0].mxu0
  %v7562 = vadd.f32 %v7521, %v7561
  %v7563 = vpop.f32.mrb[0].mxu0
  %v7564 = vpop.f32.mrb[0].mxu0
  %7565 = vdwg.mxu0
  %7566 = vmatprep.subr.bf16.mxu0 %v5959
  %7567 = vmatpush1.bf16.msra.mxu0 %v5958
  %7568 = vmatprep.subr.bf16.mxu0 %v5967
  %7569 = vmatpush1.bf16.msra.mxu0 %v5966
  %7570 = vmatprep.subr.bf16.mxu0 %v5975
  %7571 = vmatpush1.bf16.msra.mxu0 %v5974
  %7572 = vmatprep.subr.bf16.mxu0 %v5983
  %7573 = vmatpush1.bf16.msra.mxu0 %v5982
  %7574 = vmatprep.subr.bf16.mxu0 %v5991
  %7575 = vmatpush1.bf16.msra.mxu0 %v5990
  %7576 = vmatprep.subr.bf16.mxu0 %v5999
  %7577 = vmatpush1.bf16.msra.mxu0 %v5998
  %7578 = vmatprep.subr.bf16.mxu0 %v6007
  %7579 = vmatpush1.bf16.msra.mxu0 %v6006
  %7580 = vmatprep.subr.bf16.mxu0 %v6015
  %7581 = vmatpush1.bf16.msra.mxu0 %v6014
  %7582 = vmatprep.subr.bf16.mxu0 %v6023
  %7583 = vmatpush1.bf16.msra.mxu0 %v6022
  %7584 = vmatprep.subr.bf16.mxu0 %v6031
  %7585 = vmatpush1.bf16.msra.mxu0 %v6030
  %7586 = vmatprep.subr.bf16.mxu0 %v6039
  %7587 = vmatpush1.bf16.msra.mxu0 %v6038
  %7588 = vmatprep.subr.bf16.mxu0 %v6047
  %7589 = vmatpush1.bf16.msra.mxu0 %v6046
  %7590 = vmatprep.subr.bf16.mxu0 %v6055
  %7591 = vmatpush1.bf16.msra.mxu0 %v6054
  %7592 = vmatprep.subr.bf16.mxu0 %v6063
  %7593 = vmatpush1.bf16.msra.mxu0 %v6062
  %7594 = vmatprep.subr.bf16.mxu0 %v6071
  %7595 = vmatpush1.bf16.msra.mxu0 %v6070
  %7596 = vmatprep.subr.bf16.mxu0 %v6079
  %7597 = vmatpush1.bf16.msra.mxu0 %v6078
  %7598 = vmatprep.mubr.bf16.mxu0 %v1459
  %7599 = vmatmul.mubr.bf16.gmra.mrb[0].mxu0 %v1452
  %v7600 = vpop.f32.mrb[0].mxu0
  %v7601 = vadd.f32 %v7560, %v7600
  %v7602 = vpop.f32.mrb[0].mxu0
  %v7603 = vadd.f32 %v7562, %v7602
  %v7604 = vpop.f32.mrb[0].mxu0
  %v7605 = vpop.f32.mrb[0].mxu0
  %7606 = vdwg.mxu0
  %7607 = vmatprep.subr.bf16.mxu0 %v4937
  %7608 = vmatpush1.bf16.msra.mxu0 %v4936
  %7609 = vmatprep.subr.bf16.mxu0 %v4945
  %7610 = vmatpush1.bf16.msra.mxu0 %v4944
  %7611 = vmatprep.subr.bf16.mxu0 %v4953
  %7612 = vmatpush1.bf16.msra.mxu0 %v4952
  %7613 = vmatprep.subr.bf16.mxu0 %v4961
  %7614 = vmatpush1.bf16.msra.mxu0 %v4960
  %7615 = vmatprep.subr.bf16.mxu0 %v4969
  %7616 = vmatpush1.bf16.msra.mxu0 %v4968
  %7617 = vmatprep.subr.bf16.mxu0 %v4977
  %7618 = vmatpush1.bf16.msra.mxu0 %v4976
  %7619 = vmatprep.subr.bf16.mxu0 %v4985
  %7620 = vmatpush1.bf16.msra.mxu0 %v4984
  %7621 = vmatprep.subr.bf16.mxu0 %v4993
  %7622 = vmatpush1.bf16.msra.mxu0 %v4992
  %7623 = vmatprep.subr.bf16.mxu0 %v5001
  %7624 = vmatpush1.bf16.msra.mxu0 %v5000
  %7625 = vmatprep.subr.bf16.mxu0 %v5009
  %7626 = vmatpush1.bf16.msra.mxu0 %v5008
  %7627 = vmatprep.subr.bf16.mxu0 %v5017
  %7628 = vmatpush1.bf16.msra.mxu0 %v5016
  %7629 = vmatprep.subr.bf16.mxu0 %v5025
  %7630 = vmatpush1.bf16.msra.mxu0 %v5024
  %7631 = vmatprep.subr.bf16.mxu0 %v5033
  %7632 = vmatpush1.bf16.msra.mxu0 %v5032
  %7633 = vmatprep.subr.bf16.mxu0 %v5041
  %7634 = vmatpush1.bf16.msra.mxu0 %v5040
  %7635 = vmatprep.subr.bf16.mxu0 %v5049
  %7636 = vmatpush1.bf16.msra.mxu0 %v5048
  %7637 = vmatprep.subr.bf16.mxu0 %v5057
  %7638 = vmatpush1.bf16.msra.mxu0 %v5056
  %7639 = vmatprep.mubr.bf16.mxu0 %v1377
  %7640 = vmatmul.mubr.bf16.gmra.mrb[0].mxu0 %v1363
  %v7641 = vpop.f32.mrb[0].mxu0
  %v7642 = vadd.f32 0.0, %v7641
  %v7643 = vpop.f32.mrb[0].mxu0
  %v7644 = vadd.f32 0.0, %v7643
  %v7645 = vpop.f32.mrb[0].mxu0
  %v7646 = vpop.f32.mrb[0].mxu0
  %7647 = vdwg.mxu0
  %7648 = vmatprep.subr.bf16.mxu0 %v5065
  %7649 = vmatpush1.bf16.msra.mxu0 %v5064
  %7650 = vmatprep.subr.bf16.mxu0 %v5073
  %7651 = vmatpush1.bf16.msra.mxu0 %v5072
  %7652 = vmatprep.subr.bf16.mxu0 %v5081
  %7653 = vmatpush1.bf16.msra.mxu0 %v5080
  %7654 = vmatprep.subr.bf16.mxu0 %v5089
  %7655 = vmatpush1.bf16.msra.mxu0 %v5088
  %7656 = vmatprep.subr.bf16.mxu0 %v5097
  %7657 = vmatpush1.bf16.msra.mxu0 %v5096
  %7658 = vmatprep.subr.bf16.mxu0 %v5105
  %7659 = vmatpush1.bf16.msra.mxu0 %v5104
  %7660 = vmatprep.subr.bf16.mxu0 %v5113
  %7661 = vmatpush1.bf16.msra.mxu0 %v5112
  %7662 = vmatprep.subr.bf16.mxu0 %v5121
  %7663 = vmatpush1.bf16.msra.mxu0 %v5120
  %7664 = vmatprep.subr.bf16.mxu0 %v5129
  %7665 = vmatpush1.bf16.msra.mxu0 %v5128
  %7666 = vmatprep.subr.bf16.mxu0 %v5137
  %7667 = vmatpush1.bf16.msra.mxu0 %v5136
  %7668 = vmatprep.subr.bf16.mxu0 %v5145
  %7669 = vmatpush1.bf16.msra.mxu0 %v5144
  %7670 = vmatprep.subr.bf16.mxu0 %v5153
  %7671 = vmatpush1.bf16.msra.mxu0 %v5152
  %7672 = vmatprep.subr.bf16.mxu0 %v5161
  %7673 = vmatpush1.bf16.msra.mxu0 %v5160
  %7674 = vmatprep.subr.bf16.mxu0 %v5169
  %7675 = vmatpush1.bf16.msra.mxu0 %v5168
  %7676 = vmatprep.subr.bf16.mxu0 %v5177
  %7677 = vmatpush1.bf16.msra.mxu0 %v5176
  %7678 = vmatprep.subr.bf16.mxu0 %v5185
  %7679 = vmatpush1.bf16.msra.mxu0 %v5184
  %7680 = vmatprep.mubr.bf16.mxu0 %v1387
  %7681 = vmatmul.mubr.bf16.gmra.mrb[0].mxu0 %v1385
  %v7682 = vpop.f32.mrb[0].mxu0
  %v7683 = vadd.f32 %v7642, %v7682
  %v7684 = vpop.f32.mrb[0].mxu0
  %v7685 = vadd.f32 %v7644, %v7684
  %v7686 = vpop.f32.mrb[0].mxu0
  %v7687 = vpop.f32.mrb[0].mxu0
  %7688 = vdwg.mxu0
  %7689 = vmatprep.subr.bf16.mxu0 %v5193
  %7690 = vmatpush1.bf16.msra.mxu0 %v5192
  %7691 = vmatprep.subr.bf16.mxu0 %v5201
  %7692 = vmatpush1.bf16.msra.mxu0 %v5200
  %7693 = vmatprep.subr.bf16.mxu0 %v5209
  %7694 = vmatpush1.bf16.msra.mxu0 %v5208
  %7695 = vmatprep.subr.bf16.mxu0 %v5217
  %7696 = vmatpush1.bf16.msra.mxu0 %v5216
  %7697 = vmatprep.subr.bf16.mxu0 %v5225
  %7698 = vmatpush1.bf16.msra.mxu0 %v5224
  %7699 = vmatprep.subr.bf16.mxu0 %v5233
  %7700 = vmatpush1.bf16.msra.mxu0 %v5232
  %7701 = vmatprep.subr.bf16.mxu0 %v5241
  %7702 = vmatpush1.bf16.msra.mxu0 %v5240
  %7703 = vmatprep.subr.bf16.mxu0 %v5249
  %7704 = vmatpush1.bf16.msra.mxu0 %v5248
  %7705 = vmatprep.subr.bf16.mxu0 %v5257
  %7706 = vmatpush1.bf16.msra.mxu0 %v5256
  %7707 = vmatprep.subr.bf16.mxu0 %v5265
  %7708 = vmatpush1.bf16.msra.mxu0 %v5264
  %7709 = vmatprep.subr.bf16.mxu0 %v5273
  %7710 = vmatpush1.bf16.msra.mxu0 %v5272
  %7711 = vmatprep.subr.bf16.mxu0 %v5281
  %7712 = vmatpush1.bf16.msra.mxu0 %v5280
  %7713 = vmatprep.subr.bf16.mxu0 %v5289
  %7714 = vmatpush1.bf16.msra.mxu0 %v5288
  %7715 = vmatprep.subr.bf16.mxu0 %v5297
  %7716 = vmatpush1.bf16.msra.mxu0 %v5296
  %7717 = vmatprep.subr.bf16.mxu0 %v5305
  %7718 = vmatpush1.bf16.msra.mxu0 %v5304
  %7719 = vmatprep.subr.bf16.mxu0 %v5313
  %7720 = vmatpush1.bf16.msra.mxu0 %v5312
  %7721 = vmatprep.mubr.bf16.mxu0 %v1384
  %7722 = vmatmul.mubr.bf16.gmra.mrb[0].mxu0 %v1370
  %v7723 = vpop.f32.mrb[0].mxu0
  %v7724 = vadd.f32 %v7683, %v7723
  %v7725 = vpop.f32.mrb[0].mxu0
  %v7726 = vadd.f32 %v7685, %v7725
  %v7727 = vpop.f32.mrb[0].mxu0
  %v7728 = vpop.f32.mrb[0].mxu0
  %7729 = vdwg.mxu0
  %7730 = vmatprep.subr.bf16.mxu0 %v5321
  %7731 = vmatpush1.bf16.msra.mxu0 %v5320
  %7732 = vmatprep.subr.bf16.mxu0 %v5329
  %7733 = vmatpush1.bf16.msra.mxu0 %v5328
  %7734 = vmatprep.subr.bf16.mxu0 %v5337
  %7735 = vmatpush1.bf16.msra.mxu0 %v5336
  %7736 = vmatprep.subr.bf16.mxu0 %v5345
  %7737 = vmatpush1.bf16.msra.mxu0 %v5344
  %7738 = vmatprep.subr.bf16.mxu0 %v5353
  %7739 = vmatpush1.bf16.msra.mxu0 %v5352
  %7740 = vmatprep.subr.bf16.mxu0 %v5361
  %7741 = vmatpush1.bf16.msra.mxu0 %v5360
  %7742 = vmatprep.subr.bf16.mxu0 %v5369
  %7743 = vmatpush1.bf16.msra.mxu0 %v5368
  %7744 = vmatprep.subr.bf16.mxu0 %v5377
  %7745 = vmatpush1.bf16.msra.mxu0 %v5376
  %7746 = vmatprep.subr.bf16.mxu0 %v5385
  %7747 = vmatpush1.bf16.msra.mxu0 %v5384
  %7748 = vmatprep.subr.bf16.mxu0 %v5393
  %7749 = vmatpush1.bf16.msra.mxu0 %v5392
  %7750 = vmatprep.subr.bf16.mxu0 %v5401
  %7751 = vmatpush1.bf16.msra.mxu0 %v5400
  %7752 = vmatprep.subr.bf16.mxu0 %v5409
  %7753 = vmatpush1.bf16.msra.mxu0 %v5408
  %7754 = vmatprep.subr.bf16.mxu0 %v5417
  %7755 = vmatpush1.bf16.msra.mxu0 %v5416
  %7756 = vmatprep.subr.bf16.mxu0 %v5425
  %7757 = vmatpush1.bf16.msra.mxu0 %v5424
  %7758 = vmatprep.subr.bf16.mxu0 %v5433
  %7759 = vmatpush1.bf16.msra.mxu0 %v5432
  %7760 = vmatprep.subr.bf16.mxu0 %v5441
  %7761 = vmatpush1.bf16.msra.mxu0 %v5440
  %7762 = vmatprep.mubr.bf16.mxu0 %v1388
  %7763 = vmatmul.mubr.bf16.gmra.mrb[0].mxu0 %v1386
  %v7764 = vpop.f32.mrb[0].mxu0
  %v7765 = vadd.f32 %v7724, %v7764
  %v7766 = vpop.f32.mrb[0].mxu0
  %v7767 = vadd.f32 %v7726, %v7766
  %v7768 = vpop.f32.mrb[0].mxu0
  %v7769 = vpop.f32.mrb[0].mxu0
  %7770 = vdwg.mxu0
  %7771 = vmatprep.subr.bf16.mxu0 %v5449
  %7772 = vmatpush1.bf16.msra.mxu0 %v5448
  %7773 = vmatprep.subr.bf16.mxu0 %v5457
  %7774 = vmatpush1.bf16.msra.mxu0 %v5456
  %7775 = vmatprep.subr.bf16.mxu0 %v5465
  %7776 = vmatpush1.bf16.msra.mxu0 %v5464
  %7777 = vmatprep.subr.bf16.mxu0 %v5473
  %7778 = vmatpush1.bf16.msra.mxu0 %v5472
  %7779 = vmatprep.subr.bf16.mxu0 %v5481
  %7780 = vmatpush1.bf16.msra.mxu0 %v5480
  %7781 = vmatprep.subr.bf16.mxu0 %v5489
  %7782 = vmatpush1.bf16.msra.mxu0 %v5488
  %7783 = vmatprep.subr.bf16.mxu0 %v5497
  %7784 = vmatpush1.bf16.msra.mxu0 %v5496
  %7785 = vmatprep.subr.bf16.mxu0 %v5505
  %7786 = vmatpush1.bf16.msra.mxu0 %v5504
  %7787 = vmatprep.subr.bf16.mxu0 %v5513
  %7788 = vmatpush1.bf16.msra.mxu0 %v5512
  %7789 = vmatprep.subr.bf16.mxu0 %v5521
  %7790 = vmatpush1.bf16.msra.mxu0 %v5520
  %7791 = vmatprep.subr.bf16.mxu0 %v5529
  %7792 = vmatpush1.bf16.msra.mxu0 %v5528
  %7793 = vmatprep.subr.bf16.mxu0 %v5537
  %7794 = vmatpush1.bf16.msra.mxu0 %v5536
  %7795 = vmatprep.subr.bf16.mxu0 %v5545
  %7796 = vmatpush1.bf16.msra.mxu0 %v5544
  %7797 = vmatprep.subr.bf16.mxu0 %v5553
  %7798 = vmatpush1.bf16.msra.mxu0 %v5552
  %7799 = vmatprep.subr.bf16.mxu0 %v5561
  %7800 = vmatpush1.bf16.msra.mxu0 %v5560
  %7801 = vmatprep.subr.bf16.mxu0 %v5569
  %7802 = vmatpush1.bf16.msra.mxu0 %v5568
  %7803 = vmatprep.mubr.bf16.mxu0 %v1426
  %7804 = vmatmul.mubr.bf16.gmra.mrb[0].mxu0 %v1412
  %v7805 = vpop.f32.mrb[0].mxu0
  %v7806 = vadd.f32 %v7765, %v7805
  %v7807 = vpop.f32.mrb[0].mxu0
  %v7808 = vadd.f32 %v7767, %v7807
  %v7809 = vpop.f32.mrb[0].mxu0
  %v7810 = vpop.f32.mrb[0].mxu0
  %7811 = vdwg.mxu0
  %7812 = vmatprep.subr.bf16.mxu0 %v5577
  %7813 = vmatpush1.bf16.msra.mxu0 %v5576
  %7814 = vmatprep.subr.bf16.mxu0 %v5585
  %7815 = vmatpush1.bf16.msra.mxu0 %v5584
  %7816 = vmatprep.subr.bf16.mxu0 %v5593
  %7817 = vmatpush1.bf16.msra.mxu0 %v5592
  %7818 = vmatprep.subr.bf16.mxu0 %v5601
  %7819 = vmatpush1.bf16.msra.mxu0 %v5600
  %7820 = vmatprep.subr.bf16.mxu0 %v5609
  %7821 = vmatpush1.bf16.msra.mxu0 %v5608
  %7822 = vmatprep.subr.bf16.mxu0 %v5617
  %7823 = vmatpush1.bf16.msra.mxu0 %v5616
  %7824 = vmatprep.subr.bf16.mxu0 %v5625
  %7825 = vmatpush1.bf16.msra.mxu0 %v5624
  %7826 = vmatprep.subr.bf16.mxu0 %v5633
  %7827 = vmatpush1.bf16.msra.mxu0 %v5632
  %7828 = vmatprep.subr.bf16.mxu0 %v5641
  %7829 = vmatpush1.bf16.msra.mxu0 %v5640
  %7830 = vmatprep.subr.bf16.mxu0 %v5649
  %7831 = vmatpush1.bf16.msra.mxu0 %v5648
  %7832 = vmatprep.subr.bf16.mxu0 %v5657
  %7833 = vmatpush1.bf16.msra.mxu0 %v5656
  %7834 = vmatprep.subr.bf16.mxu0 %v5665
  %7835 = vmatpush1.bf16.msra.mxu0 %v5664
  %7836 = vmatprep.subr.bf16.mxu0 %v5673
  %7837 = vmatpush1.bf16.msra.mxu0 %v5672
  %7838 = vmatprep.subr.bf16.mxu0 %v5681
  %7839 = vmatpush1.bf16.msra.mxu0 %v5680
  %7840 = vmatprep.subr.bf16.mxu0 %v5689
  %7841 = vmatpush1.bf16.msra.mxu0 %v5688
  %7842 = vmatprep.subr.bf16.mxu0 %v5697
  %7843 = vmatpush1.bf16.msra.mxu0 %v5696
  %7844 = vmatprep.mubr.bf16.mxu0 %v1436
  %7845 = vmatmul.mubr.bf16.gmra.mrb[0].mxu0 %v1434
  %v7846 = vpop.f32.mrb[0].mxu0
  %v7847 = vadd.f32 %v7806, %v7846
  %v7848 = vpop.f32.mrb[0].mxu0
  %v7849 = vadd.f32 %v7808, %v7848
  %v7850 = vpop.f32.mrb[0].mxu0
  %v7851 = vpop.f32.mrb[0].mxu0
  %7852 = vdwg.mxu0
  %7853 = vmatprep.subr.bf16.mxu0 %v5705
  %7854 = vmatpush1.bf16.msra.mxu0 %v5704
  %7855 = vmatprep.subr.bf16.mxu0 %v5713
  %7856 = vmatpush1.bf16.msra.mxu0 %v5712
  %7857 = vmatprep.subr.bf16.mxu0 %v5721
  %7858 = vmatpush1.bf16.msra.mxu0 %v5720
  %7859 = vmatprep.subr.bf16.mxu0 %v5729
  %7860 = vmatpush1.bf16.msra.mxu0 %v5728
  %7861 = vmatprep.subr.bf16.mxu0 %v5737
  %7862 = vmatpush1.bf16.msra.mxu0 %v5736
  %7863 = vmatprep.subr.bf16.mxu0 %v5745
  %7864 = vmatpush1.bf16.msra.mxu0 %v5744
  %7865 = vmatprep.subr.bf16.mxu0 %v5753
  %7866 = vmatpush1.bf16.msra.mxu0 %v5752
  %7867 = vmatprep.subr.bf16.mxu0 %v5761
  %7868 = vmatpush1.bf16.msra.mxu0 %v5760
  %7869 = vmatprep.subr.bf16.mxu0 %v5769
  %7870 = vmatpush1.bf16.msra.mxu0 %v5768
  %7871 = vmatprep.subr.bf16.mxu0 %v5777
  %7872 = vmatpush1.bf16.msra.mxu0 %v5776
  %7873 = vmatprep.subr.bf16.mxu0 %v5785
  %7874 = vmatpush1.bf16.msra.mxu0 %v5784
  %7875 = vmatprep.subr.bf16.mxu0 %v5793
  %7876 = vmatpush1.bf16.msra.mxu0 %v5792
  %7877 = vmatprep.subr.bf16.mxu0 %v5801
  %7878 = vmatpush1.bf16.msra.mxu0 %v5800
  %7879 = vmatprep.subr.bf16.mxu0 %v5809
  %7880 = vmatpush1.bf16.msra.mxu0 %v5808
  %7881 = vmatprep.subr.bf16.mxu0 %v5817
  %7882 = vmatpush1.bf16.msra.mxu0 %v5816
  %7883 = vmatprep.subr.bf16.mxu0 %v5825
  %7884 = vmatpush1.bf16.msra.mxu0 %v5824
  %7885 = vmatprep.mubr.bf16.mxu0 %v1433
  %7886 = vmatmul.mubr.bf16.gmra.mrb[0].mxu0 %v1419
  %v7887 = vpop.f32.mrb[0].mxu0
  %v7888 = vadd.f32 %v7847, %v7887
  %v7889 = vpop.f32.mrb[0].mxu0
  %v7890 = vadd.f32 %v7849, %v7889
  %v7891 = vpop.f32.mrb[0].mxu0
  %v7892 = vpop.f32.mrb[0].mxu0
  %7893 = vdwg.mxu0
  %7894 = vmatprep.subr.bf16.mxu0 %v5833
  %7895 = vmatpush1.bf16.msra.mxu0 %v5832
  %7896 = vmatprep.subr.bf16.mxu0 %v5841
  %7897 = vmatpush1.bf16.msra.mxu0 %v5840
  %7898 = vmatprep.subr.bf16.mxu0 %v5849
  %7899 = vmatpush1.bf16.msra.mxu0 %v5848
  %7900 = vmatprep.subr.bf16.mxu0 %v5857
  %7901 = vmatpush1.bf16.msra.mxu0 %v5856
  %7902 = vmatprep.subr.bf16.mxu0 %v5865
  %7903 = vmatpush1.bf16.msra.mxu0 %v5864
  %7904 = vmatprep.subr.bf16.mxu0 %v5873
  %7905 = vmatpush1.bf16.msra.mxu0 %v5872
  %7906 = vmatprep.subr.bf16.mxu0 %v5881
  %7907 = vmatpush1.bf16.msra.mxu0 %v5880
  %7908 = vmatprep.subr.bf16.mxu0 %v5889
  %7909 = vmatpush1.bf16.msra.mxu0 %v5888
  %7910 = vmatprep.subr.bf16.mxu0 %v5897
  %7911 = vmatpush1.bf16.msra.mxu0 %v5896
  %7912 = vmatprep.subr.bf16.mxu0 %v5905
  %7913 = vmatpush1.bf16.msra.mxu0 %v5904
  %7914 = vmatprep.subr.bf16.mxu0 %v5913
  %7915 = vmatpush1.bf16.msra.mxu0 %v5912
  %7916 = vmatprep.subr.bf16.mxu0 %v5921
  %7917 = vmatpush1.bf16.msra.mxu0 %v5920
  %7918 = vmatprep.subr.bf16.mxu0 %v5929
  %7919 = vmatpush1.bf16.msra.mxu0 %v5928
  %7920 = vmatprep.subr.bf16.mxu0 %v5937
  %7921 = vmatpush1.bf16.msra.mxu0 %v5936
  %7922 = vmatprep.subr.bf16.mxu0 %v5945
  %7923 = vmatpush1.bf16.msra.mxu0 %v5944
  %7924 = vmatprep.subr.bf16.mxu0 %v5953
  %7925 = vmatpush1.bf16.msra.mxu0 %v5952
  %7926 = vmatprep.mubr.bf16.mxu0 %v1437
  %7927 = vmatmul.mubr.bf16.gmra.mrb[0].mxu0 %v1435
  %v7928 = vpop.f32.mrb[0].mxu0
  %v7929 = vadd.f32 %v7888, %v7928
  %v7930 = vpop.f32.mrb[0].mxu0
  %v7931 = vadd.f32 %v7890, %v7930
  %v7932 = vpop.f32.mrb[0].mxu0
  %v7933 = vpop.f32.mrb[0].mxu0
  %7934 = vdwg.mxu0
  %7935 = vmatprep.subr.bf16.mxu0 %v5961
  %7936 = vmatpush1.bf16.msra.mxu0 %v5960
  %7937 = vmatprep.subr.bf16.mxu0 %v5969
  %7938 = vmatpush1.bf16.msra.mxu0 %v5968
  %7939 = vmatprep.subr.bf16.mxu0 %v5977
  %7940 = vmatpush1.bf16.msra.mxu0 %v5976
  %7941 = vmatprep.subr.bf16.mxu0 %v5985
  %7942 = vmatpush1.bf16.msra.mxu0 %v5984
  %7943 = vmatprep.subr.bf16.mxu0 %v5993
  %7944 = vmatpush1.bf16.msra.mxu0 %v5992
  %7945 = vmatprep.subr.bf16.mxu0 %v6001
  %7946 = vmatpush1.bf16.msra.mxu0 %v6000
  %7947 = vmatprep.subr.bf16.mxu0 %v6009
  %7948 = vmatpush1.bf16.msra.mxu0 %v6008
  %7949 = vmatprep.subr.bf16.mxu0 %v6017
  %7950 = vmatpush1.bf16.msra.mxu0 %v6016
  %7951 = vmatprep.subr.bf16.mxu0 %v6025
  %7952 = vmatpush1.bf16.msra.mxu0 %v6024
  %7953 = vmatprep.subr.bf16.mxu0 %v6033
  %7954 = vmatpush1.bf16.msra.mxu0 %v6032
  %7955 = vmatprep.subr.bf16.mxu0 %v6041
  %7956 = vmatpush1.bf16.msra.mxu0 %v6040
  %7957 = vmatprep.subr.bf16.mxu0 %v6049
  %7958 = vmatpush1.bf16.msra.mxu0 %v6048
  %7959 = vmatprep.subr.bf16.mxu0 %v6057
  %7960 = vmatpush1.bf16.msra.mxu0 %v6056
  %7961 = vmatprep.subr.bf16.mxu0 %v6065
  %7962 = vmatpush1.bf16.msra.mxu0 %v6064
  %7963 = vmatprep.subr.bf16.mxu0 %v6073
  %7964 = vmatpush1.bf16.msra.mxu0 %v6072
  %7965 = vmatprep.subr.bf16.mxu0 %v6081
  %7966 = vmatpush1.bf16.msra.mxu0 %v6080
  %7967 = vmatprep.mubr.bf16.mxu0 %v1459
  %7968 = vmatmul.mubr.bf16.gmra.mrb[0].mxu0 %v1452
  %v7969 = vpop.f32.mrb[0].mxu0
  %v7970 = vadd.f32 %v7929, %v7969
  %v7971 = vpop.f32.mrb[0].mxu0
  %v7972 = vadd.f32 %v7931, %v7971
  %v7973 = vpop.f32.mrb[0].mxu0
  %v7974 = vpop.f32.mrb[0].mxu0
  %7975 = vdwg.mxu0
  %7976 = vmatprep.subr.bf16.mxu0 %v4939
  %7977 = vmatpush1.bf16.msra.mxu0 %v4938
  %7978 = vmatprep.subr.bf16.mxu0 %v4947
  %7979 = vmatpush1.bf16.msra.mxu0 %v4946
  %7980 = vmatprep.subr.bf16.mxu0 %v4955
  %7981 = vmatpush1.bf16.msra.mxu0 %v4954
  %7982 = vmatprep.subr.bf16.mxu0 %v4963
  %7983 = vmatpush1.bf16.msra.mxu0 %v4962
  %7984 = vmatprep.subr.bf16.mxu0 %v4971
  %7985 = vmatpush1.bf16.msra.mxu0 %v4970
  %7986 = vmatprep.subr.bf16.mxu0 %v4979
  %7987 = vmatpush1.bf16.msra.mxu0 %v4978
  %7988 = vmatprep.subr.bf16.mxu0 %v4987
  %7989 = vmatpush1.bf16.msra.mxu0 %v4986
  %7990 = vmatprep.subr.bf16.mxu0 %v4995
  %7991 = vmatpush1.bf16.msra.mxu0 %v4994
  %7992 = vmatprep.subr.bf16.mxu0 %v5003
  %7993 = vmatpush1.bf16.msra.mxu0 %v5002
  %7994 = vmatprep.subr.bf16.mxu0 %v5011
  %7995 = vmatpush1.bf16.msra.mxu0 %v5010
  %7996 = vmatprep.subr.bf16.mxu0 %v5019
  %7997 = vmatpush1.bf16.msra.mxu0 %v5018
  %7998 = vmatprep.subr.bf16.mxu0 %v5027
  %7999 = vmatpush1.bf16.msra.mxu0 %v5026
  %8000 = vmatprep.subr.bf16.mxu0 %v5035
  %8001 = vmatpush1.bf16.msra.mxu0 %v5034
  %8002 = vmatprep.subr.bf16.mxu0 %v5043
  %8003 = vmatpush1.bf16.msra.mxu0 %v5042
  %8004 = vmatprep.subr.bf16.mxu0 %v5051
  %8005 = vmatpush1.bf16.msra.mxu0 %v5050
  %8006 = vmatprep.subr.bf16.mxu0 %v5059
  %8007 = vmatpush1.bf16.msra.mxu0 %v5058
  %8008 = vmatprep.mubr.bf16.mxu0 %v1377
  %8009 = vmatmul.mubr.bf16.gmra.mrb[0].mxu0 %v1363
  %v8010 = vpop.f32.mrb[0].mxu0
  %v8011 = vadd.f32 0.0, %v8010
  %v8012 = vpop.f32.mrb[0].mxu0
  %v8013 = vadd.f32 0.0, %v8012
  %v8014 = vpop.f32.mrb[0].mxu0
  %v8015 = vpop.f32.mrb[0].mxu0
  %8016 = vdwg.mxu0
  %8017 = vmatprep.subr.bf16.mxu0 %v5067
  %8018 = vmatpush1.bf16.msra.mxu0 %v5066
  %8019 = vmatprep.subr.bf16.mxu0 %v5075
  %8020 = vmatpush1.bf16.msra.mxu0 %v5074
  %8021 = vmatprep.subr.bf16.mxu0 %v5083
  %8022 = vmatpush1.bf16.msra.mxu0 %v5082
  %8023 = vmatprep.subr.bf16.mxu0 %v5091
  %8024 = vmatpush1.bf16.msra.mxu0 %v5090
  %8025 = vmatprep.subr.bf16.mxu0 %v5099
  %8026 = vmatpush1.bf16.msra.mxu0 %v5098
  %8027 = vmatprep.subr.bf16.mxu0 %v5107
  %8028 = vmatpush1.bf16.msra.mxu0 %v5106
  %8029 = vmatprep.subr.bf16.mxu0 %v5115
  %8030 = vmatpush1.bf16.msra.mxu0 %v5114
  %8031 = vmatprep.subr.bf16.mxu0 %v5123
  %8032 = vmatpush1.bf16.msra.mxu0 %v5122
  %8033 = vmatprep.subr.bf16.mxu0 %v5131
  %8034 = vmatpush1.bf16.msra.mxu0 %v5130
  %8035 = vmatprep.subr.bf16.mxu0 %v5139
  %8036 = vmatpush1.bf16.msra.mxu0 %v5138
  %8037 = vmatprep.subr.bf16.mxu0 %v5147
  %8038 = vmatpush1.bf16.msra.mxu0 %v5146
  %8039 = vmatprep.subr.bf16.mxu0 %v5155
  %8040 = vmatpush1.bf16.msra.mxu0 %v5154
  %8041 = vmatprep.subr.bf16.mxu0 %v5163
  %8042 = vmatpush1.bf16.msra.mxu0 %v5162
  %8043 = vmatprep.subr.bf16.mxu0 %v5171
  %8044 = vmatpush1.bf16.msra.mxu0 %v5170
  %8045 = vmatprep.subr.bf16.mxu0 %v5179
  %8046 = vmatpush1.bf16.msra.mxu0 %v5178
  %8047 = vmatprep.subr.bf16.mxu0 %v5187
  %8048 = vmatpush1.bf16.msra.mxu0 %v5186
  %8049 = vmatprep.mubr.bf16.mxu0 %v1387
  %8050 = vmatmul.mubr.bf16.gmra.mrb[0].mxu0 %v1385
  %v8051 = vpop.f32.mrb[0].mxu0
  %v8052 = vadd.f32 %v8011, %v8051
  %v8053 = vpop.f32.mrb[0].mxu0
  %v8054 = vadd.f32 %v8013, %v8053
  %v8055 = vpop.f32.mrb[0].mxu0
  %v8056 = vpop.f32.mrb[0].mxu0
  %8057 = vdwg.mxu0
  %8058 = vmatprep.subr.bf16.mxu0 %v5195
  %8059 = vmatpush1.bf16.msra.mxu0 %v5194
  %8060 = vmatprep.subr.bf16.mxu0 %v5203
  %8061 = vmatpush1.bf16.msra.mxu0 %v5202
  %8062 = vmatprep.subr.bf16.mxu0 %v5211
  %8063 = vmatpush1.bf16.msra.mxu0 %v5210
  %8064 = vmatprep.subr.bf16.mxu0 %v5219
  %8065 = vmatpush1.bf16.msra.mxu0 %v5218
  %8066 = vmatprep.subr.bf16.mxu0 %v5227
  %8067 = vmatpush1.bf16.msra.mxu0 %v5226
  %8068 = vmatprep.subr.bf16.mxu0 %v5235
  %8069 = vmatpush1.bf16.msra.mxu0 %v5234
  %8070 = vmatprep.subr.bf16.mxu0 %v5243
  %8071 = vmatpush1.bf16.msra.mxu0 %v5242
  %8072 = vmatprep.subr.bf16.mxu0 %v5251
  %8073 = vmatpush1.bf16.msra.mxu0 %v5250
  %8074 = vmatprep.subr.bf16.mxu0 %v5259
  %8075 = vmatpush1.bf16.msra.mxu0 %v5258
  %8076 = vmatprep.subr.bf16.mxu0 %v5267
  %8077 = vmatpush1.bf16.msra.mxu0 %v5266
  %8078 = vmatprep.subr.bf16.mxu0 %v5275
  %8079 = vmatpush1.bf16.msra.mxu0 %v5274
  %8080 = vmatprep.subr.bf16.mxu0 %v5283
  %8081 = vmatpush1.bf16.msra.mxu0 %v5282
  %8082 = vmatprep.subr.bf16.mxu0 %v5291
  %8083 = vmatpush1.bf16.msra.mxu0 %v5290
  %8084 = vmatprep.subr.bf16.mxu0 %v5299
  %8085 = vmatpush1.bf16.msra.mxu0 %v5298
  %8086 = vmatprep.subr.bf16.mxu0 %v5307
  %8087 = vmatpush1.bf16.msra.mxu0 %v5306
  %8088 = vmatprep.subr.bf16.mxu0 %v5315
  %8089 = vmatpush1.bf16.msra.mxu0 %v5314
  %8090 = vmatprep.mubr.bf16.mxu0 %v1384
  %8091 = vmatmul.mubr.bf16.gmra.mrb[0].mxu0 %v1370
  %v8092 = vpop.f32.mrb[0].mxu0
  %v8093 = vadd.f32 %v8052, %v8092
  %v8094 = vpop.f32.mrb[0].mxu0
  %v8095 = vadd.f32 %v8054, %v8094
  %v8096 = vpop.f32.mrb[0].mxu0
  %v8097 = vpop.f32.mrb[0].mxu0
  %8098 = vdwg.mxu0
  %8099 = vmatprep.subr.bf16.mxu0 %v5323
  %8100 = vmatpush1.bf16.msra.mxu0 %v5322
  %8101 = vmatprep.subr.bf16.mxu0 %v5331
  %8102 = vmatpush1.bf16.msra.mxu0 %v5330
  %8103 = vmatprep.subr.bf16.mxu0 %v5339
  %8104 = vmatpush1.bf16.msra.mxu0 %v5338
  %8105 = vmatprep.subr.bf16.mxu0 %v5347
  %8106 = vmatpush1.bf16.msra.mxu0 %v5346
  %8107 = vmatprep.subr.bf16.mxu0 %v5355
  %8108 = vmatpush1.bf16.msra.mxu0 %v5354
  %8109 = vmatprep.subr.bf16.mxu0 %v5363
  %8110 = vmatpush1.bf16.msra.mxu0 %v5362
  %8111 = vmatprep.subr.bf16.mxu0 %v5371
  %8112 = vmatpush1.bf16.msra.mxu0 %v5370
  %8113 = vmatprep.subr.bf16.mxu0 %v5379
  %8114 = vmatpush1.bf16.msra.mxu0 %v5378
  %8115 = vmatprep.subr.bf16.mxu0 %v5387
  %8116 = vmatpush1.bf16.msra.mxu0 %v5386
  %8117 = vmatprep.subr.bf16.mxu0 %v5395
  %8118 = vmatpush1.bf16.msra.mxu0 %v5394
  %8119 = vmatprep.subr.bf16.mxu0 %v5403
  %8120 = vmatpush1.bf16.msra.mxu0 %v5402
  %8121 = vmatprep.subr.bf16.mxu0 %v5411
  %8122 = vmatpush1.bf16.msra.mxu0 %v5410
  %8123 = vmatprep.subr.bf16.mxu0 %v5419
  %8124 = vmatpush1.bf16.msra.mxu0 %v5418
  %8125 = vmatprep.subr.bf16.mxu0 %v5427
  %8126 = vmatpush1.bf16.msra.mxu0 %v5426
  %8127 = vmatprep.subr.bf16.mxu0 %v5435
  %8128 = vmatpush1.bf16.msra.mxu0 %v5434
  %8129 = vmatprep.subr.bf16.mxu0 %v5443
  %8130 = vmatpush1.bf16.msra.mxu0 %v5442
  %8131 = vmatprep.mubr.bf16.mxu0 %v1388
  %8132 = vmatmul.mubr.bf16.gmra.mrb[0].mxu0 %v1386
  %v8133 = vpop.f32.mrb[0].mxu0
  %v8134 = vadd.f32 %v8093, %v8133
  %v8135 = vpop.f32.mrb[0].mxu0
  %v8136 = vadd.f32 %v8095, %v8135
  %v8137 = vpop.f32.mrb[0].mxu0
  %v8138 = vpop.f32.mrb[0].mxu0
  %8139 = vdwg.mxu0
  %8140 = vmatprep.subr.bf16.mxu0 %v5451
  %8141 = vmatpush1.bf16.msra.mxu0 %v5450
  %8142 = vmatprep.subr.bf16.mxu0 %v5459
  %8143 = vmatpush1.bf16.msra.mxu0 %v5458
  %8144 = vmatprep.subr.bf16.mxu0 %v5467
  %8145 = vmatpush1.bf16.msra.mxu0 %v5466
  %8146 = vmatprep.subr.bf16.mxu0 %v5475
  %8147 = vmatpush1.bf16.msra.mxu0 %v5474
  %8148 = vmatprep.subr.bf16.mxu0 %v5483
  %8149 = vmatpush1.bf16.msra.mxu0 %v5482
  %8150 = vmatprep.subr.bf16.mxu0 %v5491
  %8151 = vmatpush1.bf16.msra.mxu0 %v5490
  %8152 = vmatprep.subr.bf16.mxu0 %v5499
  %8153 = vmatpush1.bf16.msra.mxu0 %v5498
  %8154 = vmatprep.subr.bf16.mxu0 %v5507
  %8155 = vmatpush1.bf16.msra.mxu0 %v5506
  %8156 = vmatprep.subr.bf16.mxu0 %v5515
  %8157 = vmatpush1.bf16.msra.mxu0 %v5514
  %8158 = vmatprep.subr.bf16.mxu0 %v5523
  %8159 = vmatpush1.bf16.msra.mxu0 %v5522
  %8160 = vmatprep.subr.bf16.mxu0 %v5531
  %8161 = vmatpush1.bf16.msra.mxu0 %v5530
  %8162 = vmatprep.subr.bf16.mxu0 %v5539
  %8163 = vmatpush1.bf16.msra.mxu0 %v5538
  %8164 = vmatprep.subr.bf16.mxu0 %v5547
  %8165 = vmatpush1.bf16.msra.mxu0 %v5546
  %8166 = vmatprep.subr.bf16.mxu0 %v5555
  %8167 = vmatpush1.bf16.msra.mxu0 %v5554
  %8168 = vmatprep.subr.bf16.mxu0 %v5563
  %8169 = vmatpush1.bf16.msra.mxu0 %v5562
  %8170 = vmatprep.subr.bf16.mxu0 %v5571
  %8171 = vmatpush1.bf16.msra.mxu0 %v5570
  %8172 = vmatprep.mubr.bf16.mxu0 %v1426
  %8173 = vmatmul.mubr.bf16.gmra.mrb[0].mxu0 %v1412
  %v8174 = vpop.f32.mrb[0].mxu0
  %v8175 = vadd.f32 %v8134, %v8174
  %v8176 = vpop.f32.mrb[0].mxu0
  %v8177 = vadd.f32 %v8136, %v8176
  %v8178 = vpop.f32.mrb[0].mxu0
  %v8179 = vpop.f32.mrb[0].mxu0
  %8180 = vdwg.mxu0
  %8181 = vmatprep.subr.bf16.mxu0 %v5579
  %8182 = vmatpush1.bf16.msra.mxu0 %v5578
  %8183 = vmatprep.subr.bf16.mxu0 %v5587
  %8184 = vmatpush1.bf16.msra.mxu0 %v5586
  %8185 = vmatprep.subr.bf16.mxu0 %v5595
  %8186 = vmatpush1.bf16.msra.mxu0 %v5594
  %8187 = vmatprep.subr.bf16.mxu0 %v5603
  %8188 = vmatpush1.bf16.msra.mxu0 %v5602
  %8189 = vmatprep.subr.bf16.mxu0 %v5611
  %8190 = vmatpush1.bf16.msra.mxu0 %v5610
  %8191 = vmatprep.subr.bf16.mxu0 %v5619
  %8192 = vmatpush1.bf16.msra.mxu0 %v5618
  %8193 = vmatprep.subr.bf16.mxu0 %v5627
  %8194 = vmatpush1.bf16.msra.mxu0 %v5626
  %8195 = vmatprep.subr.bf16.mxu0 %v5635
  %8196 = vmatpush1.bf16.msra.mxu0 %v5634
  %8197 = vmatprep.subr.bf16.mxu0 %v5643
  %8198 = vmatpush1.bf16.msra.mxu0 %v5642
  %8199 = vmatprep.subr.bf16.mxu0 %v5651
  %8200 = vmatpush1.bf16.msra.mxu0 %v5650
  %8201 = vmatprep.subr.bf16.mxu0 %v5659
  %8202 = vmatpush1.bf16.msra.mxu0 %v5658
  %8203 = vmatprep.subr.bf16.mxu0 %v5667
  %8204 = vmatpush1.bf16.msra.mxu0 %v5666
  %8205 = vmatprep.subr.bf16.mxu0 %v5675
  %8206 = vmatpush1.bf16.msra.mxu0 %v5674
  %8207 = vmatprep.subr.bf16.mxu0 %v5683
  %8208 = vmatpush1.bf16.msra.mxu0 %v5682
  %8209 = vmatprep.subr.bf16.mxu0 %v5691
  %8210 = vmatpush1.bf16.msra.mxu0 %v5690
  %8211 = vmatprep.subr.bf16.mxu0 %v5699
  %8212 = vmatpush1.bf16.msra.mxu0 %v5698
  %8213 = vmatprep.mubr.bf16.mxu0 %v1436
  %8214 = vmatmul.mubr.bf16.gmra.mrb[0].mxu0 %v1434
  %v8215 = vpop.f32.mrb[0].mxu0
  %v8216 = vadd.f32 %v8175, %v8215
  %v8217 = vpop.f32.mrb[0].mxu0
  %v8218 = vadd.f32 %v8177, %v8217
  %v8219 = vpop.f32.mrb[0].mxu0
  %v8220 = vpop.f32.mrb[0].mxu0
  %8221 = vdwg.mxu0
  %8222 = vmatprep.subr.bf16.mxu0 %v5707
  %8223 = vmatpush1.bf16.msra.mxu0 %v5706
  %8224 = vmatprep.subr.bf16.mxu0 %v5715
  %8225 = vmatpush1.bf16.msra.mxu0 %v5714
  %8226 = vmatprep.subr.bf16.mxu0 %v5723
  %8227 = vmatpush1.bf16.msra.mxu0 %v5722
  %8228 = vmatprep.subr.bf16.mxu0 %v5731
  %8229 = vmatpush1.bf16.msra.mxu0 %v5730
  %8230 = vmatprep.subr.bf16.mxu0 %v5739
  %8231 = vmatpush1.bf16.msra.mxu0 %v5738
  %8232 = vmatprep.subr.bf16.mxu0 %v5747
  %8233 = vmatpush1.bf16.msra.mxu0 %v5746
  %8234 = vmatprep.subr.bf16.mxu0 %v5755
  %8235 = vmatpush1.bf16.msra.mxu0 %v5754
  %8236 = vmatprep.subr.bf16.mxu0 %v5763
  %8237 = vmatpush1.bf16.msra.mxu0 %v5762
  %8238 = vmatprep.subr.bf16.mxu0 %v5771
  %8239 = vmatpush1.bf16.msra.mxu0 %v5770
  %8240 = vmatprep.subr.bf16.mxu0 %v5779
  %8241 = vmatpush1.bf16.msra.mxu0 %v5778
  %8242 = vmatprep.subr.bf16.mxu0 %v5787
  %8243 = vmatpush1.bf16.msra.mxu0 %v5786
  %8244 = vmatprep.subr.bf16.mxu0 %v5795
  %8245 = vmatpush1.bf16.msra.mxu0 %v5794
  %8246 = vmatprep.subr.bf16.mxu0 %v5803
  %8247 = vmatpush1.bf16.msra.mxu0 %v5802
  %8248 = vmatprep.subr.bf16.mxu0 %v5811
  %8249 = vmatpush1.bf16.msra.mxu0 %v5810
  %8250 = vmatprep.subr.bf16.mxu0 %v5819
  %8251 = vmatpush1.bf16.msra.mxu0 %v5818
  %8252 = vmatprep.subr.bf16.mxu0 %v5827
  %8253 = vmatpush1.bf16.msra.mxu0 %v5826
  %8254 = vmatprep.mubr.bf16.mxu0 %v1433
  %8255 = vmatmul.mubr.bf16.gmra.mrb[0].mxu0 %v1419
  %v8256 = vpop.f32.mrb[0].mxu0
  %v8257 = vadd.f32 %v8216, %v8256
  %v8258 = vpop.f32.mrb[0].mxu0
  %v8259 = vadd.f32 %v8218, %v8258
  %v8260 = vpop.f32.mrb[0].mxu0
  %v8261 = vpop.f32.mrb[0].mxu0
  %8262 = vdwg.mxu0
  %8263 = vmatprep.subr.bf16.mxu0 %v5835
  %8264 = vmatpush1.bf16.msra.mxu0 %v5834
  %8265 = vmatprep.subr.bf16.mxu0 %v5843
  %8266 = vmatpush1.bf16.msra.mxu0 %v5842
  %8267 = vmatprep.subr.bf16.mxu0 %v5851
  %8268 = vmatpush1.bf16.msra.mxu0 %v5850
  %8269 = vmatprep.subr.bf16.mxu0 %v5859
  %8270 = vmatpush1.bf16.msra.mxu0 %v5858
  %8271 = vmatprep.subr.bf16.mxu0 %v5867
  %8272 = vmatpush1.bf16.msra.mxu0 %v5866
  %8273 = vmatprep.subr.bf16.mxu0 %v5875
  %8274 = vmatpush1.bf16.msra.mxu0 %v5874
  %8275 = vmatprep.subr.bf16.mxu0 %v5883
  %8276 = vmatpush1.bf16.msra.mxu0 %v5882
  %8277 = vmatprep.subr.bf16.mxu0 %v5891
  %8278 = vmatpush1.bf16.msra.mxu0 %v5890
  %8279 = vmatprep.subr.bf16.mxu0 %v5899
  %8280 = vmatpush1.bf16.msra.mxu0 %v5898
  %8281 = vmatprep.subr.bf16.mxu0 %v5907
  %8282 = vmatpush1.bf16.msra.mxu0 %v5906
  %8283 = vmatprep.subr.bf16.mxu0 %v5915
  %8284 = vmatpush1.bf16.msra.mxu0 %v5914
  %8285 = vmatprep.subr.bf16.mxu0 %v5923
  %8286 = vmatpush1.bf16.msra.mxu0 %v5922
  %8287 = vmatprep.subr.bf16.mxu0 %v5931
  %8288 = vmatpush1.bf16.msra.mxu0 %v5930
  %8289 = vmatprep.subr.bf16.mxu0 %v5939
  %8290 = vmatpush1.bf16.msra.mxu0 %v5938
  %8291 = vmatprep.subr.bf16.mxu0 %v5947
  %8292 = vmatpush1.bf16.msra.mxu0 %v5946
  %8293 = vmatprep.subr.bf16.mxu0 %v5955
  %8294 = vmatpush1.bf16.msra.mxu0 %v5954
  %8295 = vmatprep.mubr.bf16.mxu0 %v1437
  %8296 = vmatmul.mubr.bf16.gmra.mrb[0].mxu0 %v1435
  %v8297 = vpop.f32.mrb[0].mxu0
  %v8298 = vadd.f32 %v8257, %v8297
  %v8299 = vpop.f32.mrb[0].mxu0
  %v8300 = vadd.f32 %v8259, %v8299
  %v8301 = vpop.f32.mrb[0].mxu0
  %v8302 = vpop.f32.mrb[0].mxu0
  %8303 = vdwg.mxu0
  %8304 = vmatprep.subr.bf16.mxu0 %v5963
  %8305 = vmatpush1.bf16.msra.mxu0 %v5962
  %8306 = vmatprep.subr.bf16.mxu0 %v5971
  %8307 = vmatpush1.bf16.msra.mxu0 %v5970
  %8308 = vmatprep.subr.bf16.mxu0 %v5979
  %8309 = vmatpush1.bf16.msra.mxu0 %v5978
  %8310 = vmatprep.subr.bf16.mxu0 %v5987
  %8311 = vmatpush1.bf16.msra.mxu0 %v5986
  %8312 = vmatprep.subr.bf16.mxu0 %v5995
  %8313 = vmatpush1.bf16.msra.mxu0 %v5994
  %8314 = vmatprep.subr.bf16.mxu0 %v6003
  %8315 = vmatpush1.bf16.msra.mxu0 %v6002
  %8316 = vmatprep.subr.bf16.mxu0 %v6011
  %8317 = vmatpush1.bf16.msra.mxu0 %v6010
  %8318 = vmatprep.subr.bf16.mxu0 %v6019
  %8319 = vmatpush1.bf16.msra.mxu0 %v6018
  %8320 = vmatprep.subr.bf16.mxu0 %v6027
  %8321 = vmatpush1.bf16.msra.mxu0 %v6026
  %8322 = vmatprep.subr.bf16.mxu0 %v6035
  %8323 = vmatpush1.bf16.msra.mxu0 %v6034
  %8324 = vmatprep.subr.bf16.mxu0 %v6043
  %8325 = vmatpush1.bf16.msra.mxu0 %v6042
  %8326 = vmatprep.subr.bf16.mxu0 %v6051
  %8327 = vmatpush1.bf16.msra.mxu0 %v6050
  %8328 = vmatprep.subr.bf16.mxu0 %v6059
  %8329 = vmatpush1.bf16.msra.mxu0 %v6058
  %8330 = vmatprep.subr.bf16.mxu0 %v6067
  %8331 = vmatpush1.bf16.msra.mxu0 %v6066
  %8332 = vmatprep.subr.bf16.mxu0 %v6075
  %8333 = vmatpush1.bf16.msra.mxu0 %v6074
  %8334 = vmatprep.subr.bf16.mxu0 %v6083
  %8335 = vmatpush1.bf16.msra.mxu0 %v6082
  %8336 = vmatprep.mubr.bf16.mxu0 %v1459
  %8337 = vmatmul.mubr.bf16.gmra.mrb[0].mxu0 %v1452
  %v8338 = vpop.f32.mrb[0].mxu0
  %v8339 = vadd.f32 %v8298, %v8338
  %v8340 = vpop.f32.mrb[0].mxu0
  %v8341 = vadd.f32 %v8300, %v8340
  %v8342 = vpop.f32.mrb[0].mxu0
  %v8343 = vpop.f32.mrb[0].mxu0
  %8344 = vdwg.mxu0
  %8345 = vmatprep.subr.bf16.mxu0 %v4941
  %8346 = vmatpush1.bf16.msra.mxu0 %v4940
  %8347 = vmatprep.subr.bf16.mxu0 %v4949
  %8348 = vmatpush1.bf16.msra.mxu0 %v4948
  %8349 = vmatprep.subr.bf16.mxu0 %v4957
  %8350 = vmatpush1.bf16.msra.mxu0 %v4956
  %8351 = vmatprep.subr.bf16.mxu0 %v4965
  %8352 = vmatpush1.bf16.msra.mxu0 %v4964
  %8353 = vmatprep.subr.bf16.mxu0 %v4973
  %8354 = vmatpush1.bf16.msra.mxu0 %v4972
  %8355 = vmatprep.subr.bf16.mxu0 %v4981
  %8356 = vmatpush1.bf16.msra.mxu0 %v4980
  %8357 = vmatprep.subr.bf16.mxu0 %v4989
  %8358 = vmatpush1.bf16.msra.mxu0 %v4988
  %8359 = vmatprep.subr.bf16.mxu0 %v4997
  %8360 = vmatpush1.bf16.msra.mxu0 %v4996
  %8361 = vmatprep.subr.bf16.mxu0 %v5005
  %8362 = vmatpush1.bf16.msra.mxu0 %v5004
  %8363 = vmatprep.subr.bf16.mxu0 %v5013
  %8364 = vmatpush1.bf16.msra.mxu0 %v5012
  %8365 = vmatprep.subr.bf16.mxu0 %v5021
  %8366 = vmatpush1.bf16.msra.mxu0 %v5020
  %8367 = vmatprep.subr.bf16.mxu0 %v5029
  %8368 = vmatpush1.bf16.msra.mxu0 %v5028
  %8369 = vmatprep.subr.bf16.mxu0 %v5037
  %8370 = vmatpush1.bf16.msra.mxu0 %v5036
  %8371 = vmatprep.subr.bf16.mxu0 %v5045
  %8372 = vmatpush1.bf16.msra.mxu0 %v5044
  %8373 = vmatprep.subr.bf16.mxu0 %v5053
  %8374 = vmatpush1.bf16.msra.mxu0 %v5052
  %8375 = vmatprep.subr.bf16.mxu0 %v5061
  %8376 = vmatpush1.bf16.msra.mxu0 %v5060
  %8377 = vmatprep.mubr.bf16.mxu0 %v1377
  %8378 = vmatmul.mubr.bf16.gmra.mrb[0].mxu0 %v1363
  %v8379 = vpop.f32.mrb[0].mxu0
  %v8380 = vadd.f32 0.0, %v8379
  %v8381 = vpop.f32.mrb[0].mxu0
  %v8382 = vadd.f32 0.0, %v8381
  %v8383 = vpop.f32.mrb[0].mxu0
  %v8384 = vpop.f32.mrb[0].mxu0
  %8385 = vdwg.mxu0
  %8386 = vmatprep.subr.bf16.mxu0 %v5069
  %8387 = vmatpush1.bf16.msra.mxu0 %v5068
  %8388 = vmatprep.subr.bf16.mxu0 %v5077
  %8389 = vmatpush1.bf16.msra.mxu0 %v5076
  %8390 = vmatprep.subr.bf16.mxu0 %v5085
  %8391 = vmatpush1.bf16.msra.mxu0 %v5084
  %8392 = vmatprep.subr.bf16.mxu0 %v5093
  %8393 = vmatpush1.bf16.msra.mxu0 %v5092
  %8394 = vmatprep.subr.bf16.mxu0 %v5101
  %8395 = vmatpush1.bf16.msra.mxu0 %v5100
  %8396 = vmatprep.subr.bf16.mxu0 %v5109
  %8397 = vmatpush1.bf16.msra.mxu0 %v5108
  %8398 = vmatprep.subr.bf16.mxu0 %v5117
  %8399 = vmatpush1.bf16.msra.mxu0 %v5116
  %8400 = vmatprep.subr.bf16.mxu0 %v5125
  %8401 = vmatpush1.bf16.msra.mxu0 %v5124
  %8402 = vmatprep.subr.bf16.mxu0 %v5133
  %8403 = vmatpush1.bf16.msra.mxu0 %v5132
  %8404 = vmatprep.subr.bf16.mxu0 %v5141
  %8405 = vmatpush1.bf16.msra.mxu0 %v5140
  %8406 = vmatprep.subr.bf16.mxu0 %v5149
  %8407 = vmatpush1.bf16.msra.mxu0 %v5148
  %8408 = vmatprep.subr.bf16.mxu0 %v5157
  %8409 = vmatpush1.bf16.msra.mxu0 %v5156
  %8410 = vmatprep.subr.bf16.mxu0 %v5165
  %8411 = vmatpush1.bf16.msra.mxu0 %v5164
  %8412 = vmatprep.subr.bf16.mxu0 %v5173
  %8413 = vmatpush1.bf16.msra.mxu0 %v5172
  %8414 = vmatprep.subr.bf16.mxu0 %v5181
  %8415 = vmatpush1.bf16.msra.mxu0 %v5180
  %8416 = vmatprep.subr.bf16.mxu0 %v5189
  %8417 = vmatpush1.bf16.msra.mxu0 %v5188
  %8418 = vmatprep.mubr.bf16.mxu0 %v1387
  %8419 = vmatmul.mubr.bf16.gmra.mrb[0].mxu0 %v1385
  %v8420 = vpop.f32.mrb[0].mxu0
  %v8421 = vadd.f32 %v8380, %v8420
  %v8422 = vpop.f32.mrb[0].mxu0
  %v8423 = vadd.f32 %v8382, %v8422
  %v8424 = vpop.f32.mrb[0].mxu0
  %v8425 = vpop.f32.mrb[0].mxu0
  %8426 = vdwg.mxu0
  %8427 = vmatprep.subr.bf16.mxu0 %v5197
  %8428 = vmatpush1.bf16.msra.mxu0 %v5196
  %8429 = vmatprep.subr.bf16.mxu0 %v5205
  %8430 = vmatpush1.bf16.msra.mxu0 %v5204
  %8431 = vmatprep.subr.bf16.mxu0 %v5213
  %8432 = vmatpush1.bf16.msra.mxu0 %v5212
  %8433 = vmatprep.subr.bf16.mxu0 %v5221
  %8434 = vmatpush1.bf16.msra.mxu0 %v5220
  %8435 = vmatprep.subr.bf16.mxu0 %v5229
  %8436 = vmatpush1.bf16.msra.mxu0 %v5228
  %8437 = vmatprep.subr.bf16.mxu0 %v5237
  %8438 = vmatpush1.bf16.msra.mxu0 %v5236
  %8439 = vmatprep.subr.bf16.mxu0 %v5245
  %8440 = vmatpush1.bf16.msra.mxu0 %v5244
  %8441 = vmatprep.subr.bf16.mxu0 %v5253
  %8442 = vmatpush1.bf16.msra.mxu0 %v5252
  %8443 = vmatprep.subr.bf16.mxu0 %v5261
  %8444 = vmatpush1.bf16.msra.mxu0 %v5260
  %8445 = vmatprep.subr.bf16.mxu0 %v5269
  %8446 = vmatpush1.bf16.msra.mxu0 %v5268
  %8447 = vmatprep.subr.bf16.mxu0 %v5277
  %8448 = vmatpush1.bf16.msra.mxu0 %v5276
  %8449 = vmatprep.subr.bf16.mxu0 %v5285
  %8450 = vmatpush1.bf16.msra.mxu0 %v5284
  %8451 = vmatprep.subr.bf16.mxu0 %v5293
  %8452 = vmatpush1.bf16.msra.mxu0 %v5292
  %8453 = vmatprep.subr.bf16.mxu0 %v5301
  %8454 = vmatpush1.bf16.msra.mxu0 %v5300
  %8455 = vmatprep.subr.bf16.mxu0 %v5309
  %8456 = vmatpush1.bf16.msra.mxu0 %v5308
  %8457 = vmatprep.subr.bf16.mxu0 %v5317
  %8458 = vmatpush1.bf16.msra.mxu0 %v5316
  %8459 = vmatprep.mubr.bf16.mxu0 %v1384
  %8460 = vmatmul.mubr.bf16.gmra.mrb[0].mxu0 %v1370
  %v8461 = vpop.f32.mrb[0].mxu0
  %v8462 = vadd.f32 %v8421, %v8461
  %v8463 = vpop.f32.mrb[0].mxu0
  %v8464 = vadd.f32 %v8423, %v8463
  %v8465 = vpop.f32.mrb[0].mxu0
  %v8466 = vpop.f32.mrb[0].mxu0
  %8467 = vdwg.mxu0
  %8468 = vmatprep.subr.bf16.mxu0 %v5325
  %8469 = vmatpush1.bf16.msra.mxu0 %v5324
  %8470 = vmatprep.subr.bf16.mxu0 %v5333
  %8471 = vmatpush1.bf16.msra.mxu0 %v5332
  %8472 = vmatprep.subr.bf16.mxu0 %v5341
  %8473 = vmatpush1.bf16.msra.mxu0 %v5340
  %8474 = vmatprep.subr.bf16.mxu0 %v5349
  %8475 = vmatpush1.bf16.msra.mxu0 %v5348
  %8476 = vmatprep.subr.bf16.mxu0 %v5357
  %8477 = vmatpush1.bf16.msra.mxu0 %v5356
  %8478 = vmatprep.subr.bf16.mxu0 %v5365
  %8479 = vmatpush1.bf16.msra.mxu0 %v5364
  %8480 = vmatprep.subr.bf16.mxu0 %v5373
  %8481 = vmatpush1.bf16.msra.mxu0 %v5372
  %8482 = vmatprep.subr.bf16.mxu0 %v5381
  %8483 = vmatpush1.bf16.msra.mxu0 %v5380
  %8484 = vmatprep.subr.bf16.mxu0 %v5389
  %8485 = vmatpush1.bf16.msra.mxu0 %v5388
  %8486 = vmatprep.subr.bf16.mxu0 %v5397
  %8487 = vmatpush1.bf16.msra.mxu0 %v5396
  %8488 = vmatprep.subr.bf16.mxu0 %v5405
  %8489 = vmatpush1.bf16.msra.mxu0 %v5404
  %8490 = vmatprep.subr.bf16.mxu0 %v5413
  %8491 = vmatpush1.bf16.msra.mxu0 %v5412
  %8492 = vmatprep.subr.bf16.mxu0 %v5421
  %8493 = vmatpush1.bf16.msra.mxu0 %v5420
  %8494 = vmatprep.subr.bf16.mxu0 %v5429
  %8495 = vmatpush1.bf16.msra.mxu0 %v5428
  %8496 = vmatprep.subr.bf16.mxu0 %v5437
  %8497 = vmatpush1.bf16.msra.mxu0 %v5436
  %8498 = vmatprep.subr.bf16.mxu0 %v5445
  %8499 = vmatpush1.bf16.msra.mxu0 %v5444
  %8500 = vmatprep.mubr.bf16.mxu0 %v1388
  %8501 = vmatmul.mubr.bf16.gmra.mrb[0].mxu0 %v1386
  %v8502 = vpop.f32.mrb[0].mxu0
  %v8503 = vadd.f32 %v8462, %v8502
  %v8504 = vpop.f32.mrb[0].mxu0
  %v8505 = vadd.f32 %v8464, %v8504
  %v8506 = vpop.f32.mrb[0].mxu0
  %v8507 = vpop.f32.mrb[0].mxu0
  %8508 = vdwg.mxu0
  %8509 = vmatprep.subr.bf16.mxu0 %v5453
  %8510 = vmatpush1.bf16.msra.mxu0 %v5452
  %8511 = vmatprep.subr.bf16.mxu0 %v5461
  %8512 = vmatpush1.bf16.msra.mxu0 %v5460
  %8513 = vmatprep.subr.bf16.mxu0 %v5469
  %8514 = vmatpush1.bf16.msra.mxu0 %v5468
  %8515 = vmatprep.subr.bf16.mxu0 %v5477
  %8516 = vmatpush1.bf16.msra.mxu0 %v5476
  %8517 = vmatprep.subr.bf16.mxu0 %v5485
  %8518 = vmatpush1.bf16.msra.mxu0 %v5484
  %8519 = vmatprep.subr.bf16.mxu0 %v5493
  %8520 = vmatpush1.bf16.msra.mxu0 %v5492
  %8521 = vmatprep.subr.bf16.mxu0 %v5501
  %8522 = vmatpush1.bf16.msra.mxu0 %v5500
  %8523 = vmatprep.subr.bf16.mxu0 %v5509
  %8524 = vmatpush1.bf16.msra.mxu0 %v5508
  %8525 = vmatprep.subr.bf16.mxu0 %v5517
  %8526 = vmatpush1.bf16.msra.mxu0 %v5516
  %8527 = vmatprep.subr.bf16.mxu0 %v5525
  %8528 = vmatpush1.bf16.msra.mxu0 %v5524
  %8529 = vmatprep.subr.bf16.mxu0 %v5533
  %8530 = vmatpush1.bf16.msra.mxu0 %v5532
  %8531 = vmatprep.subr.bf16.mxu0 %v5541
  %8532 = vmatpush1.bf16.msra.mxu0 %v5540
  %8533 = vmatprep.subr.bf16.mxu0 %v5549
  %8534 = vmatpush1.bf16.msra.mxu0 %v5548
  %8535 = vmatprep.subr.bf16.mxu0 %v5557
  %8536 = vmatpush1.bf16.msra.mxu0 %v5556
  %8537 = vmatprep.subr.bf16.mxu0 %v5565
  %8538 = vmatpush1.bf16.msra.mxu0 %v5564
  %8539 = vmatprep.subr.bf16.mxu0 %v5573
  %8540 = vmatpush1.bf16.msra.mxu0 %v5572
  %8541 = vmatprep.mubr.bf16.mxu0 %v1426
  %8542 = vmatmul.mubr.bf16.gmra.mrb[0].mxu0 %v1412
  %v8543 = vpop.f32.mrb[0].mxu0
  %v8544 = vadd.f32 %v8503, %v8543
  %v8545 = vpop.f32.mrb[0].mxu0
  %v8546 = vadd.f32 %v8505, %v8545
  %v8547 = vpop.f32.mrb[0].mxu0
  %v8548 = vpop.f32.mrb[0].mxu0
  %8549 = vdwg.mxu0
  %8550 = vmatprep.subr.bf16.mxu0 %v5581
  %8551 = vmatpush1.bf16.msra.mxu0 %v5580
  %8552 = vmatprep.subr.bf16.mxu0 %v5589
  %8553 = vmatpush1.bf16.msra.mxu0 %v5588
  %8554 = vmatprep.subr.bf16.mxu0 %v5597
  %8555 = vmatpush1.bf16.msra.mxu0 %v5596
  %8556 = vmatprep.subr.bf16.mxu0 %v5605
  %8557 = vmatpush1.bf16.msra.mxu0 %v5604
  %8558 = vmatprep.subr.bf16.mxu0 %v5613
  %8559 = vmatpush1.bf16.msra.mxu0 %v5612
  %8560 = vmatprep.subr.bf16.mxu0 %v5621
  %8561 = vmatpush1.bf16.msra.mxu0 %v5620
  %8562 = vmatprep.subr.bf16.mxu0 %v5629
  %8563 = vmatpush1.bf16.msra.mxu0 %v5628
  %8564 = vmatprep.subr.bf16.mxu0 %v5637
  %8565 = vmatpush1.bf16.msra.mxu0 %v5636
  %8566 = vmatprep.subr.bf16.mxu0 %v5645
  %8567 = vmatpush1.bf16.msra.mxu0 %v5644
  %8568 = vmatprep.subr.bf16.mxu0 %v5653
  %8569 = vmatpush1.bf16.msra.mxu0 %v5652
  %8570 = vmatprep.subr.bf16.mxu0 %v5661
  %8571 = vmatpush1.bf16.msra.mxu0 %v5660
  %8572 = vmatprep.subr.bf16.mxu0 %v5669
  %8573 = vmatpush1.bf16.msra.mxu0 %v5668
  %8574 = vmatprep.subr.bf16.mxu0 %v5677
  %8575 = vmatpush1.bf16.msra.mxu0 %v5676
  %8576 = vmatprep.subr.bf16.mxu0 %v5685
  %8577 = vmatpush1.bf16.msra.mxu0 %v5684
  %8578 = vmatprep.subr.bf16.mxu0 %v5693
  %8579 = vmatpush1.bf16.msra.mxu0 %v5692
  %8580 = vmatprep.subr.bf16.mxu0 %v5701
  %8581 = vmatpush1.bf16.msra.mxu0 %v5700
  %8582 = vmatprep.mubr.bf16.mxu0 %v1436
  %8583 = vmatmul.mubr.bf16.gmra.mrb[0].mxu0 %v1434
  %v8584 = vpop.f32.mrb[0].mxu0
  %v8585 = vadd.f32 %v8544, %v8584
  %v8586 = vpop.f32.mrb[0].mxu0
  %v8587 = vadd.f32 %v8546, %v8586
  %v8588 = vpop.f32.mrb[0].mxu0
  %v8589 = vpop.f32.mrb[0].mxu0
  %8590 = vdwg.mxu0
  %8591 = vmatprep.subr.bf16.mxu0 %v5709
  %8592 = vmatpush1.bf16.msra.mxu0 %v5708
  %8593 = vmatprep.subr.bf16.mxu0 %v5717
  %8594 = vmatpush1.bf16.msra.mxu0 %v5716
  %8595 = vmatprep.subr.bf16.mxu0 %v5725
  %8596 = vmatpush1.bf16.msra.mxu0 %v5724
  %8597 = vmatprep.subr.bf16.mxu0 %v5733
  %8598 = vmatpush1.bf16.msra.mxu0 %v5732
  %8599 = vmatprep.subr.bf16.mxu0 %v5741
  %8600 = vmatpush1.bf16.msra.mxu0 %v5740
  %8601 = vmatprep.subr.bf16.mxu0 %v5749
  %8602 = vmatpush1.bf16.msra.mxu0 %v5748
  %8603 = vmatprep.subr.bf16.mxu0 %v5757
  %8604 = vmatpush1.bf16.msra.mxu0 %v5756
  %8605 = vmatprep.subr.bf16.mxu0 %v5765
  %8606 = vmatpush1.bf16.msra.mxu0 %v5764
  %8607 = vmatprep.subr.bf16.mxu0 %v5773
  %8608 = vmatpush1.bf16.msra.mxu0 %v5772
  %8609 = vmatprep.subr.bf16.mxu0 %v5781
  %8610 = vmatpush1.bf16.msra.mxu0 %v5780
  %8611 = vmatprep.subr.bf16.mxu0 %v5789
  %8612 = vmatpush1.bf16.msra.mxu0 %v5788
  %8613 = vmatprep.subr.bf16.mxu0 %v5797
  %8614 = vmatpush1.bf16.msra.mxu0 %v5796
  %8615 = vmatprep.subr.bf16.mxu0 %v5805
  %8616 = vmatpush1.bf16.msra.mxu0 %v5804
  %8617 = vmatprep.subr.bf16.mxu0 %v5813
  %8618 = vmatpush1.bf16.msra.mxu0 %v5812
  %8619 = vmatprep.subr.bf16.mxu0 %v5821
  %8620 = vmatpush1.bf16.msra.mxu0 %v5820
  %8621 = vmatprep.subr.bf16.mxu0 %v5829
  %8622 = vmatpush1.bf16.msra.mxu0 %v5828
  %8623 = vmatprep.mubr.bf16.mxu0 %v1433
  %8624 = vmatmul.mubr.bf16.gmra.mrb[0].mxu0 %v1419
  %v8625 = vpop.f32.mrb[0].mxu0
  %v8626 = vadd.f32 %v8585, %v8625
  %v8627 = vpop.f32.mrb[0].mxu0
  %v8628 = vadd.f32 %v8587, %v8627
  %v8629 = vpop.f32.mrb[0].mxu0
  %v8630 = vpop.f32.mrb[0].mxu0
  %8631 = vdwg.mxu0
  %8632 = vmatprep.subr.bf16.mxu0 %v5837
  %8633 = vmatpush1.bf16.msra.mxu0 %v5836
  %8634 = vmatprep.subr.bf16.mxu0 %v5845
  %8635 = vmatpush1.bf16.msra.mxu0 %v5844
  %8636 = vmatprep.subr.bf16.mxu0 %v5853
  %8637 = vmatpush1.bf16.msra.mxu0 %v5852
  %8638 = vmatprep.subr.bf16.mxu0 %v5861
  %8639 = vmatpush1.bf16.msra.mxu0 %v5860
  %8640 = vmatprep.subr.bf16.mxu0 %v5869
  %8641 = vmatpush1.bf16.msra.mxu0 %v5868
  %8642 = vmatprep.subr.bf16.mxu0 %v5877
  %8643 = vmatpush1.bf16.msra.mxu0 %v5876
  %8644 = vmatprep.subr.bf16.mxu0 %v5885
  %8645 = vmatpush1.bf16.msra.mxu0 %v5884
  %8646 = vmatprep.subr.bf16.mxu0 %v5893
  %8647 = vmatpush1.bf16.msra.mxu0 %v5892
  %8648 = vmatprep.subr.bf16.mxu0 %v5901
  %8649 = vmatpush1.bf16.msra.mxu0 %v5900
  %8650 = vmatprep.subr.bf16.mxu0 %v5909
  %8651 = vmatpush1.bf16.msra.mxu0 %v5908
  %8652 = vmatprep.subr.bf16.mxu0 %v5917
  %8653 = vmatpush1.bf16.msra.mxu0 %v5916
  %8654 = vmatprep.subr.bf16.mxu0 %v5925
  %8655 = vmatpush1.bf16.msra.mxu0 %v5924
  %8656 = vmatprep.subr.bf16.mxu0 %v5933
  %8657 = vmatpush1.bf16.msra.mxu0 %v5932
  %8658 = vmatprep.subr.bf16.mxu0 %v5941
  %8659 = vmatpush1.bf16.msra.mxu0 %v5940
  %8660 = vmatprep.subr.bf16.mxu0 %v5949
  %8661 = vmatpush1.bf16.msra.mxu0 %v5948
  %8662 = vmatprep.subr.bf16.mxu0 %v5957
  %8663 = vmatpush1.bf16.msra.mxu0 %v5956
  %8664 = vmatprep.mubr.bf16.mxu0 %v1437
  %8665 = vmatmul.mubr.bf16.gmra.mrb[0].mxu0 %v1435
  %v8666 = vpop.f32.mrb[0].mxu0
  %v8667 = vadd.f32 %v8626, %v8666
  %v8668 = vpop.f32.mrb[0].mxu0
  %v8669 = vadd.f32 %v8628, %v8668
  %v8670 = vpop.f32.mrb[0].mxu0
  %v8671 = vpop.f32.mrb[0].mxu0
  %8672 = vdwg.mxu0
  %8673 = vmatprep.subr.bf16.mxu0 %v5965
  %8674 = vmatpush1.bf16.msra.mxu0 %v5964
  %8675 = vmatprep.subr.bf16.mxu0 %v5973
  %8676 = vmatpush1.bf16.msra.mxu0 %v5972
  %8677 = vmatprep.subr.bf16.mxu0 %v5981
  %8678 = vmatpush1.bf16.msra.mxu0 %v5980
  %8679 = vmatprep.subr.bf16.mxu0 %v5989
  %8680 = vmatpush1.bf16.msra.mxu0 %v5988
  %8681 = vmatprep.subr.bf16.mxu0 %v5997
  %8682 = vmatpush1.bf16.msra.mxu0 %v5996
  %8683 = vmatprep.subr.bf16.mxu0 %v6005
  %8684 = vmatpush1.bf16.msra.mxu0 %v6004
  %8685 = vmatprep.subr.bf16.mxu0 %v6013
  %8686 = vmatpush1.bf16.msra.mxu0 %v6012
  %8687 = vmatprep.subr.bf16.mxu0 %v6021
  %8688 = vmatpush1.bf16.msra.mxu0 %v6020
  %8689 = vmatprep.subr.bf16.mxu0 %v6029
  %8690 = vmatpush1.bf16.msra.mxu0 %v6028
  %8691 = vmatprep.subr.bf16.mxu0 %v6037
  %8692 = vmatpush1.bf16.msra.mxu0 %v6036
  %8693 = vmatprep.subr.bf16.mxu0 %v6045
  %8694 = vmatpush1.bf16.msra.mxu0 %v6044
  %8695 = vmatprep.subr.bf16.mxu0 %v6053
  %8696 = vmatpush1.bf16.msra.mxu0 %v6052
  %8697 = vmatprep.subr.bf16.mxu0 %v6061
  %8698 = vmatpush1.bf16.msra.mxu0 %v6060
  %8699 = vmatprep.subr.bf16.mxu0 %v6069
  %8700 = vmatpush1.bf16.msra.mxu0 %v6068
  %8701 = vmatprep.subr.bf16.mxu0 %v6077
  %8702 = vmatpush1.bf16.msra.mxu0 %v6076
  %8703 = vmatprep.subr.bf16.mxu0 %v6085
  %8704 = vmatpush1.bf16.msra.mxu0 %v6084
  %8705 = vmatprep.mubr.bf16.mxu0 %v1459
  %8706 = vmatmul.mubr.bf16.gmra.mrb[0].mxu0 %v1452
  %v8707 = vpop.f32.mrb[0].mxu0
  %v8708 = vadd.f32 %v8667, %v8707
  %v8709 = vpop.f32.mrb[0].mxu0
  %v8710 = vadd.f32 %v8669, %v8709
  %v8711 = vpop.f32.mrb[0].mxu0
  %v8712 = vpop.f32.mrb[0].mxu0
  %8713 = vdwg.mxu0
  %v8716 = vunpack.c.l.s4 1966171168
  %v8717 = vunpack.c.0.s8 %v8716
  %v8718 = vlaneseq
  %v8719 = vshrl.u32 %v8718, 7
  %v8720 = vsub.s32 %v8717, %v8719
  %v8721 = vrot.slane %v53, %v8720
  %v8722 = vcombine.high %v8721, %v8721
  %v8724 = vunpack.c.l.s4 1966171168
  %v8725 = vunpack.c.0.s8 %v8724
  %v8726 = vlaneseq
  %v8727 = vshrl.u32 %v8726, 7
  %v8728 = vsub.s32 %v8725, %v8727
  %v8729 = vrot.slane %v8721, %v8728
  %v8731 = vunpack.c.l.s4 1966171168
  %v8732 = vunpack.c.0.s8 %v8731
  %v8733 = vlaneseq
  %v8734 = vshrl.u32 %v8733, 7
  %v8735 = vsub.s32 %v8732, %v8734
  %v8736 = vrot.slane %v8722, %v8735
  %v8867 = vunpack.c.l.b16 %v54
  %v8868 = vunpack.c.h.b16 %v54
  %v8869 = vunpack.c.l.b16 %v55
  %v8870 = vunpack.c.h.b16 %v55
  %v8871 = vunpack.c.l.b16 %v56
  %v8872 = vunpack.c.h.b16 %v56
  %v8873 = vunpack.c.l.b16 %v57
  %v8874 = vunpack.c.h.b16 %v57
  %v8875 = vunpack.c.l.b16 %v58
  %v8876 = vunpack.c.h.b16 %v58
  %v8877 = vunpack.c.l.b16 %v59
  %v8878 = vunpack.c.h.b16 %v59
  %v8879 = vunpack.c.l.b16 %v60
  %v8880 = vunpack.c.h.b16 %v60
  %v8881 = vunpack.c.l.b16 %v61
  %v8882 = vunpack.c.h.b16 %v61
  %v8883 = vunpack.c.l.b16 %v62
  %v8884 = vunpack.c.h.b16 %v62
  %v8885 = vunpack.c.l.b16 %v63
  %v8886 = vunpack.c.h.b16 %v63
  %v8887 = vunpack.c.l.b16 %v64
  %v8888 = vunpack.c.h.b16 %v64
  %v8889 = vunpack.c.l.b16 %v65
  %v8890 = vunpack.c.h.b16 %v65
  %v8891 = vunpack.c.l.b16 %v66
  %v8892 = vunpack.c.h.b16 %v66
  %v8893 = vunpack.c.l.b16 %v67
  %v8894 = vunpack.c.h.b16 %v67
  %v8895 = vunpack.c.l.b16 %v68
  %v8896 = vunpack.c.h.b16 %v68
  %v8897 = vunpack.c.l.b16 %v69
  %v8898 = vunpack.c.h.b16 %v69
  %v8899 = vunpack.c.l.b16 %v70
  %v8900 = vunpack.c.h.b16 %v70
  %v8901 = vunpack.c.l.b16 %v71
  %v8902 = vunpack.c.h.b16 %v71
  %v8903 = vunpack.c.l.b16 %v72
  %v8904 = vunpack.c.h.b16 %v72
  %v8905 = vunpack.c.l.b16 %v73
  %v8906 = vunpack.c.h.b16 %v73
  %v8907 = vunpack.c.l.b16 %v74
  %v8908 = vunpack.c.h.b16 %v74
  %v8909 = vunpack.c.l.b16 %v75
  %v8910 = vunpack.c.h.b16 %v75
  %v8911 = vunpack.c.l.b16 %v76
  %v8912 = vunpack.c.h.b16 %v76
  %v8913 = vunpack.c.l.b16 %v77
  %v8914 = vunpack.c.h.b16 %v77
  %v8915 = vunpack.c.l.b16 %v78
  %v8916 = vunpack.c.h.b16 %v78
  %v8917 = vunpack.c.l.b16 %v79
  %v8918 = vunpack.c.h.b16 %v79
  %v8919 = vunpack.c.l.b16 %v80
  %v8920 = vunpack.c.h.b16 %v80
  %v8921 = vunpack.c.l.b16 %v81
  %v8922 = vunpack.c.h.b16 %v81
  %v8923 = vunpack.c.l.b16 %v82
  %v8924 = vunpack.c.h.b16 %v82
  %v8925 = vunpack.c.l.b16 %v83
  %v8926 = vunpack.c.h.b16 %v83
  %v8927 = vunpack.c.l.b16 %v84
  %v8928 = vunpack.c.h.b16 %v84
  %v8929 = vunpack.c.l.b16 %v85
  %v8930 = vunpack.c.h.b16 %v85
  %v8931 = vunpack.c.l.b16 %v86
  %v8932 = vunpack.c.h.b16 %v86
  %v8933 = vunpack.c.l.b16 %v87
  %v8934 = vunpack.c.h.b16 %v87
  %v8935 = vunpack.c.l.b16 %v88
  %v8936 = vunpack.c.h.b16 %v88
  %v8937 = vunpack.c.l.b16 %v89
  %v8938 = vunpack.c.h.b16 %v89
  %v8939 = vunpack.c.l.b16 %v90
  %v8940 = vunpack.c.h.b16 %v90
  %v8941 = vunpack.c.l.b16 %v91
  %v8942 = vunpack.c.h.b16 %v91
  %v8943 = vunpack.c.l.b16 %v92
  %v8944 = vunpack.c.h.b16 %v92
  %v8945 = vunpack.c.l.b16 %v93
  %v8946 = vunpack.c.h.b16 %v93
  %v8947 = vunpack.c.l.b16 %v94
  %v8948 = vunpack.c.h.b16 %v94
  %v8949 = vunpack.c.l.b16 %v95
  %v8950 = vunpack.c.h.b16 %v95
  %v8951 = vunpack.c.l.b16 %v96
  %v8952 = vunpack.c.h.b16 %v96
  %v8953 = vunpack.c.l.b16 %v97
  %v8954 = vunpack.c.h.b16 %v97
  %v8955 = vunpack.c.l.b16 %v98
  %v8956 = vunpack.c.h.b16 %v98
  %v8957 = vunpack.c.l.b16 %v99
  %v8958 = vunpack.c.h.b16 %v99
  %v8959 = vunpack.c.l.b16 %v100
  %v8960 = vunpack.c.h.b16 %v100
  %v8961 = vunpack.c.l.b16 %v101
  %v8962 = vunpack.c.h.b16 %v101
  %v8963 = vunpack.c.l.b16 %v102
  %v8964 = vunpack.c.h.b16 %v102
  %v8965 = vunpack.c.l.b16 %v103
  %v8966 = vunpack.c.h.b16 %v103
  %v8967 = vunpack.c.l.b16 %v104
  %v8968 = vunpack.c.h.b16 %v104
  %v8969 = vunpack.c.l.b16 %v105
  %v8970 = vunpack.c.h.b16 %v105
  %v8971 = vunpack.c.l.b16 %v106
  %v8972 = vunpack.c.h.b16 %v106
  %v8973 = vunpack.c.l.b16 %v107
  %v8974 = vunpack.c.h.b16 %v107
  %v8975 = vunpack.c.l.b16 %v108
  %v8976 = vunpack.c.h.b16 %v108
  %v8977 = vunpack.c.l.b16 %v109
  %v8978 = vunpack.c.h.b16 %v109
  %v8979 = vunpack.c.l.b16 %v110
  %v8980 = vunpack.c.h.b16 %v110
  %v8981 = vunpack.c.l.b16 %v111
  %v8982 = vunpack.c.h.b16 %v111
  %v8983 = vunpack.c.l.b16 %v112
  %v8984 = vunpack.c.h.b16 %v112
  %v8985 = vunpack.c.l.b16 %v113
  %v8986 = vunpack.c.h.b16 %v113
  %v8987 = vunpack.c.l.b16 %v114
  %v8988 = vunpack.c.h.b16 %v114
  %v8989 = vunpack.c.l.b16 %v115
  %v8990 = vunpack.c.h.b16 %v115
  %v8991 = vunpack.c.l.b16 %v116
  %v8992 = vunpack.c.h.b16 %v116
  %v8993 = vunpack.c.l.b16 %v117
  %v8994 = vunpack.c.h.b16 %v117
  %v8995 = vunpack.c.l.b16 %v118
  %v8996 = vunpack.c.h.b16 %v118
  %v8997 = vunpack.c.l.b16 %v119
  %v8998 = vunpack.c.h.b16 %v119
  %v8999 = vunpack.c.l.b16 %v120
  %v9000 = vunpack.c.h.b16 %v120
  %v9001 = vunpack.c.l.b16 %v121
  %v9002 = vunpack.c.h.b16 %v121
  %v9003 = vunpack.c.l.b16 %v122
  %v9004 = vunpack.c.h.b16 %v122
  %v9005 = vunpack.c.l.b16 %v123
  %v9006 = vunpack.c.h.b16 %v123
  %v9007 = vunpack.c.l.b16 %v124
  %v9008 = vunpack.c.h.b16 %v124
  %v9009 = vunpack.c.l.b16 %v125
  %v9010 = vunpack.c.h.b16 %v125
  %v9011 = vunpack.c.l.b16 %v126
  %v9012 = vunpack.c.h.b16 %v126
  %v9013 = vunpack.c.l.b16 %v127
  %v9014 = vunpack.c.h.b16 %v127
  %v9015 = vunpack.c.l.b16 %v128
  %v9016 = vunpack.c.h.b16 %v128
  %v9017 = vunpack.c.l.b16 %v129
  %v9018 = vunpack.c.h.b16 %v129
  %v9019 = vunpack.c.l.b16 %v130
  %v9020 = vunpack.c.h.b16 %v130
  %v9021 = vunpack.c.l.b16 %v131
  %v9022 = vunpack.c.h.b16 %v131
  %v9023 = vunpack.c.l.b16 %v132
  %v9024 = vunpack.c.h.b16 %v132
  %v9025 = vunpack.c.l.b16 %v133
  %v9026 = vunpack.c.h.b16 %v133
  %v9027 = vunpack.c.l.b16 %v134
  %v9028 = vunpack.c.h.b16 %v134
  %v9029 = vunpack.c.l.b16 %v135
  %v9030 = vunpack.c.h.b16 %v135
  %v9031 = vunpack.c.l.b16 %v136
  %v9032 = vunpack.c.h.b16 %v136
  %v9033 = vunpack.c.l.b16 %v137
  %v9034 = vunpack.c.h.b16 %v137
  %v9035 = vunpack.c.l.b16 %v138
  %v9036 = vunpack.c.h.b16 %v138
  %v9037 = vunpack.c.l.b16 %v139
  %v9038 = vunpack.c.h.b16 %v139
  %v9039 = vunpack.c.l.b16 %v140
  %v9040 = vunpack.c.h.b16 %v140
  %v9041 = vunpack.c.l.b16 %v141
  %v9042 = vunpack.c.h.b16 %v141
  %v9043 = vunpack.c.l.b16 %v142
  %v9044 = vunpack.c.h.b16 %v142
  %v9045 = vunpack.c.l.b16 %v143
  %v9046 = vunpack.c.h.b16 %v143
  %v9047 = vunpack.c.l.b16 %v144
  %v9048 = vunpack.c.h.b16 %v144
  %v9049 = vunpack.c.l.b16 %v145
  %v9050 = vunpack.c.h.b16 %v145
  %v9051 = vunpack.c.l.b16 %v146
  %v9052 = vunpack.c.h.b16 %v146
  %v9053 = vunpack.c.l.b16 %v147
  %v9054 = vunpack.c.h.b16 %v147
  %v9055 = vunpack.c.l.b16 %v148
  %v9056 = vunpack.c.h.b16 %v148
  %v9057 = vunpack.c.l.b16 %v149
  %v9058 = vunpack.c.h.b16 %v149
  %v9059 = vunpack.c.l.b16 %v150
  %v9060 = vunpack.c.h.b16 %v150
  %v9061 = vunpack.c.l.b16 %v151
  %v9062 = vunpack.c.h.b16 %v151
  %v9063 = vunpack.c.l.b16 %v152
  %v9064 = vunpack.c.h.b16 %v152
  %v9065 = vunpack.c.l.b16 %v153
  %v9066 = vunpack.c.h.b16 %v153
  %v9067 = vunpack.c.l.b16 %v154
  %v9068 = vunpack.c.h.b16 %v154
  %v9069 = vunpack.c.l.b16 %v155
  %v9070 = vunpack.c.h.b16 %v155
  %v9071 = vunpack.c.l.b16 %v156
  %v9072 = vunpack.c.h.b16 %v156
  %v9073 = vunpack.c.l.b16 %v157
  %v9074 = vunpack.c.h.b16 %v157
  %v9075 = vunpack.c.l.b16 %v158
  %v9076 = vunpack.c.h.b16 %v158
  %v9077 = vunpack.c.l.b16 %v159
  %v9078 = vunpack.c.h.b16 %v159
  %v9079 = vunpack.c.l.b16 %v160
  %v9080 = vunpack.c.h.b16 %v160
  %v9081 = vunpack.c.l.b16 %v161
  %v9082 = vunpack.c.h.b16 %v161
  %v9083 = vunpack.c.l.b16 %v162
  %v9084 = vunpack.c.h.b16 %v162
  %v9085 = vunpack.c.l.b16 %v163
  %v9086 = vunpack.c.h.b16 %v163
  %v9087 = vunpack.c.l.b16 %v164
  %v9088 = vunpack.c.h.b16 %v164
  %v9089 = vunpack.c.l.b16 %v165
  %v9090 = vunpack.c.h.b16 %v165
  %v9091 = vunpack.c.l.b16 %v166
  %v9092 = vunpack.c.h.b16 %v166
  %v9093 = vunpack.c.l.b16 %v167
  %v9094 = vunpack.c.h.b16 %v167
  %v9095 = vunpack.c.l.b16 %v168
  %v9096 = vunpack.c.h.b16 %v168
  %v9097 = vunpack.c.l.b16 %v169
  %v9098 = vunpack.c.h.b16 %v169
  %v9099 = vunpack.c.l.b16 %v170
  %v9100 = vunpack.c.h.b16 %v170
  %v9101 = vunpack.c.l.b16 %v171
  %v9102 = vunpack.c.h.b16 %v171
  %v9103 = vunpack.c.l.b16 %v172
  %v9104 = vunpack.c.h.b16 %v172
  %v9105 = vunpack.c.l.b16 %v173
  %v9106 = vunpack.c.h.b16 %v173
  %v9107 = vunpack.c.l.b16 %v174
  %v9108 = vunpack.c.h.b16 %v174
  %v9109 = vunpack.c.l.b16 %v175
  %v9110 = vunpack.c.h.b16 %v175
  %v9111 = vunpack.c.l.b16 %v176
  %v9112 = vunpack.c.h.b16 %v176
  %v9113 = vunpack.c.l.b16 %v177
  %v9114 = vunpack.c.h.b16 %v177
  %v9115 = vunpack.c.l.b16 %v178
  %v9116 = vunpack.c.h.b16 %v178
  %v9117 = vunpack.c.l.b16 %v179
  %v9118 = vunpack.c.h.b16 %v179
  %v9119 = vunpack.c.l.b16 %v180
  %v9120 = vunpack.c.h.b16 %v180
  %v9121 = vunpack.c.l.b16 %v181
  %v9122 = vunpack.c.h.b16 %v181
  %v9123 = vpack.c.b16 %v8875, %v8867
  %v9124 = vpack.c.b16 %v8876, %v8868
  %v9125 = vpack.c.b16 %v8877, %v8869
  %v9126 = vpack.c.b16 %v8878, %v8870
  %v9127 = vpack.c.b16 %v8879, %v8871
  %v9128 = vpack.c.b16 %v8880, %v8872
  %v9129 = vpack.c.b16 %v8881, %v8873
  %v9130 = vpack.c.b16 %v8882, %v8874
  %v9131 = vpack.c.b16 %v8891, %v8883
  %v9132 = vpack.c.b16 %v8892, %v8884
  %v9133 = vpack.c.b16 %v8893, %v8885
  %v9134 = vpack.c.b16 %v8894, %v8886
  %v9135 = vpack.c.b16 %v8895, %v8887
  %v9136 = vpack.c.b16 %v8896, %v8888
  %v9137 = vpack.c.b16 %v8897, %v8889
  %v9138 = vpack.c.b16 %v8898, %v8890
  %v9139 = vpack.c.b16 %v8907, %v8899
  %v9140 = vpack.c.b16 %v8908, %v8900
  %v9141 = vpack.c.b16 %v8909, %v8901
  %v9142 = vpack.c.b16 %v8910, %v8902
  %v9143 = vpack.c.b16 %v8911, %v8903
  %v9144 = vpack.c.b16 %v8912, %v8904
  %v9145 = vpack.c.b16 %v8913, %v8905
  %v9146 = vpack.c.b16 %v8914, %v8906
  %v9147 = vpack.c.b16 %v8923, %v8915
  %v9148 = vpack.c.b16 %v8924, %v8916
  %v9149 = vpack.c.b16 %v8925, %v8917
  %v9150 = vpack.c.b16 %v8926, %v8918
  %v9151 = vpack.c.b16 %v8927, %v8919
  %v9152 = vpack.c.b16 %v8928, %v8920
  %v9153 = vpack.c.b16 %v8929, %v8921
  %v9154 = vpack.c.b16 %v8930, %v8922
  %v9155 = vpack.c.b16 %v8939, %v8931
  %v9156 = vpack.c.b16 %v8940, %v8932
  %v9157 = vpack.c.b16 %v8941, %v8933
  %v9158 = vpack.c.b16 %v8942, %v8934
  %v9159 = vpack.c.b16 %v8943, %v8935
  %v9160 = vpack.c.b16 %v8944, %v8936
  %v9161 = vpack.c.b16 %v8945, %v8937
  %v9162 = vpack.c.b16 %v8946, %v8938
  %v9163 = vpack.c.b16 %v8955, %v8947
  %v9164 = vpack.c.b16 %v8956, %v8948
  %v9165 = vpack.c.b16 %v8957, %v8949
  %v9166 = vpack.c.b16 %v8958, %v8950
  %v9167 = vpack.c.b16 %v8959, %v8951
  %v9168 = vpack.c.b16 %v8960, %v8952
  %v9169 = vpack.c.b16 %v8961, %v8953
  %v9170 = vpack.c.b16 %v8962, %v8954
  %v9171 = vpack.c.b16 %v8971, %v8963
  %v9172 = vpack.c.b16 %v8972, %v8964
  %v9173 = vpack.c.b16 %v8973, %v8965
  %v9174 = vpack.c.b16 %v8974, %v8966
  %v9175 = vpack.c.b16 %v8975, %v8967
  %v9176 = vpack.c.b16 %v8976, %v8968
  %v9177 = vpack.c.b16 %v8977, %v8969
  %v9178 = vpack.c.b16 %v8978, %v8970
  %v9179 = vpack.c.b16 %v8987, %v8979
  %v9180 = vpack.c.b16 %v8988, %v8980
  %v9181 = vpack.c.b16 %v8989, %v8981
  %v9182 = vpack.c.b16 %v8990, %v8982
  %v9183 = vpack.c.b16 %v8991, %v8983
  %v9184 = vpack.c.b16 %v8992, %v8984
  %v9185 = vpack.c.b16 %v8993, %v8985
  %v9186 = vpack.c.b16 %v8994, %v8986
  %v9187 = vpack.c.b16 %v9003, %v8995
  %v9188 = vpack.c.b16 %v9004, %v8996
  %v9189 = vpack.c.b16 %v9005, %v8997
  %v9190 = vpack.c.b16 %v9006, %v8998
  %v9191 = vpack.c.b16 %v9007, %v8999
  %v9192 = vpack.c.b16 %v9008, %v9000
  %v9193 = vpack.c.b16 %v9009, %v9001
  %v9194 = vpack.c.b16 %v9010, %v9002
  %v9195 = vpack.c.b16 %v9019, %v9011
  %v9196 = vpack.c.b16 %v9020, %v9012
  %v9197 = vpack.c.b16 %v9021, %v9013
  %v9198 = vpack.c.b16 %v9022, %v9014
  %v9199 = vpack.c.b16 %v9023, %v9015
  %v9200 = vpack.c.b16 %v9024, %v9016
  %v9201 = vpack.c.b16 %v9025, %v9017
  %v9202 = vpack.c.b16 %v9026, %v9018
  %v9203 = vpack.c.b16 %v9035, %v9027
  %v9204 = vpack.c.b16 %v9036, %v9028
  %v9205 = vpack.c.b16 %v9037, %v9029
  %v9206 = vpack.c.b16 %v9038, %v9030
  %v9207 = vpack.c.b16 %v9039, %v9031
  %v9208 = vpack.c.b16 %v9040, %v9032
  %v9209 = vpack.c.b16 %v9041, %v9033
  %v9210 = vpack.c.b16 %v9042, %v9034
  %v9211 = vpack.c.b16 %v9051, %v9043
  %v9212 = vpack.c.b16 %v9052, %v9044
  %v9213 = vpack.c.b16 %v9053, %v9045
  %v9214 = vpack.c.b16 %v9054, %v9046
  %v9215 = vpack.c.b16 %v9055, %v9047
  %v9216 = vpack.c.b16 %v9056, %v9048
  %v9217 = vpack.c.b16 %v9057, %v9049
  %v9218 = vpack.c.b16 %v9058, %v9050
  %v9219 = vpack.c.b16 %v9067, %v9059
  %v9220 = vpack.c.b16 %v9068, %v9060
  %v9221 = vpack.c.b16 %v9069, %v9061
  %v9222 = vpack.c.b16 %v9070, %v9062
  %v9223 = vpack.c.b16 %v9071, %v9063
  %v9224 = vpack.c.b16 %v9072, %v9064
  %v9225 = vpack.c.b16 %v9073, %v9065
  %v9226 = vpack.c.b16 %v9074, %v9066
  %v9227 = vpack.c.b16 %v9083, %v9075
  %v9228 = vpack.c.b16 %v9084, %v9076
  %v9229 = vpack.c.b16 %v9085, %v9077
  %v9230 = vpack.c.b16 %v9086, %v9078
  %v9231 = vpack.c.b16 %v9087, %v9079
  %v9232 = vpack.c.b16 %v9088, %v9080
  %v9233 = vpack.c.b16 %v9089, %v9081
  %v9234 = vpack.c.b16 %v9090, %v9082
  %v9235 = vpack.c.b16 %v9099, %v9091
  %v9236 = vpack.c.b16 %v9100, %v9092
  %v9237 = vpack.c.b16 %v9101, %v9093
  %v9238 = vpack.c.b16 %v9102, %v9094
  %v9239 = vpack.c.b16 %v9103, %v9095
  %v9240 = vpack.c.b16 %v9104, %v9096
  %v9241 = vpack.c.b16 %v9105, %v9097
  %v9242 = vpack.c.b16 %v9106, %v9098
  %v9243 = vpack.c.b16 %v9115, %v9107
  %v9244 = vpack.c.b16 %v9116, %v9108
  %v9245 = vpack.c.b16 %v9117, %v9109
  %v9246 = vpack.c.b16 %v9118, %v9110
  %v9247 = vpack.c.b16 %v9119, %v9111
  %v9248 = vpack.c.b16 %v9120, %v9112
  %v9249 = vpack.c.b16 %v9121, %v9113
  %v9250 = vpack.c.b16 %v9122, %v9114
  %9379 = vmatprep.subr.bf16.mxu0 %v9124
  %9380 = vmatpush1.bf16.msra.mxu0 %v9123
  %9381 = vmatprep.subr.bf16.mxu0 %v9132
  %9382 = vmatpush1.bf16.msra.mxu0 %v9131
  %9383 = vmatprep.subr.bf16.mxu0 %v9140
  %9384 = vmatpush1.bf16.msra.mxu0 %v9139
  %9385 = vmatprep.subr.bf16.mxu0 %v9148
  %9386 = vmatpush1.bf16.msra.mxu0 %v9147
  %9387 = vmatprep.subr.bf16.mxu0 %v9156
  %9388 = vmatpush1.bf16.msra.mxu0 %v9155
  %9389 = vmatprep.subr.bf16.mxu0 %v9164
  %9390 = vmatpush1.bf16.msra.mxu0 %v9163
  %9391 = vmatprep.subr.bf16.mxu0 %v9172
  %9392 = vmatpush1.bf16.msra.mxu0 %v9171
  %9393 = vmatprep.subr.bf16.mxu0 %v9180
  %9394 = vmatpush1.bf16.msra.mxu0 %v9179
  %9395 = vmatprep.subr.bf16.mxu0 %v9188
  %9396 = vmatpush1.bf16.msra.mxu0 %v9187
  %9397 = vmatprep.subr.bf16.mxu0 %v9196
  %9398 = vmatpush1.bf16.msra.mxu0 %v9195
  %9399 = vmatprep.subr.bf16.mxu0 %v9204
  %9400 = vmatpush1.bf16.msra.mxu0 %v9203
  %9401 = vmatprep.subr.bf16.mxu0 %v9212
  %9402 = vmatpush1.bf16.msra.mxu0 %v9211
  %9403 = vmatprep.subr.bf16.mxu0 %v9220
  %9404 = vmatpush1.bf16.msra.mxu0 %v9219
  %9405 = vmatprep.subr.bf16.mxu0 %v9228
  %9406 = vmatpush1.bf16.msra.mxu0 %v9227
  %9407 = vmatprep.subr.bf16.mxu0 %v9236
  %9408 = vmatpush1.bf16.msra.mxu0 %v9235
  %9409 = vmatprep.subr.bf16.mxu0 %v9244
  %9410 = vmatpush1.bf16.msra.mxu0 %v9243
  %9411 = vmatprep.mubr.bf16.mxu0 %v8736
  %9412 = vmatmul.mubr.bf16.gmra.mrb[0].mxu0 %v8729
  %v9413 = vpop.f32.mrb[0].mxu0
  %v9414 = vadd.f32 %v7601, %v9413
  %v9415 = vpop.f32.mrb[0].mxu0
  %v9416 = vadd.f32 %v7603, %v9415
  %v9417 = vpop.f32.mrb[0].mxu0
  %v9418 = vpop.f32.mrb[0].mxu0
  %9419 = vdwg.mxu0
  %9420 = vmatprep.subr.bf16.mxu0 %v9126
  %9421 = vmatpush1.bf16.msra.mxu0 %v9125
  %9422 = vmatprep.subr.bf16.mxu0 %v9134
  %9423 = vmatpush1.bf16.msra.mxu0 %v9133
  %9424 = vmatprep.subr.bf16.mxu0 %v9142
  %9425 = vmatpush1.bf16.msra.mxu0 %v9141
  %9426 = vmatprep.subr.bf16.mxu0 %v9150
  %9427 = vmatpush1.bf16.msra.mxu0 %v9149
  %9428 = vmatprep.subr.bf16.mxu0 %v9158
  %9429 = vmatpush1.bf16.msra.mxu0 %v9157
  %9430 = vmatprep.subr.bf16.mxu0 %v9166
  %9431 = vmatpush1.bf16.msra.mxu0 %v9165
  %9432 = vmatprep.subr.bf16.mxu0 %v9174
  %9433 = vmatpush1.bf16.msra.mxu0 %v9173
  %9434 = vmatprep.subr.bf16.mxu0 %v9182
  %9435 = vmatpush1.bf16.msra.mxu0 %v9181
  %9436 = vmatprep.subr.bf16.mxu0 %v9190
  %9437 = vmatpush1.bf16.msra.mxu0 %v9189
  %9438 = vmatprep.subr.bf16.mxu0 %v9198
  %9439 = vmatpush1.bf16.msra.mxu0 %v9197
  %9440 = vmatprep.subr.bf16.mxu0 %v9206
  %9441 = vmatpush1.bf16.msra.mxu0 %v9205
  %9442 = vmatprep.subr.bf16.mxu0 %v9214
  %9443 = vmatpush1.bf16.msra.mxu0 %v9213
  %9444 = vmatprep.subr.bf16.mxu0 %v9222
  %9445 = vmatpush1.bf16.msra.mxu0 %v9221
  %9446 = vmatprep.subr.bf16.mxu0 %v9230
  %9447 = vmatpush1.bf16.msra.mxu0 %v9229
  %9448 = vmatprep.subr.bf16.mxu0 %v9238
  %9449 = vmatpush1.bf16.msra.mxu0 %v9237
  %9450 = vmatprep.subr.bf16.mxu0 %v9246
  %9451 = vmatpush1.bf16.msra.mxu0 %v9245
  %9452 = vmatprep.mubr.bf16.mxu0 %v8736
  %9453 = vmatmul.mubr.bf16.gmra.mrb[0].mxu0 %v8729
  %v9454 = vpop.f32.mrb[0].mxu0
  %v9455 = vadd.f32 %v7970, %v9454
  %v9456 = vpop.f32.mrb[0].mxu0
  %v9457 = vadd.f32 %v7972, %v9456
  %v9458 = vpop.f32.mrb[0].mxu0
  %v9459 = vpop.f32.mrb[0].mxu0
  %9460 = vdwg.mxu0
  %9461 = vmatprep.subr.bf16.mxu0 %v9128
  %9462 = vmatpush1.bf16.msra.mxu0 %v9127
  %9463 = vmatprep.subr.bf16.mxu0 %v9136
  %9464 = vmatpush1.bf16.msra.mxu0 %v9135
  %9465 = vmatprep.subr.bf16.mxu0 %v9144
  %9466 = vmatpush1.bf16.msra.mxu0 %v9143
  %9467 = vmatprep.subr.bf16.mxu0 %v9152
  %9468 = vmatpush1.bf16.msra.mxu0 %v9151
  %9469 = vmatprep.subr.bf16.mxu0 %v9160
  %9470 = vmatpush1.bf16.msra.mxu0 %v9159
  %9471 = vmatprep.subr.bf16.mxu0 %v9168
  %9472 = vmatpush1.bf16.msra.mxu0 %v9167
  %9473 = vmatprep.subr.bf16.mxu0 %v9176
  %9474 = vmatpush1.bf16.msra.mxu0 %v9175
  %9475 = vmatprep.subr.bf16.mxu0 %v9184
  %9476 = vmatpush1.bf16.msra.mxu0 %v9183
  %9477 = vmatprep.subr.bf16.mxu0 %v9192
  %9478 = vmatpush1.bf16.msra.mxu0 %v9191
  %9479 = vmatprep.subr.bf16.mxu0 %v9200
  %9480 = vmatpush1.bf16.msra.mxu0 %v9199
  %9481 = vmatprep.subr.bf16.mxu0 %v9208
  %9482 = vmatpush1.bf16.msra.mxu0 %v9207
  %9483 = vmatprep.subr.bf16.mxu0 %v9216
  %9484 = vmatpush1.bf16.msra.mxu0 %v9215
  %9485 = vmatprep.subr.bf16.mxu0 %v9224
  %9486 = vmatpush1.bf16.msra.mxu0 %v9223
  %9487 = vmatprep.subr.bf16.mxu0 %v9232
  %9488 = vmatpush1.bf16.msra.mxu0 %v9231
  %9489 = vmatprep.subr.bf16.mxu0 %v9240
  %9490 = vmatpush1.bf16.msra.mxu0 %v9239
  %9491 = vmatprep.subr.bf16.mxu0 %v9248
  %9492 = vmatpush1.bf16.msra.mxu0 %v9247
  %9493 = vmatprep.mubr.bf16.mxu0 %v8736
  %9494 = vmatmul.mubr.bf16.gmra.mrb[0].mxu0 %v8729
  %v9495 = vpop.f32.mrb[0].mxu0
  %v9496 = vadd.f32 %v8339, %v9495
  %v9497 = vpop.f32.mrb[0].mxu0
  %v9498 = vadd.f32 %v8341, %v9497
  %v9499 = vpop.f32.mrb[0].mxu0
  %v9500 = vpop.f32.mrb[0].mxu0
  %9501 = vdwg.mxu0
  %9502 = vmatprep.subr.bf16.mxu0 %v9130
  %9503 = vmatpush1.bf16.msra.mxu0 %v9129
  %9504 = vmatprep.subr.bf16.mxu0 %v9138
  %9505 = vmatpush1.bf16.msra.mxu0 %v9137
  %9506 = vmatprep.subr.bf16.mxu0 %v9146
  %9507 = vmatpush1.bf16.msra.mxu0 %v9145
  %9508 = vmatprep.subr.bf16.mxu0 %v9154
  %9509 = vmatpush1.bf16.msra.mxu0 %v9153
  %9510 = vmatprep.subr.bf16.mxu0 %v9162
  %9511 = vmatpush1.bf16.msra.mxu0 %v9161
  %9512 = vmatprep.subr.bf16.mxu0 %v9170
  %9513 = vmatpush1.bf16.msra.mxu0 %v9169
  %9514 = vmatprep.subr.bf16.mxu0 %v9178
  %9515 = vmatpush1.bf16.msra.mxu0 %v9177
  %9516 = vmatprep.subr.bf16.mxu0 %v9186
  %9517 = vmatpush1.bf16.msra.mxu0 %v9185
  %9518 = vmatprep.subr.bf16.mxu0 %v9194
  %9519 = vmatpush1.bf16.msra.mxu0 %v9193
  %9520 = vmatprep.subr.bf16.mxu0 %v9202
  %9521 = vmatpush1.bf16.msra.mxu0 %v9201
  %9522 = vmatprep.subr.bf16.mxu0 %v9210
  %9523 = vmatpush1.bf16.msra.mxu0 %v9209
  %9524 = vmatprep.subr.bf16.mxu0 %v9218
  %9525 = vmatpush1.bf16.msra.mxu0 %v9217
  %9526 = vmatprep.subr.bf16.mxu0 %v9226
  %9527 = vmatpush1.bf16.msra.mxu0 %v9225
  %9528 = vmatprep.subr.bf16.mxu0 %v9234
  %9529 = vmatpush1.bf16.msra.mxu0 %v9233
  %9530 = vmatprep.subr.bf16.mxu0 %v9242
  %9531 = vmatpush1.bf16.msra.mxu0 %v9241
  %9532 = vmatprep.subr.bf16.mxu0 %v9250
  %9533 = vmatpush1.bf16.msra.mxu0 %v9249
  %9534 = vmatprep.mubr.bf16.mxu0 %v8736
  %9535 = vmatmul.mubr.bf16.gmra.mrb[0].mxu0 %v8729
  %v9536 = vpop.f32.mrb[0].mxu0
  %v9537 = vadd.f32 %v8708, %v9536
  %v9538 = vpop.f32.mrb[0].mxu0
  %v9539 = vadd.f32 %v8710, %v9538
  %v9540 = vpop.f32.mrb[0].mxu0
  %v9541 = vpop.f32.mrb[0].mxu0
  %9542 = vdwg.mxu0
  %v9543 = vld [vmem:[%s5] sm:$0xff]
  %v9545 = vlaneseq
  %v9546 = vshrl.u32 %v9545, 7
  %v9547 = vsub.s32 0, %v9546
  %v9548 = vrot.slane %v9543, %v9547
  %v9549 = vlaneseq
  %v9550 = vshrl.u32 %v9549, 7
  %v9551 = vsub.s32 1, %v9550
  %v9552 = vrot.slane %v9543, %v9551
  %v9553 = vlaneseq
  %v9554 = vshrl.u32 %v9553, 7
  %v9555 = vsub.s32 2, %v9554
  %v9556 = vrot.slane %v9543, %v9555
  %v9557 = vlaneseq
  %v9558 = vshrl.u32 %v9557, 7
  %v9559 = vsub.s32 3, %v9558
  %v9560 = vrot.slane %v9543, %v9559
  %v9561 = vlaneseq
  %v9562 = vshrl.u32 %v9561, 7
  %v9563 = vsub.s32 4, %v9562
  %v9564 = vrot.slane %v9543, %v9563
  %v9565 = vlaneseq
  %v9566 = vshrl.u32 %v9565, 7
  %v9567 = vsub.s32 5, %v9566
  %v9568 = vrot.slane %v9543, %v9567
  %v9569 = vlaneseq
  %v9570 = vshrl.u32 %v9569, 7
  %v9571 = vsub.s32 6, %v9570
  %v9572 = vrot.slane %v9543, %v9571
  %v9573 = vlaneseq
  %v9574 = vshrl.u32 %v9573, 7
  %v9575 = vsub.s32 7, %v9574
  %v9576 = vrot.slane %v9543, %v9575
  %v9585 = vadd.f32 %v9414, %v9548
  %v9586 = vadd.f32 %v9416, %v9552
  %v9587 = vadd.f32 %v9455, %v9556
  %v9588 = vadd.f32 %v9457, %v9560
  %v9589 = vadd.f32 %v9496, %v9564
  %v9590 = vadd.f32 %v9498, %v9568
  %v9591 = vadd.f32 %v9537, %v9572
  %v9592 = vadd.f32 %v9539, %v9576
  %v9593 = vmax.f32 %v9585, 0.0
  %v9594 = vmax.f32 %v9586, 0.0
  %v9595 = vmax.f32 %v9587, 0.0
  %v9596 = vmax.f32 %v9588, 0.0
  %v9597 = vmax.f32 %v9589, 0.0
  %v9598 = vmax.f32 %v9590, 0.0
  %v9599 = vmax.f32 %v9591, 0.0
  %v9600 = vmax.f32 %v9592, 0.0
  %v9601 = vpack.c.bf16 %v9593, %v9593
  %v9602 = vpack.c.bf16 %v9594, %v9594
  %v9603 = vpack.c.bf16 %v9595, %v9595
  %v9604 = vpack.c.bf16 %v9596, %v9596
  %v9605 = vpack.c.bf16 %v9597, %v9597
  %v9606 = vpack.c.bf16 %v9598, %v9598
  %v9607 = vpack.c.bf16 %v9599, %v9599
  %v9608 = vpack.c.bf16 %v9600, %v9600
  %v9609 = vld [vmem:[%s6] sm:$0xff]
  %v9610 = vld [vmem:[%s6 + $0x8] sm:$0xff]
  %v9611 = vld [vmem:[%s6 + $0x10] sm:$0xff]
  %v9612 = vld [vmem:[%s6 + $0x18] sm:$0xff]
  %v9613 = vld [vmem:[%s6 + $0x20] sm:$0xff]
  %v9614 = vld [vmem:[%s6 + $0x28] sm:$0xff]
  %v9615 = vld [vmem:[%s6 + $0x30] sm:$0xff]
  %v9616 = vld [vmem:[%s6 + $0x38] sm:$0xff]
  %v9617 = vld [vmem:[%s6 + $0x40] sm:$0xff]
  %v9618 = vld [vmem:[%s6 + $0x48] sm:$0xff]
  %v9619 = vld [vmem:[%s6 + $0x50] sm:$0xff]
  %v9620 = vld [vmem:[%s6 + $0x58] sm:$0xff]
  %v9621 = vld [vmem:[%s6 + $0x60] sm:$0xff]
  %v9622 = vld [vmem:[%s6 + $0x68] sm:$0xff]
  %v9623 = vld [vmem:[%s6 + $0x70] sm:$0xff]
  %v9624 = vld [vmem:[%s6 + $0x78] sm:$0xff]
  %v9625 = vld [vmem:[%s6 + $0x80] sm:$0xff]
  %v9626 = vld [vmem:[%s6 + $0x88] sm:$0xff]
  %v9627 = vld [vmem:[%s6 + $0x90] sm:$0xff]
  %v9628 = vld [vmem:[%s6 + $0x98] sm:$0xff]
  %v9629 = vld [vmem:[%s6 + $0xa0] sm:$0xff]
  %v9630 = vld [vmem:[%s6 + $0xa8] sm:$0xff]
  %v9631 = vld [vmem:[%s6 + $0xb0] sm:$0xff]
  %v9632 = vld [vmem:[%s6 + $0xb8] sm:$0xff]
  %v9633 = vld [vmem:[%s6 + $0xc0] sm:$0xff]
  %v9634 = vld [vmem:[%s6 + $0xc8] sm:$0xff]
  %v9635 = vld [vmem:[%s6 + $0xd0] sm:$0xff]
  %v9636 = vld [vmem:[%s6 + $0xd8] sm:$0xff]
  %v9637 = vld [vmem:[%s6 + $0xe0] sm:$0xff]
  %v9638 = vld [vmem:[%s6 + $0xe8] sm:$0xff]
  %v9639 = vld [vmem:[%s6 + $0xf0] sm:$0xff]
  %v9640 = vld [vmem:[%s6 + $0xf8] sm:$0xff]
  %v9641 = vld [vmem:[%s6 + $0x100] sm:$0xff]
  %v9642 = vld [vmem:[%s6 + $0x108] sm:$0xff]
  %v9643 = vld [vmem:[%s6 + $0x110] sm:$0xff]
  %v9644 = vld [vmem:[%s6 + $0x118] sm:$0xff]
  %v9645 = vld [vmem:[%s6 + $0x120] sm:$0xff]
  %v9646 = vld [vmem:[%s6 + $0x128] sm:$0xff]
  %v9647 = vld [vmem:[%s6 + $0x130] sm:$0xff]
  %v9648 = vld [vmem:[%s6 + $0x138] sm:$0xff]
  %v9649 = vld [vmem:[%s6 + $0x140] sm:$0xff]
  %v9650 = vld [vmem:[%s6 + $0x148] sm:$0xff]
  %v9651 = vld [vmem:[%s6 + $0x150] sm:$0xff]
  %v9652 = vld [vmem:[%s6 + $0x158] sm:$0xff]
  %v9653 = vld [vmem:[%s6 + $0x160] sm:$0xff]
  %v9654 = vld [vmem:[%s6 + $0x168] sm:$0xff]
  %v9655 = vld [vmem:[%s6 + $0x170] sm:$0xff]
  %v9656 = vld [vmem:[%s6 + $0x178] sm:$0xff]
  %v9657 = vld [vmem:[%s6 + $0x180] sm:$0xff]
  %v9658 = vld [vmem:[%s6 + $0x188] sm:$0xff]
  %v9659 = vld [vmem:[%s6 + $0x190] sm:$0xff]
  %v9660 = vld [vmem:[%s6 + $0x198] sm:$0xff]
  %v9661 = vld [vmem:[%s6 + $0x1a0] sm:$0xff]
  %v9662 = vld [vmem:[%s6 + $0x1a8] sm:$0xff]
  %v9663 = vld [vmem:[%s6 + $0x1b0] sm:$0xff]
  %v9664 = vld [vmem:[%s6 + $0x1b8] sm:$0xff]
  %v9665 = vld [vmem:[%s6 + $0x1c0] sm:$0xff]
  %v9666 = vld [vmem:[%s6 + $0x1c8] sm:$0xff]
  %v9667 = vld [vmem:[%s6 + $0x1d0] sm:$0xff]
  %v9668 = vld [vmem:[%s6 + $0x1d8] sm:$0xff]
  %v9669 = vld [vmem:[%s6 + $0x1e0] sm:$0xff]
  %v9670 = vld [vmem:[%s6 + $0x1e8] sm:$0xff]
  %v9671 = vld [vmem:[%s6 + $0x1f0] sm:$0xff]
  %v9672 = vld [vmem:[%s6 + $0x1f8] sm:$0xff]
  %v9673 = vld [vmem:[%s6 + $0x200] sm:$0xff]
  %v9674 = vld [vmem:[%s6 + $0x208] sm:$0xff]
  %v9675 = vld [vmem:[%s6 + $0x210] sm:$0xff]
  %v9676 = vld [vmem:[%s6 + $0x218] sm:$0xff]
  %v9677 = vld [vmem:[%s6 + $0x220] sm:$0xff]
  %v9678 = vld [vmem:[%s6 + $0x228] sm:$0xff]
  %v9679 = vld [vmem:[%s6 + $0x230] sm:$0xff]
  %v9680 = vld [vmem:[%s6 + $0x238] sm:$0xff]
  %v9681 = vld [vmem:[%s6 + $0x240] sm:$0xff]
  %v9682 = vld [vmem:[%s6 + $0x248] sm:$0xff]
  %v9683 = vld [vmem:[%s6 + $0x250] sm:$0xff]
  %v9684 = vld [vmem:[%s6 + $0x258] sm:$0xff]
  %v9685 = vld [vmem:[%s6 + $0x260] sm:$0xff]
  %v9686 = vld [vmem:[%s6 + $0x268] sm:$0xff]
  %v9687 = vld [vmem:[%s6 + $0x270] sm:$0xff]
  %v9688 = vld [vmem:[%s6 + $0x278] sm:$0xff]
  %v9689 = vld [vmem:[%s6 + $0x280] sm:$0xff]
  %v9690 = vld [vmem:[%s6 + $0x288] sm:$0xff]
  %v9691 = vld [vmem:[%s6 + $0x290] sm:$0xff]
  %v9692 = vld [vmem:[%s6 + $0x298] sm:$0xff]
  %v9693 = vld [vmem:[%s6 + $0x2a0] sm:$0xff]
  %v9694 = vld [vmem:[%s6 + $0x2a8] sm:$0xff]
  %v9695 = vld [vmem:[%s6 + $0x2b0] sm:$0xff]
  %v9696 = vld [vmem:[%s6 + $0x2b8] sm:$0xff]
  %v9697 = vld [vmem:[%s6 + $0x2c0] sm:$0xff]
  %v9698 = vld [vmem:[%s6 + $0x2c8] sm:$0xff]
  %v9699 = vld [vmem:[%s6 + $0x2d0] sm:$0xff]
  %v9700 = vld [vmem:[%s6 + $0x2d8] sm:$0xff]
  %v9701 = vld [vmem:[%s6 + $0x2e0] sm:$0xff]
  %v9702 = vld [vmem:[%s6 + $0x2e8] sm:$0xff]
  %v9703 = vld [vmem:[%s6 + $0x2f0] sm:$0xff]
  %v9704 = vld [vmem:[%s6 + $0x2f8] sm:$0xff]
  %v9705 = vld [vmem:[%s6 + $0x300] sm:$0xff]
  %v9706 = vld [vmem:[%s6 + $0x308] sm:$0xff]
  %v9707 = vld [vmem:[%s6 + $0x310] sm:$0xff]
  %v9708 = vld [vmem:[%s6 + $0x318] sm:$0xff]
  %v9709 = vld [vmem:[%s6 + $0x320] sm:$0xff]
  %v9710 = vld [vmem:[%s6 + $0x328] sm:$0xff]
  %v9711 = vld [vmem:[%s6 + $0x330] sm:$0xff]
  %v9712 = vld [vmem:[%s6 + $0x338] sm:$0xff]
  %v9713 = vld [vmem:[%s6 + $0x340] sm:$0xff]
  %v9714 = vld [vmem:[%s6 + $0x348] sm:$0xff]
  %v9715 = vld [vmem:[%s6 + $0x350] sm:$0xff]
  %v9716 = vld [vmem:[%s6 + $0x358] sm:$0xff]
  %v9717 = vld [vmem:[%s6 + $0x360] sm:$0xff]
  %v9718 = vld [vmem:[%s6 + $0x368] sm:$0xff]
  %v9719 = vld [vmem:[%s6 + $0x370] sm:$0xff]
  %v9720 = vld [vmem:[%s6 + $0x378] sm:$0xff]
  %v9721 = vld [vmem:[%s6 + $0x380] sm:$0xff]
  %v9722 = vld [vmem:[%s6 + $0x388] sm:$0xff]
  %v9723 = vld [vmem:[%s6 + $0x390] sm:$0xff]
  %v9724 = vld [vmem:[%s6 + $0x398] sm:$0xff]
  %v9725 = vld [vmem:[%s6 + $0x3a0] sm:$0xff]
  %v9726 = vld [vmem:[%s6 + $0x3a8] sm:$0xff]
  %v9727 = vld [vmem:[%s6 + $0x3b0] sm:$0xff]
  %v9728 = vld [vmem:[%s6 + $0x3b8] sm:$0xff]
  %v9729 = vld [vmem:[%s6 + $0x3c0] sm:$0xff]
  %v9730 = vld [vmem:[%s6 + $0x3c8] sm:$0xff]
  %v9731 = vld [vmem:[%s6 + $0x3d0] sm:$0xff]
  %v9732 = vld [vmem:[%s6 + $0x3d8] sm:$0xff]
  %v9733 = vld [vmem:[%s6 + $0x3e0] sm:$0xff]
  %v9734 = vld [vmem:[%s6 + $0x3e8] sm:$0xff]
  %v9735 = vld [vmem:[%s6 + $0x3f0] sm:$0xff]
  %v9736 = vld [vmem:[%s6 + $0x3f8] sm:$0xff]
  %v9737 = vld [vmem:[%s6 + $0x400] sm:$0xff]
  %v9738 = vld [vmem:[%s6 + $0x408] sm:$0xff]
  %v9739 = vld [vmem:[%s6 + $0x410] sm:$0xff]
  %v9740 = vld [vmem:[%s6 + $0x418] sm:$0xff]
  %v9741 = vld [vmem:[%s6 + $0x420] sm:$0xff]
  %v9742 = vld [vmem:[%s6 + $0x428] sm:$0xff]
  %v9743 = vld [vmem:[%s6 + $0x430] sm:$0xff]
  %v9744 = vld [vmem:[%s6 + $0x438] sm:$0xff]
  %v9745 = vld [vmem:[%s6 + $0x440] sm:$0xff]
  %v9746 = vld [vmem:[%s6 + $0x448] sm:$0xff]
  %v9747 = vld [vmem:[%s6 + $0x450] sm:$0xff]
  %v9748 = vld [vmem:[%s6 + $0x458] sm:$0xff]
  %v9749 = vld [vmem:[%s6 + $0x460] sm:$0xff]
  %v9750 = vld [vmem:[%s6 + $0x468] sm:$0xff]
  %v9751 = vld [vmem:[%s6 + $0x470] sm:$0xff]
  %v9752 = vld [vmem:[%s6 + $0x478] sm:$0xff]
  %v9753 = vld [vmem:[%s6 + $0x480] sm:$0xff]
  %v9754 = vld [vmem:[%s6 + $0x488] sm:$0xff]
  %v9755 = vld [vmem:[%s6 + $0x490] sm:$0xff]
  %v9756 = vld [vmem:[%s6 + $0x498] sm:$0xff]
  %v9757 = vld [vmem:[%s6 + $0x4a0] sm:$0xff]
  %v9758 = vld [vmem:[%s6 + $0x4a8] sm:$0xff]
  %v9759 = vld [vmem:[%s6 + $0x4b0] sm:$0xff]
  %v9760 = vld [vmem:[%s6 + $0x4b8] sm:$0xff]
  %v9761 = vld [vmem:[%s6 + $0x4c0] sm:$0xff]
  %v9762 = vld [vmem:[%s6 + $0x4c8] sm:$0xff]
  %v9763 = vld [vmem:[%s6 + $0x4d0] sm:$0xff]
  %v9764 = vld [vmem:[%s6 + $0x4d8] sm:$0xff]
  %v9765 = vld [vmem:[%s6 + $0x4e0] sm:$0xff]
  %v9766 = vld [vmem:[%s6 + $0x4e8] sm:$0xff]
  %v9767 = vld [vmem:[%s6 + $0x4f0] sm:$0xff]
  %v9768 = vld [vmem:[%s6 + $0x4f8] sm:$0xff]
  %v9769 = vld [vmem:[%s6 + $0x500] sm:$0xff]
  %v9770 = vld [vmem:[%s6 + $0x508] sm:$0xff]
  %v9771 = vld [vmem:[%s6 + $0x510] sm:$0xff]
  %v9772 = vld [vmem:[%s6 + $0x518] sm:$0xff]
  %v9773 = vld [vmem:[%s6 + $0x520] sm:$0xff]
  %v9774 = vld [vmem:[%s6 + $0x528] sm:$0xff]
  %v9775 = vld [vmem:[%s6 + $0x530] sm:$0xff]
  %v9776 = vld [vmem:[%s6 + $0x538] sm:$0xff]
  %v9777 = vld [vmem:[%s6 + $0x540] sm:$0xff]
  %v9778 = vld [vmem:[%s6 + $0x548] sm:$0xff]
  %v9779 = vld [vmem:[%s6 + $0x550] sm:$0xff]
  %v9780 = vld [vmem:[%s6 + $0x558] sm:$0xff]
  %v9781 = vld [vmem:[%s6 + $0x560] sm:$0xff]
  %v9782 = vld [vmem:[%s6 + $0x568] sm:$0xff]
  %v9783 = vld [vmem:[%s6 + $0x570] sm:$0xff]
  %v9784 = vld [vmem:[%s6 + $0x578] sm:$0xff]
  %v9785 = vld [vmem:[%s6 + $0x580] sm:$0xff]
  %v9786 = vld [vmem:[%s6 + $0x588] sm:$0xff]
  %v9787 = vld [vmem:[%s6 + $0x590] sm:$0xff]
  %v9788 = vld [vmem:[%s6 + $0x598] sm:$0xff]
  %v9789 = vld [vmem:[%s6 + $0x5a0] sm:$0xff]
  %v9790 = vld [vmem:[%s6 + $0x5a8] sm:$0xff]
  %v9791 = vld [vmem:[%s6 + $0x5b0] sm:$0xff]
  %v9792 = vld [vmem:[%s6 + $0x5b8] sm:$0xff]
  %v9793 = vld [vmem:[%s6 + $0x5c0] sm:$0xff]
  %v9794 = vld [vmem:[%s6 + $0x5c8] sm:$0xff]
  %v9795 = vld [vmem:[%s6 + $0x5d0] sm:$0xff]
  %v9796 = vld [vmem:[%s6 + $0x5d8] sm:$0xff]
  %v9797 = vld [vmem:[%s6 + $0x5e0] sm:$0xff]
  %v9798 = vld [vmem:[%s6 + $0x5e8] sm:$0xff]
  %v9799 = vld [vmem:[%s6 + $0x5f0] sm:$0xff]
  %v9800 = vld [vmem:[%s6 + $0x5f8] sm:$0xff]
  %v9801 = vld [vmem:[%s6 + $0x600] sm:$0xff]
  %v9802 = vld [vmem:[%s6 + $0x608] sm:$0xff]
  %v9803 = vld [vmem:[%s6 + $0x610] sm:$0xff]
  %v9804 = vld [vmem:[%s6 + $0x618] sm:$0xff]
  %v9805 = vld [vmem:[%s6 + $0x620] sm:$0xff]
  %v9806 = vld [vmem:[%s6 + $0x628] sm:$0xff]
  %v9807 = vld [vmem:[%s6 + $0x630] sm:$0xff]
  %v9808 = vld [vmem:[%s6 + $0x638] sm:$0xff]
  %v9809 = vld [vmem:[%s6 + $0x640] sm:$0xff]
  %v9810 = vld [vmem:[%s6 + $0x648] sm:$0xff]
  %v9811 = vld [vmem:[%s6 + $0x650] sm:$0xff]
  %v9812 = vld [vmem:[%s6 + $0x658] sm:$0xff]
  %v9813 = vld [vmem:[%s6 + $0x660] sm:$0xff]
  %v9814 = vld [vmem:[%s6 + $0x668] sm:$0xff]
  %v9815 = vld [vmem:[%s6 + $0x670] sm:$0xff]
  %v9816 = vld [vmem:[%s6 + $0x678] sm:$0xff]
  %v9817 = vld [vmem:[%s6 + $0x680] sm:$0xff]
  %v9818 = vld [vmem:[%s6 + $0x688] sm:$0xff]
  %v9819 = vld [vmem:[%s6 + $0x690] sm:$0xff]
  %v9820 = vld [vmem:[%s6 + $0x698] sm:$0xff]
  %v9821 = vld [vmem:[%s6 + $0x6a0] sm:$0xff]
  %v9822 = vld [vmem:[%s6 + $0x6a8] sm:$0xff]
  %v9823 = vld [vmem:[%s6 + $0x6b0] sm:$0xff]
  %v9824 = vld [vmem:[%s6 + $0x6b8] sm:$0xff]
  %v9825 = vld [vmem:[%s6 + $0x6c0] sm:$0xff]
  %v9826 = vld [vmem:[%s6 + $0x6c8] sm:$0xff]
  %v9827 = vld [vmem:[%s6 + $0x6d0] sm:$0xff]
  %v9828 = vld [vmem:[%s6 + $0x6d8] sm:$0xff]
  %v9829 = vld [vmem:[%s6 + $0x6e0] sm:$0xff]
  %v9830 = vld [vmem:[%s6 + $0x6e8] sm:$0xff]
  %v9831 = vld [vmem:[%s6 + $0x6f0] sm:$0xff]
  %v9832 = vld [vmem:[%s6 + $0x6f8] sm:$0xff]
  %v9833 = vld [vmem:[%s6 + $0x700] sm:$0xff]
  %v9834 = vld [vmem:[%s6 + $0x708] sm:$0xff]
  %v9835 = vld [vmem:[%s6 + $0x710] sm:$0xff]
  %v9836 = vld [vmem:[%s6 + $0x718] sm:$0xff]
  %v9837 = vld [vmem:[%s6 + $0x720] sm:$0xff]
  %v9838 = vld [vmem:[%s6 + $0x728] sm:$0xff]
  %v9839 = vld [vmem:[%s6 + $0x730] sm:$0xff]
  %v9840 = vld [vmem:[%s6 + $0x738] sm:$0xff]
  %v9841 = vld [vmem:[%s6 + $0x740] sm:$0xff]
  %v9842 = vld [vmem:[%s6 + $0x748] sm:$0xff]
  %v9843 = vld [vmem:[%s6 + $0x750] sm:$0xff]
  %v9844 = vld [vmem:[%s6 + $0x758] sm:$0xff]
  %v9845 = vld [vmem:[%s6 + $0x760] sm:$0xff]
  %v9846 = vld [vmem:[%s6 + $0x768] sm:$0xff]
  %v9847 = vld [vmem:[%s6 + $0x770] sm:$0xff]
  %v9848 = vld [vmem:[%s6 + $0x778] sm:$0xff]
  %v9849 = vld [vmem:[%s6 + $0x780] sm:$0xff]
  %v9850 = vld [vmem:[%s6 + $0x788] sm:$0xff]
  %v9851 = vld [vmem:[%s6 + $0x790] sm:$0xff]
  %v9852 = vld [vmem:[%s6 + $0x798] sm:$0xff]
  %v9853 = vld [vmem:[%s6 + $0x7a0] sm:$0xff]
  %v9854 = vld [vmem:[%s6 + $0x7a8] sm:$0xff]
  %v9855 = vld [vmem:[%s6 + $0x7b0] sm:$0xff]
  %v9856 = vld [vmem:[%s6 + $0x7b8] sm:$0xff]
  %v9857 = vld [vmem:[%s6 + $0x7c0] sm:$0xff]
  %v9858 = vld [vmem:[%s6 + $0x7c8] sm:$0xff]
  %v9859 = vld [vmem:[%s6 + $0x7d0] sm:$0xff]
  %v9860 = vld [vmem:[%s6 + $0x7d8] sm:$0xff]
  %v9861 = vld [vmem:[%s6 + $0x7e0] sm:$0xff]
  %v9862 = vld [vmem:[%s6 + $0x7e8] sm:$0xff]
  %v9863 = vld [vmem:[%s6 + $0x7f0] sm:$0xff]
  %v9864 = vld [vmem:[%s6 + $0x7f8] sm:$0xff]
  %v9865 = vld [vmem:[%s7] sm:$0xf]
  %v9867 = vlaneseq
  %v9868 = vshrl.u32 %v9867, 7
  %v9869 = vsub.s32 0, %v9868
  %v9870 = vrot.slane %v9865, %v9869
  %v9871 = vlaneseq
  %v9872 = vshrl.u32 %v9871, 7
  %v9873 = vsub.s32 1, %v9872
  %v9874 = vrot.slane %v9865, %v9873
  %v9875 = vlaneseq
  %v9876 = vshrl.u32 %v9875, 7
  %v9877 = vsub.s32 2, %v9876
  %v9878 = vrot.slane %v9865, %v9877
  %v9879 = vlaneseq
  %v9880 = vshrl.u32 %v9879, 7
  %v9881 = vsub.s32 3, %v9880
  %v9882 = vrot.slane %v9865, %v9881
  %v10143 = vunpack.c.l.b16 %v9609
  %v10144 = vunpack.c.h.b16 %v9609
  %v10145 = vunpack.c.l.b16 %v9610
  %v10146 = vunpack.c.h.b16 %v9610
  %v10147 = vunpack.c.l.b16 %v9611
  %v10148 = vunpack.c.h.b16 %v9611
  %v10149 = vunpack.c.l.b16 %v9612
  %v10150 = vunpack.c.h.b16 %v9612
  %v10151 = vunpack.c.l.b16 %v9613
  %v10152 = vunpack.c.h.b16 %v9613
  %v10153 = vunpack.c.l.b16 %v9614
  %v10154 = vunpack.c.h.b16 %v9614
  %v10155 = vunpack.c.l.b16 %v9615
  %v10156 = vunpack.c.h.b16 %v9615
  %v10157 = vunpack.c.l.b16 %v9616
  %v10158 = vunpack.c.h.b16 %v9616
  %v10159 = vunpack.c.l.b16 %v9617
  %v10160 = vunpack.c.h.b16 %v9617
  %v10161 = vunpack.c.l.b16 %v9618
  %v10162 = vunpack.c.h.b16 %v9618
  %v10163 = vunpack.c.l.b16 %v9619
  %v10164 = vunpack.c.h.b16 %v9619
  %v10165 = vunpack.c.l.b16 %v9620
  %v10166 = vunpack.c.h.b16 %v9620
  %v10167 = vunpack.c.l.b16 %v9621
  %v10168 = vunpack.c.h.b16 %v9621
  %v10169 = vunpack.c.l.b16 %v9622
  %v10170 = vunpack.c.h.b16 %v9622
  %v10171 = vunpack.c.l.b16 %v9623
  %v10172 = vunpack.c.h.b16 %v9623
  %v10173 = vunpack.c.l.b16 %v9624
  %v10174 = vunpack.c.h.b16 %v9624
  %v10175 = vunpack.c.l.b16 %v9625
  %v10176 = vunpack.c.h.b16 %v9625
  %v10177 = vunpack.c.l.b16 %v9626
  %v10178 = vunpack.c.h.b16 %v9626
  %v10179 = vunpack.c.l.b16 %v9627
  %v10180 = vunpack.c.h.b16 %v9627
  %v10181 = vunpack.c.l.b16 %v9628
  %v10182 = vunpack.c.h.b16 %v9628
  %v10183 = vunpack.c.l.b16 %v9629
  %v10184 = vunpack.c.h.b16 %v9629
  %v10185 = vunpack.c.l.b16 %v9630
  %v10186 = vunpack.c.h.b16 %v9630
  %v10187 = vunpack.c.l.b16 %v9631
  %v10188 = vunpack.c.h.b16 %v9631
  %v10189 = vunpack.c.l.b16 %v9632
  %v10190 = vunpack.c.h.b16 %v9632
  %v10191 = vunpack.c.l.b16 %v9633
  %v10192 = vunpack.c.h.b16 %v9633
  %v10193 = vunpack.c.l.b16 %v9634
  %v10194 = vunpack.c.h.b16 %v9634
  %v10195 = vunpack.c.l.b16 %v9635
  %v10196 = vunpack.c.h.b16 %v9635
  %v10197 = vunpack.c.l.b16 %v9636
  %v10198 = vunpack.c.h.b16 %v9636
  %v10199 = vunpack.c.l.b16 %v9637
  %v10200 = vunpack.c.h.b16 %v9637
  %v10201 = vunpack.c.l.b16 %v9638
  %v10202 = vunpack.c.h.b16 %v9638
  %v10203 = vunpack.c.l.b16 %v9639
  %v10204 = vunpack.c.h.b16 %v9639
  %v10205 = vunpack.c.l.b16 %v9640
  %v10206 = vunpack.c.h.b16 %v9640
  %v10207 = vunpack.c.l.b16 %v9641
  %v10208 = vunpack.c.h.b16 %v9641
  %v10209 = vunpack.c.l.b16 %v9642
  %v10210 = vunpack.c.h.b16 %v9642
  %v10211 = vunpack.c.l.b16 %v9643
  %v10212 = vunpack.c.h.b16 %v9643
  %v10213 = vunpack.c.l.b16 %v9644
  %v10214 = vunpack.c.h.b16 %v9644
  %v10215 = vunpack.c.l.b16 %v9645
  %v10216 = vunpack.c.h.b16 %v9645
  %v10217 = vunpack.c.l.b16 %v9646
  %v10218 = vunpack.c.h.b16 %v9646
  %v10219 = vunpack.c.l.b16 %v9647
  %v10220 = vunpack.c.h.b16 %v9647
  %v10221 = vunpack.c.l.b16 %v9648
  %v10222 = vunpack.c.h.b16 %v9648
  %v10223 = vunpack.c.l.b16 %v9649
  %v10224 = vunpack.c.h.b16 %v9649
  %v10225 = vunpack.c.l.b16 %v9650
  %v10226 = vunpack.c.h.b16 %v9650
  %v10227 = vunpack.c.l.b16 %v9651
  %v10228 = vunpack.c.h.b16 %v9651
  %v10229 = vunpack.c.l.b16 %v9652
  %v10230 = vunpack.c.h.b16 %v9652
  %v10231 = vunpack.c.l.b16 %v9653
  %v10232 = vunpack.c.h.b16 %v9653
  %v10233 = vunpack.c.l.b16 %v9654
  %v10234 = vunpack.c.h.b16 %v9654
  %v10235 = vunpack.c.l.b16 %v9655
  %v10236 = vunpack.c.h.b16 %v9655
  %v10237 = vunpack.c.l.b16 %v9656
  %v10238 = vunpack.c.h.b16 %v9656
  %v10239 = vunpack.c.l.b16 %v9657
  %v10240 = vunpack.c.h.b16 %v9657
  %v10241 = vunpack.c.l.b16 %v9658
  %v10242 = vunpack.c.h.b16 %v9658
  %v10243 = vunpack.c.l.b16 %v9659
  %v10244 = vunpack.c.h.b16 %v9659
  %v10245 = vunpack.c.l.b16 %v9660
  %v10246 = vunpack.c.h.b16 %v9660
  %v10247 = vunpack.c.l.b16 %v9661
  %v10248 = vunpack.c.h.b16 %v9661
  %v10249 = vunpack.c.l.b16 %v9662
  %v10250 = vunpack.c.h.b16 %v9662
  %v10251 = vunpack.c.l.b16 %v9663
  %v10252 = vunpack.c.h.b16 %v9663
  %v10253 = vunpack.c.l.b16 %v9664
  %v10254 = vunpack.c.h.b16 %v9664
  %v10255 = vunpack.c.l.b16 %v9665
  %v10256 = vunpack.c.h.b16 %v9665
  %v10257 = vunpack.c.l.b16 %v9666
  %v10258 = vunpack.c.h.b16 %v9666
  %v10259 = vunpack.c.l.b16 %v9667
  %v10260 = vunpack.c.h.b16 %v9667
  %v10261 = vunpack.c.l.b16 %v9668
  %v10262 = vunpack.c.h.b16 %v9668
  %v10263 = vunpack.c.l.b16 %v9669
  %v10264 = vunpack.c.h.b16 %v9669
  %v10265 = vunpack.c.l.b16 %v9670
  %v10266 = vunpack.c.h.b16 %v9670
  %v10267 = vunpack.c.l.b16 %v9671
  %v10268 = vunpack.c.h.b16 %v9671
  %v10269 = vunpack.c.l.b16 %v9672
  %v10270 = vunpack.c.h.b16 %v9672
  %v10271 = vunpack.c.l.b16 %v9673
  %v10272 = vunpack.c.h.b16 %v9673
  %v10273 = vunpack.c.l.b16 %v9674
  %v10274 = vunpack.c.h.b16 %v9674
  %v10275 = vunpack.c.l.b16 %v9675
  %v10276 = vunpack.c.h.b16 %v9675
  %v10277 = vunpack.c.l.b16 %v9676
  %v10278 = vunpack.c.h.b16 %v9676
  %v10279 = vunpack.c.l.b16 %v9677
  %v10280 = vunpack.c.h.b16 %v9677
  %v10281 = vunpack.c.l.b16 %v9678
  %v10282 = vunpack.c.h.b16 %v9678
  %v10283 = vunpack.c.l.b16 %v9679
  %v10284 = vunpack.c.h.b16 %v9679
  %v10285 = vunpack.c.l.b16 %v9680
  %v10286 = vunpack.c.h.b16 %v9680
  %v10287 = vunpack.c.l.b16 %v9681
  %v10288 = vunpack.c.h.b16 %v9681
  %v10289 = vunpack.c.l.b16 %v9682
  %v10290 = vunpack.c.h.b16 %v9682
  %v10291 = vunpack.c.l.b16 %v9683
  %v10292 = vunpack.c.h.b16 %v9683
  %v10293 = vunpack.c.l.b16 %v9684
  %v10294 = vunpack.c.h.b16 %v9684
  %v10295 = vunpack.c.l.b16 %v9685
  %v10296 = vunpack.c.h.b16 %v9685
  %v10297 = vunpack.c.l.b16 %v9686
  %v10298 = vunpack.c.h.b16 %v9686
  %v10299 = vunpack.c.l.b16 %v9687
  %v10300 = vunpack.c.h.b16 %v9687
  %v10301 = vunpack.c.l.b16 %v9688
  %v10302 = vunpack.c.h.b16 %v9688
  %v10303 = vunpack.c.l.b16 %v9689
  %v10304 = vunpack.c.h.b16 %v9689
  %v10305 = vunpack.c.l.b16 %v9690
  %v10306 = vunpack.c.h.b16 %v9690
  %v10307 = vunpack.c.l.b16 %v9691
  %v10308 = vunpack.c.h.b16 %v9691
  %v10309 = vunpack.c.l.b16 %v9692
  %v10310 = vunpack.c.h.b16 %v9692
  %v10311 = vunpack.c.l.b16 %v9693
  %v10312 = vunpack.c.h.b16 %v9693
  %v10313 = vunpack.c.l.b16 %v9694
  %v10314 = vunpack.c.h.b16 %v9694
  %v10315 = vunpack.c.l.b16 %v9695
  %v10316 = vunpack.c.h.b16 %v9695
  %v10317 = vunpack.c.l.b16 %v9696
  %v10318 = vunpack.c.h.b16 %v9696
  %v10319 = vunpack.c.l.b16 %v9697
  %v10320 = vunpack.c.h.b16 %v9697
  %v10321 = vunpack.c.l.b16 %v9698
  %v10322 = vunpack.c.h.b16 %v9698
  %v10323 = vunpack.c.l.b16 %v9699
  %v10324 = vunpack.c.h.b16 %v9699
  %v10325 = vunpack.c.l.b16 %v9700
  %v10326 = vunpack.c.h.b16 %v9700
  %v10327 = vunpack.c.l.b16 %v9701
  %v10328 = vunpack.c.h.b16 %v9701
  %v10329 = vunpack.c.l.b16 %v9702
  %v10330 = vunpack.c.h.b16 %v9702
  %v10331 = vunpack.c.l.b16 %v9703
  %v10332 = vunpack.c.h.b16 %v9703
  %v10333 = vunpack.c.l.b16 %v9704
  %v10334 = vunpack.c.h.b16 %v9704
  %v10335 = vunpack.c.l.b16 %v9705
  %v10336 = vunpack.c.h.b16 %v9705
  %v10337 = vunpack.c.l.b16 %v9706
  %v10338 = vunpack.c.h.b16 %v9706
  %v10339 = vunpack.c.l.b16 %v9707
  %v10340 = vunpack.c.h.b16 %v9707
  %v10341 = vunpack.c.l.b16 %v9708
  %v10342 = vunpack.c.h.b16 %v9708
  %v10343 = vunpack.c.l.b16 %v9709
  %v10344 = vunpack.c.h.b16 %v9709
  %v10345 = vunpack.c.l.b16 %v9710
  %v10346 = vunpack.c.h.b16 %v9710
  %v10347 = vunpack.c.l.b16 %v9711
  %v10348 = vunpack.c.h.b16 %v9711
  %v10349 = vunpack.c.l.b16 %v9712
  %v10350 = vunpack.c.h.b16 %v9712
  %v10351 = vunpack.c.l.b16 %v9713
  %v10352 = vunpack.c.h.b16 %v9713
  %v10353 = vunpack.c.l.b16 %v9714
  %v10354 = vunpack.c.h.b16 %v9714
  %v10355 = vunpack.c.l.b16 %v9715
  %v10356 = vunpack.c.h.b16 %v9715
  %v10357 = vunpack.c.l.b16 %v9716
  %v10358 = vunpack.c.h.b16 %v9716
  %v10359 = vunpack.c.l.b16 %v9717
  %v10360 = vunpack.c.h.b16 %v9717
  %v10361 = vunpack.c.l.b16 %v9718
  %v10362 = vunpack.c.h.b16 %v9718
  %v10363 = vunpack.c.l.b16 %v9719
  %v10364 = vunpack.c.h.b16 %v9719
  %v10365 = vunpack.c.l.b16 %v9720
  %v10366 = vunpack.c.h.b16 %v9720
  %v10367 = vunpack.c.l.b16 %v9721
  %v10368 = vunpack.c.h.b16 %v9721
  %v10369 = vunpack.c.l.b16 %v9722
  %v10370 = vunpack.c.h.b16 %v9722
  %v10371 = vunpack.c.l.b16 %v9723
  %v10372 = vunpack.c.h.b16 %v9723
  %v10373 = vunpack.c.l.b16 %v9724
  %v10374 = vunpack.c.h.b16 %v9724
  %v10375 = vunpack.c.l.b16 %v9725
  %v10376 = vunpack.c.h.b16 %v9725
  %v10377 = vunpack.c.l.b16 %v9726
  %v10378 = vunpack.c.h.b16 %v9726
  %v10379 = vunpack.c.l.b16 %v9727
  %v10380 = vunpack.c.h.b16 %v9727
  %v10381 = vunpack.c.l.b16 %v9728
  %v10382 = vunpack.c.h.b16 %v9728
  %v10383 = vunpack.c.l.b16 %v9729
  %v10384 = vunpack.c.h.b16 %v9729
  %v10385 = vunpack.c.l.b16 %v9730
  %v10386 = vunpack.c.h.b16 %v9730
  %v10387 = vunpack.c.l.b16 %v9731
  %v10388 = vunpack.c.h.b16 %v9731
  %v10389 = vunpack.c.l.b16 %v9732
  %v10390 = vunpack.c.h.b16 %v9732
  %v10391 = vunpack.c.l.b16 %v9733
  %v10392 = vunpack.c.h.b16 %v9733
  %v10393 = vunpack.c.l.b16 %v9734
  %v10394 = vunpack.c.h.b16 %v9734
  %v10395 = vunpack.c.l.b16 %v9735
  %v10396 = vunpack.c.h.b16 %v9735
  %v10397 = vunpack.c.l.b16 %v9736
  %v10398 = vunpack.c.h.b16 %v9736
  %v10399 = vunpack.c.l.b16 %v9737
  %v10400 = vunpack.c.h.b16 %v9737
  %v10401 = vunpack.c.l.b16 %v9738
  %v10402 = vunpack.c.h.b16 %v9738
  %v10403 = vunpack.c.l.b16 %v9739
  %v10404 = vunpack.c.h.b16 %v9739
  %v10405 = vunpack.c.l.b16 %v9740
  %v10406 = vunpack.c.h.b16 %v9740
  %v10407 = vunpack.c.l.b16 %v9741
  %v10408 = vunpack.c.h.b16 %v9741
  %v10409 = vunpack.c.l.b16 %v9742
  %v10410 = vunpack.c.h.b16 %v9742
  %v10411 = vunpack.c.l.b16 %v9743
  %v10412 = vunpack.c.h.b16 %v9743
  %v10413 = vunpack.c.l.b16 %v9744
  %v10414 = vunpack.c.h.b16 %v9744
  %v10415 = vunpack.c.l.b16 %v9745
  %v10416 = vunpack.c.h.b16 %v9745
  %v10417 = vunpack.c.l.b16 %v9746
  %v10418 = vunpack.c.h.b16 %v9746
  %v10419 = vunpack.c.l.b16 %v9747
  %v10420 = vunpack.c.h.b16 %v9747
  %v10421 = vunpack.c.l.b16 %v9748
  %v10422 = vunpack.c.h.b16 %v9748
  %v10423 = vunpack.c.l.b16 %v9749
  %v10424 = vunpack.c.h.b16 %v9749
  %v10425 = vunpack.c.l.b16 %v9750
  %v10426 = vunpack.c.h.b16 %v9750
  %v10427 = vunpack.c.l.b16 %v9751
  %v10428 = vunpack.c.h.b16 %v9751
  %v10429 = vunpack.c.l.b16 %v9752
  %v10430 = vunpack.c.h.b16 %v9752
  %v10431 = vunpack.c.l.b16 %v9753
  %v10432 = vunpack.c.h.b16 %v9753
  %v10433 = vunpack.c.l.b16 %v9754
  %v10434 = vunpack.c.h.b16 %v9754
  %v10435 = vunpack.c.l.b16 %v9755
  %v10436 = vunpack.c.h.b16 %v9755
  %v10437 = vunpack.c.l.b16 %v9756
  %v10438 = vunpack.c.h.b16 %v9756
  %v10439 = vunpack.c.l.b16 %v9757
  %v10440 = vunpack.c.h.b16 %v9757
  %v10441 = vunpack.c.l.b16 %v9758
  %v10442 = vunpack.c.h.b16 %v9758
  %v10443 = vunpack.c.l.b16 %v9759
  %v10444 = vunpack.c.h.b16 %v9759
  %v10445 = vunpack.c.l.b16 %v9760
  %v10446 = vunpack.c.h.b16 %v9760
  %v10447 = vunpack.c.l.b16 %v9761
  %v10448 = vunpack.c.h.b16 %v9761
  %v10449 = vunpack.c.l.b16 %v9762
  %v10450 = vunpack.c.h.b16 %v9762
  %v10451 = vunpack.c.l.b16 %v9763
  %v10452 = vunpack.c.h.b16 %v9763
  %v10453 = vunpack.c.l.b16 %v9764
  %v10454 = vunpack.c.h.b16 %v9764
  %v10455 = vunpack.c.l.b16 %v9765
  %v10456 = vunpack.c.h.b16 %v9765
  %v10457 = vunpack.c.l.b16 %v9766
  %v10458 = vunpack.c.h.b16 %v9766
  %v10459 = vunpack.c.l.b16 %v9767
  %v10460 = vunpack.c.h.b16 %v9767
  %v10461 = vunpack.c.l.b16 %v9768
  %v10462 = vunpack.c.h.b16 %v9768
  %v10463 = vunpack.c.l.b16 %v9769
  %v10464 = vunpack.c.h.b16 %v9769
  %v10465 = vunpack.c.l.b16 %v9770
  %v10466 = vunpack.c.h.b16 %v9770
  %v10467 = vunpack.c.l.b16 %v9771
  %v10468 = vunpack.c.h.b16 %v9771
  %v10469 = vunpack.c.l.b16 %v9772
  %v10470 = vunpack.c.h.b16 %v9772
  %v10471 = vunpack.c.l.b16 %v9773
  %v10472 = vunpack.c.h.b16 %v9773
  %v10473 = vunpack.c.l.b16 %v9774
  %v10474 = vunpack.c.h.b16 %v9774
  %v10475 = vunpack.c.l.b16 %v9775
  %v10476 = vunpack.c.h.b16 %v9775
  %v10477 = vunpack.c.l.b16 %v9776
  %v10478 = vunpack.c.h.b16 %v9776
  %v10479 = vunpack.c.l.b16 %v9777
  %v10480 = vunpack.c.h.b16 %v9777
  %v10481 = vunpack.c.l.b16 %v9778
  %v10482 = vunpack.c.h.b16 %v9778
  %v10483 = vunpack.c.l.b16 %v9779
  %v10484 = vunpack.c.h.b16 %v9779
  %v10485 = vunpack.c.l.b16 %v9780
  %v10486 = vunpack.c.h.b16 %v9780
  %v10487 = vunpack.c.l.b16 %v9781
  %v10488 = vunpack.c.h.b16 %v9781
  %v10489 = vunpack.c.l.b16 %v9782
  %v10490 = vunpack.c.h.b16 %v9782
  %v10491 = vunpack.c.l.b16 %v9783
  %v10492 = vunpack.c.h.b16 %v9783
  %v10493 = vunpack.c.l.b16 %v9784
  %v10494 = vunpack.c.h.b16 %v9784
  %v10495 = vunpack.c.l.b16 %v9785
  %v10496 = vunpack.c.h.b16 %v9785
  %v10497 = vunpack.c.l.b16 %v9786
  %v10498 = vunpack.c.h.b16 %v9786
  %v10499 = vunpack.c.l.b16 %v9787
  %v10500 = vunpack.c.h.b16 %v9787
  %v10501 = vunpack.c.l.b16 %v9788
  %v10502 = vunpack.c.h.b16 %v9788
  %v10503 = vunpack.c.l.b16 %v9789
  %v10504 = vunpack.c.h.b16 %v9789
  %v10505 = vunpack.c.l.b16 %v9790
  %v10506 = vunpack.c.h.b16 %v9790
  %v10507 = vunpack.c.l.b16 %v9791
  %v10508 = vunpack.c.h.b16 %v9791
  %v10509 = vunpack.c.l.b16 %v9792
  %v10510 = vunpack.c.h.b16 %v9792
  %v10511 = vunpack.c.l.b16 %v9793
  %v10512 = vunpack.c.h.b16 %v9793
  %v10513 = vunpack.c.l.b16 %v9794
  %v10514 = vunpack.c.h.b16 %v9794
  %v10515 = vunpack.c.l.b16 %v9795
  %v10516 = vunpack.c.h.b16 %v9795
  %v10517 = vunpack.c.l.b16 %v9796
  %v10518 = vunpack.c.h.b16 %v9796
  %v10519 = vunpack.c.l.b16 %v9797
  %v10520 = vunpack.c.h.b16 %v9797
  %v10521 = vunpack.c.l.b16 %v9798
  %v10522 = vunpack.c.h.b16 %v9798
  %v10523 = vunpack.c.l.b16 %v9799
  %v10524 = vunpack.c.h.b16 %v9799
  %v10525 = vunpack.c.l.b16 %v9800
  %v10526 = vunpack.c.h.b16 %v9800
  %v10527 = vunpack.c.l.b16 %v9801
  %v10528 = vunpack.c.h.b16 %v9801
  %v10529 = vunpack.c.l.b16 %v9802
  %v10530 = vunpack.c.h.b16 %v9802
  %v10531 = vunpack.c.l.b16 %v9803
  %v10532 = vunpack.c.h.b16 %v9803
  %v10533 = vunpack.c.l.b16 %v9804
  %v10534 = vunpack.c.h.b16 %v9804
  %v10535 = vunpack.c.l.b16 %v9805
  %v10536 = vunpack.c.h.b16 %v9805
  %v10537 = vunpack.c.l.b16 %v9806
  %v10538 = vunpack.c.h.b16 %v9806
  %v10539 = vunpack.c.l.b16 %v9807
  %v10540 = vunpack.c.h.b16 %v9807
  %v10541 = vunpack.c.l.b16 %v9808
  %v10542 = vunpack.c.h.b16 %v9808
  %v10543 = vunpack.c.l.b16 %v9809
  %v10544 = vunpack.c.h.b16 %v9809
  %v10545 = vunpack.c.l.b16 %v9810
  %v10546 = vunpack.c.h.b16 %v9810
  %v10547 = vunpack.c.l.b16 %v9811
  %v10548 = vunpack.c.h.b16 %v9811
  %v10549 = vunpack.c.l.b16 %v9812
  %v10550 = vunpack.c.h.b16 %v9812
  %v10551 = vunpack.c.l.b16 %v9813
  %v10552 = vunpack.c.h.b16 %v9813
  %v10553 = vunpack.c.l.b16 %v9814
  %v10554 = vunpack.c.h.b16 %v9814
  %v10555 = vunpack.c.l.b16 %v9815
  %v10556 = vunpack.c.h.b16 %v9815
  %v10557 = vunpack.c.l.b16 %v9816
  %v10558 = vunpack.c.h.b16 %v9816
  %v10559 = vunpack.c.l.b16 %v9817
  %v10560 = vunpack.c.h.b16 %v9817
  %v10561 = vunpack.c.l.b16 %v9818
  %v10562 = vunpack.c.h.b16 %v9818
  %v10563 = vunpack.c.l.b16 %v9819
  %v10564 = vunpack.c.h.b16 %v9819
  %v10565 = vunpack.c.l.b16 %v9820
  %v10566 = vunpack.c.h.b16 %v9820
  %v10567 = vunpack.c.l.b16 %v9821
  %v10568 = vunpack.c.h.b16 %v9821
  %v10569 = vunpack.c.l.b16 %v9822
  %v10570 = vunpack.c.h.b16 %v9822
  %v10571 = vunpack.c.l.b16 %v9823
  %v10572 = vunpack.c.h.b16 %v9823
  %v10573 = vunpack.c.l.b16 %v9824
  %v10574 = vunpack.c.h.b16 %v9824
  %v10575 = vunpack.c.l.b16 %v9825
  %v10576 = vunpack.c.h.b16 %v9825
  %v10577 = vunpack.c.l.b16 %v9826
  %v10578 = vunpack.c.h.b16 %v9826
  %v10579 = vunpack.c.l.b16 %v9827
  %v10580 = vunpack.c.h.b16 %v9827
  %v10581 = vunpack.c.l.b16 %v9828
  %v10582 = vunpack.c.h.b16 %v9828
  %v10583 = vunpack.c.l.b16 %v9829
  %v10584 = vunpack.c.h.b16 %v9829
  %v10585 = vunpack.c.l.b16 %v9830
  %v10586 = vunpack.c.h.b16 %v9830
  %v10587 = vunpack.c.l.b16 %v9831
  %v10588 = vunpack.c.h.b16 %v9831
  %v10589 = vunpack.c.l.b16 %v9832
  %v10590 = vunpack.c.h.b16 %v9832
  %v10591 = vunpack.c.l.b16 %v9833
  %v10592 = vunpack.c.h.b16 %v9833
  %v10593 = vunpack.c.l.b16 %v9834
  %v10594 = vunpack.c.h.b16 %v9834
  %v10595 = vunpack.c.l.b16 %v9835
  %v10596 = vunpack.c.h.b16 %v9835
  %v10597 = vunpack.c.l.b16 %v9836
  %v10598 = vunpack.c.h.b16 %v9836
  %v10599 = vunpack.c.l.b16 %v9837
  %v10600 = vunpack.c.h.b16 %v9837
  %v10601 = vunpack.c.l.b16 %v9838
  %v10602 = vunpack.c.h.b16 %v9838
  %v10603 = vunpack.c.l.b16 %v9839
  %v10604 = vunpack.c.h.b16 %v9839
  %v10605 = vunpack.c.l.b16 %v9840
  %v10606 = vunpack.c.h.b16 %v9840
  %v10607 = vunpack.c.l.b16 %v9841
  %v10608 = vunpack.c.h.b16 %v9841
  %v10609 = vunpack.c.l.b16 %v9842
  %v10610 = vunpack.c.h.b16 %v9842
  %v10611 = vunpack.c.l.b16 %v9843
  %v10612 = vunpack.c.h.b16 %v9843
  %v10613 = vunpack.c.l.b16 %v9844
  %v10614 = vunpack.c.h.b16 %v9844
  %v10615 = vunpack.c.l.b16 %v9845
  %v10616 = vunpack.c.h.b16 %v9845
  %v10617 = vunpack.c.l.b16 %v9846
  %v10618 = vunpack.c.h.b16 %v9846
  %v10619 = vunpack.c.l.b16 %v9847
  %v10620 = vunpack.c.h.b16 %v9847
  %v10621 = vunpack.c.l.b16 %v9848
  %v10622 = vunpack.c.h.b16 %v9848
  %v10623 = vunpack.c.l.b16 %v9849
  %v10624 = vunpack.c.h.b16 %v9849
  %v10625 = vunpack.c.l.b16 %v9850
  %v10626 = vunpack.c.h.b16 %v9850
  %v10627 = vunpack.c.l.b16 %v9851
  %v10628 = vunpack.c.h.b16 %v9851
  %v10629 = vunpack.c.l.b16 %v9852
  %v10630 = vunpack.c.h.b16 %v9852
  %v10631 = vunpack.c.l.b16 %v9853
  %v10632 = vunpack.c.h.b16 %v9853
  %v10633 = vunpack.c.l.b16 %v9854
  %v10634 = vunpack.c.h.b16 %v9854
  %v10635 = vunpack.c.l.b16 %v9855
  %v10636 = vunpack.c.h.b16 %v9855
  %v10637 = vunpack.c.l.b16 %v9856
  %v10638 = vunpack.c.h.b16 %v9856
  %v10639 = vunpack.c.l.b16 %v9857
  %v10640 = vunpack.c.h.b16 %v9857
  %v10641 = vunpack.c.l.b16 %v9858
  %v10642 = vunpack.c.h.b16 %v9858
  %v10643 = vunpack.c.l.b16 %v9859
  %v10644 = vunpack.c.h.b16 %v9859
  %v10645 = vunpack.c.l.b16 %v9860
  %v10646 = vunpack.c.h.b16 %v9860
  %v10647 = vunpack.c.l.b16 %v9861
  %v10648 = vunpack.c.h.b16 %v9861
  %v10649 = vunpack.c.l.b16 %v9862
  %v10650 = vunpack.c.h.b16 %v9862
  %v10651 = vunpack.c.l.b16 %v9863
  %v10652 = vunpack.c.h.b16 %v9863
  %v10653 = vunpack.c.l.b16 %v9864
  %v10654 = vunpack.c.h.b16 %v9864
  %v10655 = vpack.c.b16 %v10147, %v10143
  %v10656 = vpack.c.b16 %v10148, %v10144
  %v10657 = vpack.c.b16 %v10149, %v10145
  %v10658 = vpack.c.b16 %v10150, %v10146
  %v10659 = vpack.c.b16 %v10155, %v10151
  %v10660 = vpack.c.b16 %v10156, %v10152
  %v10661 = vpack.c.b16 %v10157, %v10153
  %v10662 = vpack.c.b16 %v10158, %v10154
  %v10663 = vpack.c.b16 %v10163, %v10159
  %v10664 = vpack.c.b16 %v10164, %v10160
  %v10665 = vpack.c.b16 %v10165, %v10161
  %v10666 = vpack.c.b16 %v10166, %v10162
  %v10667 = vpack.c.b16 %v10171, %v10167
  %v10668 = vpack.c.b16 %v10172, %v10168
  %v10669 = vpack.c.b16 %v10173, %v10169
  %v10670 = vpack.c.b16 %v10174, %v10170
  %v10671 = vpack.c.b16 %v10179, %v10175
  %v10672 = vpack.c.b16 %v10180, %v10176
  %v10673 = vpack.c.b16 %v10181, %v10177
  %v10674 = vpack.c.b16 %v10182, %v10178
  %v10675 = vpack.c.b16 %v10187, %v10183
  %v10676 = vpack.c.b16 %v10188, %v10184
  %v10677 = vpack.c.b16 %v10189, %v10185
  %v10678 = vpack.c.b16 %v10190, %v10186
  %v10679 = vpack.c.b16 %v10195, %v10191
  %v10680 = vpack.c.b16 %v10196, %v10192
  %v10681 = vpack.c.b16 %v10197, %v10193
  %v10682 = vpack.c.b16 %v10198, %v10194
  %v10683 = vpack.c.b16 %v10203, %v10199
  %v10684 = vpack.c.b16 %v10204, %v10200
  %v10685 = vpack.c.b16 %v10205, %v10201
  %v10686 = vpack.c.b16 %v10206, %v10202
  %v10687 = vpack.c.b16 %v10211, %v10207
  %v10688 = vpack.c.b16 %v10212, %v10208
  %v10689 = vpack.c.b16 %v10213, %v10209
  %v10690 = vpack.c.b16 %v10214, %v10210
  %v10691 = vpack.c.b16 %v10219, %v10215
  %v10692 = vpack.c.b16 %v10220, %v10216
  %v10693 = vpack.c.b16 %v10221, %v10217
  %v10694 = vpack.c.b16 %v10222, %v10218
  %v10695 = vpack.c.b16 %v10227, %v10223
  %v10696 = vpack.c.b16 %v10228, %v10224
  %v10697 = vpack.c.b16 %v10229, %v10225
  %v10698 = vpack.c.b16 %v10230, %v10226
  %v10699 = vpack.c.b16 %v10235, %v10231
  %v10700 = vpack.c.b16 %v10236, %v10232
  %v10701 = vpack.c.b16 %v10237, %v10233
  %v10702 = vpack.c.b16 %v10238, %v10234
  %v10703 = vpack.c.b16 %v10243, %v10239
  %v10704 = vpack.c.b16 %v10244, %v10240
  %v10705 = vpack.c.b16 %v10245, %v10241
  %v10706 = vpack.c.b16 %v10246, %v10242
  %v10707 = vpack.c.b16 %v10251, %v10247
  %v10708 = vpack.c.b16 %v10252, %v10248
  %v10709 = vpack.c.b16 %v10253, %v10249
  %v10710 = vpack.c.b16 %v10254, %v10250
  %v10711 = vpack.c.b16 %v10259, %v10255
  %v10712 = vpack.c.b16 %v10260, %v10256
  %v10713 = vpack.c.b16 %v10261, %v10257
  %v10714 = vpack.c.b16 %v10262, %v10258
  %v10715 = vpack.c.b16 %v10267, %v10263
  %v10716 = vpack.c.b16 %v10268, %v10264
  %v10717 = vpack.c.b16 %v10269, %v10265
  %v10718 = vpack.c.b16 %v10270, %v10266
  %v10719 = vpack.c.b16 %v10275, %v10271
  %v10720 = vpack.c.b16 %v10276, %v10272
  %v10721 = vpack.c.b16 %v10277, %v10273
  %v10722 = vpack.c.b16 %v10278, %v10274
  %v10723 = vpack.c.b16 %v10283, %v10279
  %v10724 = vpack.c.b16 %v10284, %v10280
  %v10725 = vpack.c.b16 %v10285, %v10281
  %v10726 = vpack.c.b16 %v10286, %v10282
  %v10727 = vpack.c.b16 %v10291, %v10287
  %v10728 = vpack.c.b16 %v10292, %v10288
  %v10729 = vpack.c.b16 %v10293, %v10289
  %v10730 = vpack.c.b16 %v10294, %v10290
  %v10731 = vpack.c.b16 %v10299, %v10295
  %v10732 = vpack.c.b16 %v10300, %v10296
  %v10733 = vpack.c.b16 %v10301, %v10297
  %v10734 = vpack.c.b16 %v10302, %v10298
  %v10735 = vpack.c.b16 %v10307, %v10303
  %v10736 = vpack.c.b16 %v10308, %v10304
  %v10737 = vpack.c.b16 %v10309, %v10305
  %v10738 = vpack.c.b16 %v10310, %v10306
  %v10739 = vpack.c.b16 %v10315, %v10311
  %v10740 = vpack.c.b16 %v10316, %v10312
  %v10741 = vpack.c.b16 %v10317, %v10313
  %v10742 = vpack.c.b16 %v10318, %v10314
  %v10743 = vpack.c.b16 %v10323, %v10319
  %v10744 = vpack.c.b16 %v10324, %v10320
  %v10745 = vpack.c.b16 %v10325, %v10321
  %v10746 = vpack.c.b16 %v10326, %v10322
  %v10747 = vpack.c.b16 %v10331, %v10327
  %v10748 = vpack.c.b16 %v10332, %v10328
  %v10749 = vpack.c.b16 %v10333, %v10329
  %v10750 = vpack.c.b16 %v10334, %v10330
  %v10751 = vpack.c.b16 %v10339, %v10335
  %v10752 = vpack.c.b16 %v10340, %v10336
  %v10753 = vpack.c.b16 %v10341, %v10337
  %v10754 = vpack.c.b16 %v10342, %v10338
  %v10755 = vpack.c.b16 %v10347, %v10343
  %v10756 = vpack.c.b16 %v10348, %v10344
  %v10757 = vpack.c.b16 %v10349, %v10345
  %v10758 = vpack.c.b16 %v10350, %v10346
  %v10759 = vpack.c.b16 %v10355, %v10351
  %v10760 = vpack.c.b16 %v10356, %v10352
  %v10761 = vpack.c.b16 %v10357, %v10353
  %v10762 = vpack.c.b16 %v10358, %v10354
  %v10763 = vpack.c.b16 %v10363, %v10359
  %v10764 = vpack.c.b16 %v10364, %v10360
  %v10765 = vpack.c.b16 %v10365, %v10361
  %v10766 = vpack.c.b16 %v10366, %v10362
  %v10767 = vpack.c.b16 %v10371, %v10367
  %v10768 = vpack.c.b16 %v10372, %v10368
  %v10769 = vpack.c.b16 %v10373, %v10369
  %v10770 = vpack.c.b16 %v10374, %v10370
  %v10771 = vpack.c.b16 %v10379, %v10375
  %v10772 = vpack.c.b16 %v10380, %v10376
  %v10773 = vpack.c.b16 %v10381, %v10377
  %v10774 = vpack.c.b16 %v10382, %v10378
  %v10775 = vpack.c.b16 %v10387, %v10383
  %v10776 = vpack.c.b16 %v10388, %v10384
  %v10777 = vpack.c.b16 %v10389, %v10385
  %v10778 = vpack.c.b16 %v10390, %v10386
  %v10779 = vpack.c.b16 %v10395, %v10391
  %v10780 = vpack.c.b16 %v10396, %v10392
  %v10781 = vpack.c.b16 %v10397, %v10393
  %v10782 = vpack.c.b16 %v10398, %v10394
  %v10783 = vpack.c.b16 %v10403, %v10399
  %v10784 = vpack.c.b16 %v10404, %v10400
  %v10785 = vpack.c.b16 %v10405, %v10401
  %v10786 = vpack.c.b16 %v10406, %v10402
  %v10787 = vpack.c.b16 %v10411, %v10407
  %v10788 = vpack.c.b16 %v10412, %v10408
  %v10789 = vpack.c.b16 %v10413, %v10409
  %v10790 = vpack.c.b16 %v10414, %v10410
  %v10791 = vpack.c.b16 %v10419, %v10415
  %v10792 = vpack.c.b16 %v10420, %v10416
  %v10793 = vpack.c.b16 %v10421, %v10417
  %v10794 = vpack.c.b16 %v10422, %v10418
  %v10795 = vpack.c.b16 %v10427, %v10423
  %v10796 = vpack.c.b16 %v10428, %v10424
  %v10797 = vpack.c.b16 %v10429, %v10425
  %v10798 = vpack.c.b16 %v10430, %v10426
  %v10799 = vpack.c.b16 %v10435, %v10431
  %v10800 = vpack.c.b16 %v10436, %v10432
  %v10801 = vpack.c.b16 %v10437, %v10433
  %v10802 = vpack.c.b16 %v10438, %v10434
  %v10803 = vpack.c.b16 %v10443, %v10439
  %v10804 = vpack.c.b16 %v10444, %v10440
  %v10805 = vpack.c.b16 %v10445, %v10441
  %v10806 = vpack.c.b16 %v10446, %v10442
  %v10807 = vpack.c.b16 %v10451, %v10447
  %v10808 = vpack.c.b16 %v10452, %v10448
  %v10809 = vpack.c.b16 %v10453, %v10449
  %v10810 = vpack.c.b16 %v10454, %v10450
  %v10811 = vpack.c.b16 %v10459, %v10455
  %v10812 = vpack.c.b16 %v10460, %v10456
  %v10813 = vpack.c.b16 %v10461, %v10457
  %v10814 = vpack.c.b16 %v10462, %v10458
  %v10815 = vpack.c.b16 %v10467, %v10463
  %v10816 = vpack.c.b16 %v10468, %v10464
  %v10817 = vpack.c.b16 %v10469, %v10465
  %v10818 = vpack.c.b16 %v10470, %v10466
  %v10819 = vpack.c.b16 %v10475, %v10471
  %v10820 = vpack.c.b16 %v10476, %v10472
  %v10821 = vpack.c.b16 %v10477, %v10473
  %v10822 = vpack.c.b16 %v10478, %v10474
  %v10823 = vpack.c.b16 %v10483, %v10479
  %v10824 = vpack.c.b16 %v10484, %v10480
  %v10825 = vpack.c.b16 %v10485, %v10481
  %v10826 = vpack.c.b16 %v10486, %v10482
  %v10827 = vpack.c.b16 %v10491, %v10487
  %v10828 = vpack.c.b16 %v10492, %v10488
  %v10829 = vpack.c.b16 %v10493, %v10489
  %v10830 = vpack.c.b16 %v10494, %v10490
  %v10831 = vpack.c.b16 %v10499, %v10495
  %v10832 = vpack.c.b16 %v10500, %v10496
  %v10833 = vpack.c.b16 %v10501, %v10497
  %v10834 = vpack.c.b16 %v10502, %v10498
  %v10835 = vpack.c.b16 %v10507, %v10503
  %v10836 = vpack.c.b16 %v10508, %v10504
  %v10837 = vpack.c.b16 %v10509, %v10505
  %v10838 = vpack.c.b16 %v10510, %v10506
  %v10839 = vpack.c.b16 %v10515, %v10511
  %v10840 = vpack.c.b16 %v10516, %v10512
  %v10841 = vpack.c.b16 %v10517, %v10513
  %v10842 = vpack.c.b16 %v10518, %v10514
  %v10843 = vpack.c.b16 %v10523, %v10519
  %v10844 = vpack.c.b16 %v10524, %v10520
  %v10845 = vpack.c.b16 %v10525, %v10521
  %v10846 = vpack.c.b16 %v10526, %v10522
  %v10847 = vpack.c.b16 %v10531, %v10527
  %v10848 = vpack.c.b16 %v10532, %v10528
  %v10849 = vpack.c.b16 %v10533, %v10529
  %v10850 = vpack.c.b16 %v10534, %v10530
  %v10851 = vpack.c.b16 %v10539, %v10535
  %v10852 = vpack.c.b16 %v10540, %v10536
  %v10853 = vpack.c.b16 %v10541, %v10537
  %v10854 = vpack.c.b16 %v10542, %v10538
  %v10855 = vpack.c.b16 %v10547, %v10543
  %v10856 = vpack.c.b16 %v10548, %v10544
  %v10857 = vpack.c.b16 %v10549, %v10545
  %v10858 = vpack.c.b16 %v10550, %v10546
  %v10859 = vpack.c.b16 %v10555, %v10551
  %v10860 = vpack.c.b16 %v10556, %v10552
  %v10861 = vpack.c.b16 %v10557, %v10553
  %v10862 = vpack.c.b16 %v10558, %v10554
  %v10863 = vpack.c.b16 %v10563, %v10559
  %v10864 = vpack.c.b16 %v10564, %v10560
  %v10865 = vpack.c.b16 %v10565, %v10561
  %v10866 = vpack.c.b16 %v10566, %v10562
  %v10867 = vpack.c.b16 %v10571, %v10567
  %v10868 = vpack.c.b16 %v10572, %v10568
  %v10869 = vpack.c.b16 %v10573, %v10569
  %v10870 = vpack.c.b16 %v10574, %v10570
  %v10871 = vpack.c.b16 %v10579, %v10575
  %v10872 = vpack.c.b16 %v10580, %v10576
  %v10873 = vpack.c.b16 %v10581, %v10577
  %v10874 = vpack.c.b16 %v10582, %v10578
  %v10875 = vpack.c.b16 %v10587, %v10583
  %v10876 = vpack.c.b16 %v10588, %v10584
  %v10877 = vpack.c.b16 %v10589, %v10585
  %v10878 = vpack.c.b16 %v10590, %v10586
  %v10879 = vpack.c.b16 %v10595, %v10591
  %v10880 = vpack.c.b16 %v10596, %v10592
  %v10881 = vpack.c.b16 %v10597, %v10593
  %v10882 = vpack.c.b16 %v10598, %v10594
  %v10883 = vpack.c.b16 %v10603, %v10599
  %v10884 = vpack.c.b16 %v10604, %v10600
  %v10885 = vpack.c.b16 %v10605, %v10601
  %v10886 = vpack.c.b16 %v10606, %v10602
  %v10887 = vpack.c.b16 %v10611, %v10607
  %v10888 = vpack.c.b16 %v10612, %v10608
  %v10889 = vpack.c.b16 %v10613, %v10609
  %v10890 = vpack.c.b16 %v10614, %v10610
  %v10891 = vpack.c.b16 %v10619, %v10615
  %v10892 = vpack.c.b16 %v10620, %v10616
  %v10893 = vpack.c.b16 %v10621, %v10617
  %v10894 = vpack.c.b16 %v10622, %v10618
  %v10895 = vpack.c.b16 %v10627, %v10623
  %v10896 = vpack.c.b16 %v10628, %v10624
  %v10897 = vpack.c.b16 %v10629, %v10625
  %v10898 = vpack.c.b16 %v10630, %v10626
  %v10899 = vpack.c.b16 %v10635, %v10631
  %v10900 = vpack.c.b16 %v10636, %v10632
  %v10901 = vpack.c.b16 %v10637, %v10633
  %v10902 = vpack.c.b16 %v10638, %v10634
  %v10903 = vpack.c.b16 %v10643, %v10639
  %v10904 = vpack.c.b16 %v10644, %v10640
  %v10905 = vpack.c.b16 %v10645, %v10641
  %v10906 = vpack.c.b16 %v10646, %v10642
  %v10907 = vpack.c.b16 %v10651, %v10647
  %v10908 = vpack.c.b16 %v10652, %v10648
  %v10909 = vpack.c.b16 %v10653, %v10649
  %v10910 = vpack.c.b16 %v10654, %v10650
  %11167 = vmatprep.subr.bf16.mxu0 %v10656
  %11168 = vmatpush1.bf16.msra.mxu0 %v10655
  %11169 = vmatprep.subr.bf16.mxu0 %v10660
  %11170 = vmatpush1.bf16.msra.mxu0 %v10659
  %11171 = vmatprep.subr.bf16.mxu0 %v10664
  %11172 = vmatpush1.bf16.msra.mxu0 %v10663
  %11173 = vmatprep.subr.bf16.mxu0 %v10668
  %11174 = vmatpush1.bf16.msra.mxu0 %v10667
  %11175 = vmatprep.subr.bf16.mxu0 %v10672
  %11176 = vmatpush1.bf16.msra.mxu0 %v10671
  %11177 = vmatprep.subr.bf16.mxu0 %v10676
  %11178 = vmatpush1.bf16.msra.mxu0 %v10675
  %11179 = vmatprep.subr.bf16.mxu0 %v10680
  %11180 = vmatpush1.bf16.msra.mxu0 %v10679
  %11181 = vmatprep.subr.bf16.mxu0 %v10684
  %11182 = vmatpush1.bf16.msra.mxu0 %v10683
  %11183 = vmatprep.subr.bf16.mxu0 %v10688
  %11184 = vmatpush1.bf16.msra.mxu0 %v10687
  %11185 = vmatprep.subr.bf16.mxu0 %v10692
  %11186 = vmatpush1.bf16.msra.mxu0 %v10691
  %11187 = vmatprep.subr.bf16.mxu0 %v10696
  %11188 = vmatpush1.bf16.msra.mxu0 %v10695
  %11189 = vmatprep.subr.bf16.mxu0 %v10700
  %11190 = vmatpush1.bf16.msra.mxu0 %v10699
  %11191 = vmatprep.subr.bf16.mxu0 %v10704
  %11192 = vmatpush1.bf16.msra.mxu0 %v10703
  %11193 = vmatprep.subr.bf16.mxu0 %v10708
  %11194 = vmatpush1.bf16.msra.mxu0 %v10707
  %11195 = vmatprep.subr.bf16.mxu0 %v10712
  %11196 = vmatpush1.bf16.msra.mxu0 %v10711
  %11197 = vmatprep.subr.bf16.mxu0 %v10716
  %11198 = vmatpush1.bf16.msra.mxu0 %v10715
  %11199 = vmatprep.mubr.bf16.mxu0 %v9602
  %11200 = vmatmul.mubr.bf16.gmra.mrb[0].mxu0 %v9601
  %v11201 = vpop.f32.mrb[0].mxu0
  %v11202 = vadd.f32 %v9870, %v11201
  %v11203 = vpop.f32.mrb[0].mxu0
  %v11204 = vadd.f32 %v9874, %v11203
  %v11205 = vpop.f32.mrb[0].mxu0
  %v11206 = vpop.f32.mrb[0].mxu0
  %11207 = vdwg.mxu0
  %11208 = vmatprep.subr.bf16.mxu0 %v10720
  %11209 = vmatpush1.bf16.msra.mxu0 %v10719
  %11210 = vmatprep.subr.bf16.mxu0 %v10724
  %11211 = vmatpush1.bf16.msra.mxu0 %v10723
  %11212 = vmatprep.subr.bf16.mxu0 %v10728
  %11213 = vmatpush1.bf16.msra.mxu0 %v10727
  %11214 = vmatprep.subr.bf16.mxu0 %v10732
  %11215 = vmatpush1.bf16.msra.mxu0 %v10731
  %11216 = vmatprep.subr.bf16.mxu0 %v10736
  %11217 = vmatpush1.bf16.msra.mxu0 %v10735
  %11218 = vmatprep.subr.bf16.mxu0 %v10740
  %11219 = vmatpush1.bf16.msra.mxu0 %v10739
  %11220 = vmatprep.subr.bf16.mxu0 %v10744
  %11221 = vmatpush1.bf16.msra.mxu0 %v10743
  %11222 = vmatprep.subr.bf16.mxu0 %v10748
  %11223 = vmatpush1.bf16.msra.mxu0 %v10747
  %11224 = vmatprep.subr.bf16.mxu0 %v10752
  %11225 = vmatpush1.bf16.msra.mxu0 %v10751
  %11226 = vmatprep.subr.bf16.mxu0 %v10756
  %11227 = vmatpush1.bf16.msra.mxu0 %v10755
  %11228 = vmatprep.subr.bf16.mxu0 %v10760
  %11229 = vmatpush1.bf16.msra.mxu0 %v10759
  %11230 = vmatprep.subr.bf16.mxu0 %v10764
  %11231 = vmatpush1.bf16.msra.mxu0 %v10763
  %11232 = vmatprep.subr.bf16.mxu0 %v10768
  %11233 = vmatpush1.bf16.msra.mxu0 %v10767
  %11234 = vmatprep.subr.bf16.mxu0 %v10772
  %11235 = vmatpush1.bf16.msra.mxu0 %v10771
  %11236 = vmatprep.subr.bf16.mxu0 %v10776
  %11237 = vmatpush1.bf16.msra.mxu0 %v10775
  %11238 = vmatprep.subr.bf16.mxu0 %v10780
  %11239 = vmatpush1.bf16.msra.mxu0 %v10779
  %11240 = vmatprep.mubr.bf16.mxu0 %v9604
  %11241 = vmatmul.mubr.bf16.gmra.mrb[0].mxu0 %v9603
  %v11242 = vpop.f32.mrb[0].mxu0
  %v11243 = vadd.f32 %v11202, %v11242
  %v11244 = vpop.f32.mrb[0].mxu0
  %v11245 = vadd.f32 %v11204, %v11244
  %v11246 = vpop.f32.mrb[0].mxu0
  %v11247 = vpop.f32.mrb[0].mxu0
  %11248 = vdwg.mxu0
  %11249 = vmatprep.subr.bf16.mxu0 %v10784
  %11250 = vmatpush1.bf16.msra.mxu0 %v10783
  %11251 = vmatprep.subr.bf16.mxu0 %v10788
  %11252 = vmatpush1.bf16.msra.mxu0 %v10787
  %11253 = vmatprep.subr.bf16.mxu0 %v10792
  %11254 = vmatpush1.bf16.msra.mxu0 %v10791
  %11255 = vmatprep.subr.bf16.mxu0 %v10796
  %11256 = vmatpush1.bf16.msra.mxu0 %v10795
  %11257 = vmatprep.subr.bf16.mxu0 %v10800
  %11258 = vmatpush1.bf16.msra.mxu0 %v10799
  %11259 = vmatprep.subr.bf16.mxu0 %v10804
  %11260 = vmatpush1.bf16.msra.mxu0 %v10803
  %11261 = vmatprep.subr.bf16.mxu0 %v10808
  %11262 = vmatpush1.bf16.msra.mxu0 %v10807
  %11263 = vmatprep.subr.bf16.mxu0 %v10812
  %11264 = vmatpush1.bf16.msra.mxu0 %v10811
  %11265 = vmatprep.subr.bf16.mxu0 %v10816
  %11266 = vmatpush1.bf16.msra.mxu0 %v10815
  %11267 = vmatprep.subr.bf16.mxu0 %v10820
  %11268 = vmatpush1.bf16.msra.mxu0 %v10819
  %11269 = vmatprep.subr.bf16.mxu0 %v10824
  %11270 = vmatpush1.bf16.msra.mxu0 %v10823
  %11271 = vmatprep.subr.bf16.mxu0 %v10828
  %11272 = vmatpush1.bf16.msra.mxu0 %v10827
  %11273 = vmatprep.subr.bf16.mxu0 %v10832
  %11274 = vmatpush1.bf16.msra.mxu0 %v10831
  %11275 = vmatprep.subr.bf16.mxu0 %v10836
  %11276 = vmatpush1.bf16.msra.mxu0 %v10835
  %11277 = vmatprep.subr.bf16.mxu0 %v10840
  %11278 = vmatpush1.bf16.msra.mxu0 %v10839
  %11279 = vmatprep.subr.bf16.mxu0 %v10844
  %11280 = vmatpush1.bf16.msra.mxu0 %v10843
  %11281 = vmatprep.mubr.bf16.mxu0 %v9606
  %11282 = vmatmul.mubr.bf16.gmra.mrb[0].mxu0 %v9605
  %v11283 = vpop.f32.mrb[0].mxu0
  %v11284 = vadd.f32 %v11243, %v11283
  %v11285 = vpop.f32.mrb[0].mxu0
  %v11286 = vadd.f32 %v11245, %v11285
  %v11287 = vpop.f32.mrb[0].mxu0
  %v11288 = vpop.f32.mrb[0].mxu0
  %11289 = vdwg.mxu0
  %11290 = vmatprep.subr.bf16.mxu0 %v10848
  %11291 = vmatpush1.bf16.msra.mxu0 %v10847
  %11292 = vmatprep.subr.bf16.mxu0 %v10852
  %11293 = vmatpush1.bf16.msra.mxu0 %v10851
  %11294 = vmatprep.subr.bf16.mxu0 %v10856
  %11295 = vmatpush1.bf16.msra.mxu0 %v10855
  %11296 = vmatprep.subr.bf16.mxu0 %v10860
  %11297 = vmatpush1.bf16.msra.mxu0 %v10859
  %11298 = vmatprep.subr.bf16.mxu0 %v10864
  %11299 = vmatpush1.bf16.msra.mxu0 %v10863
  %11300 = vmatprep.subr.bf16.mxu0 %v10868
  %11301 = vmatpush1.bf16.msra.mxu0 %v10867
  %11302 = vmatprep.subr.bf16.mxu0 %v10872
  %11303 = vmatpush1.bf16.msra.mxu0 %v10871
  %11304 = vmatprep.subr.bf16.mxu0 %v10876
  %11305 = vmatpush1.bf16.msra.mxu0 %v10875
  %11306 = vmatprep.subr.bf16.mxu0 %v10880
  %11307 = vmatpush1.bf16.msra.mxu0 %v10879
  %11308 = vmatprep.subr.bf16.mxu0 %v10884
  %11309 = vmatpush1.bf16.msra.mxu0 %v10883
  %11310 = vmatprep.subr.bf16.mxu0 %v10888
  %11311 = vmatpush1.bf16.msra.mxu0 %v10887
  %11312 = vmatprep.subr.bf16.mxu0 %v10892
  %11313 = vmatpush1.bf16.msra.mxu0 %v10891
  %11314 = vmatprep.subr.bf16.mxu0 %v10896
  %11315 = vmatpush1.bf16.msra.mxu0 %v10895
  %11316 = vmatprep.subr.bf16.mxu0 %v10900
  %11317 = vmatpush1.bf16.msra.mxu0 %v10899
  %11318 = vmatprep.subr.bf16.mxu0 %v10904
  %11319 = vmatpush1.bf16.msra.mxu0 %v10903
  %11320 = vmatprep.subr.bf16.mxu0 %v10908
  %11321 = vmatpush1.bf16.msra.mxu0 %v10907
  %11322 = vmatprep.mubr.bf16.mxu0 %v9608
  %11323 = vmatmul.mubr.bf16.gmra.mrb[0].mxu0 %v9607
  %v11324 = vpop.f32.mrb[0].mxu0
  %v11325 = vadd.f32 %v11284, %v11324
  %v11326 = vpop.f32.mrb[0].mxu0
  %v11327 = vadd.f32 %v11286, %v11326
  %v11328 = vpop.f32.mrb[0].mxu0
  %v11329 = vpop.f32.mrb[0].mxu0
  %11330 = vdwg.mxu0
  %11331 = vmatprep.subr.bf16.mxu0 %v10658
  %11332 = vmatpush1.bf16.msra.mxu0 %v10657
  %11333 = vmatprep.subr.bf16.mxu0 %v10662
  %11334 = vmatpush1.bf16.msra.mxu0 %v10661
  %11335 = vmatprep.subr.bf16.mxu0 %v10666
  %11336 = vmatpush1.bf16.msra.mxu0 %v10665
  %11337 = vmatprep.subr.bf16.mxu0 %v10670
  %11338 = vmatpush1.bf16.msra.mxu0 %v10669
  %11339 = vmatprep.subr.bf16.mxu0 %v10674
  %11340 = vmatpush1.bf16.msra.mxu0 %v10673
  %11341 = vmatprep.subr.bf16.mxu0 %v10678
  %11342 = vmatpush1.bf16.msra.mxu0 %v10677
  %11343 = vmatprep.subr.bf16.mxu0 %v10682
  %11344 = vmatpush1.bf16.msra.mxu0 %v10681
  %11345 = vmatprep.subr.bf16.mxu0 %v10686
  %11346 = vmatpush1.bf16.msra.mxu0 %v10685
  %11347 = vmatprep.subr.bf16.mxu0 %v10690
  %11348 = vmatpush1.bf16.msra.mxu0 %v10689
  %11349 = vmatprep.subr.bf16.mxu0 %v10694
  %11350 = vmatpush1.bf16.msra.mxu0 %v10693
  %11351 = vmatprep.subr.bf16.mxu0 %v10698
  %11352 = vmatpush1.bf16.msra.mxu0 %v10697
  %11353 = vmatprep.subr.bf16.mxu0 %v10702
  %11354 = vmatpush1.bf16.msra.mxu0 %v10701
  %11355 = vmatprep.subr.bf16.mxu0 %v10706
  %11356 = vmatpush1.bf16.msra.mxu0 %v10705
  %11357 = vmatprep.subr.bf16.mxu0 %v10710
  %11358 = vmatpush1.bf16.msra.mxu0 %v10709
  %11359 = vmatprep.subr.bf16.mxu0 %v10714
  %11360 = vmatpush1.bf16.msra.mxu0 %v10713
  %11361 = vmatprep.subr.bf16.mxu0 %v10718
  %11362 = vmatpush1.bf16.msra.mxu0 %v10717
  %11363 = vmatprep.mubr.bf16.mxu0 %v9602
  %11364 = vmatmul.mubr.bf16.gmra.mrb[0].mxu0 %v9601
  %v11365 = vpop.f32.mrb[0].mxu0
  %v11366 = vadd.f32 %v9878, %v11365
  %v11367 = vpop.f32.mrb[0].mxu0
  %v11368 = vadd.f32 %v9882, %v11367
  %v11369 = vpop.f32.mrb[0].mxu0
  %v11370 = vpop.f32.mrb[0].mxu0
  %11371 = vdwg.mxu0
  %11372 = vmatprep.subr.bf16.mxu0 %v10722
  %11373 = vmatpush1.bf16.msra.mxu0 %v10721
  %11374 = vmatprep.subr.bf16.mxu0 %v10726
  %11375 = vmatpush1.bf16.msra.mxu0 %v10725
  %11376 = vmatprep.subr.bf16.mxu0 %v10730
  %11377 = vmatpush1.bf16.msra.mxu0 %v10729
  %11378 = vmatprep.subr.bf16.mxu0 %v10734
  %11379 = vmatpush1.bf16.msra.mxu0 %v10733
  %11380 = vmatprep.subr.bf16.mxu0 %v10738
  %11381 = vmatpush1.bf16.msra.mxu0 %v10737
  %11382 = vmatprep.subr.bf16.mxu0 %v10742
  %11383 = vmatpush1.bf16.msra.mxu0 %v10741
  %11384 = vmatprep.subr.bf16.mxu0 %v10746
  %11385 = vmatpush1.bf16.msra.mxu0 %v10745
  %11386 = vmatprep.subr.bf16.mxu0 %v10750
  %11387 = vmatpush1.bf16.msra.mxu0 %v10749
  %11388 = vmatprep.subr.bf16.mxu0 %v10754
  %11389 = vmatpush1.bf16.msra.mxu0 %v10753
  %11390 = vmatprep.subr.bf16.mxu0 %v10758
  %11391 = vmatpush1.bf16.msra.mxu0 %v10757
  %11392 = vmatprep.subr.bf16.mxu0 %v10762
  %11393 = vmatpush1.bf16.msra.mxu0 %v10761
  %11394 = vmatprep.subr.bf16.mxu0 %v10766
  %11395 = vmatpush1.bf16.msra.mxu0 %v10765
  %11396 = vmatprep.subr.bf16.mxu0 %v10770
  %11397 = vmatpush1.bf16.msra.mxu0 %v10769
  %11398 = vmatprep.subr.bf16.mxu0 %v10774
  %11399 = vmatpush1.bf16.msra.mxu0 %v10773
  %11400 = vmatprep.subr.bf16.mxu0 %v10778
  %11401 = vmatpush1.bf16.msra.mxu0 %v10777
  %11402 = vmatprep.subr.bf16.mxu0 %v10782
  %11403 = vmatpush1.bf16.msra.mxu0 %v10781
  %11404 = vmatprep.mubr.bf16.mxu0 %v9604
  %11405 = vmatmul.mubr.bf16.gmra.mrb[0].mxu0 %v9603
  %v11406 = vpop.f32.mrb[0].mxu0
  %v11407 = vadd.f32 %v11366, %v11406
  %v11408 = vpop.f32.mrb[0].mxu0
  %v11409 = vadd.f32 %v11368, %v11408
  %v11410 = vpop.f32.mrb[0].mxu0
  %v11411 = vpop.f32.mrb[0].mxu0
  %11412 = vdwg.mxu0
  %11413 = vmatprep.subr.bf16.mxu0 %v10786
  %11414 = vmatpush1.bf16.msra.mxu0 %v10785
  %11415 = vmatprep.subr.bf16.mxu0 %v10790
  %11416 = vmatpush1.bf16.msra.mxu0 %v10789
  %11417 = vmatprep.subr.bf16.mxu0 %v10794
  %11418 = vmatpush1.bf16.msra.mxu0 %v10793
  %11419 = vmatprep.subr.bf16.mxu0 %v10798
  %11420 = vmatpush1.bf16.msra.mxu0 %v10797
  %11421 = vmatprep.subr.bf16.mxu0 %v10802
  %11422 = vmatpush1.bf16.msra.mxu0 %v10801
  %11423 = vmatprep.subr.bf16.mxu0 %v10806
  %11424 = vmatpush1.bf16.msra.mxu0 %v10805
  %11425 = vmatprep.subr.bf16.mxu0 %v10810
  %11426 = vmatpush1.bf16.msra.mxu0 %v10809
  %11427 = vmatprep.subr.bf16.mxu0 %v10814
  %11428 = vmatpush1.bf16.msra.mxu0 %v10813
  %11429 = vmatprep.subr.bf16.mxu0 %v10818
  %11430 = vmatpush1.bf16.msra.mxu0 %v10817
  %11431 = vmatprep.subr.bf16.mxu0 %v10822
  %11432 = vmatpush1.bf16.msra.mxu0 %v10821
  %11433 = vmatprep.subr.bf16.mxu0 %v10826
  %11434 = vmatpush1.bf16.msra.mxu0 %v10825
  %11435 = vmatprep.subr.bf16.mxu0 %v10830
  %11436 = vmatpush1.bf16.msra.mxu0 %v10829
  %11437 = vmatprep.subr.bf16.mxu0 %v10834
  %11438 = vmatpush1.bf16.msra.mxu0 %v10833
  %11439 = vmatprep.subr.bf16.mxu0 %v10838
  %11440 = vmatpush1.bf16.msra.mxu0 %v10837
  %11441 = vmatprep.subr.bf16.mxu0 %v10842
  %11442 = vmatpush1.bf16.msra.mxu0 %v10841
  %11443 = vmatprep.subr.bf16.mxu0 %v10846
  %11444 = vmatpush1.bf16.msra.mxu0 %v10845
  %11445 = vmatprep.mubr.bf16.mxu0 %v9606
  %11446 = vmatmul.mubr.bf16.gmra.mrb[0].mxu0 %v9605
  %v11447 = vpop.f32.mrb[0].mxu0
  %v11448 = vadd.f32 %v11407, %v11447
  %v11449 = vpop.f32.mrb[0].mxu0
  %v11450 = vadd.f32 %v11409, %v11449
  %v11451 = vpop.f32.mrb[0].mxu0
  %v11452 = vpop.f32.mrb[0].mxu0
  %11453 = vdwg.mxu0
  %11454 = vmatprep.subr.bf16.mxu0 %v10850
  %11455 = vmatpush1.bf16.msra.mxu0 %v10849
  %11456 = vmatprep.subr.bf16.mxu0 %v10854
  %11457 = vmatpush1.bf16.msra.mxu0 %v10853
  %11458 = vmatprep.subr.bf16.mxu0 %v10858
  %11459 = vmatpush1.bf16.msra.mxu0 %v10857
  %11460 = vmatprep.subr.bf16.mxu0 %v10862
  %11461 = vmatpush1.bf16.msra.mxu0 %v10861
  %11462 = vmatprep.subr.bf16.mxu0 %v10866
  %11463 = vmatpush1.bf16.msra.mxu0 %v10865
  %11464 = vmatprep.subr.bf16.mxu0 %v10870
  %11465 = vmatpush1.bf16.msra.mxu0 %v10869
  %11466 = vmatprep.subr.bf16.mxu0 %v10874
  %11467 = vmatpush1.bf16.msra.mxu0 %v10873
  %11468 = vmatprep.subr.bf16.mxu0 %v10878
  %11469 = vmatpush1.bf16.msra.mxu0 %v10877
  %11470 = vmatprep.subr.bf16.mxu0 %v10882
  %11471 = vmatpush1.bf16.msra.mxu0 %v10881
  %11472 = vmatprep.subr.bf16.mxu0 %v10886
  %11473 = vmatpush1.bf16.msra.mxu0 %v10885
  %11474 = vmatprep.subr.bf16.mxu0 %v10890
  %11475 = vmatpush1.bf16.msra.mxu0 %v10889
  %11476 = vmatprep.subr.bf16.mxu0 %v10894
  %11477 = vmatpush1.bf16.msra.mxu0 %v10893
  %11478 = vmatprep.subr.bf16.mxu0 %v10898
  %11479 = vmatpush1.bf16.msra.mxu0 %v10897
  %11480 = vmatprep.subr.bf16.mxu0 %v10902
  %11481 = vmatpush1.bf16.msra.mxu0 %v10901
  %11482 = vmatprep.subr.bf16.mxu0 %v10906
  %11483 = vmatpush1.bf16.msra.mxu0 %v10905
  %11484 = vmatprep.subr.bf16.mxu0 %v10910
  %11485 = vmatpush1.bf16.msra.mxu0 %v10909
  %11486 = vmatprep.mubr.bf16.mxu0 %v9608
  %11487 = vmatmul.mubr.bf16.gmra.mrb[0].mxu0 %v9607
  %v11488 = vpop.f32.mrb[0].mxu0
  %v11489 = vadd.f32 %v11448, %v11488
  %v11490 = vpop.f32.mrb[0].mxu0
  %v11491 = vadd.f32 %v11450, %v11490
  %v11492 = vpop.f32.mrb[0].mxu0
  %v11493 = vpop.f32.mrb[0].mxu0
  %11494 = vdwg.mxu0
  %v11495 = vmax.f32 %v11325, 0.0
  %v11496 = vmax.f32 %v11327, 0.0
  %v11497 = vmax.f32 %v11489, 0.0
  %v11498 = vmax.f32 %v11491, 0.0
  %v11499 = vpack.c.bf16 %v11495, %v11495
  %v11500 = vpack.c.bf16 %v11496, %v11496
  %v11501 = vpack.c.bf16 %v11497, %v11497
  %v11502 = vpack.c.bf16 %v11498, %v11498
  %v11503 = vld [vmem:[%s8] sm:$0xff]
  %v11504 = vld [vmem:[%s8 + $0x8] sm:$0xff]
  %v11505 = vld [vmem:[%s8 + $0x10] sm:$0xff]
  %v11506 = vld [vmem:[%s8 + $0x18] sm:$0xff]
  %v11507 = vld [vmem:[%s8 + $0x20] sm:$0xff]
  %v11508 = vld [vmem:[%s8 + $0x28] sm:$0xff]
  %v11509 = vld [vmem:[%s8 + $0x30] sm:$0xff]
  %v11510 = vld [vmem:[%s8 + $0x38] sm:$0xff]
  %v11511 = vld [vmem:[%s8 + $0x40] sm:$0xff]
  %v11512 = vld [vmem:[%s8 + $0x48] sm:$0xff]
  %v11513 = vld [vmem:[%s8 + $0x50] sm:$0xff]
  %v11514 = vld [vmem:[%s8 + $0x58] sm:$0xff]
  %v11515 = vld [vmem:[%s8 + $0x60] sm:$0xff]
  %v11516 = vld [vmem:[%s8 + $0x68] sm:$0xff]
  %v11517 = vld [vmem:[%s8 + $0x70] sm:$0xff]
  %v11518 = vld [vmem:[%s8 + $0x78] sm:$0xff]
  %v11519 = vld [vmem:[%s8 + $0x80] sm:$0xff]
  %v11520 = vld [vmem:[%s8 + $0x88] sm:$0xff]
  %v11521 = vld [vmem:[%s8 + $0x90] sm:$0xff]
  %v11522 = vld [vmem:[%s8 + $0x98] sm:$0xff]
  %v11523 = vld [vmem:[%s8 + $0xa0] sm:$0xff]
  %v11524 = vld [vmem:[%s8 + $0xa8] sm:$0xff]
  %v11525 = vld [vmem:[%s8 + $0xb0] sm:$0xff]
  %v11526 = vld [vmem:[%s8 + $0xb8] sm:$0xff]
  %v11527 = vld [vmem:[%s8 + $0xc0] sm:$0xff]
  %v11528 = vld [vmem:[%s8 + $0xc8] sm:$0xff]
  %v11529 = vld [vmem:[%s8 + $0xd0] sm:$0xff]
  %v11530 = vld [vmem:[%s8 + $0xd8] sm:$0xff]
  %v11531 = vld [vmem:[%s8 + $0xe0] sm:$0xff]
  %v11532 = vld [vmem:[%s8 + $0xe8] sm:$0xff]
  %v11533 = vld [vmem:[%s8 + $0xf0] sm:$0xff]
  %v11534 = vld [vmem:[%s8 + $0xf8] sm:$0xff]
  %v11535 = vld [vmem:[%s8 + $0x100] sm:$0xff]
  %v11536 = vld [vmem:[%s8 + $0x108] sm:$0xff]
  %v11537 = vld [vmem:[%s8 + $0x110] sm:$0xff]
  %v11538 = vld [vmem:[%s8 + $0x118] sm:$0xff]
  %v11539 = vld [vmem:[%s8 + $0x120] sm:$0xff]
  %v11540 = vld [vmem:[%s8 + $0x128] sm:$0xff]
  %v11541 = vld [vmem:[%s8 + $0x130] sm:$0xff]
  %v11542 = vld [vmem:[%s8 + $0x138] sm:$0xff]
  %v11543 = vld [vmem:[%s8 + $0x140] sm:$0xff]
  %v11544 = vld [vmem:[%s8 + $0x148] sm:$0xff]
  %v11545 = vld [vmem:[%s8 + $0x150] sm:$0xff]
  %v11546 = vld [vmem:[%s8 + $0x158] sm:$0xff]
  %v11547 = vld [vmem:[%s8 + $0x160] sm:$0xff]
  %v11548 = vld [vmem:[%s8 + $0x168] sm:$0xff]
  %v11549 = vld [vmem:[%s8 + $0x170] sm:$0xff]
  %v11550 = vld [vmem:[%s8 + $0x178] sm:$0xff]
  %v11551 = vld [vmem:[%s8 + $0x180] sm:$0xff]
  %v11552 = vld [vmem:[%s8 + $0x188] sm:$0xff]
  %v11553 = vld [vmem:[%s8 + $0x190] sm:$0xff]
  %v11554 = vld [vmem:[%s8 + $0x198] sm:$0xff]
  %v11555 = vld [vmem:[%s8 + $0x1a0] sm:$0xff]
  %v11556 = vld [vmem:[%s8 + $0x1a8] sm:$0xff]
  %v11557 = vld [vmem:[%s8 + $0x1b0] sm:$0xff]
  %v11558 = vld [vmem:[%s8 + $0x1b8] sm:$0xff]
  %v11559 = vld [vmem:[%s8 + $0x1c0] sm:$0xff]
  %v11560 = vld [vmem:[%s8 + $0x1c8] sm:$0xff]
  %v11561 = vld [vmem:[%s8 + $0x1d0] sm:$0xff]
  %v11562 = vld [vmem:[%s8 + $0x1d8] sm:$0xff]
  %v11563 = vld [vmem:[%s8 + $0x1e0] sm:$0xff]
  %v11564 = vld [vmem:[%s8 + $0x1e8] sm:$0xff]
  %v11565 = vld [vmem:[%s8 + $0x1f0] sm:$0xff]
  %v11566 = vld [vmem:[%s8 + $0x1f8] sm:$0xff]
  %v11567 = vld [vmem:[%s2] sm:$0x3]
  %v11568 = vld [vmem:[%s9] sm:$0xff]
  %v11569 = vld [vmem:[%s9 + $0x8] sm:$0xff]
  %vm11570 = vcmask 64512
  %v11572 = vsel %vm11570, %v11567, 0
  %11574 = vmatprep.subr.mxu0 %v11569
  %11575 = vmatpush1.msra.mxu0 %v11568
  %11576 = vmatprep.subr.mxu0 0.0
  %11577 = vmatpush1.msra.mxu0 0.0
  %11578 = vmatprep.subr.mxu0 0.0
  %11579 = vmatpush1.msra.mxu0 0.0
  %11580 = vmatprep.subr.mxu0 0.0
  %11581 = vmatpush1.msra.mxu0 0.0
  %11582 = vmatprep.subr.mxu0 0.0
  %11583 = vmatpush1.msra.mxu0 0.0
  %11584 = vmatprep.subr.mxu0 0.0
  %11585 = vmatpush1.msra.mxu0 0.0
  %11586 = vmatprep.subr.mxu0 0.0
  %11587 = vmatpush1.msra.mxu0 0.0
  %11588 = vmatprep.subr.mxu0 0.0
  %11589 = vmatpush1.msra.mxu0 0.0
  %11590 = vmatprep.subr.mxu0 0.0
  %11591 = vmatpush1.msra.mxu0 0.0
  %11592 = vmatprep.subr.mxu0 0.0
  %11593 = vmatpush1.msra.mxu0 0.0
  %11594 = vmatprep.subr.mxu0 0.0
  %11595 = vmatpush1.msra.mxu0 0.0
  %11596 = vmatprep.subr.mxu0 0.0
  %11597 = vmatpush1.msra.mxu0 0.0
  %11598 = vmatprep.subr.mxu0 0.0
  %11599 = vmatpush1.msra.mxu0 0.0
  %11600 = vmatprep.subr.mxu0 0.0
  %11601 = vmatpush1.msra.mxu0 0.0
  %11602 = vmatprep.subr.mxu0 0.0
  %11603 = vmatpush1.msra.mxu0 0.0
  %11604 = vmatprep.subr.mxu0 0.0
  %11605 = vmatpush1.msra.mxu0 0.0
  %11606 = vmatprep.subr.mxu0 0.0
  %11607 = vmatpush1.msra.mxu0 0.0
  %11608 = vmatprep.subr.mxu0 0.0
  %11609 = vmatpush1.msra.mxu0 0.0
  %11610 = vmatprep.subr.mxu0 0.0
  %11611 = vmatpush1.msra.mxu0 0.0
  %11612 = vmatprep.subr.mxu0 0.0
  %11613 = vmatpush1.msra.mxu0 0.0
  %11614 = vmatprep.subr.mxu0 0.0
  %11615 = vmatpush1.msra.mxu0 0.0
  %11616 = vmatprep.subr.mxu0 0.0
  %11617 = vmatpush1.msra.mxu0 0.0
  %11618 = vmatprep.subr.mxu0 0.0
  %11619 = vmatpush1.msra.mxu0 0.0
  %11620 = vmatprep.subr.mxu0 0.0
  %11621 = vmatpush1.msra.mxu0 0.0
  %11622 = vmatprep.subr.mxu0 0.0
  %11623 = vmatpush1.msra.mxu0 0.0
  %11624 = vmatprep.subr.mxu0 0.0
  %11625 = vmatpush1.msra.mxu0 0.0
  %11626 = vmatprep.subr.mxu0 0.0
  %11627 = vmatpush1.msra.mxu0 0.0
  %11628 = vmatprep.subr.mxu0 0.0
  %11629 = vmatpush1.msra.mxu0 0.0
  %11630 = vmatprep.subr.mxu0 0.0
  %11631 = vmatpush1.msra.mxu0 0.0
  %11632 = vmatprep.subr.mxu0 0.0
  %11633 = vmatpush1.msra.mxu0 0.0
  %11634 = vmatprep.subr.mxu0 0.0
  %11635 = vmatpush1.msra.mxu0 0.0
  %11636 = vmatprep.subr.mxu0 0.0
  %11637 = vmatpush1.msra.mxu0 0.0
  %11638 = vmatprep.mubr.f32.mxu0 0.0
  %11639 = vmatmul.mubr.f32.gmra.mrb[0].mxu0 %v11572
  %v11640 = vpop.f32.mrb[0].mxu0
  %v11641 = vadd.f32 0.0, %v11640
  %v11642 = vpop.f32.mrb[0].mxu0
  %v11643 = vadd.f32 0.0, %v11642
  %11644 = vdwg.mxu0
  %v11709 = vunpack.c.l.b16 %v11503
  %v11710 = vunpack.c.h.b16 %v11503
  %v11711 = vunpack.c.l.b16 %v11504
  %v11712 = vunpack.c.h.b16 %v11504
  %v11713 = vunpack.c.l.b16 %v11505
  %v11714 = vunpack.c.h.b16 %v11505
  %v11715 = vunpack.c.l.b16 %v11506
  %v11716 = vunpack.c.h.b16 %v11506
  %v11717 = vunpack.c.l.b16 %v11507
  %v11718 = vunpack.c.h.b16 %v11507
  %v11719 = vunpack.c.l.b16 %v11508
  %v11720 = vunpack.c.h.b16 %v11508
  %v11721 = vunpack.c.l.b16 %v11509
  %v11722 = vunpack.c.h.b16 %v11509
  %v11723 = vunpack.c.l.b16 %v11510
  %v11724 = vunpack.c.h.b16 %v11510
  %v11725 = vunpack.c.l.b16 %v11511
  %v11726 = vunpack.c.h.b16 %v11511
  %v11727 = vunpack.c.l.b16 %v11512
  %v11728 = vunpack.c.h.b16 %v11512
  %v11729 = vunpack.c.l.b16 %v11513
  %v11730 = vunpack.c.h.b16 %v11513
  %v11731 = vunpack.c.l.b16 %v11514
  %v11732 = vunpack.c.h.b16 %v11514
  %v11733 = vunpack.c.l.b16 %v11515
  %v11734 = vunpack.c.h.b16 %v11515
  %v11735 = vunpack.c.l.b16 %v11516
  %v11736 = vunpack.c.h.b16 %v11516
  %v11737 = vunpack.c.l.b16 %v11517
  %v11738 = vunpack.c.h.b16 %v11517
  %v11739 = vunpack.c.l.b16 %v11518
  %v11740 = vunpack.c.h.b16 %v11518
  %v11741 = vunpack.c.l.b16 %v11519
  %v11742 = vunpack.c.h.b16 %v11519
  %v11743 = vunpack.c.l.b16 %v11520
  %v11744 = vunpack.c.h.b16 %v11520
  %v11745 = vunpack.c.l.b16 %v11521
  %v11746 = vunpack.c.h.b16 %v11521
  %v11747 = vunpack.c.l.b16 %v11522
  %v11748 = vunpack.c.h.b16 %v11522
  %v11749 = vunpack.c.l.b16 %v11523
  %v11750 = vunpack.c.h.b16 %v11523
  %v11751 = vunpack.c.l.b16 %v11524
  %v11752 = vunpack.c.h.b16 %v11524
  %v11753 = vunpack.c.l.b16 %v11525
  %v11754 = vunpack.c.h.b16 %v11525
  %v11755 = vunpack.c.l.b16 %v11526
  %v11756 = vunpack.c.h.b16 %v11526
  %v11757 = vunpack.c.l.b16 %v11527
  %v11758 = vunpack.c.h.b16 %v11527
  %v11759 = vunpack.c.l.b16 %v11528
  %v11760 = vunpack.c.h.b16 %v11528
  %v11761 = vunpack.c.l.b16 %v11529
  %v11762 = vunpack.c.h.b16 %v11529
  %v11763 = vunpack.c.l.b16 %v11530
  %v11764 = vunpack.c.h.b16 %v11530
  %v11765 = vunpack.c.l.b16 %v11531
  %v11766 = vunpack.c.h.b16 %v11531
  %v11767 = vunpack.c.l.b16 %v11532
  %v11768 = vunpack.c.h.b16 %v11532
  %v11769 = vunpack.c.l.b16 %v11533
  %v11770 = vunpack.c.h.b16 %v11533
  %v11771 = vunpack.c.l.b16 %v11534
  %v11772 = vunpack.c.h.b16 %v11534
  %v11773 = vunpack.c.l.b16 %v11535
  %v11774 = vunpack.c.h.b16 %v11535
  %v11775 = vunpack.c.l.b16 %v11536
  %v11776 = vunpack.c.h.b16 %v11536
  %v11777 = vunpack.c.l.b16 %v11537
  %v11778 = vunpack.c.h.b16 %v11537
  %v11779 = vunpack.c.l.b16 %v11538
  %v11780 = vunpack.c.h.b16 %v11538
  %v11781 = vunpack.c.l.b16 %v11539
  %v11782 = vunpack.c.h.b16 %v11539
  %v11783 = vunpack.c.l.b16 %v11540
  %v11784 = vunpack.c.h.b16 %v11540
  %v11785 = vunpack.c.l.b16 %v11541
  %v11786 = vunpack.c.h.b16 %v11541
  %v11787 = vunpack.c.l.b16 %v11542
  %v11788 = vunpack.c.h.b16 %v11542
  %v11789 = vunpack.c.l.b16 %v11543
  %v11790 = vunpack.c.h.b16 %v11543
  %v11791 = vunpack.c.l.b16 %v11544
  %v11792 = vunpack.c.h.b16 %v11544
  %v11793 = vunpack.c.l.b16 %v11545
  %v11794 = vunpack.c.h.b16 %v11545
  %v11795 = vunpack.c.l.b16 %v11546
  %v11796 = vunpack.c.h.b16 %v11546
  %v11797 = vunpack.c.l.b16 %v11547
  %v11798 = vunpack.c.h.b16 %v11547
  %v11799 = vunpack.c.l.b16 %v11548
  %v11800 = vunpack.c.h.b16 %v11548
  %v11801 = vunpack.c.l.b16 %v11549
  %v11802 = vunpack.c.h.b16 %v11549
  %v11803 = vunpack.c.l.b16 %v11550
  %v11804 = vunpack.c.h.b16 %v11550
  %v11805 = vunpack.c.l.b16 %v11551
  %v11806 = vunpack.c.h.b16 %v11551
  %v11807 = vunpack.c.l.b16 %v11552
  %v11808 = vunpack.c.h.b16 %v11552
  %v11809 = vunpack.c.l.b16 %v11553
  %v11810 = vunpack.c.h.b16 %v11553
  %v11811 = vunpack.c.l.b16 %v11554
  %v11812 = vunpack.c.h.b16 %v11554
  %v11813 = vunpack.c.l.b16 %v11555
  %v11814 = vunpack.c.h.b16 %v11555
  %v11815 = vunpack.c.l.b16 %v11556
  %v11816 = vunpack.c.h.b16 %v11556
  %v11817 = vunpack.c.l.b16 %v11557
  %v11818 = vunpack.c.h.b16 %v11557
  %v11819 = vunpack.c.l.b16 %v11558
  %v11820 = vunpack.c.h.b16 %v11558
  %v11821 = vunpack.c.l.b16 %v11559
  %v11822 = vunpack.c.h.b16 %v11559
  %v11823 = vunpack.c.l.b16 %v11560
  %v11824 = vunpack.c.h.b16 %v11560
  %v11825 = vunpack.c.l.b16 %v11561
  %v11826 = vunpack.c.h.b16 %v11561
  %v11827 = vunpack.c.l.b16 %v11562
  %v11828 = vunpack.c.h.b16 %v11562
  %v11829 = vunpack.c.l.b16 %v11563
  %v11830 = vunpack.c.h.b16 %v11563
  %v11831 = vunpack.c.l.b16 %v11564
  %v11832 = vunpack.c.h.b16 %v11564
  %v11833 = vunpack.c.l.b16 %v11565
  %v11834 = vunpack.c.h.b16 %v11565
  %v11835 = vunpack.c.l.b16 %v11566
  %v11836 = vunpack.c.h.b16 %v11566
  %v11837 = vpack.c.b16 %v11711, %v11709
  %v11838 = vpack.c.b16 %v11712, %v11710
  %v11839 = vpack.c.b16 %v11715, %v11713
  %v11840 = vpack.c.b16 %v11716, %v11714
  %v11841 = vpack.c.b16 %v11719, %v11717
  %v11842 = vpack.c.b16 %v11720, %v11718
  %v11843 = vpack.c.b16 %v11723, %v11721
  %v11844 = vpack.c.b16 %v11724, %v11722
  %v11845 = vpack.c.b16 %v11727, %v11725
  %v11846 = vpack.c.b16 %v11728, %v11726
  %v11847 = vpack.c.b16 %v11731, %v11729
  %v11848 = vpack.c.b16 %v11732, %v11730
  %v11849 = vpack.c.b16 %v11735, %v11733
  %v11850 = vpack.c.b16 %v11736, %v11734
  %v11851 = vpack.c.b16 %v11739, %v11737
  %v11852 = vpack.c.b16 %v11740, %v11738
  %v11853 = vpack.c.b16 %v11743, %v11741
  %v11854 = vpack.c.b16 %v11744, %v11742
  %v11855 = vpack.c.b16 %v11747, %v11745
  %v11856 = vpack.c.b16 %v11748, %v11746
  %v11857 = vpack.c.b16 %v11751, %v11749
  %v11858 = vpack.c.b16 %v11752, %v11750
  %v11859 = vpack.c.b16 %v11755, %v11753
  %v11860 = vpack.c.b16 %v11756, %v11754
  %v11861 = vpack.c.b16 %v11759, %v11757
  %v11862 = vpack.c.b16 %v11760, %v11758
  %v11863 = vpack.c.b16 %v11763, %v11761
  %v11864 = vpack.c.b16 %v11764, %v11762
  %v11865 = vpack.c.b16 %v11767, %v11765
  %v11866 = vpack.c.b16 %v11768, %v11766
  %v11867 = vpack.c.b16 %v11771, %v11769
  %v11868 = vpack.c.b16 %v11772, %v11770
  %v11869 = vpack.c.b16 %v11775, %v11773
  %v11870 = vpack.c.b16 %v11776, %v11774
  %v11871 = vpack.c.b16 %v11779, %v11777
  %v11872 = vpack.c.b16 %v11780, %v11778
  %v11873 = vpack.c.b16 %v11783, %v11781
  %v11874 = vpack.c.b16 %v11784, %v11782
  %v11875 = vpack.c.b16 %v11787, %v11785
  %v11876 = vpack.c.b16 %v11788, %v11786
  %v11877 = vpack.c.b16 %v11791, %v11789
  %v11878 = vpack.c.b16 %v11792, %v11790
  %v11879 = vpack.c.b16 %v11795, %v11793
  %v11880 = vpack.c.b16 %v11796, %v11794
  %v11881 = vpack.c.b16 %v11799, %v11797
  %v11882 = vpack.c.b16 %v11800, %v11798
  %v11883 = vpack.c.b16 %v11803, %v11801
  %v11884 = vpack.c.b16 %v11804, %v11802
  %v11885 = vpack.c.b16 %v11807, %v11805
  %v11886 = vpack.c.b16 %v11808, %v11806
  %v11887 = vpack.c.b16 %v11811, %v11809
  %v11888 = vpack.c.b16 %v11812, %v11810
  %v11889 = vpack.c.b16 %v11815, %v11813
  %v11890 = vpack.c.b16 %v11816, %v11814
  %v11891 = vpack.c.b16 %v11819, %v11817
  %v11892 = vpack.c.b16 %v11820, %v11818
  %v11893 = vpack.c.b16 %v11823, %v11821
  %v11894 = vpack.c.b16 %v11824, %v11822
  %v11895 = vpack.c.b16 %v11827, %v11825
  %v11896 = vpack.c.b16 %v11828, %v11826
  %v11897 = vpack.c.b16 %v11831, %v11829
  %v11898 = vpack.c.b16 %v11832, %v11830
  %v11899 = vpack.c.b16 %v11835, %v11833
  %v11900 = vpack.c.b16 %v11836, %v11834
  %11965 = vmatprep.subr.bf16.mxu0 %v11838
  %11966 = vmatpush1.bf16.msra.mxu0 %v11837
  %11967 = vmatprep.subr.bf16.mxu0 %v11840
  %11968 = vmatpush1.bf16.msra.mxu0 %v11839
  %11969 = vmatprep.subr.bf16.mxu0 %v11842
  %11970 = vmatpush1.bf16.msra.mxu0 %v11841
  %11971 = vmatprep.subr.bf16.mxu0 %v11844
  %11972 = vmatpush1.bf16.msra.mxu0 %v11843
  %11973 = vmatprep.subr.bf16.mxu0 %v11846
  %11974 = vmatpush1.bf16.msra.mxu0 %v11845
  %11975 = vmatprep.subr.bf16.mxu0 %v11848
  %11976 = vmatpush1.bf16.msra.mxu0 %v11847
  %11977 = vmatprep.subr.bf16.mxu0 %v11850
  %11978 = vmatpush1.bf16.msra.mxu0 %v11849
  %11979 = vmatprep.subr.bf16.mxu0 %v11852
  %11980 = vmatpush1.bf16.msra.mxu0 %v11851
  %11981 = vmatprep.subr.bf16.mxu0 %v11854
  %11982 = vmatpush1.bf16.msra.mxu0 %v11853
  %11983 = vmatprep.subr.bf16.mxu0 %v11856
  %11984 = vmatpush1.bf16.msra.mxu0 %v11855
  %11985 = vmatprep.subr.bf16.mxu0 %v11858
  %11986 = vmatpush1.bf16.msra.mxu0 %v11857
  %11987 = vmatprep.subr.bf16.mxu0 %v11860
  %11988 = vmatpush1.bf16.msra.mxu0 %v11859
  %11989 = vmatprep.subr.bf16.mxu0 %v11862
  %11990 = vmatpush1.bf16.msra.mxu0 %v11861
  %11991 = vmatprep.subr.bf16.mxu0 %v11864
  %11992 = vmatpush1.bf16.msra.mxu0 %v11863
  %11993 = vmatprep.subr.bf16.mxu0 %v11866
  %11994 = vmatpush1.bf16.msra.mxu0 %v11865
  %11995 = vmatprep.subr.bf16.mxu0 %v11868
  %11996 = vmatpush1.bf16.msra.mxu0 %v11867
  %11997 = vmatprep.mubr.bf16.mxu0 %v11500
  %11998 = vmatmul.mubr.bf16.gmra.mrb[0].mxu0 %v11499
  %v11999 = vpop.f32.mrb[0].mxu0
  %v12000 = vadd.f32 %v11641, %v11999
  %v12001 = vpop.f32.mrb[0].mxu0
  %v12002 = vadd.f32 %v11643, %v12001
  %v12003 = vpop.f32.mrb[0].mxu0
  %v12004 = vpop.f32.mrb[0].mxu0
  %12005 = vdwg.mxu0
  %12006 = vmatprep.subr.bf16.mxu0 %v11870
  %12007 = vmatpush1.bf16.msra.mxu0 %v11869
  %12008 = vmatprep.subr.bf16.mxu0 %v11872
  %12009 = vmatpush1.bf16.msra.mxu0 %v11871
  %12010 = vmatprep.subr.bf16.mxu0 %v11874
  %12011 = vmatpush1.bf16.msra.mxu0 %v11873
  %12012 = vmatprep.subr.bf16.mxu0 %v11876
  %12013 = vmatpush1.bf16.msra.mxu0 %v11875
  %12014 = vmatprep.subr.bf16.mxu0 %v11878
  %12015 = vmatpush1.bf16.msra.mxu0 %v11877
  %12016 = vmatprep.subr.bf16.mxu0 %v11880
  %12017 = vmatpush1.bf16.msra.mxu0 %v11879
  %12018 = vmatprep.subr.bf16.mxu0 %v11882
  %12019 = vmatpush1.bf16.msra.mxu0 %v11881
  %12020 = vmatprep.subr.bf16.mxu0 %v11884
  %12021 = vmatpush1.bf16.msra.mxu0 %v11883
  %12022 = vmatprep.subr.bf16.mxu0 %v11886
  %12023 = vmatpush1.bf16.msra.mxu0 %v11885
  %12024 = vmatprep.subr.bf16.mxu0 %v11888
  %12025 = vmatpush1.bf16.msra.mxu0 %v11887
  %12026 = vmatprep.subr.bf16.mxu0 %v11890
  %12027 = vmatpush1.bf16.msra.mxu0 %v11889
  %12028 = vmatprep.subr.bf16.mxu0 %v11892
  %12029 = vmatpush1.bf16.msra.mxu0 %v11891
  %12030 = vmatprep.subr.bf16.mxu0 %v11894
  %12031 = vmatpush1.bf16.msra.mxu0 %v11893
  %12032 = vmatprep.subr.bf16.mxu0 %v11896
  %12033 = vmatpush1.bf16.msra.mxu0 %v11895
  %12034 = vmatprep.subr.bf16.mxu0 %v11898
  %12035 = vmatpush1.bf16.msra.mxu0 %v11897
  %12036 = vmatprep.subr.bf16.mxu0 %v11900
  %12037 = vmatpush1.bf16.msra.mxu0 %v11899
  %12038 = vmatprep.mubr.bf16.mxu0 %v11502
  %12039 = vmatmul.mubr.bf16.gmra.mrb[0].mxu0 %v11501
  %v12040 = vpop.f32.mrb[0].mxu0
  %v12041 = vadd.f32 %v12000, %v12040
  %v12042 = vpop.f32.mrb[0].mxu0
  %v12043 = vadd.f32 %v12002, %v12042
  %v12044 = vpop.f32.mrb[0].mxu0
  %v12045 = vpop.f32.mrb[0].mxu0
  %12046 = vdwg.mxu0
  %v12047 = vld [vmem:[%s10] sm:$0x3]
  %v12049 = vlaneseq
  %v12050 = vshrl.u32 %v12049, 7
  %v12051 = vsub.s32 0, %v12050
  %v12052 = vrot.slane %v12047, %v12051
  %v12053 = vlaneseq
  %v12054 = vshrl.u32 %v12053, 7
  %v12055 = vsub.s32 1, %v12054
  %v12056 = vrot.slane %v12047, %v12055
  %v12059 = vadd.f32 %v12041, %v12052
  %v12060 = vadd.f32 %v12043, %v12056
  %v12061 = vmax.f32 %v12059, 0.0
  %v12062 = vmax.f32 %v12060, 0.0
  %v12063 = vpack.c.bf16 %v12061, %v12061
  %v12064 = vpack.c.bf16 %v12062, %v12062
  %v12065 = vld [vmem:[%s11] sm:$0xf]
  %v12066 = vld [vmem:[%s11 + $0x4] sm:$0xf]
  %v12067 = vld [vmem:[%s11 + $0x8] sm:$0xf]
  %v12068 = vld [vmem:[%s11 + $0xc] sm:$0xf]
  %v12069 = vld [vmem:[%s11 + $0x10] sm:$0xf]
  %v12070 = vld [vmem:[%s11 + $0x14] sm:$0xf]
  %v12071 = vld [vmem:[%s11 + $0x18] sm:$0xf]
  %v12072 = vld [vmem:[%s11 + $0x1c] sm:$0xf]
  %v12073 = vld [vmem:[%s11 + $0x20] sm:$0xf]
  %v12074 = vld [vmem:[%s11 + $0x24] sm:$0xf]
  %v12075 = vld [vmem:[%s11 + $0x28] sm:$0xf]
  %v12076 = vld [vmem:[%s11 + $0x2c] sm:$0xf]
  %v12077 = vld [vmem:[%s11 + $0x30] sm:$0xf]
  %v12078 = vld [vmem:[%s11 + $0x34] sm:$0xf]
  %v12079 = vld [vmem:[%s11 + $0x38] sm:$0xf]
  %v12080 = vld [vmem:[%s11 + $0x3c] sm:$0xf]
  %v12081 = vld [vmem:[%s11 + $0x40] sm:$0xf]
  %v12082 = vld [vmem:[%s11 + $0x44] sm:$0xf]
  %v12083 = vld [vmem:[%s11 + $0x48] sm:$0xf]
  %v12084 = vld [vmem:[%s11 + $0x4c] sm:$0xf]
  %v12085 = vld [vmem:[%s11 + $0x50] sm:$0xf]
  %v12086 = vld [vmem:[%s11 + $0x54] sm:$0xf]
  %v12087 = vld [vmem:[%s11 + $0x58] sm:$0xf]
  %v12088 = vld [vmem:[%s11 + $0x5c] sm:$0xf]
  %v12089 = vld [vmem:[%s11 + $0x60] sm:$0xf]
  %v12090 = vld [vmem:[%s11 + $0x64] sm:$0xf]
  %v12091 = vld [vmem:[%s11 + $0x68] sm:$0xf]
  %v12092 = vld [vmem:[%s11 + $0x6c] sm:$0xf]
  %v12093 = vld [vmem:[%s11 + $0x70] sm:$0xf]
  %v12094 = vld [vmem:[%s11 + $0x74] sm:$0xf]
  %v12095 = vld [vmem:[%s11 + $0x78] sm:$0xf]
  %v12096 = vld [vmem:[%s11 + $0x7c] sm:$0xf]
  %v12097 = vld [vmem:[%s12] sm:$0x1]
  %v12099 = vlaneseq
  %v12100 = vshrl.u32 %v12099, 7
  %v12101 = vsub.s32 0, %v12100
  %v12102 = vrot.slane %v12097, %v12101
  %v12136 = vunpack.c.l.b16 %v12065
  %v12137 = vunpack.c.l.b16 %v12066
  %v12138 = vunpack.c.l.b16 %v12067
  %v12139 = vunpack.c.l.b16 %v12068
  %v12140 = vunpack.c.l.b16 %v12069
  %v12141 = vunpack.c.l.b16 %v12070
  %v12142 = vunpack.c.l.b16 %v12071
  %v12143 = vunpack.c.l.b16 %v12072
  %v12144 = vunpack.c.l.b16 %v12073
  %v12145 = vunpack.c.l.b16 %v12074
  %v12146 = vunpack.c.l.b16 %v12075
  %v12147 = vunpack.c.l.b16 %v12076
  %v12148 = vunpack.c.l.b16 %v12077
  %v12149 = vunpack.c.l.b16 %v12078
  %v12150 = vunpack.c.l.b16 %v12079
  %v12151 = vunpack.c.l.b16 %v12080
  %v12152 = vunpack.c.l.b16 %v12081
  %v12153 = vunpack.c.l.b16 %v12082
  %v12154 = vunpack.c.l.b16 %v12083
  %v12155 = vunpack.c.l.b16 %v12084
  %v12156 = vunpack.c.l.b16 %v12085
  %v12157 = vunpack.c.l.b16 %v12086
  %v12158 = vunpack.c.l.b16 %v12087
  %v12159 = vunpack.c.l.b16 %v12088
  %v12160 = vunpack.c.l.b16 %v12089
  %v12161 = vunpack.c.l.b16 %v12090
  %v12162 = vunpack.c.l.b16 %v12091
  %v12163 = vunpack.c.l.b16 %v12092
  %v12164 = vunpack.c.l.b16 %v12093
  %v12165 = vunpack.c.l.b16 %v12094
  %v12166 = vunpack.c.l.b16 %v12095
  %v12167 = vunpack.c.l.b16 %v12096
  %v12168 = vpack.c.b16 %v12137, %v12136
  %v12169 = vpack.c.b16 %v12139, %v12138
  %v12170 = vpack.c.b16 %v12141, %v12140
  %v12171 = vpack.c.b16 %v12143, %v12142
  %v12172 = vpack.c.b16 %v12145, %v12144
  %v12173 = vpack.c.b16 %v12147, %v12146
  %v12174 = vpack.c.b16 %v12149, %v12148
  %v12175 = vpack.c.b16 %v12151, %v12150
  %v12176 = vpack.c.b16 %v12153, %v12152
  %v12177 = vpack.c.b16 %v12155, %v12154
  %v12178 = vpack.c.b16 %v12157, %v12156
  %v12179 = vpack.c.b16 %v12159, %v12158
  %v12180 = vpack.c.b16 %v12161, %v12160
  %v12181 = vpack.c.b16 %v12163, %v12162
  %v12182 = vpack.c.b16 %v12165, %v12164
  %v12183 = vpack.c.b16 %v12167, %v12166
  %12200 = vmatprep.subr.bf16.mxu0 0
  %12201 = vmatpush1.bf16.msra.mxu0 %v12168
  %12202 = vmatprep.subr.bf16.mxu0 0
  %12203 = vmatpush1.bf16.msra.mxu0 %v12169
  %12204 = vmatprep.subr.bf16.mxu0 0
  %12205 = vmatpush1.bf16.msra.mxu0 %v12170
  %12206 = vmatprep.subr.bf16.mxu0 0
  %12207 = vmatpush1.bf16.msra.mxu0 %v12171
  %12208 = vmatprep.subr.bf16.mxu0 0
  %12209 = vmatpush1.bf16.msra.mxu0 %v12172
  %12210 = vmatprep.subr.bf16.mxu0 0
  %12211 = vmatpush1.bf16.msra.mxu0 %v12173
  %12212 = vmatprep.subr.bf16.mxu0 0
  %12213 = vmatpush1.bf16.msra.mxu0 %v12174
  %12214 = vmatprep.subr.bf16.mxu0 0
  %12215 = vmatpush1.bf16.msra.mxu0 %v12175
  %12216 = vmatprep.subr.bf16.mxu0 0
  %12217 = vmatpush1.bf16.msra.mxu0 %v12176
  %12218 = vmatprep.subr.bf16.mxu0 0
  %12219 = vmatpush1.bf16.msra.mxu0 %v12177
  %12220 = vmatprep.subr.bf16.mxu0 0
  %12221 = vmatpush1.bf16.msra.mxu0 %v12178
  %12222 = vmatprep.subr.bf16.mxu0 0
  %12223 = vmatpush1.bf16.msra.mxu0 %v12179
  %12224 = vmatprep.subr.bf16.mxu0 0
  %12225 = vmatpush1.bf16.msra.mxu0 %v12180
  %12226 = vmatprep.subr.bf16.mxu0 0
  %12227 = vmatpush1.bf16.msra.mxu0 %v12181
  %12228 = vmatprep.subr.bf16.mxu0 0
  %12229 = vmatpush1.bf16.msra.mxu0 %v12182
  %12230 = vmatprep.subr.bf16.mxu0 0
  %12231 = vmatpush1.bf16.msra.mxu0 %v12183
  %12232 = vmatprep.mubr.bf16.mxu0 %v12064
  %12233 = vmatmul.mubr.bf16.gmra.mrb[0].mxu0 %v12063
  %v12234 = vpop.f32.mrb[0].mxu0
  %v12235 = vadd.f32 %v12102, %v12234
  %v12236 = vpop.f32.mrb[0].mxu0
  %v12237 = vpop.f32.mrb[0].mxu0
  %v12238 = vpop.f32.mrb[0].mxu0
  %12239 = vdwg.mxu0
  %v12240 = vmax.f32 %v12235, 0.0
  %v12241 = vld [vmem:[%s13] sm:$0x1]
  %v12243 = vlaneseq
  %v12244 = vshrl.u32 %v12243, 7
  %v12245 = vsub.s32 0, %v12244
  %v12246 = vrot.slane %v12241, %v12245
  %v12248 = vmul.f32 %v12240, %v12246
  %vm12249 = vcmask 1041408
  %v12250 = vsel %vm12249, %v12248, 0.0
  %12251 = vadd.xlane.f32.xlu0 %v12250
  %v12252 = vpop.xlane.xlu0 %12251
  %v12253 = vld [vmem:[#allocation2] sm:$0x1]
  %v12255 = vlaneseq
  %v12256 = vshrl.u32 %v12255, 7
  %v12257 = vsub.s32 0, %v12256
  %v12258 = vrot.slane %v12253, %v12257
  %v12260 = vadd.f32 %v12252, %v12258
  %vm12261 = vcmask 1024
  %12262 = vst.msk [vmem:[%s15] sm:$0x3] %vm12261, %v12260
  // Predicated region
  $region62: #{critic_forward.7} parent=0 // pred_check
    _
  $region63: #{critic_forward.7} parent=0 // pred_check_branch
    %12264 = sbr.rel (0) target = $region65
  $region64: #{critic_forward.7} parent=0 // pred_region
    _
  $region65: #{critic_forward.7} parent=0 // pred_fallthru
    _
  // Predicated region
  $region66: #{critic_forward.7} parent=0 // pred_check
    _
  $region67: #{critic_forward.7} parent=0 // pred_check_branch
    %12266 = sbr.rel (0) target = $region69
  $region68: #{critic_forward.7} parent=0 // pred_region
    _
  $region69: #{critic_forward.7} parent=0 // pred_fallthru
    _

</llo_original>
